<compile_context>
chip_gen: v7x
topology: tpu7x:2x2x1
jax: 0.10.0
libtpu: 0.0.40
codegen_flags: <defaults>
</compile_context>

<pallas_src>
import functools
import math

import jax
import jax.numpy as jnp
from jax.experimental import pallas as pl
from jax.experimental.pallas import tpu as pltpu


# ---------------------------------------------------------------------------
# helpers
# ---------------------------------------------------------------------------

def _round_up(x, m):
    return (x + m - 1) // m * m


def _pick_rows(hw, frames, channels, budget_bytes=8 << 20, max_rows=512):
    """Spatial positions handled per fused-kernel block (multiple of 8).

    Sized so the dominant in-kernel f32 intermediates (x, qkv, attn, GEGLU h1, ...)
    stay well inside the v7x 64 MiB VMEM budget; capped at 512 rows, past which the
    ~0.35us per-grid-step overhead is already fully amortized.
    """
    per_row = frames * channels * 13 * 4           # ~ live f32 bytes per spatial row
    rows = budget_bytes // max(per_row, 1)
    rows = max(8, min(max_rows, rows))
    rows = min(rows, _round_up(hw, 8))
    return max(8, (rows // 8) * 8)


def _pick_tile_m(m, target=256):
    return target if m >= target else _round_up(m, 8)


def sinusoidal_pe(max_len, dim):
    """diffusers SinusoidalPositionalEmbedding table."""
    pos = jnp.arange(max_len, dtype=jnp.float32)[:, None]
    div = jnp.exp(jnp.arange(0, dim, 2, dtype=jnp.float32) *
                  (-math.log(10000.0) / dim))
    pe = jnp.zeros((max_len, dim), jnp.float32)
    pe = pe.at[:, 0::2].set(jnp.sin(pos * div))
    pe = pe.at[:, 1::2].set(jnp.cos(pos * div))
    return pe


def _tanh_gelu(x):
    # tanh-approximate GELU: tanh goes to the EUP slot instead of an erf VALU polynomial.
    return 0.5 * x * (1.0 + jnp.tanh(0.7978845608028654 * (x + 0.044715 * x * x * x)))


# ---------------------------------------------------------------------------
# Fused pos-embed + LayerNorm + temporal attention + GEGLU FF kernel
# ---------------------------------------------------------------------------

def _temporal_block_kernel(hid_ref, pad_ref, t0_ref, pe_ref, g_ref, beta_ref,
                           wqkv_ref, wo_ref, bo_ref, w1_ref, b1_ref, w2_ref, b2_ref,
                           o_ref, *, frames, rows, heads, channels, inner, eps):
    """One block = `rows` spatial positions x `frames` frames, frame-major (F*rows, C).

    The pad-frame concat, +temb, +positional-embedding, LayerNorm, fused-QKV
    projection, the tiny FxF temporal attention (VPU mul + lane reduce + one stacked
    softmax per query frame) and the GEGLU feed-forward all run in VMEM; the output
    drops the pad frames and is stored bf16 in the same (frame, row, C) layout.
    """
    C = channels
    F = frames
    dh = C // heads

    # --- assemble frame-major sequence: [pad_first, hidden frames..., pad_last] + temb + PE
    pe = pe_ref[...]                                            # (F, C)
    t0 = t0_ref[0]                                              # (1, C)
    pieces = []
    for i in range(F):
        if i == 0:
            p_i = pad_ref[0, 0]
        elif i == F - 1:
            p_i = pad_ref[0, 1]
        else:
            p_i = hid_ref[0, i - 1]
        pieces.append(p_i + (t0 + pe[i:i + 1]))                 # (rows, C)
    x = jnp.concatenate(pieces, axis=0)                         # (F*rows, C) f32

    # --- LayerNorm (f32 statistics)
    mu = jnp.mean(x, axis=-1, keepdims=True)
    var = jnp.mean((x - mu) ** 2, axis=-1, keepdims=True)
    xn = (x - mu) * jax.lax.rsqrt(var + eps) * g_ref[...] + beta_ref[...]

    # --- fused QKV projection: one (C,3C) MXU matmul (softmax scale folded into Wq)
    xb = xn.astype(jnp.bfloat16)
    qkv = jnp.dot(xb, wqkv_ref[...], preferred_element_type=jnp.float32)   # (F*rows, 3C)
    q = qkv[:, :C]
    k = qkv[:, C:2 * C]
    v = qkv[:, 2 * C:]

    # --- temporal self-attention over the F frames of each spatial position
    head_outs = []
    for h in range(heads):                                      # heads defaults to 1
        lo, hi = h * dh, (h + 1) * dh
        qh, kh, vh = q[:, lo:hi], k[:, lo:hi], v[:, lo:hi]
        k_f = [kh[j * rows:(j + 1) * rows] for j in range(F)]
        v_f = [vh[j * rows:(j + 1) * rows] for j in range(F)]
        out_f = []
        for i in range(F):
            qi = qh[i * rows:(i + 1) * rows]
            # all F scores for this query frame as ONE (rows, F) tile
            s = jnp.concatenate(
                [jnp.sum(qi * k_f[j], axis=-1, keepdims=True) for j in range(F)],
                axis=-1)                                        # (rows, F)
            m = jnp.max(s, axis=-1, keepdims=True)
            p = jnp.exp(s - m)                                  # single EUP pass
            pw = p * pl.reciprocal(jnp.sum(p, axis=-1, keepdims=True), approx=True)
            oi = pw[:, 0:1] * v_f[0]
            for j in range(1, F):
                oi = oi + pw[:, j:j + 1] * v_f[j]
            out_f.append(oi)                                    # (rows, dh)
        head_outs.append(jnp.concatenate(out_f, axis=0))        # (F*rows, dh)
    attn = head_outs[0] if heads == 1 else jnp.concatenate(head_outs, axis=-1)
    attn = (jnp.dot(attn.astype(jnp.bfloat16), wo_ref[...],
                    preferred_element_type=jnp.float32) + bo_ref[...])

    # --- GEGLU feed-forward: one lane-dense (C,4C) matmul, split into value / gate
    h1 = (jnp.dot(attn.astype(jnp.bfloat16), w1_ref[...],
                  preferred_element_type=jnp.float32) + b1_ref[...])
    val = h1[:, :inner]
    gate = h1[:, inner:]
    y = (jnp.dot((val * _tanh_gelu(gate)).astype(jnp.bfloat16), w2_ref[...],
                 preferred_element_type=jnp.float32) + b2_ref[...])

    # --- drop the two pad frames; store bf16 in the (frame, row, C) input layout
    for i in range(F - 2):
        o_ref[0, i] = y[(i + 1) * rows:(i + 2) * rows].astype(jnp.bfloat16)


def temporal_attention_ff(hid4, pad4, t0_3d, pe, p, *, heads, frames, rows, eps=1e-5):
    b, f, hwpad, C = hid4.shape
    nrb = hwpad // rows
    inner = 2 * C
    kern = functools.partial(_temporal_block_kernel, frames=frames, rows=rows,
                             heads=heads, channels=C, inner=inner, eps=eps)
    full2 = lambda bi, ri: (0, 0)
    return pl.pallas_call(
        kern,
        grid=(b, nrb),
        in_specs=[
            pl.BlockSpec((1, f, rows, C), lambda bi, ri: (bi, 0, ri, 0)),   # hidden frames
            pl.BlockSpec((1, 2, rows, C), lambda bi, ri: (bi, 0, ri, 0)),   # pad frames
            pl.BlockSpec((1, 1, C), lambda bi, ri: (bi, 0, 0)),             # temb (frame 0)
            pl.BlockSpec((frames, C), full2),                               # PE table
            pl.BlockSpec((1, C), full2),                                    # ln gamma
            pl.BlockSpec((1, C), full2),                                    # ln beta
            pl.BlockSpec((C, 3 * C), full2),                                # fused Wqkv (bf16)
            pl.BlockSpec((C, C), full2),                                    # Wo
            pl.BlockSpec((1, C), full2),                                    # bo
            pl.BlockSpec((C, 2 * inner), full2),                            # ff W1
            pl.BlockSpec((1, 2 * inner), full2),                            # ff b1
            pl.BlockSpec((inner, C), full2),                                # ff W2
            pl.BlockSpec((1, C), full2),                                    # ff b2
        ],
        out_specs=pl.BlockSpec((1, f, rows, C), lambda bi, ri: (bi, 0, ri, 0)),
        out_shape=jax.ShapeDtypeStruct((b, f, hwpad, C), jnp.bfloat16),
        compiler_params=pltpu.CompilerParams(
            dimension_semantics=("parallel", "parallel")),
    )(hid4, pad4, t0_3d, pe, p["ln_g"], p["ln_b"], p["wqkv"], p["wo"], p["bo"],
      p["ff_w1"], p["ff_b1"], p["ff_w2"], p["ff_b2"])


# ---------------------------------------------------------------------------
# zero_module Conv2d 3x3 + residual (M-tiled im2col matmul, bias+residual fused)
# ---------------------------------------------------------------------------

def _conv_residual_kernel(p_ref, w_ref, b_ref, r_ref, o_ref):
    o_ref[...] = (jnp.dot(p_ref[...], w_ref[...], preferred_element_type=jnp.float32)
                  + b_ref[...] + r_ref[...])


def conv3x3_proj_residual(x_nhwc_bf16, w2d_bf16, bias, residual_2d):
    B, H, W, Cin = x_nhwc_bf16.shape
    Cout = w2d_bf16.shape[1]
    xp = jnp.pad(x_nhwc_bf16, ((0, 0), (1, 1), (1, 1), (0, 0)))
    cols = [xp[:, ky:ky + H, kx:kx + W, :] for ky in range(3) for kx in range(3)]
    patches = jnp.concatenate(cols, axis=-1).reshape(B * H * W, 9 * Cin)   # bf16 im2col
    M, K = patches.shape
    tm = _pick_tile_m(M)
    mpad = _round_up(M, tm)
    if mpad != M:                                    # pad M to the tile instead of tm=M
        patches = jnp.pad(patches, ((0, mpad - M), (0, 0)))
        residual_2d = jnp.pad(residual_2d, ((0, mpad - M), (0, 0)))
    out = pl.pallas_call(
        _conv_residual_kernel,
        grid=(mpad // tm,),
        in_specs=[
            pl.BlockSpec((tm, K), lambda i: (i, 0)),
            pl.BlockSpec((K, Cout), lambda i: (0, 0)),
            pl.BlockSpec((1, Cout), lambda i: (0, 0)),
            pl.BlockSpec((tm, Cout), lambda i: (i, 0)),
        ],
        out_specs=pl.BlockSpec((tm, Cout), lambda i: (i, 0)),
        out_shape=jax.ShapeDtypeStruct((mpad, Cout), jnp.float32),
        compiler_params=pltpu.CompilerParams(dimension_semantics=("parallel",)),
    )(patches, w2d_bf16, bias.reshape(1, Cout), residual_2d)
    return out[:M]


# ---------------------------------------------------------------------------
# Parameters (deterministic, synthetic)
# ---------------------------------------------------------------------------

def init_params(key, in_channels, heads=1, time_embed_dim=64, max_pos_t=154):
    C = in_channels
    inner = 2 * C                       # FeedForward inner_dim = in_channels * 2
    dh = C // heads
    scale = dh ** -0.5
    ks = jax.random.split(key, 11)
    s = 0.05
    wq = jax.random.normal(ks[2], (C, C), jnp.float32) * s * scale   # scale folded in
    wk = jax.random.normal(ks[3], (C, C), jnp.float32) * s
    wv = jax.random.normal(ks[4], (C, C), jnp.float32) * s
    return {
        # time_emb_proj Linear
        "time_w": jax.random.normal(ks[0], (time_embed_dim, C), jnp.float32) * s,
        "time_b": jax.random.normal(ks[1], (C,), jnp.float32) * s,
        # sinusoidal positional embedding table
        "pe_t": sinusoidal_pe(max_pos_t, C),
        # LayerNorm (elementwise affine, default init)
        "ln_g": jnp.ones((1, C), jnp.float32),
        "ln_b": jnp.zeros((1, C), jnp.float32),
        # Attention: fused [Wq|Wk|Wv] (q/k/v bias=False), out proj bias=True
        "wqkv": jnp.concatenate([wq, wk, wv], axis=1).astype(jnp.bfloat16),
        "wo": (jax.random.normal(ks[5], (C, C), jnp.float32) * s).astype(jnp.bfloat16),
        "bo": (jax.random.normal(ks[6], (C,), jnp.float32) * s).reshape(1, C),
        # GEGLU FeedForward (W1 columns = [value | gate])
        "ff_w1": (jax.random.normal(ks[7], (C, 2 * inner), jnp.float32) * s
                  ).astype(jnp.bfloat16),
        "ff_b1": (jax.random.normal(ks[8], (2 * inner,), jnp.float32) * s
                  ).reshape(1, 2 * inner),
        "ff_w2": (jax.random.normal(ks[9], (inner, C), jnp.float32) * s
                  ).astype(jnp.bfloat16),
        "ff_b2": (jax.random.normal(ks[10], (C,), jnp.float32) * s).reshape(1, C),
        # zero_module(Conv2d 3x3)
        "proj_w": jnp.zeros((9 * C, C), jnp.bfloat16),
        "proj_b": jnp.zeros((C,), jnp.float32),
    }


# ---------------------------------------------------------------------------
# Forward pass
# ---------------------------------------------------------------------------

def _prepare_inputs(params, hidden_states, pad_states, temb, num_frames):
    BF, C, H, W = hidden_states.shape
    f = num_frames
    b = BF // f
    F = f + 2
    HW = H * W

    hs = hidden_states.astype(jnp.float32)

    # time_emb_proj: tiny (b, time_dim) @ (time_dim, C) Linear, frame-0 embedding per
    # batch.  Plain XLA — far below pallas_call launch cost.
    t0 = (temb.reshape(b, f, -1)[:, 0].astype(jnp.float32) @ params["time_w"]
          + params["time_b"])                                              # (b, C)

    rows = _pick_rows(HW, F, C)
    hwpad = _round_up(HW, rows)

    # channels-last, frame-major activations (one transpose pass each); the pad-concat,
    # +temb and +PE happen inside the fused kernel, not here.
    hid4 = hs.transpose(0, 2, 3, 1).reshape(b, f, HW, C)
    pad_cl = pad_states.astype(jnp.float32).transpose(0, 2, 3, 4, 1)       # (b, P, H, W, C)
    pad4 = jnp.stack([pad_cl[:, 0], pad_cl[:, -1]], axis=1).reshape(b, 2, HW, C)
    if hwpad != HW:
        hid4 = jnp.pad(hid4, ((0, 0), (0, 0), (0, hwpad - HW), (0, 0)))
        pad4 = jnp.pad(pad4, ((0, 0), (0, 0), (0, hwpad - HW), (0, 0)))

    pe = params["pe_t"][:F]                                                # (F, C)
    return hid4, pad4, t0[:, None, :], pe, rows


def sk_motion_module_forward(params, hidden_states, pad_states, temb,
                             num_frames, heads):
    BF, C, H, W = hidden_states.shape
    f = num_frames
    HW = H * W

    hid4, pad4, t0_3d, pe, rows = _prepare_inputs(params, hidden_states, pad_states,
                                                  temb, num_frames)

    y = temporal_attention_ff(hid4, pad4, t0_3d, pe, params,
                              heads=heads, frames=f + 2, rows=rows)
    # y: (b, f, HWpad, C) bf16, pad frames already dropped in-kernel; its layout feeds
    # the conv directly (slice + reshape only, no transpose glue).
    res = y[:, :, :HW].reshape(BF, H, W, C)

    # residual kept in f32 for exactness of the zero-init conv path
    resid2d = hidden_states.astype(jnp.float32).transpose(0, 2, 3, 1).reshape(BF * HW, C)
    out2d = conv3x3_proj_residual(res, params["proj_w"], params["proj_b"], resid2d)
    return out2d.reshape(BF, H, W, C).transpose(0, 3, 1, 2)                # back to NCHW


# ---------------------------------------------------------------------------
# Pure-JAX reference of the fused temporal path (mirrors the kernel's bf16 cast points)
# ---------------------------------------------------------------------------

def _temporal_reference(hid4, pad4, t0, pe, p, *, heads, eps=1e-5):
    b, f, hwpad, C = hid4.shape
    inner = 2 * C
    dh = C // heads
    bf = lambda a: a.astype(jnp.bfloat16).astype(jnp.float32)
    x = jnp.concatenate([pad4[:, 0:1], hid4, pad4[:, 1:2]], axis=1)        # (b, F, n, C)
    x = x + t0[:, None, None, :] + pe[None, :, None, :]
    mu = x.mean(-1, keepdims=True)
    var = ((x - mu) ** 2).mean(-1, keepdims=True)
    xn = (x - mu) * jax.lax.rsqrt(var + eps) * p["ln_g"][0] + p["ln_b"][0]
    qkv = bf(xn) @ p["wqkv"].astype(jnp.float32)
    q, k, v = qkv[..., :C], qkv[..., C:2 * C], qkv[..., 2 * C:]
    outs = []
    for h in range(heads):
        sl = slice(h * dh, (h + 1) * dh)
        s = jnp.einsum('bfnc,bgnc->bnfg', q[..., sl], k[..., sl])
        w = jnp.exp(s - s.max(-1, keepdims=True))
        w = w / w.sum(-1, keepdims=True)
        outs.append(jnp.einsum('bnfg,bgnc->bfnc', w, v[..., sl]))
    attn = outs[0] if heads == 1 else jnp.concatenate(outs, axis=-1)
    attn = bf(attn) @ p["wo"].astype(jnp.float32) + p["bo"][0]
    h1 = bf(attn) @ p["ff_w1"].astype(jnp.float32) + p["ff_b1"][0]
    val, gate = h1[..., :inner], h1[..., inner:]
    y = bf(val * _tanh_gelu(gate)) @ p["ff_w2"].astype(jnp.float32) + p["ff_b2"][0]
    return y[:, 1:-1]                                                       # (b, f, n, C)


# ---------------------------------------------------------------------------

if __name__ == "__main__":
    key = jax.random.PRNGKey(0)
    b, f, C, H, W = 2, 4, 32, 8, 8
    heads = 1                      # SKMotionModule default num_attention_heads=1
    time_dim = 64                  # small stand-in for blocks_time_embed_dim

    k1, k2, k3, kp = jax.random.split(key, 4)
    hidden_states = jax.random.normal(k1, (b * f, C, H, W), jnp.float32)
    pad_states = jax.random.normal(k2, (b, C, 2, H, W), jnp.float32)
    temb = jax.random.normal(k3, (b * f, time_dim), jnp.float32)
    params = init_params(kp, C, heads=heads, time_embed_dim=time_dim, max_pos_t=154)

    fwd = jax.jit(functools.partial(sk_motion_module_forward,
                                    num_frames=f, heads=heads))
    out = jax.block_until_ready(fwd(params, hidden_states, pad_states, temb))

    assert out.shape == hidden_states.shape, out.shape
    assert bool(jnp.all(jnp.isfinite(out)))
    # proj is zero_module-initialized, so the module output equals hidden_states exactly;
    # this validates the full data plumbing (attention/FF run but contribute zero).
    assert bool(jnp.allclose(out, hidden_states)), "zero-init proj residual check failed"

    # attention/FF numerics: fused Pallas path vs a pure-JAX reference (bf16 / approx-
    # reciprocal / tanh-GELU tolerances accounted for by the loose bounds).
    hid4, pad4, t0_3d, pe, rows = _prepare_inputs(params, hidden_states, pad_states,
                                                  temb, f)
    yk = temporal_attention_ff(hid4, pad4, t0_3d, pe, params,
                               heads=heads, frames=f + 2, rows=rows)
    yr = _temporal_reference(hid4, pad4, t0_3d[:, 0], pe, params, heads=heads)
    assert bool(jnp.allclose(yk.astype(jnp.float32), yr, atol=2e-2, rtol=1e-1)), \
        "temporal attention/FF mismatch vs pure-JAX reference"
    print("KERNEL_OK")
</pallas_src>

<mosaic_0001>
module attributes {stable_mosaic.version = 11 : i64} {
  func.func @_temporal_block_kernel(%arg0: i32, %arg1: i32, %arg2: memref<1x4x64x32xf32, #tpu.memory_space<vmem>>, %arg3: memref<1x2x64x32xf32, #tpu.memory_space<vmem>>, %arg4: memref<1x1x32xf32, #tpu.memory_space<vmem>>, %arg5: memref<6x32xf32, #tpu.memory_space<vmem>>, %arg6: memref<1x32xf32, #tpu.memory_space<vmem>>, %arg7: memref<1x32xf32, #tpu.memory_space<vmem>>, %arg8: memref<32x96xbf16, #tpu.memory_space<vmem>>, %arg9: memref<32x32xbf16, #tpu.memory_space<vmem>>, %arg10: memref<1x32xf32, #tpu.memory_space<vmem>>, %arg11: memref<32x128xbf16, #tpu.memory_space<vmem>>, %arg12: memref<1x128xf32, #tpu.memory_space<vmem>>, %arg13: memref<64x32xbf16, #tpu.memory_space<vmem>>, %arg14: memref<1x32xf32, #tpu.memory_space<vmem>>, %arg15: memref<1x4x64x32xbf16, #tpu.memory_space<vmem>>) attributes {dimension_semantics = [#tpu.dimension_semantics<parallel>, #tpu.dimension_semantics<parallel>], iteration_bounds = array<i64: 2, 1>, scalar_prefetch = 0 : i64, scratch_operands = 0 : i64, tpu.core_type = #tpu.core_type<tc>, window_params = [{transform_indices = @transform_0, window_bounds = array<i64: 1, 4, 64, 32>}, {transform_indices = @transform_1, window_bounds = array<i64: 1, 2, 64, 32>}, {transform_indices = @transform_2, window_bounds = array<i64: 1, 1, 32>}, {pipeline_mode = #tpu.pipeline_mode<synchronous>, transform_indices = @transform_3, window_bounds = array<i64: 6, 32>}, {pipeline_mode = #tpu.pipeline_mode<synchronous>, transform_indices = @transform_4, window_bounds = array<i64: 1, 32>}, {pipeline_mode = #tpu.pipeline_mode<synchronous>, transform_indices = @transform_5, window_bounds = array<i64: 1, 32>}, {pipeline_mode = #tpu.pipeline_mode<synchronous>, transform_indices = @transform_6, window_bounds = array<i64: 32, 96>}, {pipeline_mode = #tpu.pipeline_mode<synchronous>, transform_indices = @transform_7, window_bounds = array<i64: 32, 32>}, {pipeline_mode = #tpu.pipeline_mode<synchronous>, transform_indices = @transform_8, window_bounds = array<i64: 1, 32>}, {pipeline_mode = #tpu.pipeline_mode<synchronous>, transform_indices = @transform_9, window_bounds = array<i64: 32, 128>}, {pipeline_mode = #tpu.pipeline_mode<synchronous>, transform_indices = @transform_10, window_bounds = array<i64: 1, 128>}, {pipeline_mode = #tpu.pipeline_mode<synchronous>, transform_indices = @transform_11, window_bounds = array<i64: 64, 32>}, {pipeline_mode = #tpu.pipeline_mode<synchronous>, transform_indices = @transform_12, window_bounds = array<i64: 1, 32>}, {transform_indices = @transform_13, window_bounds = array<i64: 1, 4, 64, 32>}]} {
    %c0 = arith.constant 0 : index
    %c0_0 = arith.constant 0 : index
    %0 = vector.load %arg5[%c0, %c0_0] : memref<6x32xf32, #tpu.memory_space<vmem>>, vector<6x32xf32>
    %c0_1 = arith.constant 0 : index
    %c0_2 = arith.constant 0 : index
    %c0_3 = arith.constant 0 : index
    %1 = vector.load %arg4[%c0_1, %c0_2, %c0_3] : memref<1x1x32xf32, #tpu.memory_space<vmem>>, vector<1x1x32xf32>
    %2 = vector.shape_cast %1 : vector<1x1x32xf32> to vector<1x32xf32>
    %c0_4 = arith.constant 0 : index
    %c0_5 = arith.constant 0 : index
    %c0_6 = arith.constant 0 : index
    %c0_7 = arith.constant 0 : index
    %3 = vector.load %arg3[%c0_4, %c0_5, %c0_6, %c0_7] : memref<1x2x64x32xf32, #tpu.memory_space<vmem>>, vector<1x1x64x32xf32>
    %4 = vector.shape_cast %3 : vector<1x1x64x32xf32> to vector<64x32xf32>
    %5 = vector.extract_strided_slice %0 {offsets = [0, 0], sizes = [1, 32], strides = [1, 1]} : vector<6x32xf32> to vector<1x32xf32>
    %6 = arith.addf %2, %5 : vector<1x32xf32>
    %7 = vector.broadcast %6 : vector<1x32xf32> to vector<64x32xf32>
    %8 = arith.addf %4, %7 : vector<64x32xf32>
    %c0_8 = arith.constant 0 : index
    %c0_9 = arith.constant 0 : index
    %c0_10 = arith.constant 0 : index
    %c0_11 = arith.constant 0 : index
    %9 = vector.load %arg2[%c0_8, %c0_9, %c0_10, %c0_11] : memref<1x4x64x32xf32, #tpu.memory_space<vmem>>, vector<1x1x64x32xf32>
    %10 = vector.shape_cast %9 : vector<1x1x64x32xf32> to vector<64x32xf32>
    %11 = vector.extract_strided_slice %0 {offsets = [1, 0], sizes = [1, 32], strides = [1, 1]} : vector<6x32xf32> to vector<1x32xf32>
    %12 = arith.addf %2, %11 : vector<1x32xf32>
    %13 = vector.broadcast %12 : vector<1x32xf32> to vector<64x32xf32>
    %14 = arith.addf %10, %13 : vector<64x32xf32>
    %c0_12 = arith.constant 0 : index
    %c1 = arith.constant 1 : index
    %c0_13 = arith.constant 0 : index
    %c0_14 = arith.constant 0 : index
    %15 = vector.load %arg2[%c0_12, %c1, %c0_13, %c0_14] : memref<1x4x64x32xf32, #tpu.memory_space<vmem>>, vector<1x1x64x32xf32>
    %16 = vector.shape_cast %15 : vector<1x1x64x32xf32> to vector<64x32xf32>
    %17 = vector.extract_strided_slice %0 {offsets = [2, 0], sizes = [1, 32], strides = [1, 1]} : vector<6x32xf32> to vector<1x32xf32>
    %18 = arith.addf %2, %17 : vector<1x32xf32>
    %19 = vector.broadcast %18 : vector<1x32xf32> to vector<64x32xf32>
    %20 = arith.addf %16, %19 : vector<64x32xf32>
    %c0_15 = arith.constant 0 : index
    %c2 = arith.constant 2 : index
    %c0_16 = arith.constant 0 : index
    %c0_17 = arith.constant 0 : index
    %21 = vector.load %arg2[%c0_15, %c2, %c0_16, %c0_17] : memref<1x4x64x32xf32, #tpu.memory_space<vmem>>, vector<1x1x64x32xf32>
    %22 = vector.shape_cast %21 : vector<1x1x64x32xf32> to vector<64x32xf32>
    %23 = vector.extract_strided_slice %0 {offsets = [3, 0], sizes = [1, 32], strides = [1, 1]} : vector<6x32xf32> to vector<1x32xf32>
    %24 = arith.addf %2, %23 : vector<1x32xf32>
    %25 = vector.broadcast %24 : vector<1x32xf32> to vector<64x32xf32>
    %26 = arith.addf %22, %25 : vector<64x32xf32>
    %c0_18 = arith.constant 0 : index
    %c3 = arith.constant 3 : index
    %c0_19 = arith.constant 0 : index
    %c0_20 = arith.constant 0 : index
    %27 = vector.load %arg2[%c0_18, %c3, %c0_19, %c0_20] : memref<1x4x64x32xf32, #tpu.memory_space<vmem>>, vector<1x1x64x32xf32>
    %28 = vector.shape_cast %27 : vector<1x1x64x32xf32> to vector<64x32xf32>
    %29 = vector.extract_strided_slice %0 {offsets = [4, 0], sizes = [1, 32], strides = [1, 1]} : vector<6x32xf32> to vector<1x32xf32>
    %30 = arith.addf %2, %29 : vector<1x32xf32>
    %31 = vector.broadcast %30 : vector<1x32xf32> to vector<64x32xf32>
    %32 = arith.addf %28, %31 : vector<64x32xf32>
    %c0_21 = arith.constant 0 : index
    %c1_22 = arith.constant 1 : index
    %c0_23 = arith.constant 0 : index
    %c0_24 = arith.constant 0 : index
    %33 = vector.load %arg3[%c0_21, %c1_22, %c0_23, %c0_24] : memref<1x2x64x32xf32, #tpu.memory_space<vmem>>, vector<1x1x64x32xf32>
    %34 = vector.shape_cast %33 : vector<1x1x64x32xf32> to vector<64x32xf32>
    %35 = vector.extract_strided_slice %0 {offsets = [5, 0], sizes = [1, 32], strides = [1, 1]} : vector<6x32xf32> to vector<1x32xf32>
    %36 = arith.addf %2, %35 : vector<1x32xf32>
    %37 = vector.broadcast %36 : vector<1x32xf32> to vector<64x32xf32>
    %38 = arith.addf %34, %37 : vector<64x32xf32>
    %39 = tpu.concatenate %8, %14, %20, %26, %32, %38 in 0 : vector<64x32xf32>, vector<64x32xf32>, vector<64x32xf32>, vector<64x32xf32>, vector<64x32xf32>, vector<64x32xf32> -> vector<384x32xf32>
    %cst = arith.constant dense<0.000000e+00> : vector<384xf32>
    %40 = vector.multi_reduction <add>, %39, %cst [1] : vector<384x32xf32> to vector<384xf32>
    %41 = vector.shape_cast %40 : vector<384xf32> to vector<384x1xf32>
    %cst_25 = arith.constant 3.200000e+01 : f32
    %42 = vector.broadcast %cst_25 : f32 to vector<384x1xf32>
    %43 = arith.divf %41, %42 : vector<384x1xf32>
    %44 = vector.broadcast %43 : vector<384x1xf32> to vector<384x32xf32>
    %45 = arith.subf %39, %44 : vector<384x32xf32>
    %46 = arith.mulf %45, %45 : vector<384x32xf32>
    %cst_26 = arith.constant dense<0.000000e+00> : vector<384xf32>
    %47 = vector.multi_reduction <add>, %46, %cst_26 [1] : vector<384x32xf32> to vector<384xf32>
    %48 = vector.shape_cast %47 : vector<384xf32> to vector<384x1xf32>
    %cst_27 = arith.constant 3.200000e+01 : f32
    %49 = vector.broadcast %cst_27 : f32 to vector<384x1xf32>
    %50 = arith.divf %48, %49 : vector<384x1xf32>
    %51 = vector.broadcast %43 : vector<384x1xf32> to vector<384x32xf32>
    %52 = arith.subf %39, %51 : vector<384x32xf32>
    %cst_28 = arith.constant 9.99999974E-6 : f32
    %53 = vector.broadcast %cst_28 : f32 to vector<384x1xf32>
    %54 = arith.addf %50, %53 : vector<384x1xf32>
    %55 = math.rsqrt %54 : vector<384x1xf32>
    %56 = vector.broadcast %55 : vector<384x1xf32> to vector<384x32xf32>
    %57 = arith.mulf %52, %56 : vector<384x32xf32>
    %c0_29 = arith.constant 0 : index
    %c0_30 = arith.constant 0 : index
    %58 = vector.load %arg6[%c0_29, %c0_30] : memref<1x32xf32, #tpu.memory_space<vmem>>, vector<1x32xf32>
    %59 = vector.broadcast %58 : vector<1x32xf32> to vector<384x32xf32>
    %60 = arith.mulf %57, %59 : vector<384x32xf32>
    %c0_31 = arith.constant 0 : index
    %c0_32 = arith.constant 0 : index
    %61 = vector.load %arg7[%c0_31, %c0_32] : memref<1x32xf32, #tpu.memory_space<vmem>>, vector<1x32xf32>
    %62 = vector.broadcast %61 : vector<1x32xf32> to vector<384x32xf32>
    %63 = arith.addf %60, %62 : vector<384x32xf32>
    %64 = arith.truncf %63 : vector<384x32xf32> to vector<384x32xbf16>
    %c0_33 = arith.constant 0 : index
    %c0_34 = arith.constant 0 : index
    %65 = vector.load %arg8[%c0_33, %c0_34] : memref<32x96xbf16, #tpu.memory_space<vmem>>, vector<32x96xbf16>
    %cst_35 = arith.constant dense<0.000000e+00> : vector<384x96xf32>
    %66 = tpu.matmul %64, %65, %cst_35 {dimension_numbers = #tpu.dot_dimension_numbers<[1], [0], [0], [1], [0, 0, 1, 1], [], []>} : vector<384x32xbf16>, vector<32x96xbf16>, vector<384x96xf32> -> vector<384x96xf32>
    %67 = vector.extract_strided_slice %66 {offsets = [0, 0], sizes = [384, 32], strides = [1, 1]} : vector<384x96xf32> to vector<384x32xf32>
    %68 = vector.extract_strided_slice %66 {offsets = [0, 32], sizes = [384, 32], strides = [1, 1]} : vector<384x96xf32> to vector<384x32xf32>
    %69 = vector.extract_strided_slice %66 {offsets = [0, 64], sizes = [384, 32], strides = [1, 1]} : vector<384x96xf32> to vector<384x32xf32>
    %70 = vector.extract_strided_slice %68 {offsets = [0, 0], sizes = [64, 32], strides = [1, 1]} : vector<384x32xf32> to vector<64x32xf32>
    %71 = vector.extract_strided_slice %68 {offsets = [64, 0], sizes = [64, 32], strides = [1, 1]} : vector<384x32xf32> to vector<64x32xf32>
    %72 = vector.extract_strided_slice %68 {offsets = [128, 0], sizes = [64, 32], strides = [1, 1]} : vector<384x32xf32> to vector<64x32xf32>
    %73 = vector.extract_strided_slice %68 {offsets = [192, 0], sizes = [64, 32], strides = [1, 1]} : vector<384x32xf32> to vector<64x32xf32>
    %74 = vector.extract_strided_slice %68 {offsets = [256, 0], sizes = [64, 32], strides = [1, 1]} : vector<384x32xf32> to vector<64x32xf32>
    %75 = vector.extract_strided_slice %68 {offsets = [320, 0], sizes = [64, 32], strides = [1, 1]} : vector<384x32xf32> to vector<64x32xf32>
    %76 = vector.extract_strided_slice %69 {offsets = [0, 0], sizes = [64, 32], strides = [1, 1]} : vector<384x32xf32> to vector<64x32xf32>
    %77 = vector.extract_strided_slice %69 {offsets = [64, 0], sizes = [64, 32], strides = [1, 1]} : vector<384x32xf32> to vector<64x32xf32>
    %78 = vector.extract_strided_slice %69 {offsets = [128, 0], sizes = [64, 32], strides = [1, 1]} : vector<384x32xf32> to vector<64x32xf32>
    %79 = vector.extract_strided_slice %69 {offsets = [192, 0], sizes = [64, 32], strides = [1, 1]} : vector<384x32xf32> to vector<64x32xf32>
    %80 = vector.extract_strided_slice %69 {offsets = [256, 0], sizes = [64, 32], strides = [1, 1]} : vector<384x32xf32> to vector<64x32xf32>
    %81 = vector.extract_strided_slice %69 {offsets = [320, 0], sizes = [64, 32], strides = [1, 1]} : vector<384x32xf32> to vector<64x32xf32>
    %82 = vector.extract_strided_slice %67 {offsets = [0, 0], sizes = [64, 32], strides = [1, 1]} : vector<384x32xf32> to vector<64x32xf32>
    %83 = arith.mulf %82, %70 : vector<64x32xf32>
    %cst_36 = arith.constant dense<0.000000e+00> : vector<64xf32>
    %84 = vector.multi_reduction <add>, %83, %cst_36 [1] : vector<64x32xf32> to vector<64xf32>
    %85 = vector.shape_cast %84 : vector<64xf32> to vector<64x1xf32>
    %86 = arith.mulf %82, %71 : vector<64x32xf32>
    %cst_37 = arith.constant dense<0.000000e+00> : vector<64xf32>
    %87 = vector.multi_reduction <add>, %86, %cst_37 [1] : vector<64x32xf32> to vector<64xf32>
    %88 = vector.shape_cast %87 : vector<64xf32> to vector<64x1xf32>
    %89 = arith.mulf %82, %72 : vector<64x32xf32>
    %cst_38 = arith.constant dense<0.000000e+00> : vector<64xf32>
    %90 = vector.multi_reduction <add>, %89, %cst_38 [1] : vector<64x32xf32> to vector<64xf32>
    %91 = vector.shape_cast %90 : vector<64xf32> to vector<64x1xf32>
    %92 = arith.mulf %82, %73 : vector<64x32xf32>
    %cst_39 = arith.constant dense<0.000000e+00> : vector<64xf32>
    %93 = vector.multi_reduction <add>, %92, %cst_39 [1] : vector<64x32xf32> to vector<64xf32>
    %94 = vector.shape_cast %93 : vector<64xf32> to vector<64x1xf32>
    %95 = arith.mulf %82, %74 : vector<64x32xf32>
    %cst_40 = arith.constant dense<0.000000e+00> : vector<64xf32>
    %96 = vector.multi_reduction <add>, %95, %cst_40 [1] : vector<64x32xf32> to vector<64xf32>
    %97 = vector.shape_cast %96 : vector<64xf32> to vector<64x1xf32>
    %98 = arith.mulf %82, %75 : vector<64x32xf32>
    %cst_41 = arith.constant dense<0.000000e+00> : vector<64xf32>
    %99 = vector.multi_reduction <add>, %98, %cst_41 [1] : vector<64x32xf32> to vector<64xf32>
    %100 = vector.shape_cast %99 : vector<64xf32> to vector<64x1xf32>
    %101 = tpu.concatenate %85, %88, %91, %94, %97, %100 in 1 : vector<64x1xf32>, vector<64x1xf32>, vector<64x1xf32>, vector<64x1xf32>, vector<64x1xf32>, vector<64x1xf32> -> vector<64x6xf32>
    %cst_42 = arith.constant dense<0xFF800000> : vector<64xf32>
    %102 = vector.multi_reduction <maximumf>, %101, %cst_42 [1] : vector<64x6xf32> to vector<64xf32>
    %103 = vector.shape_cast %102 : vector<64xf32> to vector<64x1xf32>
    %104 = vector.broadcast %103 : vector<64x1xf32> to vector<64x6xf32>
    %105 = arith.subf %101, %104 : vector<64x6xf32>
    %106 = math.exp %105 : vector<64x6xf32>
    %cst_43 = arith.constant dense<0.000000e+00> : vector<64xf32>
    %107 = vector.multi_reduction <add>, %106, %cst_43 [1] : vector<64x6xf32> to vector<64xf32>
    %108 = vector.shape_cast %107 : vector<64xf32> to vector<64x1xf32>
    %109 = tpu.reciprocal %108 {approx = true} : vector<64x1xf32> -> vector<64x1xf32>
    %110 = vector.broadcast %109 : vector<64x1xf32> to vector<64x6xf32>
    %111 = arith.mulf %106, %110 : vector<64x6xf32>
    %112 = vector.extract_strided_slice %111 {offsets = [0, 0], sizes = [64, 1], strides = [1, 1]} : vector<64x6xf32> to vector<64x1xf32>
    %113 = vector.broadcast %112 : vector<64x1xf32> to vector<64x32xf32>
    %114 = arith.mulf %113, %76 : vector<64x32xf32>
    %115 = vector.extract_strided_slice %111 {offsets = [0, 1], sizes = [64, 1], strides = [1, 1]} : vector<64x6xf32> to vector<64x1xf32>
    %116 = vector.broadcast %115 : vector<64x1xf32> to vector<64x32xf32>
    %117 = arith.mulf %116, %77 : vector<64x32xf32>
    %118 = arith.addf %114, %117 : vector<64x32xf32>
    %119 = vector.extract_strided_slice %111 {offsets = [0, 2], sizes = [64, 1], strides = [1, 1]} : vector<64x6xf32> to vector<64x1xf32>
    %120 = vector.broadcast %119 : vector<64x1xf32> to vector<64x32xf32>
    %121 = arith.mulf %120, %78 : vector<64x32xf32>
    %122 = arith.addf %118, %121 : vector<64x32xf32>
    %123 = vector.extract_strided_slice %111 {offsets = [0, 3], sizes = [64, 1], strides = [1, 1]} : vector<64x6xf32> to vector<64x1xf32>
    %124 = vector.broadcast %123 : vector<64x1xf32> to vector<64x32xf32>
    %125 = arith.mulf %124, %79 : vector<64x32xf32>
    %126 = arith.addf %122, %125 : vector<64x32xf32>
    %127 = vector.extract_strided_slice %111 {offsets = [0, 4], sizes = [64, 1], strides = [1, 1]} : vector<64x6xf32> to vector<64x1xf32>
    %128 = vector.broadcast %127 : vector<64x1xf32> to vector<64x32xf32>
    %129 = arith.mulf %128, %80 : vector<64x32xf32>
    %130 = arith.addf %126, %129 : vector<64x32xf32>
    %131 = vector.extract_strided_slice %111 {offsets = [0, 5], sizes = [64, 1], strides = [1, 1]} : vector<64x6xf32> to vector<64x1xf32>
    %132 = vector.broadcast %131 : vector<64x1xf32> to vector<64x32xf32>
    %133 = arith.mulf %132, %81 : vector<64x32xf32>
    %134 = arith.addf %130, %133 : vector<64x32xf32>
    %135 = vector.extract_strided_slice %67 {offsets = [64, 0], sizes = [64, 32], strides = [1, 1]} : vector<384x32xf32> to vector<64x32xf32>
    %136 = arith.mulf %135, %70 : vector<64x32xf32>
    %cst_44 = arith.constant dense<0.000000e+00> : vector<64xf32>
    %137 = vector.multi_reduction <add>, %136, %cst_44 [1] : vector<64x32xf32> to vector<64xf32>
    %138 = vector.shape_cast %137 : vector<64xf32> to vector<64x1xf32>
    %139 = arith.mulf %135, %71 : vector<64x32xf32>
    %cst_45 = arith.constant dense<0.000000e+00> : vector<64xf32>
    %140 = vector.multi_reduction <add>, %139, %cst_45 [1] : vector<64x32xf32> to vector<64xf32>
    %141 = vector.shape_cast %140 : vector<64xf32> to vector<64x1xf32>
    %142 = arith.mulf %135, %72 : vector<64x32xf32>
    %cst_46 = arith.constant dense<0.000000e+00> : vector<64xf32>
    %143 = vector.multi_reduction <add>, %142, %cst_46 [1] : vector<64x32xf32> to vector<64xf32>
    %144 = vector.shape_cast %143 : vector<64xf32> to vector<64x1xf32>
    %145 = arith.mulf %135, %73 : vector<64x32xf32>
    %cst_47 = arith.constant dense<0.000000e+00> : vector<64xf32>
    %146 = vector.multi_reduction <add>, %145, %cst_47 [1] : vector<64x32xf32> to vector<64xf32>
    %147 = vector.shape_cast %146 : vector<64xf32> to vector<64x1xf32>
    %148 = arith.mulf %135, %74 : vector<64x32xf32>
    %cst_48 = arith.constant dense<0.000000e+00> : vector<64xf32>
    %149 = vector.multi_reduction <add>, %148, %cst_48 [1] : vector<64x32xf32> to vector<64xf32>
    %150 = vector.shape_cast %149 : vector<64xf32> to vector<64x1xf32>
    %151 = arith.mulf %135, %75 : vector<64x32xf32>
    %cst_49 = arith.constant dense<0.000000e+00> : vector<64xf32>
    %152 = vector.multi_reduction <add>, %151, %cst_49 [1] : vector<64x32xf32> to vector<64xf32>
    %153 = vector.shape_cast %152 : vector<64xf32> to vector<64x1xf32>
    %154 = tpu.concatenate %138, %141, %144, %147, %150, %153 in 1 : vector<64x1xf32>, vector<64x1xf32>, vector<64x1xf32>, vector<64x1xf32>, vector<64x1xf32>, vector<64x1xf32> -> vector<64x6xf32>
    %cst_50 = arith.constant dense<0xFF800000> : vector<64xf32>
    %155 = vector.multi_reduction <maximumf>, %154, %cst_50 [1] : vector<64x6xf32> to vector<64xf32>
    %156 = vector.shape_cast %155 : vector<64xf32> to vector<64x1xf32>
    %157 = vector.broadcast %156 : vector<64x1xf32> to vector<64x6xf32>
    %158 = arith.subf %154, %157 : vector<64x6xf32>
    %159 = math.exp %158 : vector<64x6xf32>
    %cst_51 = arith.constant dense<0.000000e+00> : vector<64xf32>
    %160 = vector.multi_reduction <add>, %159, %cst_51 [1] : vector<64x6xf32> to vector<64xf32>
    %161 = vector.shape_cast %160 : vector<64xf32> to vector<64x1xf32>
    %162 = tpu.reciprocal %161 {approx = true} : vector<64x1xf32> -> vector<64x1xf32>
    %163 = vector.broadcast %162 : vector<64x1xf32> to vector<64x6xf32>
    %164 = arith.mulf %159, %163 : vector<64x6xf32>
    %165 = vector.extract_strided_slice %164 {offsets = [0, 0], sizes = [64, 1], strides = [1, 1]} : vector<64x6xf32> to vector<64x1xf32>
    %166 = vector.broadcast %165 : vector<64x1xf32> to vector<64x32xf32>
    %167 = arith.mulf %166, %76 : vector<64x32xf32>
    %168 = vector.extract_strided_slice %164 {offsets = [0, 1], sizes = [64, 1], strides = [1, 1]} : vector<64x6xf32> to vector<64x1xf32>
    %169 = vector.broadcast %168 : vector<64x1xf32> to vector<64x32xf32>
    %170 = arith.mulf %169, %77 : vector<64x32xf32>
    %171 = arith.addf %167, %170 : vector<64x32xf32>
    %172 = vector.extract_strided_slice %164 {offsets = [0, 2], sizes = [64, 1], strides = [1, 1]} : vector<64x6xf32> to vector<64x1xf32>
    %173 = vector.broadcast %172 : vector<64x1xf32> to vector<64x32xf32>
    %174 = arith.mulf %173, %78 : vector<64x32xf32>
    %175 = arith.addf %171, %174 : vector<64x32xf32>
    %176 = vector.extract_strided_slice %164 {offsets = [0, 3], sizes = [64, 1], strides = [1, 1]} : vector<64x6xf32> to vector<64x1xf32>
    %177 = vector.broadcast %176 : vector<64x1xf32> to vector<64x32xf32>
    %178 = arith.mulf %177, %79 : vector<64x32xf32>
    %179 = arith.addf %175, %178 : vector<64x32xf32>
    %180 = vector.extract_strided_slice %164 {offsets = [0, 4], sizes = [64, 1], strides = [1, 1]} : vector<64x6xf32> to vector<64x1xf32>
    %181 = vector.broadcast %180 : vector<64x1xf32> to vector<64x32xf32>
    %182 = arith.mulf %181, %80 : vector<64x32xf32>
    %183 = arith.addf %179, %182 : vector<64x32xf32>
    %184 = vector.extract_strided_slice %164 {offsets = [0, 5], sizes = [64, 1], strides = [1, 1]} : vector<64x6xf32> to vector<64x1xf32>
    %185 = vector.broadcast %184 : vector<64x1xf32> to vector<64x32xf32>
    %186 = arith.mulf %185, %81 : vector<64x32xf32>
    %187 = arith.addf %183, %186 : vector<64x32xf32>
    %188 = vector.extract_strided_slice %67 {offsets = [128, 0], sizes = [64, 32], strides = [1, 1]} : vector<384x32xf32> to vector<64x32xf32>
    %189 = arith.mulf %188, %70 : vector<64x32xf32>
    %cst_52 = arith.constant dense<0.000000e+00> : vector<64xf32>
    %190 = vector.multi_reduction <add>, %189, %cst_52 [1] : vector<64x32xf32> to vector<64xf32>
    %191 = vector.shape_cast %190 : vector<64xf32> to vector<64x1xf32>
    %192 = arith.mulf %188, %71 : vector<64x32xf32>
    %cst_53 = arith.constant dense<0.000000e+00> : vector<64xf32>
    %193 = vector.multi_reduction <add>, %192, %cst_53 [1] : vector<64x32xf32> to vector<64xf32>
    %194 = vector.shape_cast %193 : vector<64xf32> to vector<64x1xf32>
    %195 = arith.mulf %188, %72 : vector<64x32xf32>
    %cst_54 = arith.constant dense<0.000000e+00> : vector<64xf32>
    %196 = vector.multi_reduction <add>, %195, %cst_54 [1] : vector<64x32xf32> to vector<64xf32>
    %197 = vector.shape_cast %196 : vector<64xf32> to vector<64x1xf32>
    %198 = arith.mulf %188, %73 : vector<64x32xf32>
    %cst_55 = arith.constant dense<0.000000e+00> : vector<64xf32>
    %199 = vector.multi_reduction <add>, %198, %cst_55 [1] : vector<64x32xf32> to vector<64xf32>
    %200 = vector.shape_cast %199 : vector<64xf32> to vector<64x1xf32>
    %201 = arith.mulf %188, %74 : vector<64x32xf32>
    %cst_56 = arith.constant dense<0.000000e+00> : vector<64xf32>
    %202 = vector.multi_reduction <add>, %201, %cst_56 [1] : vector<64x32xf32> to vector<64xf32>
    %203 = vector.shape_cast %202 : vector<64xf32> to vector<64x1xf32>
    %204 = arith.mulf %188, %75 : vector<64x32xf32>
    %cst_57 = arith.constant dense<0.000000e+00> : vector<64xf32>
    %205 = vector.multi_reduction <add>, %204, %cst_57 [1] : vector<64x32xf32> to vector<64xf32>
    %206 = vector.shape_cast %205 : vector<64xf32> to vector<64x1xf32>
    %207 = tpu.concatenate %191, %194, %197, %200, %203, %206 in 1 : vector<64x1xf32>, vector<64x1xf32>, vector<64x1xf32>, vector<64x1xf32>, vector<64x1xf32>, vector<64x1xf32> -> vector<64x6xf32>
    %cst_58 = arith.constant dense<0xFF800000> : vector<64xf32>
    %208 = vector.multi_reduction <maximumf>, %207, %cst_58 [1] : vector<64x6xf32> to vector<64xf32>
    %209 = vector.shape_cast %208 : vector<64xf32> to vector<64x1xf32>
    %210 = vector.broadcast %209 : vector<64x1xf32> to vector<64x6xf32>
    %211 = arith.subf %207, %210 : vector<64x6xf32>
    %212 = math.exp %211 : vector<64x6xf32>
    %cst_59 = arith.constant dense<0.000000e+00> : vector<64xf32>
    %213 = vector.multi_reduction <add>, %212, %cst_59 [1] : vector<64x6xf32> to vector<64xf32>
    %214 = vector.shape_cast %213 : vector<64xf32> to vector<64x1xf32>
    %215 = tpu.reciprocal %214 {approx = true} : vector<64x1xf32> -> vector<64x1xf32>
    %216 = vector.broadcast %215 : vector<64x1xf32> to vector<64x6xf32>
    %217 = arith.mulf %212, %216 : vector<64x6xf32>
    %218 = vector.extract_strided_slice %217 {offsets = [0, 0], sizes = [64, 1], strides = [1, 1]} : vector<64x6xf32> to vector<64x1xf32>
    %219 = vector.broadcast %218 : vector<64x1xf32> to vector<64x32xf32>
    %220 = arith.mulf %219, %76 : vector<64x32xf32>
    %221 = vector.extract_strided_slice %217 {offsets = [0, 1], sizes = [64, 1], strides = [1, 1]} : vector<64x6xf32> to vector<64x1xf32>
    %222 = vector.broadcast %221 : vector<64x1xf32> to vector<64x32xf32>
    %223 = arith.mulf %222, %77 : vector<64x32xf32>
    %224 = arith.addf %220, %223 : vector<64x32xf32>
    %225 = vector.extract_strided_slice %217 {offsets = [0, 2], sizes = [64, 1], strides = [1, 1]} : vector<64x6xf32> to vector<64x1xf32>
    %226 = vector.broadcast %225 : vector<64x1xf32> to vector<64x32xf32>
    %227 = arith.mulf %226, %78 : vector<64x32xf32>
    %228 = arith.addf %224, %227 : vector<64x32xf32>
    %229 = vector.extract_strided_slice %217 {offsets = [0, 3], sizes = [64, 1], strides = [1, 1]} : vector<64x6xf32> to vector<64x1xf32>
    %230 = vector.broadcast %229 : vector<64x1xf32> to vector<64x32xf32>
    %231 = arith.mulf %230, %79 : vector<64x32xf32>
    %232 = arith.addf %228, %231 : vector<64x32xf32>
    %233 = vector.extract_strided_slice %217 {offsets = [0, 4], sizes = [64, 1], strides = [1, 1]} : vector<64x6xf32> to vector<64x1xf32>
    %234 = vector.broadcast %233 : vector<64x1xf32> to vector<64x32xf32>
    %235 = arith.mulf %234, %80 : vector<64x32xf32>
    %236 = arith.addf %232, %235 : vector<64x32xf32>
    %237 = vector.extract_strided_slice %217 {offsets = [0, 5], sizes = [64, 1], strides = [1, 1]} : vector<64x6xf32> to vector<64x1xf32>
    %238 = vector.broadcast %237 : vector<64x1xf32> to vector<64x32xf32>
    %239 = arith.mulf %238, %81 : vector<64x32xf32>
    %240 = arith.addf %236, %239 : vector<64x32xf32>
    %241 = vector.extract_strided_slice %67 {offsets = [192, 0], sizes = [64, 32], strides = [1, 1]} : vector<384x32xf32> to vector<64x32xf32>
    %242 = arith.mulf %241, %70 : vector<64x32xf32>
    %cst_60 = arith.constant dense<0.000000e+00> : vector<64xf32>
    %243 = vector.multi_reduction <add>, %242, %cst_60 [1] : vector<64x32xf32> to vector<64xf32>
    %244 = vector.shape_cast %243 : vector<64xf32> to vector<64x1xf32>
    %245 = arith.mulf %241, %71 : vector<64x32xf32>
    %cst_61 = arith.constant dense<0.000000e+00> : vector<64xf32>
    %246 = vector.multi_reduction <add>, %245, %cst_61 [1] : vector<64x32xf32> to vector<64xf32>
    %247 = vector.shape_cast %246 : vector<64xf32> to vector<64x1xf32>
    %248 = arith.mulf %241, %72 : vector<64x32xf32>
    %cst_62 = arith.constant dense<0.000000e+00> : vector<64xf32>
    %249 = vector.multi_reduction <add>, %248, %cst_62 [1] : vector<64x32xf32> to vector<64xf32>
    %250 = vector.shape_cast %249 : vector<64xf32> to vector<64x1xf32>
    %251 = arith.mulf %241, %73 : vector<64x32xf32>
    %cst_63 = arith.constant dense<0.000000e+00> : vector<64xf32>
    %252 = vector.multi_reduction <add>, %251, %cst_63 [1] : vector<64x32xf32> to vector<64xf32>
    %253 = vector.shape_cast %252 : vector<64xf32> to vector<64x1xf32>
    %254 = arith.mulf %241, %74 : vector<64x32xf32>
    %cst_64 = arith.constant dense<0.000000e+00> : vector<64xf32>
    %255 = vector.multi_reduction <add>, %254, %cst_64 [1] : vector<64x32xf32> to vector<64xf32>
    %256 = vector.shape_cast %255 : vector<64xf32> to vector<64x1xf32>
    %257 = arith.mulf %241, %75 : vector<64x32xf32>
    %cst_65 = arith.constant dense<0.000000e+00> : vector<64xf32>
    %258 = vector.multi_reduction <add>, %257, %cst_65 [1] : vector<64x32xf32> to vector<64xf32>
    %259 = vector.shape_cast %258 : vector<64xf32> to vector<64x1xf32>
    %260 = tpu.concatenate %244, %247, %250, %253, %256, %259 in 1 : vector<64x1xf32>, vector<64x1xf32>, vector<64x1xf32>, vector<64x1xf32>, vector<64x1xf32>, vector<64x1xf32> -> vector<64x6xf32>
    %cst_66 = arith.constant dense<0xFF800000> : vector<64xf32>
    %261 = vector.multi_reduction <maximumf>, %260, %cst_66 [1] : vector<64x6xf32> to vector<64xf32>
    %262 = vector.shape_cast %261 : vector<64xf32> to vector<64x1xf32>
    %263 = vector.broadcast %262 : vector<64x1xf32> to vector<64x6xf32>
    %264 = arith.subf %260, %263 : vector<64x6xf32>
    %265 = math.exp %264 : vector<64x6xf32>
    %cst_67 = arith.constant dense<0.000000e+00> : vector<64xf32>
    %266 = vector.multi_reduction <add>, %265, %cst_67 [1] : vector<64x6xf32> to vector<64xf32>
    %267 = vector.shape_cast %266 : vector<64xf32> to vector<64x1xf32>
    %268 = tpu.reciprocal %267 {approx = true} : vector<64x1xf32> -> vector<64x1xf32>
    %269 = vector.broadcast %268 : vector<64x1xf32> to vector<64x6xf32>
    %270 = arith.mulf %265, %269 : vector<64x6xf32>
    %271 = vector.extract_strided_slice %270 {offsets = [0, 0], sizes = [64, 1], strides = [1, 1]} : vector<64x6xf32> to vector<64x1xf32>
    %272 = vector.broadcast %271 : vector<64x1xf32> to vector<64x32xf32>
    %273 = arith.mulf %272, %76 : vector<64x32xf32>
    %274 = vector.extract_strided_slice %270 {offsets = [0, 1], sizes = [64, 1], strides = [1, 1]} : vector<64x6xf32> to vector<64x1xf32>
    %275 = vector.broadcast %274 : vector<64x1xf32> to vector<64x32xf32>
    %276 = arith.mulf %275, %77 : vector<64x32xf32>
    %277 = arith.addf %273, %276 : vector<64x32xf32>
    %278 = vector.extract_strided_slice %270 {offsets = [0, 2], sizes = [64, 1], strides = [1, 1]} : vector<64x6xf32> to vector<64x1xf32>
    %279 = vector.broadcast %278 : vector<64x1xf32> to vector<64x32xf32>
    %280 = arith.mulf %279, %78 : vector<64x32xf32>
    %281 = arith.addf %277, %280 : vector<64x32xf32>
    %282 = vector.extract_strided_slice %270 {offsets = [0, 3], sizes = [64, 1], strides = [1, 1]} : vector<64x6xf32> to vector<64x1xf32>
    %283 = vector.broadcast %282 : vector<64x1xf32> to vector<64x32xf32>
    %284 = arith.mulf %283, %79 : vector<64x32xf32>
    %285 = arith.addf %281, %284 : vector<64x32xf32>
    %286 = vector.extract_strided_slice %270 {offsets = [0, 4], sizes = [64, 1], strides = [1, 1]} : vector<64x6xf32> to vector<64x1xf32>
    %287 = vector.broadcast %286 : vector<64x1xf32> to vector<64x32xf32>
    %288 = arith.mulf %287, %80 : vector<64x32xf32>
    %289 = arith.addf %285, %288 : vector<64x32xf32>
    %290 = vector.extract_strided_slice %270 {offsets = [0, 5], sizes = [64, 1], strides = [1, 1]} : vector<64x6xf32> to vector<64x1xf32>
    %291 = vector.broadcast %290 : vector<64x1xf32> to vector<64x32xf32>
    %292 = arith.mulf %291, %81 : vector<64x32xf32>
    %293 = arith.addf %289, %292 : vector<64x32xf32>
    %294 = vector.extract_strided_slice %67 {offsets = [256, 0], sizes = [64, 32], strides = [1, 1]} : vector<384x32xf32> to vector<64x32xf32>
    %295 = arith.mulf %294, %70 : vector<64x32xf32>
    %cst_68 = arith.constant dense<0.000000e+00> : vector<64xf32>
    %296 = vector.multi_reduction <add>, %295, %cst_68 [1] : vector<64x32xf32> to vector<64xf32>
    %297 = vector.shape_cast %296 : vector<64xf32> to vector<64x1xf32>
    %298 = arith.mulf %294, %71 : vector<64x32xf32>
    %cst_69 = arith.constant dense<0.000000e+00> : vector<64xf32>
    %299 = vector.multi_reduction <add>, %298, %cst_69 [1] : vector<64x32xf32> to vector<64xf32>
    %300 = vector.shape_cast %299 : vector<64xf32> to vector<64x1xf32>
    %301 = arith.mulf %294, %72 : vector<64x32xf32>
    %cst_70 = arith.constant dense<0.000000e+00> : vector<64xf32>
    %302 = vector.multi_reduction <add>, %301, %cst_70 [1] : vector<64x32xf32> to vector<64xf32>
    %303 = vector.shape_cast %302 : vector<64xf32> to vector<64x1xf32>
    %304 = arith.mulf %294, %73 : vector<64x32xf32>
    %cst_71 = arith.constant dense<0.000000e+00> : vector<64xf32>
    %305 = vector.multi_reduction <add>, %304, %cst_71 [1] : vector<64x32xf32> to vector<64xf32>
    %306 = vector.shape_cast %305 : vector<64xf32> to vector<64x1xf32>
    %307 = arith.mulf %294, %74 : vector<64x32xf32>
    %cst_72 = arith.constant dense<0.000000e+00> : vector<64xf32>
    %308 = vector.multi_reduction <add>, %307, %cst_72 [1] : vector<64x32xf32> to vector<64xf32>
    %309 = vector.shape_cast %308 : vector<64xf32> to vector<64x1xf32>
    %310 = arith.mulf %294, %75 : vector<64x32xf32>
    %cst_73 = arith.constant dense<0.000000e+00> : vector<64xf32>
    %311 = vector.multi_reduction <add>, %310, %cst_73 [1] : vector<64x32xf32> to vector<64xf32>
    %312 = vector.shape_cast %311 : vector<64xf32> to vector<64x1xf32>
    %313 = tpu.concatenate %297, %300, %303, %306, %309, %312 in 1 : vector<64x1xf32>, vector<64x1xf32>, vector<64x1xf32>, vector<64x1xf32>, vector<64x1xf32>, vector<64x1xf32> -> vector<64x6xf32>
    %cst_74 = arith.constant dense<0xFF800000> : vector<64xf32>
    %314 = vector.multi_reduction <maximumf>, %313, %cst_74 [1] : vector<64x6xf32> to vector<64xf32>
    %315 = vector.shape_cast %314 : vector<64xf32> to vector<64x1xf32>
    %316 = vector.broadcast %315 : vector<64x1xf32> to vector<64x6xf32>
    %317 = arith.subf %313, %316 : vector<64x6xf32>
    %318 = math.exp %317 : vector<64x6xf32>
    %cst_75 = arith.constant dense<0.000000e+00> : vector<64xf32>
    %319 = vector.multi_reduction <add>, %318, %cst_75 [1] : vector<64x6xf32> to vector<64xf32>
    %320 = vector.shape_cast %319 : vector<64xf32> to vector<64x1xf32>
    %321 = tpu.reciprocal %320 {approx = true} : vector<64x1xf32> -> vector<64x1xf32>
    %322 = vector.broadcast %321 : vector<64x1xf32> to vector<64x6xf32>
    %323 = arith.mulf %318, %322 : vector<64x6xf32>
    %324 = vector.extract_strided_slice %323 {offsets = [0, 0], sizes = [64, 1], strides = [1, 1]} : vector<64x6xf32> to vector<64x1xf32>
    %325 = vector.broadcast %324 : vector<64x1xf32> to vector<64x32xf32>
    %326 = arith.mulf %325, %76 : vector<64x32xf32>
    %327 = vector.extract_strided_slice %323 {offsets = [0, 1], sizes = [64, 1], strides = [1, 1]} : vector<64x6xf32> to vector<64x1xf32>
    %328 = vector.broadcast %327 : vector<64x1xf32> to vector<64x32xf32>
    %329 = arith.mulf %328, %77 : vector<64x32xf32>
    %330 = arith.addf %326, %329 : vector<64x32xf32>
    %331 = vector.extract_strided_slice %323 {offsets = [0, 2], sizes = [64, 1], strides = [1, 1]} : vector<64x6xf32> to vector<64x1xf32>
    %332 = vector.broadcast %331 : vector<64x1xf32> to vector<64x32xf32>
    %333 = arith.mulf %332, %78 : vector<64x32xf32>
    %334 = arith.addf %330, %333 : vector<64x32xf32>
    %335 = vector.extract_strided_slice %323 {offsets = [0, 3], sizes = [64, 1], strides = [1, 1]} : vector<64x6xf32> to vector<64x1xf32>
    %336 = vector.broadcast %335 : vector<64x1xf32> to vector<64x32xf32>
    %337 = arith.mulf %336, %79 : vector<64x32xf32>
    %338 = arith.addf %334, %337 : vector<64x32xf32>
    %339 = vector.extract_strided_slice %323 {offsets = [0, 4], sizes = [64, 1], strides = [1, 1]} : vector<64x6xf32> to vector<64x1xf32>
    %340 = vector.broadcast %339 : vector<64x1xf32> to vector<64x32xf32>
    %341 = arith.mulf %340, %80 : vector<64x32xf32>
    %342 = arith.addf %338, %341 : vector<64x32xf32>
    %343 = vector.extract_strided_slice %323 {offsets = [0, 5], sizes = [64, 1], strides = [1, 1]} : vector<64x6xf32> to vector<64x1xf32>
    %344 = vector.broadcast %343 : vector<64x1xf32> to vector<64x32xf32>
    %345 = arith.mulf %344, %81 : vector<64x32xf32>
    %346 = arith.addf %342, %345 : vector<64x32xf32>
    %347 = vector.extract_strided_slice %67 {offsets = [320, 0], sizes = [64, 32], strides = [1, 1]} : vector<384x32xf32> to vector<64x32xf32>
    %348 = arith.mulf %347, %70 : vector<64x32xf32>
    %cst_76 = arith.constant dense<0.000000e+00> : vector<64xf32>
    %349 = vector.multi_reduction <add>, %348, %cst_76 [1] : vector<64x32xf32> to vector<64xf32>
    %350 = vector.shape_cast %349 : vector<64xf32> to vector<64x1xf32>
    %351 = arith.mulf %347, %71 : vector<64x32xf32>
    %cst_77 = arith.constant dense<0.000000e+00> : vector<64xf32>
    %352 = vector.multi_reduction <add>, %351, %cst_77 [1] : vector<64x32xf32> to vector<64xf32>
    %353 = vector.shape_cast %352 : vector<64xf32> to vector<64x1xf32>
    %354 = arith.mulf %347, %72 : vector<64x32xf32>
    %cst_78 = arith.constant dense<0.000000e+00> : vector<64xf32>
    %355 = vector.multi_reduction <add>, %354, %cst_78 [1] : vector<64x32xf32> to vector<64xf32>
    %356 = vector.shape_cast %355 : vector<64xf32> to vector<64x1xf32>
    %357 = arith.mulf %347, %73 : vector<64x32xf32>
    %cst_79 = arith.constant dense<0.000000e+00> : vector<64xf32>
    %358 = vector.multi_reduction <add>, %357, %cst_79 [1] : vector<64x32xf32> to vector<64xf32>
    %359 = vector.shape_cast %358 : vector<64xf32> to vector<64x1xf32>
    %360 = arith.mulf %347, %74 : vector<64x32xf32>
    %cst_80 = arith.constant dense<0.000000e+00> : vector<64xf32>
    %361 = vector.multi_reduction <add>, %360, %cst_80 [1] : vector<64x32xf32> to vector<64xf32>
    %362 = vector.shape_cast %361 : vector<64xf32> to vector<64x1xf32>
    %363 = arith.mulf %347, %75 : vector<64x32xf32>
    %cst_81 = arith.constant dense<0.000000e+00> : vector<64xf32>
    %364 = vector.multi_reduction <add>, %363, %cst_81 [1] : vector<64x32xf32> to vector<64xf32>
    %365 = vector.shape_cast %364 : vector<64xf32> to vector<64x1xf32>
    %366 = tpu.concatenate %350, %353, %356, %359, %362, %365 in 1 : vector<64x1xf32>, vector<64x1xf32>, vector<64x1xf32>, vector<64x1xf32>, vector<64x1xf32>, vector<64x1xf32> -> vector<64x6xf32>
    %cst_82 = arith.constant dense<0xFF800000> : vector<64xf32>
    %367 = vector.multi_reduction <maximumf>, %366, %cst_82 [1] : vector<64x6xf32> to vector<64xf32>
    %368 = vector.shape_cast %367 : vector<64xf32> to vector<64x1xf32>
    %369 = vector.broadcast %368 : vector<64x1xf32> to vector<64x6xf32>
    %370 = arith.subf %366, %369 : vector<64x6xf32>
    %371 = math.exp %370 : vector<64x6xf32>
    %cst_83 = arith.constant dense<0.000000e+00> : vector<64xf32>
    %372 = vector.multi_reduction <add>, %371, %cst_83 [1] : vector<64x6xf32> to vector<64xf32>
    %373 = vector.shape_cast %372 : vector<64xf32> to vector<64x1xf32>
    %374 = tpu.reciprocal %373 {approx = true} : vector<64x1xf32> -> vector<64x1xf32>
    %375 = vector.broadcast %374 : vector<64x1xf32> to vector<64x6xf32>
    %376 = arith.mulf %371, %375 : vector<64x6xf32>
    %377 = vector.extract_strided_slice %376 {offsets = [0, 0], sizes = [64, 1], strides = [1, 1]} : vector<64x6xf32> to vector<64x1xf32>
    %378 = vector.broadcast %377 : vector<64x1xf32> to vector<64x32xf32>
    %379 = arith.mulf %378, %76 : vector<64x32xf32>
    %380 = vector.extract_strided_slice %376 {offsets = [0, 1], sizes = [64, 1], strides = [1, 1]} : vector<64x6xf32> to vector<64x1xf32>
    %381 = vector.broadcast %380 : vector<64x1xf32> to vector<64x32xf32>
    %382 = arith.mulf %381, %77 : vector<64x32xf32>
    %383 = arith.addf %379, %382 : vector<64x32xf32>
    %384 = vector.extract_strided_slice %376 {offsets = [0, 2], sizes = [64, 1], strides = [1, 1]} : vector<64x6xf32> to vector<64x1xf32>
    %385 = vector.broadcast %384 : vector<64x1xf32> to vector<64x32xf32>
    %386 = arith.mulf %385, %78 : vector<64x32xf32>
    %387 = arith.addf %383, %386 : vector<64x32xf32>
    %388 = vector.extract_strided_slice %376 {offsets = [0, 3], sizes = [64, 1], strides = [1, 1]} : vector<64x6xf32> to vector<64x1xf32>
    %389 = vector.broadcast %388 : vector<64x1xf32> to vector<64x32xf32>
    %390 = arith.mulf %389, %79 : vector<64x32xf32>
    %391 = arith.addf %387, %390 : vector<64x32xf32>
    %392 = vector.extract_strided_slice %376 {offsets = [0, 4], sizes = [64, 1], strides = [1, 1]} : vector<64x6xf32> to vector<64x1xf32>
    %393 = vector.broadcast %392 : vector<64x1xf32> to vector<64x32xf32>
    %394 = arith.mulf %393, %80 : vector<64x32xf32>
    %395 = arith.addf %391, %394 : vector<64x32xf32>
    %396 = vector.extract_strided_slice %376 {offsets = [0, 5], sizes = [64, 1], strides = [1, 1]} : vector<64x6xf32> to vector<64x1xf32>
    %397 = vector.broadcast %396 : vector<64x1xf32> to vector<64x32xf32>
    %398 = arith.mulf %397, %81 : vector<64x32xf32>
    %399 = arith.addf %395, %398 : vector<64x32xf32>
    %400 = tpu.concatenate %134, %187, %240, %293, %346, %399 in 0 : vector<64x32xf32>, vector<64x32xf32>, vector<64x32xf32>, vector<64x32xf32>, vector<64x32xf32>, vector<64x32xf32> -> vector<384x32xf32>
    %401 = arith.truncf %400 : vector<384x32xf32> to vector<384x32xbf16>
    %c0_84 = arith.constant 0 : index
    %c0_85 = arith.constant 0 : index
    %402 = vector.load %arg9[%c0_84, %c0_85] : memref<32x32xbf16, #tpu.memory_space<vmem>>, vector<32x32xbf16>
    %cst_86 = arith.constant dense<0.000000e+00> : vector<384x32xf32>
    %403 = tpu.matmul %401, %402, %cst_86 {dimension_numbers = #tpu.dot_dimension_numbers<[1], [0], [0], [1], [0, 0, 1, 1], [], []>} : vector<384x32xbf16>, vector<32x32xbf16>, vector<384x32xf32> -> vector<384x32xf32>
    %c0_87 = arith.constant 0 : index
    %c0_88 = arith.constant 0 : index
    %404 = vector.load %arg10[%c0_87, %c0_88] : memref<1x32xf32, #tpu.memory_space<vmem>>, vector<1x32xf32>
    %405 = vector.broadcast %404 : vector<1x32xf32> to vector<384x32xf32>
    %406 = arith.addf %403, %405 : vector<384x32xf32>
    %407 = arith.truncf %406 : vector<384x32xf32> to vector<384x32xbf16>
    %c0_89 = arith.constant 0 : index
    %c0_90 = arith.constant 0 : index
    %408 = vector.load %arg11[%c0_89, %c0_90] : memref<32x128xbf16, #tpu.memory_space<vmem>>, vector<32x128xbf16>
    %cst_91 = arith.constant dense<0.000000e+00> : vector<384x128xf32>
    %409 = tpu.matmul %407, %408, %cst_91 {dimension_numbers = #tpu.dot_dimension_numbers<[1], [0], [0], [1], [0, 0, 1, 1], [], []>} : vector<384x32xbf16>, vector<32x128xbf16>, vector<384x128xf32> -> vector<384x128xf32>
    %c0_92 = arith.constant 0 : index
    %c0_93 = arith.constant 0 : index
    %410 = vector.load %arg12[%c0_92, %c0_93] : memref<1x128xf32, #tpu.memory_space<vmem>>, vector<1x128xf32>
    %411 = vector.broadcast %410 : vector<1x128xf32> to vector<384x128xf32>
    %412 = arith.addf %409, %411 : vector<384x128xf32>
    %413 = vector.extract_strided_slice %412 {offsets = [0, 0], sizes = [384, 64], strides = [1, 1]} : vector<384x128xf32> to vector<384x64xf32>
    %414 = vector.extract_strided_slice %412 {offsets = [0, 64], sizes = [384, 64], strides = [1, 1]} : vector<384x128xf32> to vector<384x64xf32>
    %cst_94 = arith.constant 5.000000e-01 : f32
    %415 = vector.broadcast %cst_94 : f32 to vector<384x64xf32>
    %416 = arith.mulf %415, %414 : vector<384x64xf32>
    %cst_95 = arith.constant 4.471500e-02 : f32
    %417 = vector.broadcast %cst_95 : f32 to vector<384x64xf32>
    %418 = arith.mulf %417, %414 : vector<384x64xf32>
    %419 = arith.mulf %418, %414 : vector<384x64xf32>
    %420 = arith.mulf %419, %414 : vector<384x64xf32>
    %421 = arith.addf %414, %420 : vector<384x64xf32>
    %cst_96 = arith.constant 0.797884583 : f32
    %422 = vector.broadcast %cst_96 : f32 to vector<384x64xf32>
    %423 = arith.mulf %422, %421 : vector<384x64xf32>
    %424 = math.tanh %423 : vector<384x64xf32>
    %cst_97 = arith.constant 1.000000e+00 : f32
    %425 = vector.broadcast %cst_97 : f32 to vector<384x64xf32>
    %426 = arith.addf %425, %424 : vector<384x64xf32>
    %427 = arith.mulf %416, %426 : vector<384x64xf32>
    %428 = arith.mulf %413, %427 : vector<384x64xf32>
    %429 = arith.truncf %428 : vector<384x64xf32> to vector<384x64xbf16>
    %c0_98 = arith.constant 0 : index
    %c0_99 = arith.constant 0 : index
    %430 = vector.load %arg13[%c0_98, %c0_99] : memref<64x32xbf16, #tpu.memory_space<vmem>>, vector<64x32xbf16>
    %cst_100 = arith.constant dense<0.000000e+00> : vector<384x32xf32>
    %431 = tpu.matmul %429, %430, %cst_100 {dimension_numbers = #tpu.dot_dimension_numbers<[1], [0], [0], [1], [0, 0, 1, 1], [], []>} : vector<384x64xbf16>, vector<64x32xbf16>, vector<384x32xf32> -> vector<384x32xf32>
    %c0_101 = arith.constant 0 : index
    %c0_102 = arith.constant 0 : index
    %432 = vector.load %arg14[%c0_101, %c0_102] : memref<1x32xf32, #tpu.memory_space<vmem>>, vector<1x32xf32>
    %433 = vector.broadcast %432 : vector<1x32xf32> to vector<384x32xf32>
    %434 = arith.addf %431, %433 : vector<384x32xf32>
    %435 = vector.extract_strided_slice %434 {offsets = [64, 0], sizes = [64, 32], strides = [1, 1]} : vector<384x32xf32> to vector<64x32xf32>
    %436 = arith.truncf %435 : vector<64x32xf32> to vector<64x32xbf16>
    %c0_103 = arith.constant 0 : index
    %c0_104 = arith.constant 0 : index
    %c0_105 = arith.constant 0 : index
    %c0_106 = arith.constant 0 : index
    %437 = vector.load %arg15[%c0_103, %c0_104, %c0_105, %c0_106] : memref<1x4x64x32xbf16, #tpu.memory_space<vmem>>, vector<1x1x64x32xbf16>
    %438 = vector.shape_cast %437 : vector<1x1x64x32xbf16> to vector<64x32xbf16>
    %439 = vector.shape_cast %436 : vector<64x32xbf16> to vector<1x1x64x32xbf16>
    tpu.vector_store %arg15[%c0_103, %c0_104, %c0_105, %c0_106], %439 {strides = array<i32>} : memref<1x4x64x32xbf16, #tpu.memory_space<vmem>>, vector<1x1x64x32xbf16>,
    %440 = vector.extract_strided_slice %434 {offsets = [128, 0], sizes = [64, 32], strides = [1, 1]} : vector<384x32xf32> to vector<64x32xf32>
    %441 = arith.truncf %440 : vector<64x32xf32> to vector<64x32xbf16>
    %c0_107 = arith.constant 0 : index
    %c1_108 = arith.constant 1 : index
    %c0_109 = arith.constant 0 : index
    %c0_110 = arith.constant 0 : index
    %442 = vector.load %arg15[%c0_107, %c1_108, %c0_109, %c0_110] : memref<1x4x64x32xbf16, #tpu.memory_space<vmem>>, vector<1x1x64x32xbf16>
    %443 = vector.shape_cast %442 : vector<1x1x64x32xbf16> to vector<64x32xbf16>
    %444 = vector.shape_cast %441 : vector<64x32xbf16> to vector<1x1x64x32xbf16>
    tpu.vector_store %arg15[%c0_107, %c1_108, %c0_109, %c0_110], %444 {strides = array<i32>} : memref<1x4x64x32xbf16, #tpu.memory_space<vmem>>, vector<1x1x64x32xbf16>,
    %445 = vector.extract_strided_slice %434 {offsets = [192, 0], sizes = [64, 32], strides = [1, 1]} : vector<384x32xf32> to vector<64x32xf32>
    %446 = arith.truncf %445 : vector<64x32xf32> to vector<64x32xbf16>
    %c0_111 = arith.constant 0 : index
    %c2_112 = arith.constant 2 : index
    %c0_113 = arith.constant 0 : index
    %c0_114 = arith.constant 0 : index
    %447 = vector.load %arg15[%c0_111, %c2_112, %c0_113, %c0_114] : memref<1x4x64x32xbf16, #tpu.memory_space<vmem>>, vector<1x1x64x32xbf16>
    %448 = vector.shape_cast %447 : vector<1x1x64x32xbf16> to vector<64x32xbf16>
    %449 = vector.shape_cast %446 : vector<64x32xbf16> to vector<1x1x64x32xbf16>
    tpu.vector_store %arg15[%c0_111, %c2_112, %c0_113, %c0_114], %449 {strides = array<i32>} : memref<1x4x64x32xbf16, #tpu.memory_space<vmem>>, vector<1x1x64x32xbf16>,
    %450 = vector.extract_strided_slice %434 {offsets = [256, 0], sizes = [64, 32], strides = [1, 1]} : vector<384x32xf32> to vector<64x32xf32>
    %451 = arith.truncf %450 : vector<64x32xf32> to vector<64x32xbf16>
    %c0_115 = arith.constant 0 : index
    %c3_116 = arith.constant 3 : index
    %c0_117 = arith.constant 0 : index
    %c0_118 = arith.constant 0 : index
    %452 = vector.load %arg15[%c0_115, %c3_116, %c0_117, %c0_118] : memref<1x4x64x32xbf16, #tpu.memory_space<vmem>>, vector<1x1x64x32xbf16>
    %453 = vector.shape_cast %452 : vector<1x1x64x32xbf16> to vector<64x32xbf16>
    %454 = vector.shape_cast %451 : vector<64x32xbf16> to vector<1x1x64x32xbf16>
    tpu.vector_store %arg15[%c0_115, %c3_116, %c0_117, %c0_118], %454 {strides = array<i32>} : memref<1x4x64x32xbf16, #tpu.memory_space<vmem>>, vector<1x1x64x32xbf16>,
    return
  }
  func.func @transform_0(%arg0: i32, %arg1: i32) -> (i32, i32, i32, i32) {
    %c0_i32 = arith.constant 0 : i32
    %c0_i32_0 = arith.constant 0 : i32
    %c0_i32_1 = arith.constant 0 : i32
    return %arg0, %c0_i32, %arg1, %c0_i32_0 : i32, i32, i32, i32
  }
  func.func @transform_1(%arg0: i32, %arg1: i32) -> (i32, i32, i32, i32) {
    %c0_i32 = arith.constant 0 : i32
    %c0_i32_0 = arith.constant 0 : i32
    %c0_i32_1 = arith.constant 0 : i32
    return %arg0, %c0_i32, %arg1, %c0_i32_0 : i32, i32, i32, i32
  }
  func.func @transform_2(%arg0: i32, %arg1: i32) -> (i32, i32, i32) {
    %c0_i32 = arith.constant 0 : i32
    %c0_i32_0 = arith.constant 0 : i32
    %c0_i32_1 = arith.constant 0 : i32
    return %arg0, %c0_i32, %c0_i32_0 : i32, i32, i32
  }
  func.func @transform_3(%arg0: i32, %arg1: i32) -> (i32, i32) {
    %c0_i32 = arith.constant 0 : i32
    %c0_i32_0 = arith.constant 0 : i32
    %c0_i32_1 = arith.constant 0 : i32
    return %c0_i32, %c0_i32_0 : i32, i32
  }
  func.func @transform_4(%arg0: i32, %arg1: i32) -> (i32, i32) {
    %c0_i32 = arith.constant 0 : i32
    %c0_i32_0 = arith.constant 0 : i32
    %c0_i32_1 = arith.constant 0 : i32
    return %c0_i32, %c0_i32_0 : i32, i32
  }
  func.func @transform_5(%arg0: i32, %arg1: i32) -> (i32, i32) {
    %c0_i32 = arith.constant 0 : i32
    %c0_i32_0 = arith.constant 0 : i32
    %c0_i32_1 = arith.constant 0 : i32
    return %c0_i32, %c0_i32_0 : i32, i32
  }
  func.func @transform_6(%arg0: i32, %arg1: i32) -> (i32, i32) {
    %c0_i32 = arith.constant 0 : i32
    %c0_i32_0 = arith.constant 0 : i32
    %c0_i32_1 = arith.constant 0 : i32
    return %c0_i32, %c0_i32_0 : i32, i32
  }
  func.func @transform_7(%arg0: i32, %arg1: i32) -> (i32, i32) {
    %c0_i32 = arith.constant 0 : i32
    %c0_i32_0 = arith.constant 0 : i32
    %c0_i32_1 = arith.constant 0 : i32
    return %c0_i32, %c0_i32_0 : i32, i32
  }
  func.func @transform_8(%arg0: i32, %arg1: i32) -> (i32, i32) {
    %c0_i32 = arith.constant 0 : i32
    %c0_i32_0 = arith.constant 0 : i32
    %c0_i32_1 = arith.constant 0 : i32
    return %c0_i32, %c0_i32_0 : i32, i32
  }
  func.func @transform_9(%arg0: i32, %arg1: i32) -> (i32, i32) {
    %c0_i32 = arith.constant 0 : i32
    %c0_i32_0 = arith.constant 0 : i32
    %c0_i32_1 = arith.constant 0 : i32
    return %c0_i32, %c0_i32_0 : i32, i32
  }
  func.func @transform_10(%arg0: i32, %arg1: i32) -> (i32, i32) {
    %c0_i32 = arith.constant 0 : i32
    %c0_i32_0 = arith.constant 0 : i32
    %c0_i32_1 = arith.constant 0 : i32
    return %c0_i32, %c0_i32_0 : i32, i32
  }
  func.func @transform_11(%arg0: i32, %arg1: i32) -> (i32, i32) {
    %c0_i32 = arith.constant 0 : i32
    %c0_i32_0 = arith.constant 0 : i32
    %c0_i32_1 = arith.constant 0 : i32
    return %c0_i32, %c0_i32_0 : i32, i32
  }
  func.func @transform_12(%arg0: i32, %arg1: i32) -> (i32, i32) {
    %c0_i32 = arith.constant 0 : i32
    %c0_i32_0 = arith.constant 0 : i32
    %c0_i32_1 = arith.constant 0 : i32
    return %c0_i32, %c0_i32_0 : i32, i32
  }
  func.func @transform_13(%arg0: i32, %arg1: i32) -> (i32, i32, i32, i32) {
    %c0_i32 = arith.constant 0 : i32
    %c0_i32_0 = arith.constant 0 : i32
    %c0_i32_1 = arith.constant 0 : i32
    return %arg0, %c0_i32, %arg1, %c0_i32_0 : i32, i32, i32, i32
  }
}

module attributes {stable_mosaic.version = 11 : i64} {
  func.func @_conv_residual_kernel(%arg0: i32, %arg1: memref<256x288xbf16, #tpu.memory_space<vmem>>, %arg2: memref<288x32xbf16, #tpu.memory_space<vmem>>, %arg3: memref<1x32xf32, #tpu.memory_space<vmem>>, %arg4: memref<256x32xf32, #tpu.memory_space<vmem>>, %arg5: memref<256x32xf32, #tpu.memory_space<vmem>>) attributes {dimension_semantics = [#tpu.dimension_semantics<parallel>], iteration_bounds = array<i64: 2>, scalar_prefetch = 0 : i64, scratch_operands = 0 : i64, tpu.core_type = #tpu.core_type<tc>, window_params = [{transform_indices = @transform_0, window_bounds = array<i64: 256, 288>}, {pipeline_mode = #tpu.pipeline_mode<synchronous>, transform_indices = @transform_1, window_bounds = array<i64: 288, 32>}, {pipeline_mode = #tpu.pipeline_mode<synchronous>, transform_indices = @transform_2, window_bounds = array<i64: 1, 32>}, {transform_indices = @transform_3, window_bounds = array<i64: 256, 32>}, {transform_indices = @transform_4, window_bounds = array<i64: 256, 32>}]} {
    %c0 = arith.constant 0 : index
    %c0_0 = arith.constant 0 : index
    %0 = vector.load %arg1[%c0, %c0_0] : memref<256x288xbf16, #tpu.memory_space<vmem>>, vector<256x288xbf16>
    %c0_1 = arith.constant 0 : index
    %c0_2 = arith.constant 0 : index
    %1 = vector.load %arg2[%c0_1, %c0_2] : memref<288x32xbf16, #tpu.memory_space<vmem>>, vector<288x32xbf16>
    %cst = arith.constant dense<0.000000e+00> : vector<256x32xf32>
    %2 = tpu.matmul %0, %1, %cst {dimension_numbers = #tpu.dot_dimension_numbers<[1], [0], [0], [1], [0, 0, 1, 1], [], []>} : vector<256x288xbf16>, vector<288x32xbf16>, vector<256x32xf32> -> vector<256x32xf32>
    %c0_3 = arith.constant 0 : index
    %c0_4 = arith.constant 0 : index
    %3 = vector.load %arg3[%c0_3, %c0_4] : memref<1x32xf32, #tpu.memory_space<vmem>>, vector<1x32xf32>
    %4 = vector.broadcast %3 : vector<1x32xf32> to vector<256x32xf32>
    %5 = arith.addf %2, %4 : vector<256x32xf32>
    %c0_5 = arith.constant 0 : index
    %c0_6 = arith.constant 0 : index
    %6 = vector.load %arg4[%c0_5, %c0_6] : memref<256x32xf32, #tpu.memory_space<vmem>>, vector<256x32xf32>
    %7 = arith.addf %5, %6 : vector<256x32xf32>
    %c0_7 = arith.constant 0 : index
    %c0_8 = arith.constant 0 : index
    %8 = vector.load %arg5[%c0_7, %c0_8] : memref<256x32xf32, #tpu.memory_space<vmem>>, vector<256x32xf32>
    tpu.vector_store %arg5[%c0_7, %c0_8], %7 {strides = array<i32>} : memref<256x32xf32, #tpu.memory_space<vmem>>, vector<256x32xf32>,
    return
  }
  func.func @transform_0(%arg0: i32) -> (i32, i32) {
    %c0_i32 = arith.constant 0 : i32
    %c0_i32_0 = arith.constant 0 : i32
    return %arg0, %c0_i32 : i32, i32
  }
  func.func @transform_1(%arg0: i32) -> (i32, i32) {
    %c0_i32 = arith.constant 0 : i32
    %c0_i32_0 = arith.constant 0 : i32
    %c0_i32_1 = arith.constant 0 : i32
    return %c0_i32, %c0_i32_0 : i32, i32
  }
  func.func @transform_2(%arg0: i32) -> (i32, i32) {
    %c0_i32 = arith.constant 0 : i32
    %c0_i32_0 = arith.constant 0 : i32
    %c0_i32_1 = arith.constant 0 : i32
    return %c0_i32, %c0_i32_0 : i32, i32
  }
  func.func @transform_3(%arg0: i32) -> (i32, i32) {
    %c0_i32 = arith.constant 0 : i32
    %c0_i32_0 = arith.constant 0 : i32
    return %arg0, %c0_i32 : i32, i32
  }
  func.func @transform_4(%arg0: i32) -> (i32, i32) {
    %c0_i32 = arith.constant 0 : i32
    %c0_i32_0 = arith.constant 0 : i32
    return %arg0, %c0_i32 : i32, i32
  }
}

</mosaic_0001>

<llo_original>
// kernel: sk_motion_module_forward.3
$region0: #{sk_motion_module_forward.3}
  #allocation0 [shape = 'u32[]', space=smem, size = 0x4, offset = 0x4, fixed_abs, tag = 'smem constant byte address 0x4 - core index']
  #allocation1 [shape = 'u32[144,128]{1,0:T(1,128)}', space=vmem, size = 0x12000, scoped, tag = 'internal scratch']
  %s0 = inlined_call_operand.vmem [shape: bf16[512,288], index: 0, kind: input, shape index: {}]
  %s1 = inlined_call_operand.vmem [shape: bf16[288,32], index: 1, kind: input, shape index: {}]
  %s2 = inlined_call_operand.vmem [shape: f32[1,32], index: 2, kind: input, shape index: {}]
  %s3 = inlined_call_operand.vmem [shape: f32[512,32], index: 3, kind: input, shape index: {}]
  %s4 = inlined_call_operand.hbm [shape: f32[512,32], index: 4, kind: output, shape index: {}]
  %s5 = sld [smem:[#allocation0]]
  $region49: #{sk_motion_module_forward.3} parent=0
    _
  %s7 = ssub.s32 1, %s5
  %s8 = scalar_select 0, %s7, %s5
  $region1: #{sk_motion_module_forward.3} parent=0
    #allocation2 [shape = 'u8[262144]{0}', space=vmem, size = 0x40000, scoped, tag = 'output window, operand 0']
    #allocation3 [shape = 's32[2]{0}', space=sflag, size = 0x8, scoped, tag = 'scoped memory for sk_motion_module_forward.3']
    %9 = vsyncpa [#allocation3], 0
    %s10 = scalar_lea.sflag [#allocation3], 1
    %11 = vsyncpa %s10, 0
    loop: start=0, step=1, limit=4
    $region2: #{sk_motion_module_forward.3} parent=1 // loop_pre_header
      _
    $region3: #{sk_motion_module_forward.3} parent=1 // loop_header
      %s13 = sphi 0, %s17
      %p14 = scmp.ge.s32.totalorder %s13, 4
      %s23 = sphi 0, %s25
      %s26 = sphi 0, %s23
      %s27 = sphi 0, %s26
      %s43 = sphi 0, %s27
      %s47 = sphi 0, %s47
      %s49 = sphi 0, %s47
      %s50 = sphi 0, %s49
      %s64 = sphi 0, %s50
      %s68 = sphi 0, %s68
      %s70 = sphi 0, %s68
      %s71 = sphi 0, %s70
      %s85 = sphi 0, %s71
      %s91 = sphi 0, %s93
      %s94 = sphi 0, %s91
      %s95 = sphi 0, %s94
      %s111 = sphi 0, %s95
      %s117 = sphi 0, %s119
      %s120 = sphi 0, %s117
      %s121 = sphi 0, %s120
      %s137 = sphi 0, %s121
    $region4: #{sk_motion_module_forward.3} parent=1 // loop_header_branch
      %16 = sbr.rel (%p14) target = $region8
    $region5: #{sk_motion_module_forward.3} parent=1 // loop_body
      %s18 = ssub.s32 %s13, 1
      %s19 = ssub.s32 %s13, 2
      %s20 = sadd.s32 %s13, 1
      %s21 = ssub.s32 %s13, %s20
      %p22 = scmp.eq.s32.totalorder %s21, 0
      %s24 = sadd.s32 %s23, 1
      %s25 = scalar_select %p22, %s23, %s24
      %p28 = pneg %p22
      %p29 = scmp.eq.s32.totalorder %s13, 1
      %p30 = por %p28, %p29
      %p31 = scmp.ne.s32.totalorder %s23, %s26
      %p32 = scmp.eq.s32.totalorder %s13, 0
      %p33 = por %p31, %p32
      %p34 = scmp.ne.s32.totalorder %s23, %s26
      %p35 = scmp.eq.s32.totalorder %s18, 1
      %p36 = por %p34, %p35
      %p37 = scmp.ne.s32.totalorder %s26, %s27
      %p38 = scmp.eq.s32.totalorder %s18, 0
      %p39 = por %p37, %p38
      %p40 = scmp.ne.s32.totalorder %s26, %s27
      %p41 = scmp.eq.s32.totalorder %s19, 1
      %p42 = por %p40, %p41
      %p44 = scmp.ne.s32.totalorder %s27, %s43
      %p45 = scmp.eq.s32.totalorder %s19, 0
      %p46 = por %p44, %p45
      %s48 = sadd.s32 %s47, 1
      %p51 = scmp.eq.s32.totalorder %s13, 1
      %p52 = scmp.ne.s32.totalorder %s47, %s49
      %p53 = scmp.eq.s32.totalorder %s13, 0
      %p54 = por %p52, %p53
      %p55 = scmp.ne.s32.totalorder %s47, %s49
      %p56 = scmp.eq.s32.totalorder %s18, 1
      %p57 = por %p55, %p56
      %p58 = scmp.ne.s32.totalorder %s49, %s50
      %p59 = scmp.eq.s32.totalorder %s18, 0
      %p60 = por %p58, %p59
      %p61 = scmp.ne.s32.totalorder %s49, %s50
      %p62 = scmp.eq.s32.totalorder %s19, 1
      %p63 = por %p61, %p62
      %p65 = scmp.ne.s32.totalorder %s50, %s64
      %p66 = scmp.eq.s32.totalorder %s19, 0
      %p67 = por %p65, %p66
      %s69 = sadd.s32 %s68, 1
      %p72 = scmp.eq.s32.totalorder %s13, 1
      %p73 = scmp.ne.s32.totalorder %s68, %s70
      %p74 = scmp.eq.s32.totalorder %s13, 0
      %p75 = por %p73, %p74
      %p76 = scmp.ne.s32.totalorder %s68, %s70
      %p77 = scmp.eq.s32.totalorder %s18, 1
      %p78 = por %p76, %p77
      %p79 = scmp.ne.s32.totalorder %s70, %s71
      %p80 = scmp.eq.s32.totalorder %s18, 0
      %p81 = por %p79, %p80
      %p82 = scmp.ne.s32.totalorder %s70, %s71
      %p83 = scmp.eq.s32.totalorder %s19, 1
      %p84 = por %p82, %p83
      %p86 = scmp.ne.s32.totalorder %s71, %s85
      %p87 = scmp.eq.s32.totalorder %s19, 0
      %p88 = por %p86, %p87
      %s89 = ssub.s32 %s13, %s20
      %p90 = scmp.eq.s32.totalorder %s89, 0
      %s92 = sadd.s32 %s91, 1
      %s93 = scalar_select %p90, %s91, %s92
      %p96 = pneg %p90
      %p97 = scmp.eq.s32.totalorder %s13, 1
      %p98 = por %p96, %p97
      %p99 = scmp.ne.s32.totalorder %s91, %s94
      %p100 = scmp.eq.s32.totalorder %s13, 0
      %p101 = por %p99, %p100
      %p102 = scmp.ne.s32.totalorder %s91, %s94
      %p103 = scmp.eq.s32.totalorder %s18, 1
      %p104 = por %p102, %p103
      %p105 = scmp.ne.s32.totalorder %s94, %s95
      %p106 = scmp.eq.s32.totalorder %s18, 0
      %p107 = por %p105, %p106
      %p108 = scmp.ne.s32.totalorder %s94, %s95
      %p109 = scmp.eq.s32.totalorder %s19, 1
      %p110 = por %p108, %p109
      %p112 = scmp.ne.s32.totalorder %s95, %s111
      %p113 = scmp.eq.s32.totalorder %s19, 0
      %p114 = por %p112, %p113
      %s115 = ssub.s32 %s13, %s20
      %p116 = scmp.eq.s32.totalorder %s115, 0
      %s118 = sadd.s32 %s117, 1
      %s119 = scalar_select %p116, %s117, %s118
      %p122 = pneg %p116
      %p123 = scmp.eq.s32.totalorder %s13, 1
      %p124 = por %p122, %p123
      %p125 = scmp.ne.s32.totalorder %s117, %s120
      %p126 = scmp.eq.s32.totalorder %s13, 0
      %p127 = por %p125, %p126
      %p128 = scmp.ne.s32.totalorder %s117, %s120
      %p129 = scmp.eq.s32.totalorder %s18, 1
      %p130 = por %p128, %p129
      %p131 = scmp.ne.s32.totalorder %s120, %s121
      %p132 = scmp.eq.s32.totalorder %s18, 0
      %p133 = por %p131, %p132
      %p134 = scmp.ne.s32.totalorder %s120, %s121
      %p135 = scmp.eq.s32.totalorder %s19, 1
      %p136 = por %p134, %p135
      %p138 = scmp.ne.s32.totalorder %s121, %s137
      %p139 = scmp.eq.s32.totalorder %s19, 0
      %p140 = por %p138, %p139
      %p141 = scmp.le.s32.totalorder 1, %s13
      %p142 = scmp.lt.s32.totalorder %s13, 3
      %p143 = pnand %p141, %p142
      %p144 = pneg %p143
      // Predicated region
      $region9: #{sk_motion_module_forward.3} parent=5 // pred_check
        _
      $region10: #{sk_motion_module_forward.3} parent=5 // pred_check_branch
        %146 = sbr.rel (%p143) target = $region12
      $region11: #{sk_motion_module_forward.3} parent=5 // pred_region
        %s147 = ssub.s32 %s13, 1
        // Predicated region
        $region13: #{sk_motion_module_forward.3} parent=11 // pred_check
          %p148 = pneg %p60
        $region14: #{sk_motion_module_forward.3} parent=11 // pred_check_branch
          %150 = sbr.rel (%p148) target = $region16
        $region15: #{sk_motion_module_forward.3} parent=11 // pred_region
          _
        $region16: #{sk_motion_module_forward.3} parent=11 // pred_fallthru
          _
        // Predicated region
        $region17: #{sk_motion_module_forward.3} parent=11 // pred_check
          %p151 = pneg %p81
        $region18: #{sk_motion_module_forward.3} parent=11 // pred_check_branch
          %153 = sbr.rel (%p151) target = $region20
        $region19: #{sk_motion_module_forward.3} parent=11 // pred_region
          _
        $region20: #{sk_motion_module_forward.3} parent=11 // pred_fallthru
          _
      $region12: #{sk_motion_module_forward.3} parent=5 // pred_fallthru
        _
      %p154 = scmp.lt.s32.totalorder %s13, 2
      // Predicated region
      $region21: #{sk_motion_module_forward.3} parent=5 // pred_check
        %p155 = pneg %p154
      $region22: #{sk_motion_module_forward.3} parent=5 // pred_check_branch
        %157 = sbr.rel (%p155) target = $region24
      $region23: #{sk_motion_module_forward.3} parent=5 // pred_region
        // Predicated region
        $region25: #{sk_motion_module_forward.3} parent=23 // pred_check
          %p158 = pneg %p33
        $region26: #{sk_motion_module_forward.3} parent=23 // pred_check_branch
          %160 = sbr.rel (%p158) target = $region28
        $region27: #{sk_motion_module_forward.3} parent=23 // pred_region
          %s161 = smul.u32 32, %s13
          %p162 = scmp.lt.s32.totalorder %s161, 63
          %s163 = scalar_select %p162, %s161, 63
          %s164 = smul.addr %s163, 3
          %s165 = smul.addr %s164, 4
          %s166 = scalar_lea.vmem %s0, %s165
          %s167 = smul.u32 32, %s13
        $region28: #{sk_motion_module_forward.3} parent=23 // pred_fallthru
          _
        // Predicated region
        $region29: #{sk_motion_module_forward.3} parent=23 // pred_check
          %p168 = pneg %p101
        $region30: #{sk_motion_module_forward.3} parent=23 // pred_check_branch
          %170 = sbr.rel (%p168) target = $region32
        $region31: #{sk_motion_module_forward.3} parent=23 // pred_region
          %s171 = smul.u32 32, %s13
          %p172 = scmp.lt.s32.totalorder %s171, 63
          %s173 = scalar_select %p172, %s171, 63
          %s174 = smul.addr %s173, 8
          %s175 = scalar_lea.vmem %s3, %s174
          %s176 = smul.u32 32, %s13
        $region32: #{sk_motion_module_forward.3} parent=23 // pred_fallthru
          _
      $region24: #{sk_motion_module_forward.3} parent=5 // pred_fallthru
        _
      %p177 = scmp.le.s32.totalorder 1, %s13
      %p178 = scmp.lt.s32.totalorder %s13, 3
      %p179 = pnand %p177, %p178
      %p180 = pneg %p179
      // Predicated region
      $region33: #{sk_motion_module_forward.3} parent=5 // pred_check
        _
      $region34: #{sk_motion_module_forward.3} parent=5 // pred_check_branch
        %182 = sbr.rel (%p179) target = $region36
      $region35: #{sk_motion_module_forward.3} parent=5 // pred_region
        %s183 = ssub.s32 %s13, 1
        %s184 = smul.u32 32, %s18
        %p185 = scmp.lt.s32.totalorder %s184, 63
        %s186 = scalar_select %p185, %s184, 63
        %s187 = smul.addr %s186, 3
        %s188 = smul.addr %s187, 4
        %s189 = scalar_lea.vmem %s0, %s188
        %p190 = pneg %p39
        %p191 = pneg %p36
        %p192 = pneg %p60
        %p193 = pneg %p57
        %p194 = pneg %p81
        %p195 = pneg %p78
        %s196 = smul.u32 32, %s18
        %p197 = scmp.lt.s32.totalorder %s196, 63
        %s198 = scalar_select %p197, %s196, 63
        %s199 = smul.addr %s198, 8
        %s200 = scalar_lea.vmem %s3, %s199
        %p201 = pneg %p107
        %p202 = pneg %p104
        %p203 = pneg %p133
        %p204 = pneg %p130
        %s205 = sand.u32 %s120, 1
        %s206 = scalar_lea.sflag [#allocation3], %s205
        %s207 = sand.u32 %s120, 1
        %s208 = smul.addr %s207, 256
        %s209 = scalar_lea.vmem [#allocation2], %s208
        %s210 = smul.u32 32, %s18
        %p211 = scmp.lt.s32.totalorder %s210, 63
        %s212 = scalar_select %p211, %s210, 63
        %s213 = smul.addr %s212, 3
        %s214 = smul.addr %s213, 4
        %s215 = scalar_lea.vmem %s0, %s214
        %s216 = smul.u32 32, %s18
        %s217 = smul.u32 32, %s18
        %p218 = scmp.lt.s32.totalorder %s217, 63
        %s219 = scalar_select %p218, %s217, 63
        %s220 = smul.addr %s219, 8
        %s221 = scalar_lea.vmem %s3, %s220
        %s222 = smul.u32 32, %s18
        %s223 = smul.u32 32, %s18
        %v225 = vld [vmem:[%s215] sm:$0xff]
        %v226 = vld [vmem:[%s215 + $0x8] sm:$0xf]
        %v227 = vld [vmem:[%s215 + $0xc] sm:$0xff]
        %v228 = vld [vmem:[%s215 + $0x14] sm:$0xf]
        %v229 = vld [vmem:[%s215 + $0x18] sm:$0xff]
        %v230 = vld [vmem:[%s215 + $0x20] sm:$0xf]
        %v231 = vld [vmem:[%s215 + $0x24] sm:$0xff]
        %v232 = vld [vmem:[%s215 + $0x2c] sm:$0xf]
        %v233 = vld [vmem:[%s215 + $0x30] sm:$0xff]
        %v234 = vld [vmem:[%s215 + $0x38] sm:$0xf]
        %v235 = vld [vmem:[%s215 + $0x3c] sm:$0xff]
        %v236 = vld [vmem:[%s215 + $0x44] sm:$0xf]
        %v237 = vld [vmem:[%s215 + $0x48] sm:$0xff]
        %v238 = vld [vmem:[%s215 + $0x50] sm:$0xf]
        %v239 = vld [vmem:[%s215 + $0x54] sm:$0xff]
        %v240 = vld [vmem:[%s215 + $0x5c] sm:$0xf]
        %v241 = vld [vmem:[%s215 + $0x60] sm:$0xff]
        %v242 = vld [vmem:[%s215 + $0x68] sm:$0xf]
        %v243 = vld [vmem:[%s215 + $0x6c] sm:$0xff]
        %v244 = vld [vmem:[%s215 + $0x74] sm:$0xf]
        %v245 = vld [vmem:[%s215 + $0x78] sm:$0xff]
        %v246 = vld [vmem:[%s215 + $0x80] sm:$0xf]
        %v247 = vld [vmem:[%s215 + $0x84] sm:$0xff]
        %v248 = vld [vmem:[%s215 + $0x8c] sm:$0xf]
        %v249 = vld [vmem:[%s215 + $0x90] sm:$0xff]
        %v250 = vld [vmem:[%s215 + $0x98] sm:$0xf]
        %v251 = vld [vmem:[%s215 + $0x9c] sm:$0xff]
        %v252 = vld [vmem:[%s215 + $0xa4] sm:$0xf]
        %v253 = vld [vmem:[%s215 + $0xa8] sm:$0xff]
        %v254 = vld [vmem:[%s215 + $0xb0] sm:$0xf]
        %v255 = vld [vmem:[%s215 + $0xb4] sm:$0xff]
        %v256 = vld [vmem:[%s215 + $0xbc] sm:$0xf]
        %v257 = vld [vmem:[%s215 + $0xc0] sm:$0xff]
        %v258 = vld [vmem:[%s215 + $0xc8] sm:$0xf]
        %v259 = vld [vmem:[%s215 + $0xcc] sm:$0xff]
        %v260 = vld [vmem:[%s215 + $0xd4] sm:$0xf]
        %v261 = vld [vmem:[%s215 + $0xd8] sm:$0xff]
        %v262 = vld [vmem:[%s215 + $0xe0] sm:$0xf]
        %v263 = vld [vmem:[%s215 + $0xe4] sm:$0xff]
        %v264 = vld [vmem:[%s215 + $0xec] sm:$0xf]
        %v265 = vld [vmem:[%s215 + $0xf0] sm:$0xff]
        %v266 = vld [vmem:[%s215 + $0xf8] sm:$0xf]
        %v267 = vld [vmem:[%s215 + $0xfc] sm:$0xff]
        %v268 = vld [vmem:[%s215 + $0x104] sm:$0xf]
        %v269 = vld [vmem:[%s215 + $0x108] sm:$0xff]
        %v270 = vld [vmem:[%s215 + $0x110] sm:$0xf]
        %v271 = vld [vmem:[%s215 + $0x114] sm:$0xff]
        %v272 = vld [vmem:[%s215 + $0x11c] sm:$0xf]
        %v273 = vld [vmem:[%s215 + $0x120] sm:$0xff]
        %v274 = vld [vmem:[%s215 + $0x128] sm:$0xf]
        %v275 = vld [vmem:[%s215 + $0x12c] sm:$0xff]
        %v276 = vld [vmem:[%s215 + $0x134] sm:$0xf]
        %v277 = vld [vmem:[%s215 + $0x138] sm:$0xff]
        %v278 = vld [vmem:[%s215 + $0x140] sm:$0xf]
        %v279 = vld [vmem:[%s215 + $0x144] sm:$0xff]
        %v280 = vld [vmem:[%s215 + $0x14c] sm:$0xf]
        %v281 = vld [vmem:[%s215 + $0x150] sm:$0xff]
        %v282 = vld [vmem:[%s215 + $0x158] sm:$0xf]
        %v283 = vld [vmem:[%s215 + $0x15c] sm:$0xff]
        %v284 = vld [vmem:[%s215 + $0x164] sm:$0xf]
        %v285 = vld [vmem:[%s215 + $0x168] sm:$0xff]
        %v286 = vld [vmem:[%s215 + $0x170] sm:$0xf]
        %v287 = vld [vmem:[%s215 + $0x174] sm:$0xff]
        %v288 = vld [vmem:[%s215 + $0x17c] sm:$0xf]
        %v289 = vld [vmem:[%s1] sm:$0xf]
        %v290 = vld [vmem:[%s1 + $0x4] sm:$0xf]
        %v291 = vld [vmem:[%s1 + $0x8] sm:$0xf]
        %v292 = vld [vmem:[%s1 + $0xc] sm:$0xf]
        %v293 = vld [vmem:[%s1 + $0x10] sm:$0xf]
        %v294 = vld [vmem:[%s1 + $0x14] sm:$0xf]
        %v295 = vld [vmem:[%s1 + $0x18] sm:$0xf]
        %v296 = vld [vmem:[%s1 + $0x1c] sm:$0xf]
        %v297 = vld [vmem:[%s1 + $0x20] sm:$0xf]
        %v298 = vld [vmem:[%s1 + $0x24] sm:$0xf]
        %v299 = vld [vmem:[%s1 + $0x28] sm:$0xf]
        %v300 = vld [vmem:[%s1 + $0x2c] sm:$0xf]
        %v301 = vld [vmem:[%s1 + $0x30] sm:$0xf]
        %v302 = vld [vmem:[%s1 + $0x34] sm:$0xf]
        %v303 = vld [vmem:[%s1 + $0x38] sm:$0xf]
        %v304 = vld [vmem:[%s1 + $0x3c] sm:$0xf]
        %v305 = vld [vmem:[%s1 + $0x40] sm:$0xf]
        %v306 = vld [vmem:[%s1 + $0x44] sm:$0xf]
        %v307 = vld [vmem:[%s1 + $0x48] sm:$0xf]
        %v308 = vld [vmem:[%s1 + $0x4c] sm:$0xf]
        %v309 = vld [vmem:[%s1 + $0x50] sm:$0xf]
        %v310 = vld [vmem:[%s1 + $0x54] sm:$0xf]
        %v311 = vld [vmem:[%s1 + $0x58] sm:$0xf]
        %v312 = vld [vmem:[%s1 + $0x5c] sm:$0xf]
        %v313 = vld [vmem:[%s1 + $0x60] sm:$0xf]
        %v314 = vld [vmem:[%s1 + $0x64] sm:$0xf]
        %v315 = vld [vmem:[%s1 + $0x68] sm:$0xf]
        %v316 = vld [vmem:[%s1 + $0x6c] sm:$0xf]
        %v317 = vld [vmem:[%s1 + $0x70] sm:$0xf]
        %v318 = vld [vmem:[%s1 + $0x74] sm:$0xf]
        %v319 = vld [vmem:[%s1 + $0x78] sm:$0xf]
        %v320 = vld [vmem:[%s1 + $0x7c] sm:$0xf]
        %v321 = vld [vmem:[%s1 + $0x80] sm:$0xf]
        %v322 = vld [vmem:[%s1 + $0x84] sm:$0xf]
        %v323 = vld [vmem:[%s1 + $0x88] sm:$0xf]
        %v324 = vld [vmem:[%s1 + $0x8c] sm:$0xf]
        %v325 = vld [vmem:[%s2] sm:$0x1]
        %v327 = vlaneseq
        %v328 = vshrl.u32 %v327, 7
        %v329 = vsub.s32 0, %v328
        %v330 = vrot.slane %v325, %v329
        %v396 = vunpack.c.l.b16 %v225
        %v397 = vunpack.c.h.b16 %v225
        %v398 = vunpack.c.l.b16 %v226
        %v399 = vunpack.c.l.b16 %v227
        %v400 = vunpack.c.h.b16 %v227
        %v401 = vunpack.c.l.b16 %v228
        %v402 = vunpack.c.l.b16 %v229
        %v403 = vunpack.c.h.b16 %v229
        %v404 = vunpack.c.l.b16 %v230
        %v405 = vunpack.c.l.b16 %v231
        %v406 = vunpack.c.h.b16 %v231
        %v407 = vunpack.c.l.b16 %v232
        %v408 = vunpack.c.l.b16 %v233
        %v409 = vunpack.c.h.b16 %v233
        %v410 = vunpack.c.l.b16 %v234
        %v411 = vunpack.c.l.b16 %v235
        %v412 = vunpack.c.h.b16 %v235
        %v413 = vunpack.c.l.b16 %v236
        %v414 = vunpack.c.l.b16 %v237
        %v415 = vunpack.c.h.b16 %v237
        %v416 = vunpack.c.l.b16 %v238
        %v417 = vunpack.c.l.b16 %v239
        %v418 = vunpack.c.h.b16 %v239
        %v419 = vunpack.c.l.b16 %v240
        %v420 = vunpack.c.l.b16 %v241
        %v421 = vunpack.c.h.b16 %v241
        %v422 = vunpack.c.l.b16 %v242
        %v423 = vunpack.c.l.b16 %v243
        %v424 = vunpack.c.h.b16 %v243
        %v425 = vunpack.c.l.b16 %v244
        %v426 = vunpack.c.l.b16 %v245
        %v427 = vunpack.c.h.b16 %v245
        %v428 = vunpack.c.l.b16 %v246
        %v429 = vunpack.c.l.b16 %v247
        %v430 = vunpack.c.h.b16 %v247
        %v431 = vunpack.c.l.b16 %v248
        %v432 = vunpack.c.l.b16 %v249
        %v433 = vunpack.c.h.b16 %v249
        %v434 = vunpack.c.l.b16 %v250
        %v435 = vunpack.c.l.b16 %v251
        %v436 = vunpack.c.h.b16 %v251
        %v437 = vunpack.c.l.b16 %v252
        %v438 = vunpack.c.l.b16 %v253
        %v439 = vunpack.c.h.b16 %v253
        %v440 = vunpack.c.l.b16 %v254
        %v441 = vunpack.c.l.b16 %v255
        %v442 = vunpack.c.h.b16 %v255
        %v443 = vunpack.c.l.b16 %v256
        %v444 = vunpack.c.l.b16 %v257
        %v445 = vunpack.c.h.b16 %v257
        %v446 = vunpack.c.l.b16 %v258
        %v447 = vunpack.c.l.b16 %v259
        %v448 = vunpack.c.h.b16 %v259
        %v449 = vunpack.c.l.b16 %v260
        %v450 = vunpack.c.l.b16 %v261
        %v451 = vunpack.c.h.b16 %v261
        %v452 = vunpack.c.l.b16 %v262
        %v453 = vunpack.c.l.b16 %v263
        %v454 = vunpack.c.h.b16 %v263
        %v455 = vunpack.c.l.b16 %v264
        %v456 = vunpack.c.l.b16 %v265
        %v457 = vunpack.c.h.b16 %v265
        %v458 = vunpack.c.l.b16 %v266
        %v459 = vunpack.c.l.b16 %v267
        %v460 = vunpack.c.h.b16 %v267
        %v461 = vunpack.c.l.b16 %v268
        %v462 = vunpack.c.l.b16 %v269
        %v463 = vunpack.c.h.b16 %v269
        %v464 = vunpack.c.l.b16 %v270
        %v465 = vunpack.c.l.b16 %v271
        %v466 = vunpack.c.h.b16 %v271
        %v467 = vunpack.c.l.b16 %v272
        %v468 = vunpack.c.l.b16 %v273
        %v469 = vunpack.c.h.b16 %v273
        %v470 = vunpack.c.l.b16 %v274
        %v471 = vunpack.c.l.b16 %v275
        %v472 = vunpack.c.h.b16 %v275
        %v473 = vunpack.c.l.b16 %v276
        %v474 = vunpack.c.l.b16 %v277
        %v475 = vunpack.c.h.b16 %v277
        %v476 = vunpack.c.l.b16 %v278
        %v477 = vunpack.c.l.b16 %v279
        %v478 = vunpack.c.h.b16 %v279
        %v479 = vunpack.c.l.b16 %v280
        %v480 = vunpack.c.l.b16 %v281
        %v481 = vunpack.c.h.b16 %v281
        %v482 = vunpack.c.l.b16 %v282
        %v483 = vunpack.c.l.b16 %v283
        %v484 = vunpack.c.h.b16 %v283
        %v485 = vunpack.c.l.b16 %v284
        %v486 = vunpack.c.l.b16 %v285
        %v487 = vunpack.c.h.b16 %v285
        %v488 = vunpack.c.l.b16 %v286
        %v489 = vunpack.c.l.b16 %v287
        %v490 = vunpack.c.h.b16 %v287
        %v491 = vunpack.c.l.b16 %v288
        %v492 = vpack.c.b16 %v399, %v396
        %v493 = vpack.c.b16 %v400, %v397
        %v494 = vpack.c.b16 %v401, %v398
        %v495 = vpack.c.b16 %v405, %v402
        %v496 = vpack.c.b16 %v406, %v403
        %v497 = vpack.c.b16 %v407, %v404
        %v498 = vpack.c.b16 %v411, %v408
        %v499 = vpack.c.b16 %v412, %v409
        %v500 = vpack.c.b16 %v413, %v410
        %v501 = vpack.c.b16 %v417, %v414
        %v502 = vpack.c.b16 %v418, %v415
        %v503 = vpack.c.b16 %v419, %v416
        %v504 = vpack.c.b16 %v423, %v420
        %v505 = vpack.c.b16 %v424, %v421
        %v506 = vpack.c.b16 %v425, %v422
        %v507 = vpack.c.b16 %v429, %v426
        %v508 = vpack.c.b16 %v430, %v427
        %v509 = vpack.c.b16 %v431, %v428
        %v510 = vpack.c.b16 %v435, %v432
        %v511 = vpack.c.b16 %v436, %v433
        %v512 = vpack.c.b16 %v437, %v434
        %v513 = vpack.c.b16 %v441, %v438
        %v514 = vpack.c.b16 %v442, %v439
        %v515 = vpack.c.b16 %v443, %v440
        %v516 = vpack.c.b16 %v447, %v444
        %v517 = vpack.c.b16 %v448, %v445
        %v518 = vpack.c.b16 %v449, %v446
        %v519 = vpack.c.b16 %v453, %v450
        %v520 = vpack.c.b16 %v454, %v451
        %v521 = vpack.c.b16 %v455, %v452
        %v522 = vpack.c.b16 %v459, %v456
        %v523 = vpack.c.b16 %v460, %v457
        %v524 = vpack.c.b16 %v461, %v458
        %v525 = vpack.c.b16 %v465, %v462
        %v526 = vpack.c.b16 %v466, %v463
        %v527 = vpack.c.b16 %v467, %v464
        %v528 = vpack.c.b16 %v471, %v468
        %v529 = vpack.c.b16 %v472, %v469
        %v530 = vpack.c.b16 %v473, %v470
        %v531 = vpack.c.b16 %v477, %v474
        %v532 = vpack.c.b16 %v478, %v475
        %v533 = vpack.c.b16 %v479, %v476
        %v534 = vpack.c.b16 %v483, %v480
        %v535 = vpack.c.b16 %v484, %v481
        %v536 = vpack.c.b16 %v485, %v482
        %v537 = vpack.c.b16 %v489, %v486
        %v538 = vpack.c.b16 %v490, %v487
        %v539 = vpack.c.b16 %v491, %v488
        %v608 = vunpack.c.l.b16 %v289
        %v609 = vunpack.c.l.b16 %v290
        %v610 = vunpack.c.l.b16 %v291
        %v611 = vunpack.c.l.b16 %v292
        %v612 = vunpack.c.l.b16 %v293
        %v613 = vunpack.c.l.b16 %v294
        %v614 = vunpack.c.l.b16 %v295
        %v615 = vunpack.c.l.b16 %v296
        %v616 = vunpack.c.l.b16 %v297
        %v617 = vunpack.c.l.b16 %v298
        %v618 = vunpack.c.l.b16 %v299
        %v619 = vunpack.c.l.b16 %v300
        %v620 = vunpack.c.l.b16 %v301
        %v621 = vunpack.c.l.b16 %v302
        %v622 = vunpack.c.l.b16 %v303
        %v623 = vunpack.c.l.b16 %v304
        %v624 = vunpack.c.l.b16 %v305
        %v625 = vunpack.c.l.b16 %v306
        %v626 = vunpack.c.l.b16 %v307
        %v627 = vunpack.c.l.b16 %v308
        %v628 = vunpack.c.l.b16 %v309
        %v629 = vunpack.c.l.b16 %v310
        %v630 = vunpack.c.l.b16 %v311
        %v631 = vunpack.c.l.b16 %v312
        %v632 = vunpack.c.l.b16 %v313
        %v633 = vunpack.c.l.b16 %v314
        %v634 = vunpack.c.l.b16 %v315
        %v635 = vunpack.c.l.b16 %v316
        %v636 = vunpack.c.l.b16 %v317
        %v637 = vunpack.c.l.b16 %v318
        %v638 = vunpack.c.l.b16 %v319
        %v639 = vunpack.c.l.b16 %v320
        %v640 = vunpack.c.l.b16 %v321
        %v641 = vunpack.c.l.b16 %v322
        %v642 = vunpack.c.l.b16 %v323
        %v643 = vunpack.c.l.b16 %v324
        %v644 = vpack.c.b16 %v609, %v608
        %v645 = vpack.c.b16 %v611, %v610
        %v646 = vpack.c.b16 %v613, %v612
        %v647 = vpack.c.b16 %v615, %v614
        %v648 = vpack.c.b16 %v617, %v616
        %v649 = vpack.c.b16 %v619, %v618
        %v650 = vpack.c.b16 %v621, %v620
        %v651 = vpack.c.b16 %v623, %v622
        %v652 = vpack.c.b16 %v625, %v624
        %v653 = vpack.c.b16 %v627, %v626
        %v654 = vpack.c.b16 %v629, %v628
        %v655 = vpack.c.b16 %v631, %v630
        %v656 = vpack.c.b16 %v633, %v632
        %v657 = vpack.c.b16 %v635, %v634
        %v658 = vpack.c.b16 %v637, %v636
        %v659 = vpack.c.b16 %v639, %v638
        %v660 = vpack.c.b16 %v641, %v640
        %v661 = vpack.c.b16 %v643, %v642
        %vm680 = vcmask 261120
        %v682 = vsel %vm680, %v494, 0
        %v685 = vsel %vm680, %v497, 0
        %v688 = vsel %vm680, %v500, 0
        %v691 = vsel %vm680, %v503, 0
        %v694 = vsel %vm680, %v506, 0
        %v697 = vsel %vm680, %v509, 0
        %v700 = vsel %vm680, %v512, 0
        %v703 = vsel %vm680, %v515, 0
        %v706 = vsel %vm680, %v518, 0
        %v709 = vsel %vm680, %v521, 0
        %v712 = vsel %vm680, %v524, 0
        %v715 = vsel %vm680, %v527, 0
        %v718 = vsel %vm680, %v530, 0
        %v721 = vsel %vm680, %v533, 0
        %v724 = vsel %vm680, %v536, 0
        %v727 = vsel %vm680, %v539, 0
        %729 = vmatprep.subr.bf16.mxu0 0
        %730 = vmatpush1.bf16.msra.mxu0 %v644
        %731 = vmatprep.subr.bf16.mxu0 0
        %732 = vmatpush1.bf16.msra.mxu0 %v645
        %733 = vmatprep.subr.bf16.mxu0 0
        %734 = vmatpush1.bf16.msra.mxu0 %v646
        %735 = vmatprep.subr.bf16.mxu0 0
        %736 = vmatpush1.bf16.msra.mxu0 %v647
        %737 = vmatprep.subr.bf16.mxu0 0
        %738 = vmatpush1.bf16.msra.mxu0 %v648
        %739 = vmatprep.subr.bf16.mxu0 0
        %740 = vmatpush1.bf16.msra.mxu0 %v649
        %741 = vmatprep.subr.bf16.mxu0 0
        %742 = vmatpush1.bf16.msra.mxu0 %v650
        %743 = vmatprep.subr.bf16.mxu0 0
        %744 = vmatpush1.bf16.msra.mxu0 %v651
        %745 = vmatprep.subr.bf16.mxu0 0
        %746 = vmatpush1.bf16.msra.mxu0 %v652
        %747 = vmatprep.subr.bf16.mxu0 0
        %748 = vmatpush1.bf16.msra.mxu0 %v653
        %749 = vmatprep.subr.bf16.mxu0 0
        %750 = vmatpush1.bf16.msra.mxu0 %v654
        %751 = vmatprep.subr.bf16.mxu0 0
        %752 = vmatpush1.bf16.msra.mxu0 %v655
        %753 = vmatprep.subr.bf16.mxu0 0
        %754 = vmatpush1.bf16.msra.mxu0 %v656
        %755 = vmatprep.subr.bf16.mxu0 0
        %756 = vmatpush1.bf16.msra.mxu0 %v657
        %757 = vmatprep.subr.bf16.mxu0 0
        %758 = vmatpush1.bf16.msra.mxu0 %v658
        %759 = vmatprep.subr.bf16.mxu0 0
        %760 = vmatpush1.bf16.msra.mxu0 %v659
        %761 = vmatprep.mubr.bf16.mxu0 %v493
        %762 = vmatmul.mubr.bf16.gmra.mrb[0].mxu0 %v492
        %v763 = vpop.f32.mrb[0].mxu0
        %v764 = vadd.f32 %v330, %v763
        %v765 = vpop.f32.mrb[0].mxu0
        %v766 = vpop.f32.mrb[0].mxu0
        %v767 = vadd.f32 %v330, %v766
        %v768 = vpop.f32.mrb[0].mxu0
        %769 = vmatprep.mubr.bf16.mxu0 %v496
        %770 = vmatmul.mubr.bf16.gmra.mrb[0].mxu0 %v495
        %v771 = vpop.f32.mrb[0].mxu0
        %v772 = vadd.f32 %v330, %v771
        %v773 = vpop.f32.mrb[0].mxu0
        %v774 = vpop.f32.mrb[0].mxu0
        %v775 = vadd.f32 %v330, %v774
        %v776 = vpop.f32.mrb[0].mxu0
        %777 = vmatprep.mubr.bf16.mxu0 %v499
        %778 = vmatmul.mubr.bf16.gmra.mrb[0].mxu0 %v498
        %v779 = vpop.f32.mrb[0].mxu0
        %v780 = vadd.f32 %v330, %v779
        %v781 = vpop.f32.mrb[0].mxu0
        %v782 = vpop.f32.mrb[0].mxu0
        %v783 = vadd.f32 %v330, %v782
        %v784 = vpop.f32.mrb[0].mxu0
        %785 = vmatprep.mubr.bf16.mxu0 %v502
        %786 = vmatmul.mubr.bf16.gmra.mrb[0].mxu0 %v501
        %v787 = vpop.f32.mrb[0].mxu0
        %v788 = vadd.f32 %v330, %v787
        %v789 = vpop.f32.mrb[0].mxu0
        %v790 = vpop.f32.mrb[0].mxu0
        %v791 = vadd.f32 %v330, %v790
        %v792 = vpop.f32.mrb[0].mxu0
        %793 = vmatprep.mubr.bf16.mxu0 %v505
        %794 = vmatmul.mubr.bf16.gmra.mrb[0].mxu0 %v504
        %v795 = vpop.f32.mrb[0].mxu0
        %v796 = vadd.f32 %v330, %v795
        %v797 = vpop.f32.mrb[0].mxu0
        %v798 = vpop.f32.mrb[0].mxu0
        %v799 = vadd.f32 %v330, %v798
        %v800 = vpop.f32.mrb[0].mxu0
        %801 = vmatprep.mubr.bf16.mxu0 %v508
        %802 = vmatmul.mubr.bf16.gmra.mrb[0].mxu0 %v507
        %v803 = vpop.f32.mrb[0].mxu0
        %v804 = vadd.f32 %v330, %v803
        %v805 = vpop.f32.mrb[0].mxu0
        %v806 = vpop.f32.mrb[0].mxu0
        %v807 = vadd.f32 %v330, %v806
        %v808 = vpop.f32.mrb[0].mxu0
        %809 = vmatprep.mubr.bf16.mxu0 %v511
        %810 = vmatmul.mubr.bf16.gmra.mrb[0].mxu0 %v510
        %v811 = vpop.f32.mrb[0].mxu0
        %v812 = vadd.f32 %v330, %v811
        %v813 = vpop.f32.mrb[0].mxu0
        %v814 = vpop.f32.mrb[0].mxu0
        %v815 = vadd.f32 %v330, %v814
        %v816 = vpop.f32.mrb[0].mxu0
        %817 = vmatprep.mubr.bf16.mxu0 %v514
        %818 = vmatmul.mubr.bf16.gmra.mrb[0].mxu0 %v513
        %v819 = vpop.f32.mrb[0].mxu0
        %v820 = vadd.f32 %v330, %v819
        %v821 = vpop.f32.mrb[0].mxu0
        %v822 = vpop.f32.mrb[0].mxu0
        %v823 = vadd.f32 %v330, %v822
        %v824 = vpop.f32.mrb[0].mxu0
        %825 = vmatprep.mubr.bf16.mxu0 %v517
        %826 = vmatmul.mubr.bf16.gmra.mrb[0].mxu0 %v516
        %v827 = vpop.f32.mrb[0].mxu0
        %v828 = vadd.f32 %v330, %v827
        %v829 = vpop.f32.mrb[0].mxu0
        %v830 = vpop.f32.mrb[0].mxu0
        %v831 = vadd.f32 %v330, %v830
        %v832 = vpop.f32.mrb[0].mxu0
        %833 = vmatprep.mubr.bf16.mxu0 %v520
        %834 = vmatmul.mubr.bf16.gmra.mrb[0].mxu0 %v519
        %v835 = vpop.f32.mrb[0].mxu0
        %v836 = vadd.f32 %v330, %v835
        %v837 = vpop.f32.mrb[0].mxu0
        %v838 = vpop.f32.mrb[0].mxu0
        %v839 = vadd.f32 %v330, %v838
        %v840 = vpop.f32.mrb[0].mxu0
        %841 = vmatprep.mubr.bf16.mxu0 %v523
        %842 = vmatmul.mubr.bf16.gmra.mrb[0].mxu0 %v522
        %v843 = vpop.f32.mrb[0].mxu0
        %v844 = vadd.f32 %v330, %v843
        %v845 = vpop.f32.mrb[0].mxu0
        %v846 = vpop.f32.mrb[0].mxu0
        %v847 = vadd.f32 %v330, %v846
        %v848 = vpop.f32.mrb[0].mxu0
        %849 = vmatprep.mubr.bf16.mxu0 %v526
        %850 = vmatmul.mubr.bf16.gmra.mrb[0].mxu0 %v525
        %v851 = vpop.f32.mrb[0].mxu0
        %v852 = vadd.f32 %v330, %v851
        %v853 = vpop.f32.mrb[0].mxu0
        %v854 = vpop.f32.mrb[0].mxu0
        %v855 = vadd.f32 %v330, %v854
        %v856 = vpop.f32.mrb[0].mxu0
        %857 = vmatprep.mubr.bf16.mxu0 %v529
        %858 = vmatmul.mubr.bf16.gmra.mrb[0].mxu0 %v528
        %v859 = vpop.f32.mrb[0].mxu0
        %v860 = vadd.f32 %v330, %v859
        %v861 = vpop.f32.mrb[0].mxu0
        %v862 = vpop.f32.mrb[0].mxu0
        %v863 = vadd.f32 %v330, %v862
        %v864 = vpop.f32.mrb[0].mxu0
        %865 = vmatprep.mubr.bf16.mxu0 %v532
        %866 = vmatmul.mubr.bf16.gmra.mrb[0].mxu0 %v531
        %v867 = vpop.f32.mrb[0].mxu0
        %v868 = vadd.f32 %v330, %v867
        %v869 = vpop.f32.mrb[0].mxu0
        %v870 = vpop.f32.mrb[0].mxu0
        %v871 = vadd.f32 %v330, %v870
        %v872 = vpop.f32.mrb[0].mxu0
        %873 = vmatprep.mubr.bf16.mxu0 %v535
        %874 = vmatmul.mubr.bf16.gmra.mrb[0].mxu0 %v534
        %v875 = vpop.f32.mrb[0].mxu0
        %v876 = vadd.f32 %v330, %v875
        %v877 = vpop.f32.mrb[0].mxu0
        %v878 = vpop.f32.mrb[0].mxu0
        %v879 = vadd.f32 %v330, %v878
        %v880 = vpop.f32.mrb[0].mxu0
        %881 = vmatprep.mubr.bf16.mxu0 %v538
        %882 = vmatmul.mubr.bf16.gmra.mrb[0].mxu0 %v537
        %v883 = vpop.f32.mrb[0].mxu0
        %v884 = vadd.f32 %v330, %v883
        %v885 = vpop.f32.mrb[0].mxu0
        %v886 = vpop.f32.mrb[0].mxu0
        %v887 = vadd.f32 %v330, %v886
        %v888 = vpop.f32.mrb[0].mxu0
        %889 = vdwg.mxu0
        %890 = vmatprep.subr.bf16.mxu0 0
        %891 = vmatpush1.bf16.msra.mxu0 %v660
        %892 = vmatprep.subr.bf16.mxu0 0
        %893 = vmatpush1.bf16.msra.mxu0 %v661
        %894 = vmatprep.subr.bf16.mxu0 0
        %895 = vmatpush1.bf16.msra.mxu0 0
        %896 = vmatprep.subr.bf16.mxu0 0
        %897 = vmatpush1.bf16.msra.mxu0 0
        %898 = vmatprep.subr.bf16.mxu0 0
        %899 = vmatpush1.bf16.msra.mxu0 0
        %900 = vmatprep.subr.bf16.mxu0 0
        %901 = vmatpush1.bf16.msra.mxu0 0
        %902 = vmatprep.subr.bf16.mxu0 0
        %903 = vmatpush1.bf16.msra.mxu0 0
        %904 = vmatprep.subr.bf16.mxu0 0
        %905 = vmatpush1.bf16.msra.mxu0 0
        %906 = vmatprep.subr.bf16.mxu0 0
        %907 = vmatpush1.bf16.msra.mxu0 0
        %908 = vmatprep.subr.bf16.mxu0 0
        %909 = vmatpush1.bf16.msra.mxu0 0
        %910 = vmatprep.subr.bf16.mxu0 0
        %911 = vmatpush1.bf16.msra.mxu0 0
        %912 = vmatprep.subr.bf16.mxu0 0
        %913 = vmatpush1.bf16.msra.mxu0 0
        %914 = vmatprep.subr.bf16.mxu0 0
        %915 = vmatpush1.bf16.msra.mxu0 0
        %916 = vmatprep.subr.bf16.mxu0 0
        %917 = vmatpush1.bf16.msra.mxu0 0
        %918 = vmatprep.subr.bf16.mxu0 0
        %919 = vmatpush1.bf16.msra.mxu0 0
        %920 = vmatprep.subr.bf16.mxu0 0
        %921 = vmatpush1.bf16.msra.mxu0 0
        %922 = vmatprep.mubr.bf16.mxu0 0
        %923 = vmatmul.mubr.bf16.gmra.mrb[0].mxu0 %v682
        %v924 = vpop.f32.mrb[0].mxu0
        %v925 = vadd.f32 %v764, %v924
        %v926 = vpop.f32.mrb[0].mxu0
        %v927 = vpop.f32.mrb[0].mxu0
        %v928 = vadd.f32 %v767, %v927
        %v929 = vpop.f32.mrb[0].mxu0
        %930 = vmatprep.mubr.bf16.mxu0 0
        %931 = vmatmul.mubr.bf16.gmra.mrb[0].mxu0 %v685
        %v932 = vpop.f32.mrb[0].mxu0
        %v933 = vadd.f32 %v772, %v932
        %v934 = vpop.f32.mrb[0].mxu0
        %v935 = vpop.f32.mrb[0].mxu0
        %v936 = vadd.f32 %v775, %v935
        %v937 = vpop.f32.mrb[0].mxu0
        %938 = vmatprep.mubr.bf16.mxu0 0
        %939 = vmatmul.mubr.bf16.gmra.mrb[0].mxu0 %v688
        %v940 = vpop.f32.mrb[0].mxu0
        %v941 = vadd.f32 %v780, %v940
        %v942 = vpop.f32.mrb[0].mxu0
        %v943 = vpop.f32.mrb[0].mxu0
        %v944 = vadd.f32 %v783, %v943
        %v945 = vpop.f32.mrb[0].mxu0
        %946 = vmatprep.mubr.bf16.mxu0 0
        %947 = vmatmul.mubr.bf16.gmra.mrb[0].mxu0 %v691
        %v948 = vpop.f32.mrb[0].mxu0
        %v949 = vadd.f32 %v788, %v948
        %v950 = vpop.f32.mrb[0].mxu0
        %v951 = vpop.f32.mrb[0].mxu0
        %v952 = vadd.f32 %v791, %v951
        %v953 = vpop.f32.mrb[0].mxu0
        %954 = vmatprep.mubr.bf16.mxu0 0
        %955 = vmatmul.mubr.bf16.gmra.mrb[0].mxu0 %v694
        %v956 = vpop.f32.mrb[0].mxu0
        %v957 = vadd.f32 %v796, %v956
        %v958 = vpop.f32.mrb[0].mxu0
        %v959 = vpop.f32.mrb[0].mxu0
        %v960 = vadd.f32 %v799, %v959
        %v961 = vpop.f32.mrb[0].mxu0
        %962 = vmatprep.mubr.bf16.mxu0 0
        %963 = vmatmul.mubr.bf16.gmra.mrb[0].mxu0 %v697
        %v964 = vpop.f32.mrb[0].mxu0
        %v965 = vadd.f32 %v804, %v964
        %v966 = vpop.f32.mrb[0].mxu0
        %v967 = vpop.f32.mrb[0].mxu0
        %v968 = vadd.f32 %v807, %v967
        %v969 = vpop.f32.mrb[0].mxu0
        %970 = vmatprep.mubr.bf16.mxu0 0
        %971 = vmatmul.mubr.bf16.gmra.mrb[0].mxu0 %v700
        %v972 = vpop.f32.mrb[0].mxu0
        %v973 = vadd.f32 %v812, %v972
        %v974 = vpop.f32.mrb[0].mxu0
        %v975 = vpop.f32.mrb[0].mxu0
        %v976 = vadd.f32 %v815, %v975
        %v977 = vpop.f32.mrb[0].mxu0
        %978 = vmatprep.mubr.bf16.mxu0 0
        %979 = vmatmul.mubr.bf16.gmra.mrb[0].mxu0 %v703
        %v980 = vpop.f32.mrb[0].mxu0
        %v981 = vadd.f32 %v820, %v980
        %v982 = vpop.f32.mrb[0].mxu0
        %v983 = vpop.f32.mrb[0].mxu0
        %v984 = vadd.f32 %v823, %v983
        %v985 = vpop.f32.mrb[0].mxu0
        %986 = vmatprep.mubr.bf16.mxu0 0
        %987 = vmatmul.mubr.bf16.gmra.mrb[0].mxu0 %v706
        %v988 = vpop.f32.mrb[0].mxu0
        %v989 = vadd.f32 %v828, %v988
        %v990 = vpop.f32.mrb[0].mxu0
        %v991 = vpop.f32.mrb[0].mxu0
        %v992 = vadd.f32 %v831, %v991
        %v993 = vpop.f32.mrb[0].mxu0
        %994 = vmatprep.mubr.bf16.mxu0 0
        %995 = vmatmul.mubr.bf16.gmra.mrb[0].mxu0 %v709
        %v996 = vpop.f32.mrb[0].mxu0
        %v997 = vadd.f32 %v836, %v996
        %v998 = vpop.f32.mrb[0].mxu0
        %v999 = vpop.f32.mrb[0].mxu0
        %v1000 = vadd.f32 %v839, %v999
        %v1001 = vpop.f32.mrb[0].mxu0
        %1002 = vmatprep.mubr.bf16.mxu0 0
        %1003 = vmatmul.mubr.bf16.gmra.mrb[0].mxu0 %v712
        %v1004 = vpop.f32.mrb[0].mxu0
        %v1005 = vadd.f32 %v844, %v1004
        %v1006 = vpop.f32.mrb[0].mxu0
        %v1007 = vpop.f32.mrb[0].mxu0
        %v1008 = vadd.f32 %v847, %v1007
        %v1009 = vpop.f32.mrb[0].mxu0
        %1010 = vmatprep.mubr.bf16.mxu0 0
        %1011 = vmatmul.mubr.bf16.gmra.mrb[0].mxu0 %v715
        %v1012 = vpop.f32.mrb[0].mxu0
        %v1013 = vadd.f32 %v852, %v1012
        %v1014 = vpop.f32.mrb[0].mxu0
        %v1015 = vpop.f32.mrb[0].mxu0
        %v1016 = vadd.f32 %v855, %v1015
        %v1017 = vpop.f32.mrb[0].mxu0
        %1018 = vmatprep.mubr.bf16.mxu0 0
        %1019 = vmatmul.mubr.bf16.gmra.mrb[0].mxu0 %v718
        %v1020 = vpop.f32.mrb[0].mxu0
        %v1021 = vadd.f32 %v860, %v1020
        %v1022 = vpop.f32.mrb[0].mxu0
        %v1023 = vpop.f32.mrb[0].mxu0
        %v1024 = vadd.f32 %v863, %v1023
        %v1025 = vpop.f32.mrb[0].mxu0
        %1026 = vmatprep.mubr.bf16.mxu0 0
        %1027 = vmatmul.mubr.bf16.gmra.mrb[0].mxu0 %v721
        %v1028 = vpop.f32.mrb[0].mxu0
        %v1029 = vadd.f32 %v868, %v1028
        %v1030 = vpop.f32.mrb[0].mxu0
        %v1031 = vpop.f32.mrb[0].mxu0
        %v1032 = vadd.f32 %v871, %v1031
        %v1033 = vpop.f32.mrb[0].mxu0
        %1034 = vmatprep.mubr.bf16.mxu0 0
        %1035 = vmatmul.mubr.bf16.gmra.mrb[0].mxu0 %v724
        %v1036 = vpop.f32.mrb[0].mxu0
        %v1037 = vadd.f32 %v876, %v1036
        %v1038 = vpop.f32.mrb[0].mxu0
        %v1039 = vpop.f32.mrb[0].mxu0
        %v1040 = vadd.f32 %v879, %v1039
        %v1041 = vpop.f32.mrb[0].mxu0
        %1042 = vmatprep.mubr.bf16.mxu0 0
        %1043 = vmatmul.mubr.bf16.gmra.mrb[0].mxu0 %v727
        %v1044 = vpop.f32.mrb[0].mxu0
        %v1045 = vadd.f32 %v884, %v1044
        %v1046 = vpop.f32.mrb[0].mxu0
        %v1047 = vpop.f32.mrb[0].mxu0
        %v1048 = vadd.f32 %v887, %v1047
        %v1049 = vpop.f32.mrb[0].mxu0
        %1050 = vdwg.mxu0
        %v1051 = vld [vmem:[%s221] sm:$0xff]
        %v1052 = vld [vmem:[%s221 + $0x8] sm:$0xff]
        %v1053 = vld [vmem:[%s221 + $0x10] sm:$0xff]
        %v1054 = vld [vmem:[%s221 + $0x18] sm:$0xff]
        %v1055 = vld [vmem:[%s221 + $0x20] sm:$0xff]
        %v1056 = vld [vmem:[%s221 + $0x28] sm:$0xff]
        %v1057 = vld [vmem:[%s221 + $0x30] sm:$0xff]
        %v1058 = vld [vmem:[%s221 + $0x38] sm:$0xff]
        %v1059 = vld [vmem:[%s221 + $0x40] sm:$0xff]
        %v1060 = vld [vmem:[%s221 + $0x48] sm:$0xff]
        %v1061 = vld [vmem:[%s221 + $0x50] sm:$0xff]
        %v1062 = vld [vmem:[%s221 + $0x58] sm:$0xff]
        %v1063 = vld [vmem:[%s221 + $0x60] sm:$0xff]
        %v1064 = vld [vmem:[%s221 + $0x68] sm:$0xff]
        %v1065 = vld [vmem:[%s221 + $0x70] sm:$0xff]
        %v1066 = vld [vmem:[%s221 + $0x78] sm:$0xff]
        %v1067 = vld [vmem:[%s221 + $0x80] sm:$0xff]
        %v1068 = vld [vmem:[%s221 + $0x88] sm:$0xff]
        %v1069 = vld [vmem:[%s221 + $0x90] sm:$0xff]
        %v1070 = vld [vmem:[%s221 + $0x98] sm:$0xff]
        %v1071 = vld [vmem:[%s221 + $0xa0] sm:$0xff]
        %v1072 = vld [vmem:[%s221 + $0xa8] sm:$0xff]
        %v1073 = vld [vmem:[%s221 + $0xb0] sm:$0xff]
        %v1074 = vld [vmem:[%s221 + $0xb8] sm:$0xff]
        %v1075 = vld [vmem:[%s221 + $0xc0] sm:$0xff]
        %v1076 = vld [vmem:[%s221 + $0xc8] sm:$0xff]
        %v1077 = vld [vmem:[%s221 + $0xd0] sm:$0xff]
        %v1078 = vld [vmem:[%s221 + $0xd8] sm:$0xff]
        %v1079 = vld [vmem:[%s221 + $0xe0] sm:$0xff]
        %v1080 = vld [vmem:[%s221 + $0xe8] sm:$0xff]
        %v1081 = vld [vmem:[%s221 + $0xf0] sm:$0xff]
        %v1082 = vld [vmem:[%s221 + $0xf8] sm:$0xff]
        %v1083 = vadd.f32 %v925, %v1051
        %v1084 = vadd.f32 %v928, %v1052
        %v1085 = vadd.f32 %v933, %v1053
        %v1086 = vadd.f32 %v936, %v1054
        %v1087 = vadd.f32 %v941, %v1055
        %v1088 = vadd.f32 %v944, %v1056
        %v1089 = vadd.f32 %v949, %v1057
        %v1090 = vadd.f32 %v952, %v1058
        %v1091 = vadd.f32 %v957, %v1059
        %v1092 = vadd.f32 %v960, %v1060
        %v1093 = vadd.f32 %v965, %v1061
        %v1094 = vadd.f32 %v968, %v1062
        %v1095 = vadd.f32 %v973, %v1063
        %v1096 = vadd.f32 %v976, %v1064
        %v1097 = vadd.f32 %v981, %v1065
        %v1098 = vadd.f32 %v984, %v1066
        %v1099 = vadd.f32 %v989, %v1067
        %v1100 = vadd.f32 %v992, %v1068
        %v1101 = vadd.f32 %v997, %v1069
        %v1102 = vadd.f32 %v1000, %v1070
        %v1103 = vadd.f32 %v1005, %v1071
        %v1104 = vadd.f32 %v1008, %v1072
        %v1105 = vadd.f32 %v1013, %v1073
        %v1106 = vadd.f32 %v1016, %v1074
        %v1107 = vadd.f32 %v1021, %v1075
        %v1108 = vadd.f32 %v1024, %v1076
        %v1109 = vadd.f32 %v1029, %v1077
        %v1110 = vadd.f32 %v1032, %v1078
        %v1111 = vadd.f32 %v1037, %v1079
        %v1112 = vadd.f32 %v1040, %v1080
        %v1113 = vadd.f32 %v1045, %v1081
        %v1114 = vadd.f32 %v1048, %v1082
        %1115 = vst.msk [vmem:[%s209] sm:$0xff] %vm680, %v1083
        %1116 = vst.msk [vmem:[%s209 + $0x8] sm:$0xff] %vm680, %v1084
        %1117 = vst.msk [vmem:[%s209 + $0x10] sm:$0xff] %vm680, %v1085
        %1118 = vst.msk [vmem:[%s209 + $0x18] sm:$0xff] %vm680, %v1086
        %1119 = vst.msk [vmem:[%s209 + $0x20] sm:$0xff] %vm680, %v1087
        %1120 = vst.msk [vmem:[%s209 + $0x28] sm:$0xff] %vm680, %v1088
        %1121 = vst.msk [vmem:[%s209 + $0x30] sm:$0xff] %vm680, %v1089
        %1122 = vst.msk [vmem:[%s209 + $0x38] sm:$0xff] %vm680, %v1090
        %1123 = vst.msk [vmem:[%s209 + $0x40] sm:$0xff] %vm680, %v1091
        %1124 = vst.msk [vmem:[%s209 + $0x48] sm:$0xff] %vm680, %v1092
        %1125 = vst.msk [vmem:[%s209 + $0x50] sm:$0xff] %vm680, %v1093
        %1126 = vst.msk [vmem:[%s209 + $0x58] sm:$0xff] %vm680, %v1094
        %1127 = vst.msk [vmem:[%s209 + $0x60] sm:$0xff] %vm680, %v1095
        %1128 = vst.msk [vmem:[%s209 + $0x68] sm:$0xff] %vm680, %v1096
        %1129 = vst.msk [vmem:[%s209 + $0x70] sm:$0xff] %vm680, %v1097
        %1130 = vst.msk [vmem:[%s209 + $0x78] sm:$0xff] %vm680, %v1098
        %1131 = vst.msk [vmem:[%s209 + $0x80] sm:$0xff] %vm680, %v1099
        %1132 = vst.msk [vmem:[%s209 + $0x88] sm:$0xff] %vm680, %v1100
        %1133 = vst.msk [vmem:[%s209 + $0x90] sm:$0xff] %vm680, %v1101
        %1134 = vst.msk [vmem:[%s209 + $0x98] sm:$0xff] %vm680, %v1102
        %1135 = vst.msk [vmem:[%s209 + $0xa0] sm:$0xff] %vm680, %v1103
        %1136 = vst.msk [vmem:[%s209 + $0xa8] sm:$0xff] %vm680, %v1104
        %1137 = vst.msk [vmem:[%s209 + $0xb0] sm:$0xff] %vm680, %v1105
        %1138 = vst.msk [vmem:[%s209 + $0xb8] sm:$0xff] %vm680, %v1106
        %1139 = vst.msk [vmem:[%s209 + $0xc0] sm:$0xff] %vm680, %v1107
        %1140 = vst.msk [vmem:[%s209 + $0xc8] sm:$0xff] %vm680, %v1108
        %1141 = vst.msk [vmem:[%s209 + $0xd0] sm:$0xff] %vm680, %v1109
        %1142 = vst.msk [vmem:[%s209 + $0xd8] sm:$0xff] %vm680, %v1110
        %1143 = vst.msk [vmem:[%s209 + $0xe0] sm:$0xff] %vm680, %v1111
        %1144 = vst.msk [vmem:[%s209 + $0xe8] sm:$0xff] %vm680, %v1112
        %1145 = vst.msk [vmem:[%s209 + $0xf0] sm:$0xff] %vm680, %v1113
        %1146 = vst.msk [vmem:[%s209 + $0xf8] sm:$0xff] %vm680, %v1114
        %s1147 = sand.u32 %s120, 1
        %s1148 = scalar_lea.sflag [#allocation3], %s1147
        %s1149 = sand.u32 %s120, 1
        %s1150 = smul.addr %s1149, 256
        %s1151 = scalar_lea.vmem [#allocation2], %s1150
        // Predicated region
        $region37: #{sk_motion_module_forward.3} parent=35 // pred_check
          %p1152 = pneg %p130
        $region38: #{sk_motion_module_forward.3} parent=35 // pred_check_branch
          %1154 = sbr.rel (%p1152) target = $region40
        $region39: #{sk_motion_module_forward.3} parent=35 // pred_region
          %s1155 = smul.u32 32, %s18
          %s1157 = ssub.s32 4096, 4096
          %1158 = vsyncadd %s1148, %s1157
          %s1159 = smul.addr %s1155, 128
          %s1160 = scalar_lea.hbm %s4, %s1159
          %s1161 = sshll.u32 %s1151, 4
          %s1162 = int_to_ptr.vmem [resolvable:$true] %s1161
          %1167 = dma.vmem_to_hbm [thread:$0]  %s1162, 4096, %s1160, %s1148, 128, 128, 8
        $region40: #{sk_motion_module_forward.3} parent=35 // pred_fallthru
          _
      $region36: #{sk_motion_module_forward.3} parent=5 // pred_fallthru
        _
      %p1168 = scmp.le.s32.totalorder 2, %s13
      // Predicated region
      $region41: #{sk_motion_module_forward.3} parent=5 // pred_check
        %p1169 = pneg %p1168
      $region42: #{sk_motion_module_forward.3} parent=5 // pred_check_branch
        %1171 = sbr.rel (%p1169) target = $region44
      $region43: #{sk_motion_module_forward.3} parent=5 // pred_region
        %s1172 = ssub.s32 %s13, 2
        // Predicated region
        $region45: #{sk_motion_module_forward.3} parent=43 // pred_check
          %p1173 = pneg %p136
        $region46: #{sk_motion_module_forward.3} parent=43 // pred_check_branch
          %1175 = sbr.rel (%p1173) target = $region48
        $region47: #{sk_motion_module_forward.3} parent=43 // pred_region
          %s1176 = sand.u32 %s121, 1
          %s1177 = scalar_lea.sflag [#allocation3], %s1176
          %s1178 = sand.u32 %s121, 1
          %s1179 = smul.addr %s1178, 256
          %s1180 = scalar_lea.vmem [#allocation2], %s1179
          %1181 = dma.done %s1177, 4096
        $region48: #{sk_motion_module_forward.3} parent=43 // pred_fallthru
          _
      $region44: #{sk_motion_module_forward.3} parent=5 // pred_fallthru
        _
    $region6: #{sk_motion_module_forward.3} parent=1 // loop_footer
      %s17 = sadd.s32 1, %s13
    $region7: #{sk_motion_module_forward.3} parent=1 // loop_footer_branch
      %12 = sbr.rel target = $region3
    $region8: #{sk_motion_module_forward.3} parent=1 // loop_exit
      _
    %1182 = vsyncpa [#allocation3], 1
    %s1183 = scalar_lea.sflag [#allocation3], 1
    %1184 = vsyncpa %s1183, 1

// kernel: sk_motion_module_forward.2
$region0: #{sk_motion_module_forward.2}
  #allocation0 [shape = 'u32[]', space=smem, size = 0x4, offset = 0x4, fixed_abs, tag = 'smem constant byte address 0x4 - core index']
  #allocation1 [shape = 'u32[144,128]{1,0:T(1,128)}', space=vmem, size = 0x12000, scoped, tag = 'internal scratch']
  %s0 = inlined_call_operand.hbm [shape: f32[2,4,64,32], index: 0, kind: input, shape index: {}]
  %s1 = inlined_call_operand.hbm [shape: f32[2,2,64,32], index: 1, kind: input, shape index: {}]
  %s2 = inlined_call_operand.vmem [shape: f32[2,1,32], index: 2, kind: input, shape index: {}]
  %s3 = inlined_call_operand.vmem [shape: f32[6,32], index: 3, kind: input, shape index: {}]
  %s4 = inlined_call_operand.vmem [shape: f32[1,32], index: 4, kind: input, shape index: {}]
  %s5 = inlined_call_operand.vmem [shape: f32[1,32], index: 5, kind: input, shape index: {}]
  %s6 = inlined_call_operand.vmem [shape: bf16[32,96], index: 6, kind: input, shape index: {}]
  %s7 = inlined_call_operand.vmem [shape: bf16[32,32], index: 7, kind: input, shape index: {}]
  %s8 = inlined_call_operand.vmem [shape: f32[1,32], index: 8, kind: input, shape index: {}]
  %s9 = inlined_call_operand.vmem [shape: bf16[32,128], index: 9, kind: input, shape index: {}]
  %s10 = inlined_call_operand.vmem [shape: f32[1,128], index: 10, kind: input, shape index: {}]
  %s11 = inlined_call_operand.vmem [shape: bf16[64,32], index: 11, kind: input, shape index: {}]
  %s12 = inlined_call_operand.vmem [shape: f32[1,32], index: 12, kind: input, shape index: {}]
  %s13 = inlined_call_operand.vmem [shape: bf16[2,4,64,32], index: 13, kind: output, shape index: {}]
  %s14 = sld [smem:[#allocation0]]
  $region93: #{sk_motion_module_forward.2} parent=0
    _
  %s16 = ssub.s32 1, %s14
  %s17 = scalar_select 0, %s16, %s14
  $region1: #{sk_motion_module_forward.2} parent=0
    #allocation2 [shape = 'u8[262144]{0}', space=vmem, size = 0x40000, scoped, tag = 'input window, operand 0']
    #allocation3 [shape = 's32[2]{0}', space=sflag, size = 0x8, scoped, tag = 'scoped memory for sk_motion_module_forward.2']
    #allocation4 [shape = 'u8[131072]{0}', space=vmem, size = 0x20000, scoped, tag = 'input window, operand 1']
    #allocation5 [shape = 's32[2]{0}', space=sflag, size = 0x8, scoped, tag = 'scoped memory for sk_motion_module_forward.2']
    %18 = vsyncpa [#allocation3], 0
    %s19 = scalar_lea.sflag [#allocation3], 1
    %20 = vsyncpa %s19, 0
    %21 = vsyncpa [#allocation5], 0
    %s22 = scalar_lea.sflag [#allocation5], 1
    %23 = vsyncpa %s22, 0
    loop: start=0, step=1, limit=4
    $region2: #{sk_motion_module_forward.2} parent=1 // loop_pre_header
      _
    $region3: #{sk_motion_module_forward.2} parent=1 // loop_header
      %s25 = sphi 0, %s29
      %p26 = scmp.ge.s32.totalorder %s25, 4
      %s32 = sphi 0, %s44
      %s33 = sphi 0, %s40
      %s34 = sphi 0, %s32
      %s35 = sphi 0, %s33
      %s36 = sphi 0, %s34
      %s37 = sphi 0, %s35
      %s49 = sphi 0, %s51
      %s52 = sphi 0, %s49
      %s53 = sphi 0, %s52
      %s69 = sphi 0, %s53
      %s77 = sphi 0, %s79
      %s80 = sphi 0, %s77
      %s81 = sphi 0, %s80
      %s97 = sphi 0, %s81
      %s103 = sphi 0, %s105
      %s106 = sphi 0, %s103
      %s107 = sphi 0, %s106
      %s123 = sphi 0, %s107
      %s127 = sphi 0, %s127
      %s129 = sphi 0, %s127
      %s130 = sphi 0, %s129
      %s144 = sphi 0, %s130
      %s148 = sphi 0, %s148
      %s150 = sphi 0, %s148
      %s151 = sphi 0, %s150
      %s165 = sphi 0, %s151
      %s169 = sphi 0, %s169
      %s171 = sphi 0, %s169
      %s172 = sphi 0, %s171
      %s186 = sphi 0, %s172
      %s190 = sphi 0, %s190
      %s192 = sphi 0, %s190
      %s193 = sphi 0, %s192
      %s207 = sphi 0, %s193
      %s211 = sphi 0, %s211
      %s213 = sphi 0, %s211
      %s214 = sphi 0, %s213
      %s228 = sphi 0, %s214
      %s232 = sphi 0, %s232
      %s234 = sphi 0, %s232
      %s235 = sphi 0, %s234
      %s249 = sphi 0, %s235
      %s253 = sphi 0, %s253
      %s255 = sphi 0, %s253
      %s256 = sphi 0, %s255
      %s270 = sphi 0, %s256
      %s274 = sphi 0, %s274
      %s276 = sphi 0, %s274
      %s277 = sphi 0, %s276
      %s291 = sphi 0, %s277
      %s295 = sphi 0, %s295
      %s297 = sphi 0, %s295
      %s298 = sphi 0, %s297
      %s312 = sphi 0, %s298
      %s316 = sphi 0, %s316
      %s318 = sphi 0, %s316
      %s319 = sphi 0, %s318
      %s333 = sphi 0, %s319
      %s341 = sphi 0, %s343
      %s344 = sphi 0, %s341
      %s345 = sphi 0, %s344
      %s361 = sphi 0, %s345
    $region4: #{sk_motion_module_forward.2} parent=1 // loop_header_branch
      %28 = sbr.rel (%p26) target = $region8
    $region5: #{sk_motion_module_forward.2} parent=1 // loop_body
      %s30 = ssub.s32 %s25, 1
      %s31 = ssub.s32 %s25, 2
      %s38 = sadd.s32 1, %s33
      %p39 = scmp.ge.s32.totalorder %s38, 1
      %s40 = scalar_select %p39, 0, %s38
      %s41 = sadd.s32 1, %s32
      %s42 = scalar_select %p39, %s41, %s32
      %p43 = scmp.ge.s32.totalorder %s42, 2
      %s44 = scalar_select %p43, 0, %s42
      %s45 = ssub.s32 %s32, %s44
      %s46 = ssub.s32 %s33, %s40
      %s47 = sor.u32 %s45, %s46
      %p48 = scmp.eq.s32.totalorder %s47, 0
      %s50 = sadd.s32 %s49, 1
      %s51 = scalar_select %p48, %s49, %s50
      %p54 = pneg %p48
      %p55 = scmp.eq.s32.totalorder %s25, 1
      %p56 = por %p54, %p55
      %p57 = scmp.ne.s32.totalorder %s49, %s52
      %p58 = scmp.eq.s32.totalorder %s25, 0
      %p59 = por %p57, %p58
      %p60 = scmp.ne.s32.totalorder %s49, %s52
      %p61 = scmp.eq.s32.totalorder %s30, 1
      %p62 = por %p60, %p61
      %p63 = scmp.ne.s32.totalorder %s52, %s53
      %p64 = scmp.eq.s32.totalorder %s30, 0
      %p65 = por %p63, %p64
      %p66 = scmp.ne.s32.totalorder %s52, %s53
      %p67 = scmp.eq.s32.totalorder %s31, 1
      %p68 = por %p66, %p67
      %p70 = scmp.ne.s32.totalorder %s53, %s69
      %p71 = scmp.eq.s32.totalorder %s31, 0
      %p72 = por %p70, %p71
      %s73 = ssub.s32 %s32, %s44
      %s74 = ssub.s32 %s33, %s40
      %s75 = sor.u32 %s73, %s74
      %p76 = scmp.eq.s32.totalorder %s75, 0
      %s78 = sadd.s32 %s77, 1
      %s79 = scalar_select %p76, %s77, %s78
      %p82 = pneg %p76
      %p83 = scmp.eq.s32.totalorder %s25, 1
      %p84 = por %p82, %p83
      %p85 = scmp.ne.s32.totalorder %s77, %s80
      %p86 = scmp.eq.s32.totalorder %s25, 0
      %p87 = por %p85, %p86
      %p88 = scmp.ne.s32.totalorder %s77, %s80
      %p89 = scmp.eq.s32.totalorder %s30, 1
      %p90 = por %p88, %p89
      %p91 = scmp.ne.s32.totalorder %s80, %s81
      %p92 = scmp.eq.s32.totalorder %s30, 0
      %p93 = por %p91, %p92
      %p94 = scmp.ne.s32.totalorder %s80, %s81
      %p95 = scmp.eq.s32.totalorder %s31, 1
      %p96 = por %p94, %p95
      %p98 = scmp.ne.s32.totalorder %s81, %s97
      %p99 = scmp.eq.s32.totalorder %s31, 0
      %p100 = por %p98, %p99
      %s101 = ssub.s32 %s32, %s44
      %p102 = scmp.eq.s32.totalorder %s101, 0
      %s104 = sadd.s32 %s103, 1
      %s105 = scalar_select %p102, %s103, %s104
      %p108 = pneg %p102
      %p109 = scmp.eq.s32.totalorder %s25, 1
      %p110 = por %p108, %p109
      %p111 = scmp.ne.s32.totalorder %s103, %s106
      %p112 = scmp.eq.s32.totalorder %s25, 0
      %p113 = por %p111, %p112
      %p114 = scmp.ne.s32.totalorder %s103, %s106
      %p115 = scmp.eq.s32.totalorder %s30, 1
      %p116 = por %p114, %p115
      %p117 = scmp.ne.s32.totalorder %s106, %s107
      %p118 = scmp.eq.s32.totalorder %s30, 0
      %p119 = por %p117, %p118
      %p120 = scmp.ne.s32.totalorder %s106, %s107
      %p121 = scmp.eq.s32.totalorder %s31, 1
      %p122 = por %p120, %p121
      %p124 = scmp.ne.s32.totalorder %s107, %s123
      %p125 = scmp.eq.s32.totalorder %s31, 0
      %p126 = por %p124, %p125
      %s128 = sadd.s32 %s127, 1
      %p131 = scmp.eq.s32.totalorder %s25, 1
      %p132 = scmp.ne.s32.totalorder %s127, %s129
      %p133 = scmp.eq.s32.totalorder %s25, 0
      %p134 = por %p132, %p133
      %p135 = scmp.ne.s32.totalorder %s127, %s129
      %p136 = scmp.eq.s32.totalorder %s30, 1
      %p137 = por %p135, %p136
      %p138 = scmp.ne.s32.totalorder %s129, %s130
      %p139 = scmp.eq.s32.totalorder %s30, 0
      %p140 = por %p138, %p139
      %p141 = scmp.ne.s32.totalorder %s129, %s130
      %p142 = scmp.eq.s32.totalorder %s31, 1
      %p143 = por %p141, %p142
      %p145 = scmp.ne.s32.totalorder %s130, %s144
      %p146 = scmp.eq.s32.totalorder %s31, 0
      %p147 = por %p145, %p146
      %s149 = sadd.s32 %s148, 1
      %p152 = scmp.eq.s32.totalorder %s25, 1
      %p153 = scmp.ne.s32.totalorder %s148, %s150
      %p154 = scmp.eq.s32.totalorder %s25, 0
      %p155 = por %p153, %p154
      %p156 = scmp.ne.s32.totalorder %s148, %s150
      %p157 = scmp.eq.s32.totalorder %s30, 1
      %p158 = por %p156, %p157
      %p159 = scmp.ne.s32.totalorder %s150, %s151
      %p160 = scmp.eq.s32.totalorder %s30, 0
      %p161 = por %p159, %p160
      %p162 = scmp.ne.s32.totalorder %s150, %s151
      %p163 = scmp.eq.s32.totalorder %s31, 1
      %p164 = por %p162, %p163
      %p166 = scmp.ne.s32.totalorder %s151, %s165
      %p167 = scmp.eq.s32.totalorder %s31, 0
      %p168 = por %p166, %p167
      %s170 = sadd.s32 %s169, 1
      %p173 = scmp.eq.s32.totalorder %s25, 1
      %p174 = scmp.ne.s32.totalorder %s169, %s171
      %p175 = scmp.eq.s32.totalorder %s25, 0
      %p176 = por %p174, %p175
      %p177 = scmp.ne.s32.totalorder %s169, %s171
      %p178 = scmp.eq.s32.totalorder %s30, 1
      %p179 = por %p177, %p178
      %p180 = scmp.ne.s32.totalorder %s171, %s172
      %p181 = scmp.eq.s32.totalorder %s30, 0
      %p182 = por %p180, %p181
      %p183 = scmp.ne.s32.totalorder %s171, %s172
      %p184 = scmp.eq.s32.totalorder %s31, 1
      %p185 = por %p183, %p184
      %p187 = scmp.ne.s32.totalorder %s172, %s186
      %p188 = scmp.eq.s32.totalorder %s31, 0
      %p189 = por %p187, %p188
      %s191 = sadd.s32 %s190, 1
      %p194 = scmp.eq.s32.totalorder %s25, 1
      %p195 = scmp.ne.s32.totalorder %s190, %s192
      %p196 = scmp.eq.s32.totalorder %s25, 0
      %p197 = por %p195, %p196
      %p198 = scmp.ne.s32.totalorder %s190, %s192
      %p199 = scmp.eq.s32.totalorder %s30, 1
      %p200 = por %p198, %p199
      %p201 = scmp.ne.s32.totalorder %s192, %s193
      %p202 = scmp.eq.s32.totalorder %s30, 0
      %p203 = por %p201, %p202
      %p204 = scmp.ne.s32.totalorder %s192, %s193
      %p205 = scmp.eq.s32.totalorder %s31, 1
      %p206 = por %p204, %p205
      %p208 = scmp.ne.s32.totalorder %s193, %s207
      %p209 = scmp.eq.s32.totalorder %s31, 0
      %p210 = por %p208, %p209
      %s212 = sadd.s32 %s211, 1
      %p215 = scmp.eq.s32.totalorder %s25, 1
      %p216 = scmp.ne.s32.totalorder %s211, %s213
      %p217 = scmp.eq.s32.totalorder %s25, 0
      %p218 = por %p216, %p217
      %p219 = scmp.ne.s32.totalorder %s211, %s213
      %p220 = scmp.eq.s32.totalorder %s30, 1
      %p221 = por %p219, %p220
      %p222 = scmp.ne.s32.totalorder %s213, %s214
      %p223 = scmp.eq.s32.totalorder %s30, 0
      %p224 = por %p222, %p223
      %p225 = scmp.ne.s32.totalorder %s213, %s214
      %p226 = scmp.eq.s32.totalorder %s31, 1
      %p227 = por %p225, %p226
      %p229 = scmp.ne.s32.totalorder %s214, %s228
      %p230 = scmp.eq.s32.totalorder %s31, 0
      %p231 = por %p229, %p230
      %s233 = sadd.s32 %s232, 1
      %p236 = scmp.eq.s32.totalorder %s25, 1
      %p237 = scmp.ne.s32.totalorder %s232, %s234
      %p238 = scmp.eq.s32.totalorder %s25, 0
      %p239 = por %p237, %p238
      %p240 = scmp.ne.s32.totalorder %s232, %s234
      %p241 = scmp.eq.s32.totalorder %s30, 1
      %p242 = por %p240, %p241
      %p243 = scmp.ne.s32.totalorder %s234, %s235
      %p244 = scmp.eq.s32.totalorder %s30, 0
      %p245 = por %p243, %p244
      %p246 = scmp.ne.s32.totalorder %s234, %s235
      %p247 = scmp.eq.s32.totalorder %s31, 1
      %p248 = por %p246, %p247
      %p250 = scmp.ne.s32.totalorder %s235, %s249
      %p251 = scmp.eq.s32.totalorder %s31, 0
      %p252 = por %p250, %p251
      %s254 = sadd.s32 %s253, 1
      %p257 = scmp.eq.s32.totalorder %s25, 1
      %p258 = scmp.ne.s32.totalorder %s253, %s255
      %p259 = scmp.eq.s32.totalorder %s25, 0
      %p260 = por %p258, %p259
      %p261 = scmp.ne.s32.totalorder %s253, %s255
      %p262 = scmp.eq.s32.totalorder %s30, 1
      %p263 = por %p261, %p262
      %p264 = scmp.ne.s32.totalorder %s255, %s256
      %p265 = scmp.eq.s32.totalorder %s30, 0
      %p266 = por %p264, %p265
      %p267 = scmp.ne.s32.totalorder %s255, %s256
      %p268 = scmp.eq.s32.totalorder %s31, 1
      %p269 = por %p267, %p268
      %p271 = scmp.ne.s32.totalorder %s256, %s270
      %p272 = scmp.eq.s32.totalorder %s31, 0
      %p273 = por %p271, %p272
      %s275 = sadd.s32 %s274, 1
      %p278 = scmp.eq.s32.totalorder %s25, 1
      %p279 = scmp.ne.s32.totalorder %s274, %s276
      %p280 = scmp.eq.s32.totalorder %s25, 0
      %p281 = por %p279, %p280
      %p282 = scmp.ne.s32.totalorder %s274, %s276
      %p283 = scmp.eq.s32.totalorder %s30, 1
      %p284 = por %p282, %p283
      %p285 = scmp.ne.s32.totalorder %s276, %s277
      %p286 = scmp.eq.s32.totalorder %s30, 0
      %p287 = por %p285, %p286
      %p288 = scmp.ne.s32.totalorder %s276, %s277
      %p289 = scmp.eq.s32.totalorder %s31, 1
      %p290 = por %p288, %p289
      %p292 = scmp.ne.s32.totalorder %s277, %s291
      %p293 = scmp.eq.s32.totalorder %s31, 0
      %p294 = por %p292, %p293
      %s296 = sadd.s32 %s295, 1
      %p299 = scmp.eq.s32.totalorder %s25, 1
      %p300 = scmp.ne.s32.totalorder %s295, %s297
      %p301 = scmp.eq.s32.totalorder %s25, 0
      %p302 = por %p300, %p301
      %p303 = scmp.ne.s32.totalorder %s295, %s297
      %p304 = scmp.eq.s32.totalorder %s30, 1
      %p305 = por %p303, %p304
      %p306 = scmp.ne.s32.totalorder %s297, %s298
      %p307 = scmp.eq.s32.totalorder %s30, 0
      %p308 = por %p306, %p307
      %p309 = scmp.ne.s32.totalorder %s297, %s298
      %p310 = scmp.eq.s32.totalorder %s31, 1
      %p311 = por %p309, %p310
      %p313 = scmp.ne.s32.totalorder %s298, %s312
      %p314 = scmp.eq.s32.totalorder %s31, 0
      %p315 = por %p313, %p314
      %s317 = sadd.s32 %s316, 1
      %p320 = scmp.eq.s32.totalorder %s25, 1
      %p321 = scmp.ne.s32.totalorder %s316, %s318
      %p322 = scmp.eq.s32.totalorder %s25, 0
      %p323 = por %p321, %p322
      %p324 = scmp.ne.s32.totalorder %s316, %s318
      %p325 = scmp.eq.s32.totalorder %s30, 1
      %p326 = por %p324, %p325
      %p327 = scmp.ne.s32.totalorder %s318, %s319
      %p328 = scmp.eq.s32.totalorder %s30, 0
      %p329 = por %p327, %p328
      %p330 = scmp.ne.s32.totalorder %s318, %s319
      %p331 = scmp.eq.s32.totalorder %s31, 1
      %p332 = por %p330, %p331
      %p334 = scmp.ne.s32.totalorder %s319, %s333
      %p335 = scmp.eq.s32.totalorder %s31, 0
      %p336 = por %p334, %p335
      %s337 = ssub.s32 %s32, %s44
      %s338 = ssub.s32 %s33, %s40
      %s339 = sor.u32 %s337, %s338
      %p340 = scmp.eq.s32.totalorder %s339, 0
      %s342 = sadd.s32 %s341, 1
      %s343 = scalar_select %p340, %s341, %s342
      %p346 = pneg %p340
      %p347 = scmp.eq.s32.totalorder %s25, 1
      %p348 = por %p346, %p347
      %p349 = scmp.ne.s32.totalorder %s341, %s344
      %p350 = scmp.eq.s32.totalorder %s25, 0
      %p351 = por %p349, %p350
      %p352 = scmp.ne.s32.totalorder %s341, %s344
      %p353 = scmp.eq.s32.totalorder %s30, 1
      %p354 = por %p352, %p353
      %p355 = scmp.ne.s32.totalorder %s344, %s345
      %p356 = scmp.eq.s32.totalorder %s30, 0
      %p357 = por %p355, %p356
      %p358 = scmp.ne.s32.totalorder %s344, %s345
      %p359 = scmp.eq.s32.totalorder %s31, 1
      %p360 = por %p358, %p359
      %p362 = scmp.ne.s32.totalorder %s345, %s361
      %p363 = scmp.eq.s32.totalorder %s31, 0
      %p364 = por %p362, %p363
      %p365 = scmp.le.s32.totalorder 1, %s25
      %p366 = scmp.lt.s32.totalorder %s25, 3
      %p367 = pnand %p365, %p366
      %p368 = pneg %p367
      // Predicated region
      $region9: #{sk_motion_module_forward.2} parent=5 // pred_check
        _
      $region10: #{sk_motion_module_forward.2} parent=5 // pred_check_branch
        %370 = sbr.rel (%p367) target = $region12
      $region11: #{sk_motion_module_forward.2} parent=5 // pred_region
        %s371 = ssub.s32 %s25, 1
        // Predicated region
        $region13: #{sk_motion_module_forward.2} parent=11 // pred_check
          %p372 = pneg %p140
        $region14: #{sk_motion_module_forward.2} parent=11 // pred_check_branch
          %374 = sbr.rel (%p372) target = $region16
        $region15: #{sk_motion_module_forward.2} parent=11 // pred_region
          _
        $region16: #{sk_motion_module_forward.2} parent=11 // pred_fallthru
          _
        // Predicated region
        $region17: #{sk_motion_module_forward.2} parent=11 // pred_check
          %p375 = pneg %p161
        $region18: #{sk_motion_module_forward.2} parent=11 // pred_check_branch
          %377 = sbr.rel (%p375) target = $region20
        $region19: #{sk_motion_module_forward.2} parent=11 // pred_region
          _
        $region20: #{sk_motion_module_forward.2} parent=11 // pred_fallthru
          _
        // Predicated region
        $region21: #{sk_motion_module_forward.2} parent=11 // pred_check
          %p378 = pneg %p182
        $region22: #{sk_motion_module_forward.2} parent=11 // pred_check_branch
          %380 = sbr.rel (%p378) target = $region24
        $region23: #{sk_motion_module_forward.2} parent=11 // pred_region
          _
        $region24: #{sk_motion_module_forward.2} parent=11 // pred_fallthru
          _
        // Predicated region
        $region25: #{sk_motion_module_forward.2} parent=11 // pred_check
          %p381 = pneg %p203
        $region26: #{sk_motion_module_forward.2} parent=11 // pred_check_branch
          %383 = sbr.rel (%p381) target = $region28
        $region27: #{sk_motion_module_forward.2} parent=11 // pred_region
          _
        $region28: #{sk_motion_module_forward.2} parent=11 // pred_fallthru
          _
        // Predicated region
        $region29: #{sk_motion_module_forward.2} parent=11 // pred_check
          %p384 = pneg %p224
        $region30: #{sk_motion_module_forward.2} parent=11 // pred_check_branch
          %386 = sbr.rel (%p384) target = $region32
        $region31: #{sk_motion_module_forward.2} parent=11 // pred_region
          _
        $region32: #{sk_motion_module_forward.2} parent=11 // pred_fallthru
          _
        // Predicated region
        $region33: #{sk_motion_module_forward.2} parent=11 // pred_check
          %p387 = pneg %p245
        $region34: #{sk_motion_module_forward.2} parent=11 // pred_check_branch
          %389 = sbr.rel (%p387) target = $region36
        $region35: #{sk_motion_module_forward.2} parent=11 // pred_region
          _
        $region36: #{sk_motion_module_forward.2} parent=11 // pred_fallthru
          _
        // Predicated region
        $region37: #{sk_motion_module_forward.2} parent=11 // pred_check
          %p390 = pneg %p266
        $region38: #{sk_motion_module_forward.2} parent=11 // pred_check_branch
          %392 = sbr.rel (%p390) target = $region40
        $region39: #{sk_motion_module_forward.2} parent=11 // pred_region
          _
        $region40: #{sk_motion_module_forward.2} parent=11 // pred_fallthru
          _
        // Predicated region
        $region41: #{sk_motion_module_forward.2} parent=11 // pred_check
          %p393 = pneg %p287
        $region42: #{sk_motion_module_forward.2} parent=11 // pred_check_branch
          %395 = sbr.rel (%p393) target = $region44
        $region43: #{sk_motion_module_forward.2} parent=11 // pred_region
          _
        $region44: #{sk_motion_module_forward.2} parent=11 // pred_fallthru
          _
        // Predicated region
        $region45: #{sk_motion_module_forward.2} parent=11 // pred_check
          %p396 = pneg %p308
        $region46: #{sk_motion_module_forward.2} parent=11 // pred_check_branch
          %398 = sbr.rel (%p396) target = $region48
        $region47: #{sk_motion_module_forward.2} parent=11 // pred_region
          _
        $region48: #{sk_motion_module_forward.2} parent=11 // pred_fallthru
          _
        // Predicated region
        $region49: #{sk_motion_module_forward.2} parent=11 // pred_check
          %p399 = pneg %p329
        $region50: #{sk_motion_module_forward.2} parent=11 // pred_check_branch
          %401 = sbr.rel (%p399) target = $region52
        $region51: #{sk_motion_module_forward.2} parent=11 // pred_region
          _
        $region52: #{sk_motion_module_forward.2} parent=11 // pred_fallthru
          _
      $region12: #{sk_motion_module_forward.2} parent=5 // pred_fallthru
        _
      %p402 = scmp.lt.s32.totalorder %s25, 2
      // Predicated region
      $region53: #{sk_motion_module_forward.2} parent=5 // pred_check
        %p403 = pneg %p402
      $region54: #{sk_motion_module_forward.2} parent=5 // pred_check_branch
        %405 = sbr.rel (%p403) target = $region56
      $region55: #{sk_motion_module_forward.2} parent=5 // pred_region
        // Predicated region
        $region57: #{sk_motion_module_forward.2} parent=55 // pred_check
          %p406 = pneg %p59
        $region58: #{sk_motion_module_forward.2} parent=55 // pred_check_branch
          %408 = sbr.rel (%p406) target = $region60
        $region59: #{sk_motion_module_forward.2} parent=55 // pred_region
          %s409 = sand.u32 %s49, 1
          %s410 = scalar_lea.sflag [#allocation3], %s409
          %s411 = sand.u32 %s49, 1
          %s412 = smul.addr %s411, 256
          %s413 = scalar_lea.vmem [#allocation2], %s412
          %s414 = smul.u32 8, %s33
          %s416 = ssub.s32 4096, 4096
          %417 = vsyncadd %s410, %s416
          %s418 = smul.addr %s32, 32
          %s419 = sadd.s32 %s414, %s418
          %s420 = smul.addr %s419, 128
          %s421 = scalar_lea.hbm %s0, %s420
          %s422 = sshll.u32 %s413, 4
          %s423 = int_to_ptr.vmem [resolvable:$true] %s422
          %428 = dma.hbm_to_vmem [thread:$0]  %s421, 4096, %s423, %s410, 128, 128, 8
        $region60: #{sk_motion_module_forward.2} parent=55 // pred_fallthru
          _
        // Predicated region
        $region61: #{sk_motion_module_forward.2} parent=55 // pred_check
          %p429 = pneg %p87
        $region62: #{sk_motion_module_forward.2} parent=55 // pred_check_branch
          %431 = sbr.rel (%p429) target = $region64
        $region63: #{sk_motion_module_forward.2} parent=55 // pred_region
          %s432 = sand.u32 %s77, 1
          %s433 = scalar_lea.sflag [#allocation5], %s432
          %s434 = sand.u32 %s77, 1
          %s435 = smul.addr %s434, 128
          %s436 = scalar_lea.vmem [#allocation4], %s435
          %s437 = smul.u32 8, %s33
          %s439 = ssub.s32 2048, 2048
          %440 = vsyncadd %s433, %s439
          %s441 = smul.addr %s32, 16
          %s442 = sadd.s32 %s437, %s441
          %s443 = smul.addr %s442, 128
          %s444 = scalar_lea.hbm %s1, %s443
          %s445 = sshll.u32 %s436, 4
          %s446 = int_to_ptr.vmem [resolvable:$true] %s445
          %451 = dma.hbm_to_vmem [thread:$0]  %s444, 2048, %s446, %s433, 128, 128, 8
        $region64: #{sk_motion_module_forward.2} parent=55 // pred_fallthru
          _
        // Predicated region
        $region65: #{sk_motion_module_forward.2} parent=55 // pred_check
          %p452 = pneg %p113
        $region66: #{sk_motion_module_forward.2} parent=55 // pred_check_branch
          %454 = sbr.rel (%p452) target = $region68
        $region67: #{sk_motion_module_forward.2} parent=55 // pred_region
          %p455 = scmp.lt.s32.totalorder %s32, 1
          %s456 = scalar_select %p455, %s32, 1
          %s457 = scalar_lea.vmem %s2, %s456
        $region68: #{sk_motion_module_forward.2} parent=55 // pred_fallthru
          _
      $region56: #{sk_motion_module_forward.2} parent=5 // pred_fallthru
        _
      %p458 = scmp.le.s32.totalorder 1, %s25
      %p459 = scmp.lt.s32.totalorder %s25, 3
      %p460 = pnand %p458, %p459
      %p461 = pneg %p460
      // Predicated region
      $region69: #{sk_motion_module_forward.2} parent=5 // pred_check
        _
      $region70: #{sk_motion_module_forward.2} parent=5 // pred_check_branch
        %463 = sbr.rel (%p460) target = $region72
      $region71: #{sk_motion_module_forward.2} parent=5 // pred_region
        %s464 = ssub.s32 %s25, 1
        %s465 = sand.u32 %s52, 1
        %s466 = scalar_lea.sflag [#allocation3], %s465
        %s467 = sand.u32 %s52, 1
        %s468 = smul.addr %s467, 256
        %s469 = scalar_lea.vmem [#allocation2], %s468
        // Predicated region
        $region73: #{sk_motion_module_forward.2} parent=71 // pred_check
          %p470 = pneg %p65
        $region74: #{sk_motion_module_forward.2} parent=71 // pred_check_branch
          %472 = sbr.rel (%p470) target = $region76
        $region75: #{sk_motion_module_forward.2} parent=71 // pred_region
          %473 = dma.done %s466, 4096
        $region76: #{sk_motion_module_forward.2} parent=71 // pred_fallthru
          _
        %s474 = sand.u32 %s80, 1
        %s475 = scalar_lea.sflag [#allocation5], %s474
        %s476 = sand.u32 %s80, 1
        %s477 = smul.addr %s476, 128
        %s478 = scalar_lea.vmem [#allocation4], %s477
        // Predicated region
        $region77: #{sk_motion_module_forward.2} parent=71 // pred_check
          %p479 = pneg %p93
        $region78: #{sk_motion_module_forward.2} parent=71 // pred_check_branch
          %481 = sbr.rel (%p479) target = $region80
        $region79: #{sk_motion_module_forward.2} parent=71 // pred_region
          %482 = dma.done %s475, 2048
        $region80: #{sk_motion_module_forward.2} parent=71 // pred_fallthru
          _
        %s483 = sand.u32 %s52, 1
        %s484 = scalar_lea.sflag [#allocation3], %s483
        %s485 = sand.u32 %s52, 1
        %s486 = smul.addr %s485, 256
        %s487 = scalar_lea.vmem [#allocation2], %s486
        %p488 = pneg %p65
        %p489 = pneg %p62
        %s490 = sand.u32 %s80, 1
        %s491 = scalar_lea.sflag [#allocation5], %s490
        %s492 = sand.u32 %s80, 1
        %s493 = smul.addr %s492, 128
        %s494 = scalar_lea.vmem [#allocation4], %s493
        %p495 = pneg %p93
        %p496 = pneg %p90
        %p497 = scmp.lt.s32.totalorder %s34, 1
        %s498 = scalar_select %p497, %s34, 1
        %s499 = scalar_lea.vmem %s2, %s498
        %p500 = pneg %p119
        %p501 = pneg %p116
        %p502 = pneg %p140
        %p503 = pneg %p137
        %p504 = pneg %p161
        %p505 = pneg %p158
        %p506 = pneg %p182
        %p507 = pneg %p179
        %p508 = pneg %p203
        %p509 = pneg %p200
        %p510 = pneg %p224
        %p511 = pneg %p221
        %p512 = pneg %p245
        %p513 = pneg %p242
        %p514 = pneg %p266
        %p515 = pneg %p263
        %p516 = pneg %p287
        %p517 = pneg %p284
        %p518 = pneg %p308
        %p519 = pneg %p305
        %p520 = pneg %p329
        %p521 = pneg %p326
        %p522 = pneg %p357
        %p523 = pneg %p354
        %s524 = smul.u32 8, %s35
        %p525 = scmp.lt.s32.totalorder %s34, 1
        %s526 = scalar_select %p525, %s34, 1
        %p527 = scmp.lt.s32.totalorder %s524, 7
        %s528 = scalar_select %p527, %s524, 7
        %s529 = smul.addr %s526, 32
        %s530 = sadd.s32 %s528, %s529
        %s531 = smul.addr %s530, 4
        %s532 = scalar_lea.vmem %s13, %s531
        %s533 = smul.u32 8, %s35
        %s534 = smul.u32 8, %s35
        %p535 = scmp.lt.s32.totalorder %s34, 1
        %s536 = scalar_select %p535, %s34, 1
        %s537 = scalar_lea.vmem %s2, %s536
        %s538 = smul.u32 8, %s35
        %p539 = scmp.lt.s32.totalorder %s34, 1
        %s540 = scalar_select %p539, %s34, 1
        %p541 = scmp.lt.s32.totalorder %s538, 7
        %s542 = scalar_select %p541, %s538, 7
        %s543 = smul.addr %s540, 32
        %s544 = sadd.s32 %s542, %s543
        %s545 = smul.addr %s544, 4
        %s546 = scalar_lea.vmem %s13, %s545
        %s547 = smul.u32 8, %s35
        %v549 = vld [vmem:[%s3] sm:$0x3f]
        %v550 = vld [vmem:[%s537] sm:$0x1]
        %v551 = vld [vmem:[%s478] sm:$0xff]
        %v552 = vld [vmem:[%s478 + $0x8] sm:$0xff]
        %v553 = vld [vmem:[%s478 + $0x10] sm:$0xff]
        %v554 = vld [vmem:[%s478 + $0x18] sm:$0xff]
        %v555 = vld [vmem:[%s478 + $0x20] sm:$0xff]
        %v556 = vld [vmem:[%s478 + $0x28] sm:$0xff]
        %v557 = vld [vmem:[%s478 + $0x30] sm:$0xff]
        %v558 = vld [vmem:[%s478 + $0x38] sm:$0xff]
        %v559 = vadd.f32 %v550, %v549
        %v561 = vlaneseq
        %v562 = vshrl.u32 %v561, 7
        %v563 = vsub.s32 0, %v562
        %v564 = vrot.slane %v559, %v563
        %v566 = vadd.f32 %v551, %v564
        %v567 = vadd.f32 %v552, %v564
        %v568 = vadd.f32 %v553, %v564
        %v569 = vadd.f32 %v554, %v564
        %v570 = vadd.f32 %v555, %v564
        %v571 = vadd.f32 %v556, %v564
        %v572 = vadd.f32 %v557, %v564
        %v573 = vadd.f32 %v558, %v564
        %v574 = vld [vmem:[%s469] sm:$0xff]
        %v575 = vld [vmem:[%s469 + $0x8] sm:$0xff]
        %v576 = vld [vmem:[%s469 + $0x10] sm:$0xff]
        %v577 = vld [vmem:[%s469 + $0x18] sm:$0xff]
        %v578 = vld [vmem:[%s469 + $0x20] sm:$0xff]
        %v579 = vld [vmem:[%s469 + $0x28] sm:$0xff]
        %v580 = vld [vmem:[%s469 + $0x30] sm:$0xff]
        %v581 = vld [vmem:[%s469 + $0x38] sm:$0xff]
        %v584 = vunpack.c.l.s4 1966171168
        %v585 = vunpack.c.0.s8 %v584
        %v586 = vlaneseq
        %v587 = vshrl.u32 %v586, 7
        %v588 = vsub.s32 %v585, %v587
        %v589 = vrot.slane %v549, %v588
        %v590 = vcombine.high %v589, %v589
        %v592 = vunpack.c.l.s4 1966171168
        %v593 = vunpack.c.0.s8 %v592
        %v594 = vlaneseq
        %v595 = vshrl.u32 %v594, 7
        %v596 = vsub.s32 %v593, %v595
        %v597 = vrot.slane %v589, %v596
        %v599 = vunpack.c.l.s4 1966171168
        %v600 = vunpack.c.0.s8 %v599
        %v601 = vlaneseq
        %v602 = vshrl.u32 %v601, 7
        %v603 = vsub.s32 %v600, %v602
        %v604 = vrot.slane %v590, %v603
        %v606 = vadd.f32 %v550, %v604
        %v608 = vlaneseq
        %v609 = vshrl.u32 %v608, 7
        %v610 = vsub.s32 0, %v609
        %v611 = vrot.slane %v606, %v610
        %v613 = vadd.f32 %v574, %v611
        %v614 = vadd.f32 %v575, %v611
        %v615 = vadd.f32 %v576, %v611
        %v616 = vadd.f32 %v577, %v611
        %v617 = vadd.f32 %v578, %v611
        %v618 = vadd.f32 %v579, %v611
        %v619 = vadd.f32 %v580, %v611
        %v620 = vadd.f32 %v581, %v611
        %s621 = scalar_lea.vmem %s469, 64 [#allocation2]
        %v622 = vld [vmem:[%s621] sm:$0xff]
        %v623 = vld [vmem:[%s621 + $0x8] sm:$0xff]
        %v624 = vld [vmem:[%s621 + $0x10] sm:$0xff]
        %v625 = vld [vmem:[%s621 + $0x18] sm:$0xff]
        %v626 = vld [vmem:[%s621 + $0x20] sm:$0xff]
        %v627 = vld [vmem:[%s621 + $0x28] sm:$0xff]
        %v628 = vld [vmem:[%s621 + $0x30] sm:$0xff]
        %v629 = vld [vmem:[%s621 + $0x38] sm:$0xff]
        %v630 = vcombine.high %v597, %v597
        %v632 = vadd.f32 %v550, %v630
        %v634 = vlaneseq
        %v635 = vshrl.u32 %v634, 7
        %v636 = vsub.s32 0, %v635
        %v637 = vrot.slane %v632, %v636
        %v639 = vadd.f32 %v622, %v637
        %v640 = vadd.f32 %v623, %v637
        %v641 = vadd.f32 %v624, %v637
        %v642 = vadd.f32 %v625, %v637
        %v643 = vadd.f32 %v626, %v637
        %v644 = vadd.f32 %v627, %v637
        %v645 = vadd.f32 %v628, %v637
        %v646 = vadd.f32 %v629, %v637
        %s647 = scalar_lea.vmem %s469, 128 [#allocation2]
        %v648 = vld [vmem:[%s647] sm:$0xff]
        %v649 = vld [vmem:[%s647 + $0x8] sm:$0xff]
        %v650 = vld [vmem:[%s647 + $0x10] sm:$0xff]
        %v651 = vld [vmem:[%s647 + $0x18] sm:$0xff]
        %v652 = vld [vmem:[%s647 + $0x20] sm:$0xff]
        %v653 = vld [vmem:[%s647 + $0x28] sm:$0xff]
        %v654 = vld [vmem:[%s647 + $0x30] sm:$0xff]
        %v655 = vld [vmem:[%s647 + $0x38] sm:$0xff]
        %v656 = vcombine.high %v604, %v604
        %v658 = vadd.f32 %v550, %v656
        %v660 = vlaneseq
        %v661 = vshrl.u32 %v660, 7
        %v662 = vsub.s32 0, %v661
        %v663 = vrot.slane %v658, %v662
        %v665 = vadd.f32 %v648, %v663
        %v666 = vadd.f32 %v649, %v663
        %v667 = vadd.f32 %v650, %v663
        %v668 = vadd.f32 %v651, %v663
        %v669 = vadd.f32 %v652, %v663
        %v670 = vadd.f32 %v653, %v663
        %v671 = vadd.f32 %v654, %v663
        %v672 = vadd.f32 %v655, %v663
        %s673 = scalar_lea.vmem %s469, 192 [#allocation2]
        %v674 = vld [vmem:[%s673] sm:$0xff]
        %v675 = vld [vmem:[%s673 + $0x8] sm:$0xff]
        %v676 = vld [vmem:[%s673 + $0x10] sm:$0xff]
        %v677 = vld [vmem:[%s673 + $0x18] sm:$0xff]
        %v678 = vld [vmem:[%s673 + $0x20] sm:$0xff]
        %v679 = vld [vmem:[%s673 + $0x28] sm:$0xff]
        %v680 = vld [vmem:[%s673 + $0x30] sm:$0xff]
        %v681 = vld [vmem:[%s673 + $0x38] sm:$0xff]
        %v682 = vcombine.high %v549, %v549
        %v684 = vunpack.c.l.s4 1966171168
        %v685 = vunpack.c.0.s8 %v684
        %v686 = vlaneseq
        %v687 = vshrl.u32 %v686, 7
        %v688 = vsub.s32 %v685, %v687
        %v689 = vrot.slane %v682, %v688
        %v691 = vunpack.c.l.s4 1966171168
        %v692 = vunpack.c.0.s8 %v691
        %v693 = vlaneseq
        %v694 = vshrl.u32 %v693, 7
        %v695 = vsub.s32 %v692, %v694
        %v696 = vrot.slane %v689, %v695
        %v698 = vadd.f32 %v550, %v696
        %v700 = vlaneseq
        %v701 = vshrl.u32 %v700, 7
        %v702 = vsub.s32 0, %v701
        %v703 = vrot.slane %v698, %v702
        %v705 = vadd.f32 %v674, %v703
        %v706 = vadd.f32 %v675, %v703
        %v707 = vadd.f32 %v676, %v703
        %v708 = vadd.f32 %v677, %v703
        %v709 = vadd.f32 %v678, %v703
        %v710 = vadd.f32 %v679, %v703
        %v711 = vadd.f32 %v680, %v703
        %v712 = vadd.f32 %v681, %v703
        %s713 = scalar_lea.vmem %s478, 64 [#allocation4]
        %v714 = vld [vmem:[%s713] sm:$0xff]
        %v715 = vld [vmem:[%s713 + $0x8] sm:$0xff]
        %v716 = vld [vmem:[%s713 + $0x10] sm:$0xff]
        %v717 = vld [vmem:[%s713 + $0x18] sm:$0xff]
        %v718 = vld [vmem:[%s713 + $0x20] sm:$0xff]
        %v719 = vld [vmem:[%s713 + $0x28] sm:$0xff]
        %v720 = vld [vmem:[%s713 + $0x30] sm:$0xff]
        %v721 = vld [vmem:[%s713 + $0x38] sm:$0xff]
        %v722 = vcombine.high %v689, %v689
        %v724 = vunpack.c.l.s4 1966171168
        %v725 = vunpack.c.0.s8 %v724
        %v726 = vlaneseq
        %v727 = vshrl.u32 %v726, 7
        %v728 = vsub.s32 %v725, %v727
        %v729 = vrot.slane %v722, %v728
        %v731 = vadd.f32 %v550, %v729
        %v733 = vlaneseq
        %v734 = vshrl.u32 %v733, 7
        %v735 = vsub.s32 0, %v734
        %v736 = vrot.slane %v731, %v735
        %v738 = vadd.f32 %v714, %v736
        %v739 = vadd.f32 %v715, %v736
        %v740 = vadd.f32 %v716, %v736
        %v741 = vadd.f32 %v717, %v736
        %v742 = vadd.f32 %v718, %v736
        %v743 = vadd.f32 %v719, %v736
        %v744 = vadd.f32 %v720, %v736
        %v745 = vadd.f32 %v721, %v736
        %vm746 = vcmask 261120
        %v747 = vsel %vm746, %v566, 0.0
        %748 = vadd.xlane.f32.xlu0 %v747
        %v749 = vpop.xlane.xlu0 %748
        %v750 = vsel %vm746, %v567, 0.0
        %751 = vadd.xlane.f32.xlu0 %v750
        %v752 = vpop.xlane.xlu0 %751
        %v753 = vsel %vm746, %v568, 0.0
        %754 = vadd.xlane.f32.xlu0 %v753
        %v755 = vpop.xlane.xlu0 %754
        %v756 = vsel %vm746, %v569, 0.0
        %757 = vadd.xlane.f32.xlu0 %v756
        %v758 = vpop.xlane.xlu0 %757
        %v759 = vsel %vm746, %v570, 0.0
        %760 = vadd.xlane.f32.xlu0 %v759
        %v761 = vpop.xlane.xlu0 %760
        %v762 = vsel %vm746, %v571, 0.0
        %763 = vadd.xlane.f32.xlu0 %v762
        %v764 = vpop.xlane.xlu0 %763
        %v765 = vsel %vm746, %v572, 0.0
        %766 = vadd.xlane.f32.xlu0 %v765
        %v767 = vpop.xlane.xlu0 %766
        %v768 = vsel %vm746, %v573, 0.0
        %769 = vadd.xlane.f32.xlu0 %v768
        %v770 = vpop.xlane.xlu0 %769
        %v771 = vsel %vm746, %v613, 0.0
        %772 = vadd.xlane.f32.xlu0 %v771
        %v773 = vpop.xlane.xlu0 %772
        %v774 = vsel %vm746, %v614, 0.0
        %775 = vadd.xlane.f32.xlu0 %v774
        %v776 = vpop.xlane.xlu0 %775
        %v777 = vsel %vm746, %v615, 0.0
        %778 = vadd.xlane.f32.xlu0 %v777
        %v779 = vpop.xlane.xlu0 %778
        %v780 = vsel %vm746, %v616, 0.0
        %781 = vadd.xlane.f32.xlu0 %v780
        %v782 = vpop.xlane.xlu0 %781
        %v783 = vsel %vm746, %v617, 0.0
        %784 = vadd.xlane.f32.xlu0 %v783
        %v785 = vpop.xlane.xlu0 %784
        %v786 = vsel %vm746, %v618, 0.0
        %787 = vadd.xlane.f32.xlu0 %v786
        %v788 = vpop.xlane.xlu0 %787
        %v789 = vsel %vm746, %v619, 0.0
        %790 = vadd.xlane.f32.xlu0 %v789
        %v791 = vpop.xlane.xlu0 %790
        %v792 = vsel %vm746, %v620, 0.0
        %793 = vadd.xlane.f32.xlu0 %v792
        %v794 = vpop.xlane.xlu0 %793
        %v795 = vsel %vm746, %v639, 0.0
        %796 = vadd.xlane.f32.xlu0 %v795
        %v797 = vpop.xlane.xlu0 %796
        %v798 = vsel %vm746, %v640, 0.0
        %799 = vadd.xlane.f32.xlu0 %v798
        %v800 = vpop.xlane.xlu0 %799
        %v801 = vsel %vm746, %v641, 0.0
        %802 = vadd.xlane.f32.xlu0 %v801
        %v803 = vpop.xlane.xlu0 %802
        %v804 = vsel %vm746, %v642, 0.0
        %805 = vadd.xlane.f32.xlu0 %v804
        %v806 = vpop.xlane.xlu0 %805
        %v807 = vsel %vm746, %v643, 0.0
        %808 = vadd.xlane.f32.xlu0 %v807
        %v809 = vpop.xlane.xlu0 %808
        %v810 = vsel %vm746, %v644, 0.0
        %811 = vadd.xlane.f32.xlu0 %v810
        %v812 = vpop.xlane.xlu0 %811
        %v813 = vsel %vm746, %v645, 0.0
        %814 = vadd.xlane.f32.xlu0 %v813
        %v815 = vpop.xlane.xlu0 %814
        %v816 = vsel %vm746, %v646, 0.0
        %817 = vadd.xlane.f32.xlu0 %v816
        %v818 = vpop.xlane.xlu0 %817
        %v819 = vsel %vm746, %v665, 0.0
        %820 = vadd.xlane.f32.xlu0 %v819
        %v821 = vpop.xlane.xlu0 %820
        %v822 = vsel %vm746, %v666, 0.0
        %823 = vadd.xlane.f32.xlu0 %v822
        %v824 = vpop.xlane.xlu0 %823
        %v825 = vsel %vm746, %v667, 0.0
        %826 = vadd.xlane.f32.xlu0 %v825
        %v827 = vpop.xlane.xlu0 %826
        %v828 = vsel %vm746, %v668, 0.0
        %829 = vadd.xlane.f32.xlu0 %v828
        %v830 = vpop.xlane.xlu0 %829
        %v831 = vsel %vm746, %v669, 0.0
        %832 = vadd.xlane.f32.xlu0 %v831
        %v833 = vpop.xlane.xlu0 %832
        %v834 = vsel %vm746, %v670, 0.0
        %835 = vadd.xlane.f32.xlu0 %v834
        %v836 = vpop.xlane.xlu0 %835
        %v837 = vsel %vm746, %v671, 0.0
        %838 = vadd.xlane.f32.xlu0 %v837
        %v839 = vpop.xlane.xlu0 %838
        %v840 = vsel %vm746, %v672, 0.0
        %841 = vadd.xlane.f32.xlu0 %v840
        %v842 = vpop.xlane.xlu0 %841
        %v843 = vsel %vm746, %v705, 0.0
        %844 = vadd.xlane.f32.xlu0 %v843
        %v845 = vpop.xlane.xlu0 %844
        %v846 = vsel %vm746, %v706, 0.0
        %847 = vadd.xlane.f32.xlu0 %v846
        %v848 = vpop.xlane.xlu0 %847
        %v849 = vsel %vm746, %v707, 0.0
        %850 = vadd.xlane.f32.xlu0 %v849
        %v851 = vpop.xlane.xlu0 %850
        %v852 = vsel %vm746, %v708, 0.0
        %853 = vadd.xlane.f32.xlu0 %v852
        %v854 = vpop.xlane.xlu0 %853
        %v855 = vsel %vm746, %v709, 0.0
        %856 = vadd.xlane.f32.xlu0 %v855
        %v857 = vpop.xlane.xlu0 %856
        %v858 = vsel %vm746, %v710, 0.0
        %859 = vadd.xlane.f32.xlu0 %v858
        %v860 = vpop.xlane.xlu0 %859
        %v861 = vsel %vm746, %v711, 0.0
        %862 = vadd.xlane.f32.xlu0 %v861
        %v863 = vpop.xlane.xlu0 %862
        %v864 = vsel %vm746, %v712, 0.0
        %865 = vadd.xlane.f32.xlu0 %v864
        %v866 = vpop.xlane.xlu0 %865
        %v867 = vsel %vm746, %v738, 0.0
        %868 = vadd.xlane.f32.xlu0 %v867
        %v869 = vpop.xlane.xlu0 %868
        %v870 = vsel %vm746, %v739, 0.0
        %871 = vadd.xlane.f32.xlu0 %v870
        %v872 = vpop.xlane.xlu0 %871
        %v873 = vsel %vm746, %v740, 0.0
        %874 = vadd.xlane.f32.xlu0 %v873
        %v875 = vpop.xlane.xlu0 %874
        %v876 = vsel %vm746, %v741, 0.0
        %877 = vadd.xlane.f32.xlu0 %v876
        %v878 = vpop.xlane.xlu0 %877
        %v879 = vsel %vm746, %v742, 0.0
        %880 = vadd.xlane.f32.xlu0 %v879
        %v881 = vpop.xlane.xlu0 %880
        %v882 = vsel %vm746, %v743, 0.0
        %883 = vadd.xlane.f32.xlu0 %v882
        %v884 = vpop.xlane.xlu0 %883
        %v885 = vsel %vm746, %v744, 0.0
        %886 = vadd.xlane.f32.xlu0 %v885
        %v887 = vpop.xlane.xlu0 %886
        %v888 = vsel %vm746, %v745, 0.0
        %889 = vadd.xlane.f32.xlu0 %v888
        %v890 = vpop.xlane.xlu0 %889
        %v891 = vrcp.pop 32.0
        %v892 = vmul.f32 %v749, %v891
        %v893 = vmul.f32 %v752, %v891
        %v894 = vmul.f32 %v755, %v891
        %v895 = vmul.f32 %v758, %v891
        %v896 = vmul.f32 %v761, %v891
        %v897 = vmul.f32 %v764, %v891
        %v898 = vmul.f32 %v767, %v891
        %v899 = vmul.f32 %v770, %v891
        %v900 = vmul.f32 %v773, %v891
        %v901 = vmul.f32 %v776, %v891
        %v902 = vmul.f32 %v779, %v891
        %v903 = vmul.f32 %v782, %v891
        %v904 = vmul.f32 %v785, %v891
        %v905 = vmul.f32 %v788, %v891
        %v906 = vmul.f32 %v791, %v891
        %v907 = vmul.f32 %v794, %v891
        %v908 = vmul.f32 %v797, %v891
        %v909 = vmul.f32 %v800, %v891
        %v910 = vmul.f32 %v803, %v891
        %v911 = vmul.f32 %v806, %v891
        %v912 = vmul.f32 %v809, %v891
        %v913 = vmul.f32 %v812, %v891
        %v914 = vmul.f32 %v815, %v891
        %v915 = vmul.f32 %v818, %v891
        %v916 = vmul.f32 %v821, %v891
        %v917 = vmul.f32 %v824, %v891
        %v918 = vmul.f32 %v827, %v891
        %v919 = vmul.f32 %v830, %v891
        %v920 = vmul.f32 %v833, %v891
        %v921 = vmul.f32 %v836, %v891
        %v922 = vmul.f32 %v839, %v891
        %v923 = vmul.f32 %v842, %v891
        %v924 = vmul.f32 %v845, %v891
        %v925 = vmul.f32 %v848, %v891
        %v926 = vmul.f32 %v851, %v891
        %v927 = vmul.f32 %v854, %v891
        %v928 = vmul.f32 %v857, %v891
        %v929 = vmul.f32 %v860, %v891
        %v930 = vmul.f32 %v863, %v891
        %v931 = vmul.f32 %v866, %v891
        %v932 = vmul.f32 %v869, %v891
        %v933 = vmul.f32 %v872, %v891
        %v934 = vmul.f32 %v875, %v891
        %v935 = vmul.f32 %v878, %v891
        %v936 = vmul.f32 %v881, %v891
        %v937 = vmul.f32 %v884, %v891
        %v938 = vmul.f32 %v887, %v891
        %v939 = vmul.f32 %v890, %v891
        %v940 = vsub.f32 %v566, %v892
        %v941 = vsub.f32 %v567, %v893
        %v942 = vsub.f32 %v568, %v894
        %v943 = vsub.f32 %v569, %v895
        %v944 = vsub.f32 %v570, %v896
        %v945 = vsub.f32 %v571, %v897
        %v946 = vsub.f32 %v572, %v898
        %v947 = vsub.f32 %v573, %v899
        %v948 = vsub.f32 %v613, %v900
        %v949 = vsub.f32 %v614, %v901
        %v950 = vsub.f32 %v615, %v902
        %v951 = vsub.f32 %v616, %v903
        %v952 = vsub.f32 %v617, %v904
        %v953 = vsub.f32 %v618, %v905
        %v954 = vsub.f32 %v619, %v906
        %v955 = vsub.f32 %v620, %v907
        %v956 = vsub.f32 %v639, %v908
        %v957 = vsub.f32 %v640, %v909
        %v958 = vsub.f32 %v641, %v910
        %v959 = vsub.f32 %v642, %v911
        %v960 = vsub.f32 %v643, %v912
        %v961 = vsub.f32 %v644, %v913
        %v962 = vsub.f32 %v645, %v914
        %v963 = vsub.f32 %v646, %v915
        %v964 = vsub.f32 %v665, %v916
        %v965 = vsub.f32 %v666, %v917
        %v966 = vsub.f32 %v667, %v918
        %v967 = vsub.f32 %v668, %v919
        %v968 = vsub.f32 %v669, %v920
        %v969 = vsub.f32 %v670, %v921
        %v970 = vsub.f32 %v671, %v922
        %v971 = vsub.f32 %v672, %v923
        %v972 = vsub.f32 %v705, %v924
        %v973 = vsub.f32 %v706, %v925
        %v974 = vsub.f32 %v707, %v926
        %v975 = vsub.f32 %v708, %v927
        %v976 = vsub.f32 %v709, %v928
        %v977 = vsub.f32 %v710, %v929
        %v978 = vsub.f32 %v711, %v930
        %v979 = vsub.f32 %v712, %v931
        %v980 = vsub.f32 %v738, %v932
        %v981 = vsub.f32 %v739, %v933
        %v982 = vsub.f32 %v740, %v934
        %v983 = vsub.f32 %v741, %v935
        %v984 = vsub.f32 %v742, %v936
        %v985 = vsub.f32 %v743, %v937
        %v986 = vsub.f32 %v744, %v938
        %v987 = vsub.f32 %v745, %v939
        %v988 = vmul.f32 %v940, %v940
        %v989 = vmul.f32 %v941, %v941
        %v990 = vmul.f32 %v942, %v942
        %v991 = vmul.f32 %v943, %v943
        %v992 = vmul.f32 %v944, %v944
        %v993 = vmul.f32 %v945, %v945
        %v994 = vmul.f32 %v946, %v946
        %v995 = vmul.f32 %v947, %v947
        %v996 = vmul.f32 %v948, %v948
        %v997 = vmul.f32 %v949, %v949
        %v998 = vmul.f32 %v950, %v950
        %v999 = vmul.f32 %v951, %v951
        %v1000 = vmul.f32 %v952, %v952
        %v1001 = vmul.f32 %v953, %v953
        %v1002 = vmul.f32 %v954, %v954
        %v1003 = vmul.f32 %v955, %v955
        %v1004 = vmul.f32 %v956, %v956
        %v1005 = vmul.f32 %v957, %v957
        %v1006 = vmul.f32 %v958, %v958
        %v1007 = vmul.f32 %v959, %v959
        %v1008 = vmul.f32 %v960, %v960
        %v1009 = vmul.f32 %v961, %v961
        %v1010 = vmul.f32 %v962, %v962
        %v1011 = vmul.f32 %v963, %v963
        %v1012 = vmul.f32 %v964, %v964
        %v1013 = vmul.f32 %v965, %v965
        %v1014 = vmul.f32 %v966, %v966
        %v1015 = vmul.f32 %v967, %v967
        %v1016 = vmul.f32 %v968, %v968
        %v1017 = vmul.f32 %v969, %v969
        %v1018 = vmul.f32 %v970, %v970
        %v1019 = vmul.f32 %v971, %v971
        %v1020 = vmul.f32 %v972, %v972
        %v1021 = vmul.f32 %v973, %v973
        %v1022 = vmul.f32 %v974, %v974
        %v1023 = vmul.f32 %v975, %v975
        %v1024 = vmul.f32 %v976, %v976
        %v1025 = vmul.f32 %v977, %v977
        %v1026 = vmul.f32 %v978, %v978
        %v1027 = vmul.f32 %v979, %v979
        %v1028 = vmul.f32 %v980, %v980
        %v1029 = vmul.f32 %v981, %v981
        %v1030 = vmul.f32 %v982, %v982
        %v1031 = vmul.f32 %v983, %v983
        %v1032 = vmul.f32 %v984, %v984
        %v1033 = vmul.f32 %v985, %v985
        %v1034 = vmul.f32 %v986, %v986
        %v1035 = vmul.f32 %v987, %v987
        %v1036 = vsel %vm746, %v988, 0.0
        %1037 = vadd.xlane.f32.xlu0 %v1036
        %v1038 = vpop.xlane.xlu0 %1037
        %v1039 = vsel %vm746, %v989, 0.0
        %1040 = vadd.xlane.f32.xlu0 %v1039
        %v1041 = vpop.xlane.xlu0 %1040
        %v1042 = vsel %vm746, %v990, 0.0
        %1043 = vadd.xlane.f32.xlu0 %v1042
        %v1044 = vpop.xlane.xlu0 %1043
        %v1045 = vsel %vm746, %v991, 0.0
        %1046 = vadd.xlane.f32.xlu0 %v1045
        %v1047 = vpop.xlane.xlu0 %1046
        %v1048 = vsel %vm746, %v992, 0.0
        %1049 = vadd.xlane.f32.xlu0 %v1048
        %v1050 = vpop.xlane.xlu0 %1049
        %v1051 = vsel %vm746, %v993, 0.0
        %1052 = vadd.xlane.f32.xlu0 %v1051
        %v1053 = vpop.xlane.xlu0 %1052
        %v1054 = vsel %vm746, %v994, 0.0
        %1055 = vadd.xlane.f32.xlu0 %v1054
        %v1056 = vpop.xlane.xlu0 %1055
        %v1057 = vsel %vm746, %v995, 0.0
        %1058 = vadd.xlane.f32.xlu0 %v1057
        %v1059 = vpop.xlane.xlu0 %1058
        %v1060 = vsel %vm746, %v996, 0.0
        %1061 = vadd.xlane.f32.xlu0 %v1060
        %v1062 = vpop.xlane.xlu0 %1061
        %v1063 = vsel %vm746, %v997, 0.0
        %1064 = vadd.xlane.f32.xlu0 %v1063
        %v1065 = vpop.xlane.xlu0 %1064
        %v1066 = vsel %vm746, %v998, 0.0
        %1067 = vadd.xlane.f32.xlu0 %v1066
        %v1068 = vpop.xlane.xlu0 %1067
        %v1069 = vsel %vm746, %v999, 0.0
        %1070 = vadd.xlane.f32.xlu0 %v1069
        %v1071 = vpop.xlane.xlu0 %1070
        %v1072 = vsel %vm746, %v1000, 0.0
        %1073 = vadd.xlane.f32.xlu0 %v1072
        %v1074 = vpop.xlane.xlu0 %1073
        %v1075 = vsel %vm746, %v1001, 0.0
        %1076 = vadd.xlane.f32.xlu0 %v1075
        %v1077 = vpop.xlane.xlu0 %1076
        %v1078 = vsel %vm746, %v1002, 0.0
        %1079 = vadd.xlane.f32.xlu0 %v1078
        %v1080 = vpop.xlane.xlu0 %1079
        %v1081 = vsel %vm746, %v1003, 0.0
        %1082 = vadd.xlane.f32.xlu0 %v1081
        %v1083 = vpop.xlane.xlu0 %1082
        %v1084 = vsel %vm746, %v1004, 0.0
        %1085 = vadd.xlane.f32.xlu0 %v1084
        %v1086 = vpop.xlane.xlu0 %1085
        %v1087 = vsel %vm746, %v1005, 0.0
        %1088 = vadd.xlane.f32.xlu0 %v1087
        %v1089 = vpop.xlane.xlu0 %1088
        %v1090 = vsel %vm746, %v1006, 0.0
        %1091 = vadd.xlane.f32.xlu0 %v1090
        %v1092 = vpop.xlane.xlu0 %1091
        %v1093 = vsel %vm746, %v1007, 0.0
        %1094 = vadd.xlane.f32.xlu0 %v1093
        %v1095 = vpop.xlane.xlu0 %1094
        %v1096 = vsel %vm746, %v1008, 0.0
        %1097 = vadd.xlane.f32.xlu0 %v1096
        %v1098 = vpop.xlane.xlu0 %1097
        %v1099 = vsel %vm746, %v1009, 0.0
        %1100 = vadd.xlane.f32.xlu0 %v1099
        %v1101 = vpop.xlane.xlu0 %1100
        %v1102 = vsel %vm746, %v1010, 0.0
        %1103 = vadd.xlane.f32.xlu0 %v1102
        %v1104 = vpop.xlane.xlu0 %1103
        %v1105 = vsel %vm746, %v1011, 0.0
        %1106 = vadd.xlane.f32.xlu0 %v1105
        %v1107 = vpop.xlane.xlu0 %1106
        %v1108 = vsel %vm746, %v1012, 0.0
        %1109 = vadd.xlane.f32.xlu0 %v1108
        %v1110 = vpop.xlane.xlu0 %1109
        %v1111 = vsel %vm746, %v1013, 0.0
        %1112 = vadd.xlane.f32.xlu0 %v1111
        %v1113 = vpop.xlane.xlu0 %1112
        %v1114 = vsel %vm746, %v1014, 0.0
        %1115 = vadd.xlane.f32.xlu0 %v1114
        %v1116 = vpop.xlane.xlu0 %1115
        %v1117 = vsel %vm746, %v1015, 0.0
        %1118 = vadd.xlane.f32.xlu0 %v1117
        %v1119 = vpop.xlane.xlu0 %1118
        %v1120 = vsel %vm746, %v1016, 0.0
        %1121 = vadd.xlane.f32.xlu0 %v1120
        %v1122 = vpop.xlane.xlu0 %1121
        %v1123 = vsel %vm746, %v1017, 0.0
        %1124 = vadd.xlane.f32.xlu0 %v1123
        %v1125 = vpop.xlane.xlu0 %1124
        %v1126 = vsel %vm746, %v1018, 0.0
        %1127 = vadd.xlane.f32.xlu0 %v1126
        %v1128 = vpop.xlane.xlu0 %1127
        %v1129 = vsel %vm746, %v1019, 0.0
        %1130 = vadd.xlane.f32.xlu0 %v1129
        %v1131 = vpop.xlane.xlu0 %1130
        %v1132 = vsel %vm746, %v1020, 0.0
        %1133 = vadd.xlane.f32.xlu0 %v1132
        %v1134 = vpop.xlane.xlu0 %1133
        %v1135 = vsel %vm746, %v1021, 0.0
        %1136 = vadd.xlane.f32.xlu0 %v1135
        %v1137 = vpop.xlane.xlu0 %1136
        %v1138 = vsel %vm746, %v1022, 0.0
        %1139 = vadd.xlane.f32.xlu0 %v1138
        %v1140 = vpop.xlane.xlu0 %1139
        %v1141 = vsel %vm746, %v1023, 0.0
        %1142 = vadd.xlane.f32.xlu0 %v1141
        %v1143 = vpop.xlane.xlu0 %1142
        %v1144 = vsel %vm746, %v1024, 0.0
        %1145 = vadd.xlane.f32.xlu0 %v1144
        %v1146 = vpop.xlane.xlu0 %1145
        %v1147 = vsel %vm746, %v1025, 0.0
        %1148 = vadd.xlane.f32.xlu0 %v1147
        %v1149 = vpop.xlane.xlu0 %1148
        %v1150 = vsel %vm746, %v1026, 0.0
        %1151 = vadd.xlane.f32.xlu0 %v1150
        %v1152 = vpop.xlane.xlu0 %1151
        %v1153 = vsel %vm746, %v1027, 0.0
        %1154 = vadd.xlane.f32.xlu0 %v1153
        %v1155 = vpop.xlane.xlu0 %1154
        %v1156 = vsel %vm746, %v1028, 0.0
        %1157 = vadd.xlane.f32.xlu0 %v1156
        %v1158 = vpop.xlane.xlu0 %1157
        %v1159 = vsel %vm746, %v1029, 0.0
        %1160 = vadd.xlane.f32.xlu0 %v1159
        %v1161 = vpop.xlane.xlu0 %1160
        %v1162 = vsel %vm746, %v1030, 0.0
        %1163 = vadd.xlane.f32.xlu0 %v1162
        %v1164 = vpop.xlane.xlu0 %1163
        %v1165 = vsel %vm746, %v1031, 0.0
        %1166 = vadd.xlane.f32.xlu0 %v1165
        %v1167 = vpop.xlane.xlu0 %1166
        %v1168 = vsel %vm746, %v1032, 0.0
        %1169 = vadd.xlane.f32.xlu0 %v1168
        %v1170 = vpop.xlane.xlu0 %1169
        %v1171 = vsel %vm746, %v1033, 0.0
        %1172 = vadd.xlane.f32.xlu0 %v1171
        %v1173 = vpop.xlane.xlu0 %1172
        %v1174 = vsel %vm746, %v1034, 0.0
        %1175 = vadd.xlane.f32.xlu0 %v1174
        %v1176 = vpop.xlane.xlu0 %1175
        %v1177 = vsel %vm746, %v1035, 0.0
        %1178 = vadd.xlane.f32.xlu0 %v1177
        %v1179 = vpop.xlane.xlu0 %1178
        %v1180 = vmul.f32 %v1038, %v891
        %v1181 = vmul.f32 %v1041, %v891
        %v1182 = vmul.f32 %v1044, %v891
        %v1183 = vmul.f32 %v1047, %v891
        %v1184 = vmul.f32 %v1050, %v891
        %v1185 = vmul.f32 %v1053, %v891
        %v1186 = vmul.f32 %v1056, %v891
        %v1187 = vmul.f32 %v1059, %v891
        %v1188 = vmul.f32 %v1062, %v891
        %v1189 = vmul.f32 %v1065, %v891
        %v1190 = vmul.f32 %v1068, %v891
        %v1191 = vmul.f32 %v1071, %v891
        %v1192 = vmul.f32 %v1074, %v891
        %v1193 = vmul.f32 %v1077, %v891
        %v1194 = vmul.f32 %v1080, %v891
        %v1195 = vmul.f32 %v1083, %v891
        %v1196 = vmul.f32 %v1086, %v891
        %v1197 = vmul.f32 %v1089, %v891
        %v1198 = vmul.f32 %v1092, %v891
        %v1199 = vmul.f32 %v1095, %v891
        %v1200 = vmul.f32 %v1098, %v891
        %v1201 = vmul.f32 %v1101, %v891
        %v1202 = vmul.f32 %v1104, %v891
        %v1203 = vmul.f32 %v1107, %v891
        %v1204 = vmul.f32 %v1110, %v891
        %v1205 = vmul.f32 %v1113, %v891
        %v1206 = vmul.f32 %v1116, %v891
        %v1207 = vmul.f32 %v1119, %v891
        %v1208 = vmul.f32 %v1122, %v891
        %v1209 = vmul.f32 %v1125, %v891
        %v1210 = vmul.f32 %v1128, %v891
        %v1211 = vmul.f32 %v1131, %v891
        %v1212 = vmul.f32 %v1134, %v891
        %v1213 = vmul.f32 %v1137, %v891
        %v1214 = vmul.f32 %v1140, %v891
        %v1215 = vmul.f32 %v1143, %v891
        %v1216 = vmul.f32 %v1146, %v891
        %v1217 = vmul.f32 %v1149, %v891
        %v1218 = vmul.f32 %v1152, %v891
        %v1219 = vmul.f32 %v1155, %v891
        %v1220 = vmul.f32 %v1158, %v891
        %v1221 = vmul.f32 %v1161, %v891
        %v1222 = vmul.f32 %v1164, %v891
        %v1223 = vmul.f32 %v1167, %v891
        %v1224 = vmul.f32 %v1170, %v891
        %v1225 = vmul.f32 %v1173, %v891
        %v1226 = vmul.f32 %v1176, %v891
        %v1227 = vmul.f32 %v1179, %v891
        %v1228 = vadd.f32 %v1180, 1e-05
        %v1229 = vadd.f32 %v1181, 1e-05
        %v1230 = vadd.f32 %v1182, 1e-05
        %v1231 = vadd.f32 %v1183, 1e-05
        %v1232 = vadd.f32 %v1184, 1e-05
        %v1233 = vadd.f32 %v1185, 1e-05
        %v1234 = vadd.f32 %v1186, 1e-05
        %v1235 = vadd.f32 %v1187, 1e-05
        %v1236 = vadd.f32 %v1188, 1e-05
        %v1237 = vadd.f32 %v1189, 1e-05
        %v1238 = vadd.f32 %v1190, 1e-05
        %v1239 = vadd.f32 %v1191, 1e-05
        %v1240 = vadd.f32 %v1192, 1e-05
        %v1241 = vadd.f32 %v1193, 1e-05
        %v1242 = vadd.f32 %v1194, 1e-05
        %v1243 = vadd.f32 %v1195, 1e-05
        %v1244 = vadd.f32 %v1196, 1e-05
        %v1245 = vadd.f32 %v1197, 1e-05
        %v1246 = vadd.f32 %v1198, 1e-05
        %v1247 = vadd.f32 %v1199, 1e-05
        %v1248 = vadd.f32 %v1200, 1e-05
        %v1249 = vadd.f32 %v1201, 1e-05
        %v1250 = vadd.f32 %v1202, 1e-05
        %v1251 = vadd.f32 %v1203, 1e-05
        %v1252 = vadd.f32 %v1204, 1e-05
        %v1253 = vadd.f32 %v1205, 1e-05
        %v1254 = vadd.f32 %v1206, 1e-05
        %v1255 = vadd.f32 %v1207, 1e-05
        %v1256 = vadd.f32 %v1208, 1e-05
        %v1257 = vadd.f32 %v1209, 1e-05
        %v1258 = vadd.f32 %v1210, 1e-05
        %v1259 = vadd.f32 %v1211, 1e-05
        %v1260 = vadd.f32 %v1212, 1e-05
        %v1261 = vadd.f32 %v1213, 1e-05
        %v1262 = vadd.f32 %v1214, 1e-05
        %v1263 = vadd.f32 %v1215, 1e-05
        %v1264 = vadd.f32 %v1216, 1e-05
        %v1265 = vadd.f32 %v1217, 1e-05
        %v1266 = vadd.f32 %v1218, 1e-05
        %v1267 = vadd.f32 %v1219, 1e-05
        %v1268 = vadd.f32 %v1220, 1e-05
        %v1269 = vadd.f32 %v1221, 1e-05
        %v1270 = vadd.f32 %v1222, 1e-05
        %v1271 = vadd.f32 %v1223, 1e-05
        %v1272 = vadd.f32 %v1224, 1e-05
        %v1273 = vadd.f32 %v1225, 1e-05
        %v1274 = vadd.f32 %v1226, 1e-05
        %v1275 = vadd.f32 %v1227, 1e-05
        %v1276 = vrsqrt.pop %v1228
        %v1277 = vrsqrt.pop %v1229
        %v1278 = vrsqrt.pop %v1230
        %v1279 = vrsqrt.pop %v1231
        %v1280 = vrsqrt.pop %v1232
        %v1281 = vrsqrt.pop %v1233
        %v1282 = vrsqrt.pop %v1234
        %v1283 = vrsqrt.pop %v1235
        %v1284 = vrsqrt.pop %v1236
        %v1285 = vrsqrt.pop %v1237
        %v1286 = vrsqrt.pop %v1238
        %v1287 = vrsqrt.pop %v1239
        %v1288 = vrsqrt.pop %v1240
        %v1289 = vrsqrt.pop %v1241
        %v1290 = vrsqrt.pop %v1242
        %v1291 = vrsqrt.pop %v1243
        %v1292 = vrsqrt.pop %v1244
        %v1293 = vrsqrt.pop %v1245
        %v1294 = vrsqrt.pop %v1246
        %v1295 = vrsqrt.pop %v1247
        %v1296 = vrsqrt.pop %v1248
        %v1297 = vrsqrt.pop %v1249
        %v1298 = vrsqrt.pop %v1250
        %v1299 = vrsqrt.pop %v1251
        %v1300 = vrsqrt.pop %v1252
        %v1301 = vrsqrt.pop %v1253
        %v1302 = vrsqrt.pop %v1254
        %v1303 = vrsqrt.pop %v1255
        %v1304 = vrsqrt.pop %v1256
        %v1305 = vrsqrt.pop %v1257
        %v1306 = vrsqrt.pop %v1258
        %v1307 = vrsqrt.pop %v1259
        %v1308 = vrsqrt.pop %v1260
        %v1309 = vrsqrt.pop %v1261
        %v1310 = vrsqrt.pop %v1262
        %v1311 = vrsqrt.pop %v1263
        %v1312 = vrsqrt.pop %v1264
        %v1313 = vrsqrt.pop %v1265
        %v1314 = vrsqrt.pop %v1266
        %v1315 = vrsqrt.pop %v1267
        %v1316 = vrsqrt.pop %v1268
        %v1317 = vrsqrt.pop %v1269
        %v1318 = vrsqrt.pop %v1270
        %v1319 = vrsqrt.pop %v1271
        %v1320 = vrsqrt.pop %v1272
        %v1321 = vrsqrt.pop %v1273
        %v1322 = vrsqrt.pop %v1274
        %v1323 = vrsqrt.pop %v1275
        %v1324 = vmul.f32 %v940, %v1276
        %v1325 = vmul.f32 %v941, %v1277
        %v1326 = vmul.f32 %v942, %v1278
        %v1327 = vmul.f32 %v943, %v1279
        %v1328 = vmul.f32 %v944, %v1280
        %v1329 = vmul.f32 %v945, %v1281
        %v1330 = vmul.f32 %v946, %v1282
        %v1331 = vmul.f32 %v947, %v1283
        %v1332 = vmul.f32 %v948, %v1284
        %v1333 = vmul.f32 %v949, %v1285
        %v1334 = vmul.f32 %v950, %v1286
        %v1335 = vmul.f32 %v951, %v1287
        %v1336 = vmul.f32 %v952, %v1288
        %v1337 = vmul.f32 %v953, %v1289
        %v1338 = vmul.f32 %v954, %v1290
        %v1339 = vmul.f32 %v955, %v1291
        %v1340 = vmul.f32 %v956, %v1292
        %v1341 = vmul.f32 %v957, %v1293
        %v1342 = vmul.f32 %v958, %v1294
        %v1343 = vmul.f32 %v959, %v1295
        %v1344 = vmul.f32 %v960, %v1296
        %v1345 = vmul.f32 %v961, %v1297
        %v1346 = vmul.f32 %v962, %v1298
        %v1347 = vmul.f32 %v963, %v1299
        %v1348 = vmul.f32 %v964, %v1300
        %v1349 = vmul.f32 %v965, %v1301
        %v1350 = vmul.f32 %v966, %v1302
        %v1351 = vmul.f32 %v967, %v1303
        %v1352 = vmul.f32 %v968, %v1304
        %v1353 = vmul.f32 %v969, %v1305
        %v1354 = vmul.f32 %v970, %v1306
        %v1355 = vmul.f32 %v971, %v1307
        %v1356 = vmul.f32 %v972, %v1308
        %v1357 = vmul.f32 %v973, %v1309
        %v1358 = vmul.f32 %v974, %v1310
        %v1359 = vmul.f32 %v975, %v1311
        %v1360 = vmul.f32 %v976, %v1312
        %v1361 = vmul.f32 %v977, %v1313
        %v1362 = vmul.f32 %v978, %v1314
        %v1363 = vmul.f32 %v979, %v1315
        %v1364 = vmul.f32 %v980, %v1316
        %v1365 = vmul.f32 %v981, %v1317
        %v1366 = vmul.f32 %v982, %v1318
        %v1367 = vmul.f32 %v983, %v1319
        %v1368 = vmul.f32 %v984, %v1320
        %v1369 = vmul.f32 %v985, %v1321
        %v1370 = vmul.f32 %v986, %v1322
        %v1371 = vmul.f32 %v987, %v1323
        %v1372 = vld [vmem:[%s4] sm:$0x1]
        %v1374 = vlaneseq
        %v1375 = vshrl.u32 %v1374, 7
        %v1376 = vsub.s32 0, %v1375
        %v1377 = vrot.slane %v1372, %v1376
        %v1379 = vmul.f32 %v1324, %v1377
        %v1380 = vmul.f32 %v1325, %v1377
        %v1381 = vmul.f32 %v1326, %v1377
        %v1382 = vmul.f32 %v1327, %v1377
        %v1383 = vmul.f32 %v1328, %v1377
        %v1384 = vmul.f32 %v1329, %v1377
        %v1385 = vmul.f32 %v1330, %v1377
        %v1386 = vmul.f32 %v1331, %v1377
        %v1387 = vmul.f32 %v1332, %v1377
        %v1388 = vmul.f32 %v1333, %v1377
        %v1389 = vmul.f32 %v1334, %v1377
        %v1390 = vmul.f32 %v1335, %v1377
        %v1391 = vmul.f32 %v1336, %v1377
        %v1392 = vmul.f32 %v1337, %v1377
        %v1393 = vmul.f32 %v1338, %v1377
        %v1394 = vmul.f32 %v1339, %v1377
        %v1395 = vmul.f32 %v1340, %v1377
        %v1396 = vmul.f32 %v1341, %v1377
        %v1397 = vmul.f32 %v1342, %v1377
        %v1398 = vmul.f32 %v1343, %v1377
        %v1399 = vmul.f32 %v1344, %v1377
        %v1400 = vmul.f32 %v1345, %v1377
        %v1401 = vmul.f32 %v1346, %v1377
        %v1402 = vmul.f32 %v1347, %v1377
        %v1403 = vmul.f32 %v1348, %v1377
        %v1404 = vmul.f32 %v1349, %v1377
        %v1405 = vmul.f32 %v1350, %v1377
        %v1406 = vmul.f32 %v1351, %v1377
        %v1407 = vmul.f32 %v1352, %v1377
        %v1408 = vmul.f32 %v1353, %v1377
        %v1409 = vmul.f32 %v1354, %v1377
        %v1410 = vmul.f32 %v1355, %v1377
        %v1411 = vmul.f32 %v1356, %v1377
        %v1412 = vmul.f32 %v1357, %v1377
        %v1413 = vmul.f32 %v1358, %v1377
        %v1414 = vmul.f32 %v1359, %v1377
        %v1415 = vmul.f32 %v1360, %v1377
        %v1416 = vmul.f32 %v1361, %v1377
        %v1417 = vmul.f32 %v1362, %v1377
        %v1418 = vmul.f32 %v1363, %v1377
        %v1419 = vmul.f32 %v1364, %v1377
        %v1420 = vmul.f32 %v1365, %v1377
        %v1421 = vmul.f32 %v1366, %v1377
        %v1422 = vmul.f32 %v1367, %v1377
        %v1423 = vmul.f32 %v1368, %v1377
        %v1424 = vmul.f32 %v1369, %v1377
        %v1425 = vmul.f32 %v1370, %v1377
        %v1426 = vmul.f32 %v1371, %v1377
        %v1427 = vld [vmem:[%s5] sm:$0x1]
        %v1429 = vlaneseq
        %v1430 = vshrl.u32 %v1429, 7
        %v1431 = vsub.s32 0, %v1430
        %v1432 = vrot.slane %v1427, %v1431
        %v1434 = vadd.f32 %v1379, %v1432
        %v1435 = vadd.f32 %v1380, %v1432
        %v1436 = vadd.f32 %v1381, %v1432
        %v1437 = vadd.f32 %v1382, %v1432
        %v1438 = vadd.f32 %v1383, %v1432
        %v1439 = vadd.f32 %v1384, %v1432
        %v1440 = vadd.f32 %v1385, %v1432
        %v1441 = vadd.f32 %v1386, %v1432
        %v1442 = vadd.f32 %v1387, %v1432
        %v1443 = vadd.f32 %v1388, %v1432
        %v1444 = vadd.f32 %v1389, %v1432
        %v1445 = vadd.f32 %v1390, %v1432
        %v1446 = vadd.f32 %v1391, %v1432
        %v1447 = vadd.f32 %v1392, %v1432
        %v1448 = vadd.f32 %v1393, %v1432
        %v1449 = vadd.f32 %v1394, %v1432
        %v1450 = vadd.f32 %v1395, %v1432
        %v1451 = vadd.f32 %v1396, %v1432
        %v1452 = vadd.f32 %v1397, %v1432
        %v1453 = vadd.f32 %v1398, %v1432
        %v1454 = vadd.f32 %v1399, %v1432
        %v1455 = vadd.f32 %v1400, %v1432
        %v1456 = vadd.f32 %v1401, %v1432
        %v1457 = vadd.f32 %v1402, %v1432
        %v1458 = vadd.f32 %v1403, %v1432
        %v1459 = vadd.f32 %v1404, %v1432
        %v1460 = vadd.f32 %v1405, %v1432
        %v1461 = vadd.f32 %v1406, %v1432
        %v1462 = vadd.f32 %v1407, %v1432
        %v1463 = vadd.f32 %v1408, %v1432
        %v1464 = vadd.f32 %v1409, %v1432
        %v1465 = vadd.f32 %v1410, %v1432
        %v1466 = vadd.f32 %v1411, %v1432
        %v1467 = vadd.f32 %v1412, %v1432
        %v1468 = vadd.f32 %v1413, %v1432
        %v1469 = vadd.f32 %v1414, %v1432
        %v1470 = vadd.f32 %v1415, %v1432
        %v1471 = vadd.f32 %v1416, %v1432
        %v1472 = vadd.f32 %v1417, %v1432
        %v1473 = vadd.f32 %v1418, %v1432
        %v1474 = vadd.f32 %v1419, %v1432
        %v1475 = vadd.f32 %v1420, %v1432
        %v1476 = vadd.f32 %v1421, %v1432
        %v1477 = vadd.f32 %v1422, %v1432
        %v1478 = vadd.f32 %v1423, %v1432
        %v1479 = vadd.f32 %v1424, %v1432
        %v1480 = vadd.f32 %v1425, %v1432
        %v1481 = vadd.f32 %v1426, %v1432
        %v1482 = vpack.c.bf16 %v1435, %v1434
        %v1483 = vpack.c.bf16 %v1437, %v1436
        %v1484 = vpack.c.bf16 %v1439, %v1438
        %v1485 = vpack.c.bf16 %v1441, %v1440
        %v1486 = vpack.c.bf16 %v1443, %v1442
        %v1487 = vpack.c.bf16 %v1445, %v1444
        %v1488 = vpack.c.bf16 %v1447, %v1446
        %v1489 = vpack.c.bf16 %v1449, %v1448
        %v1490 = vpack.c.bf16 %v1451, %v1450
        %v1491 = vpack.c.bf16 %v1453, %v1452
        %v1492 = vpack.c.bf16 %v1455, %v1454
        %v1493 = vpack.c.bf16 %v1457, %v1456
        %v1494 = vpack.c.bf16 %v1459, %v1458
        %v1495 = vpack.c.bf16 %v1461, %v1460
        %v1496 = vpack.c.bf16 %v1463, %v1462
        %v1497 = vpack.c.bf16 %v1465, %v1464
        %v1498 = vpack.c.bf16 %v1467, %v1466
        %v1499 = vpack.c.bf16 %v1469, %v1468
        %v1500 = vpack.c.bf16 %v1471, %v1470
        %v1501 = vpack.c.bf16 %v1473, %v1472
        %v1502 = vpack.c.bf16 %v1475, %v1474
        %v1503 = vpack.c.bf16 %v1477, %v1476
        %v1504 = vpack.c.bf16 %v1479, %v1478
        %v1505 = vpack.c.bf16 %v1481, %v1480
        %v1506 = vld [vmem:[%s6] sm:$0xf]
        %v1507 = vld [vmem:[%s6 + $0x4] sm:$0xf]
        %v1508 = vld [vmem:[%s6 + $0x8] sm:$0xf]
        %v1509 = vld [vmem:[%s6 + $0xc] sm:$0xf]
        %v1514 = vunpack.c.l.b16 %v1506
        %v1515 = vunpack.c.l.b16 %v1507
        %v1516 = vunpack.c.l.b16 %v1508
        %v1517 = vunpack.c.l.b16 %v1509
        %v1518 = vpack.c.b16 %v1515, %v1514
        %v1519 = vpack.c.b16 %v1517, %v1516
        %v1523 = vsel %vm746, %v1482, 0
        %v1526 = vsel %vm746, %v1483, 0
        %v1529 = vsel %vm746, %v1484, 0
        %v1532 = vsel %vm746, %v1485, 0
        %v1535 = vsel %vm746, %v1486, 0
        %v1538 = vsel %vm746, %v1487, 0
        %v1541 = vsel %vm746, %v1488, 0
        %v1544 = vsel %vm746, %v1489, 0
        %v1547 = vsel %vm746, %v1490, 0
        %v1550 = vsel %vm746, %v1491, 0
        %v1553 = vsel %vm746, %v1492, 0
        %v1556 = vsel %vm746, %v1493, 0
        %v1559 = vsel %vm746, %v1494, 0
        %v1562 = vsel %vm746, %v1495, 0
        %v1565 = vsel %vm746, %v1496, 0
        %v1568 = vsel %vm746, %v1497, 0
        %v1571 = vsel %vm746, %v1498, 0
        %v1574 = vsel %vm746, %v1499, 0
        %v1577 = vsel %vm746, %v1500, 0
        %v1580 = vsel %vm746, %v1501, 0
        %v1583 = vsel %vm746, %v1502, 0
        %v1586 = vsel %vm746, %v1503, 0
        %v1589 = vsel %vm746, %v1504, 0
        %v1592 = vsel %vm746, %v1505, 0
        %1594 = vmatprep.subr.bf16.mxu0 0
        %1595 = vmatpush1.bf16.msra.mxu0 %v1518
        %1596 = vmatprep.subr.bf16.mxu0 0
        %1597 = vmatpush1.bf16.msra.mxu0 %v1519
        %1598 = vmatprep.subr.bf16.mxu0 0
        %1599 = vmatpush1.bf16.msra.mxu0 0
        %1600 = vmatprep.subr.bf16.mxu0 0
        %1601 = vmatpush1.bf16.msra.mxu0 0
        %1602 = vmatprep.subr.bf16.mxu0 0
        %1603 = vmatpush1.bf16.msra.mxu0 0
        %1604 = vmatprep.subr.bf16.mxu0 0
        %1605 = vmatpush1.bf16.msra.mxu0 0
        %1606 = vmatprep.subr.bf16.mxu0 0
        %1607 = vmatpush1.bf16.msra.mxu0 0
        %1608 = vmatprep.subr.bf16.mxu0 0
        %1609 = vmatpush1.bf16.msra.mxu0 0
        %1610 = vmatprep.subr.bf16.mxu0 0
        %1611 = vmatpush1.bf16.msra.mxu0 0
        %1612 = vmatprep.subr.bf16.mxu0 0
        %1613 = vmatpush1.bf16.msra.mxu0 0
        %1614 = vmatprep.subr.bf16.mxu0 0
        %1615 = vmatpush1.bf16.msra.mxu0 0
        %1616 = vmatprep.subr.bf16.mxu0 0
        %1617 = vmatpush1.bf16.msra.mxu0 0
        %1618 = vmatprep.subr.bf16.mxu0 0
        %1619 = vmatpush1.bf16.msra.mxu0 0
        %1620 = vmatprep.subr.bf16.mxu0 0
        %1621 = vmatpush1.bf16.msra.mxu0 0
        %1622 = vmatprep.subr.bf16.mxu0 0
        %1623 = vmatpush1.bf16.msra.mxu0 0
        %1624 = vmatprep.subr.bf16.mxu0 0
        %1625 = vmatpush1.bf16.msra.mxu0 0
        %1626 = vmatprep.mubr.bf16.mxu0 0
        %1627 = vmatmul.mubr.bf16.gmra.mrb[0].mxu0 %v1523
        %v1628 = vpop.f32.mrb[0].mxu0
        %v1629 = vadd.f32 0.0, %v1628
        %v1630 = vpop.f32.mrb[0].mxu0
        %v1631 = vpop.f32.mrb[0].mxu0
        %v1632 = vadd.f32 0.0, %v1631
        %v1633 = vpop.f32.mrb[0].mxu0
        %1634 = vmatprep.mubr.bf16.mxu0 0
        %1635 = vmatmul.mubr.bf16.gmra.mrb[0].mxu0 %v1526
        %v1636 = vpop.f32.mrb[0].mxu0
        %v1637 = vadd.f32 0.0, %v1636
        %v1638 = vpop.f32.mrb[0].mxu0
        %v1639 = vpop.f32.mrb[0].mxu0
        %v1640 = vadd.f32 0.0, %v1639
        %v1641 = vpop.f32.mrb[0].mxu0
        %1642 = vmatprep.mubr.bf16.mxu0 0
        %1643 = vmatmul.mubr.bf16.gmra.mrb[0].mxu0 %v1529
        %v1644 = vpop.f32.mrb[0].mxu0
        %v1645 = vadd.f32 0.0, %v1644
        %v1646 = vpop.f32.mrb[0].mxu0
        %v1647 = vpop.f32.mrb[0].mxu0
        %v1648 = vadd.f32 0.0, %v1647
        %v1649 = vpop.f32.mrb[0].mxu0
        %1650 = vmatprep.mubr.bf16.mxu0 0
        %1651 = vmatmul.mubr.bf16.gmra.mrb[0].mxu0 %v1532
        %v1652 = vpop.f32.mrb[0].mxu0
        %v1653 = vadd.f32 0.0, %v1652
        %v1654 = vpop.f32.mrb[0].mxu0
        %v1655 = vpop.f32.mrb[0].mxu0
        %v1656 = vadd.f32 0.0, %v1655
        %v1657 = vpop.f32.mrb[0].mxu0
        %1658 = vmatprep.mubr.bf16.mxu0 0
        %1659 = vmatmul.mubr.bf16.gmra.mrb[0].mxu0 %v1535
        %v1660 = vpop.f32.mrb[0].mxu0
        %v1661 = vadd.f32 0.0, %v1660
        %v1662 = vpop.f32.mrb[0].mxu0
        %v1663 = vpop.f32.mrb[0].mxu0
        %v1664 = vadd.f32 0.0, %v1663
        %v1665 = vpop.f32.mrb[0].mxu0
        %1666 = vmatprep.mubr.bf16.mxu0 0
        %1667 = vmatmul.mubr.bf16.gmra.mrb[0].mxu0 %v1538
        %v1668 = vpop.f32.mrb[0].mxu0
        %v1669 = vadd.f32 0.0, %v1668
        %v1670 = vpop.f32.mrb[0].mxu0
        %v1671 = vpop.f32.mrb[0].mxu0
        %v1672 = vadd.f32 0.0, %v1671
        %v1673 = vpop.f32.mrb[0].mxu0
        %1674 = vmatprep.mubr.bf16.mxu0 0
        %1675 = vmatmul.mubr.bf16.gmra.mrb[0].mxu0 %v1541
        %v1676 = vpop.f32.mrb[0].mxu0
        %v1677 = vadd.f32 0.0, %v1676
        %v1678 = vpop.f32.mrb[0].mxu0
        %v1679 = vpop.f32.mrb[0].mxu0
        %v1680 = vadd.f32 0.0, %v1679
        %v1681 = vpop.f32.mrb[0].mxu0
        %1682 = vmatprep.mubr.bf16.mxu0 0
        %1683 = vmatmul.mubr.bf16.gmra.mrb[0].mxu0 %v1544
        %v1684 = vpop.f32.mrb[0].mxu0
        %v1685 = vadd.f32 0.0, %v1684
        %v1686 = vpop.f32.mrb[0].mxu0
        %v1687 = vpop.f32.mrb[0].mxu0
        %v1688 = vadd.f32 0.0, %v1687
        %v1689 = vpop.f32.mrb[0].mxu0
        %1690 = vmatprep.mubr.bf16.mxu0 0
        %1691 = vmatmul.mubr.bf16.gmra.mrb[0].mxu0 %v1547
        %v1692 = vpop.f32.mrb[0].mxu0
        %v1693 = vadd.f32 0.0, %v1692
        %v1694 = vpop.f32.mrb[0].mxu0
        %v1695 = vpop.f32.mrb[0].mxu0
        %v1696 = vadd.f32 0.0, %v1695
        %v1697 = vpop.f32.mrb[0].mxu0
        %1698 = vmatprep.mubr.bf16.mxu0 0
        %1699 = vmatmul.mubr.bf16.gmra.mrb[0].mxu0 %v1550
        %v1700 = vpop.f32.mrb[0].mxu0
        %v1701 = vadd.f32 0.0, %v1700
        %v1702 = vpop.f32.mrb[0].mxu0
        %v1703 = vpop.f32.mrb[0].mxu0
        %v1704 = vadd.f32 0.0, %v1703
        %v1705 = vpop.f32.mrb[0].mxu0
        %1706 = vmatprep.mubr.bf16.mxu0 0
        %1707 = vmatmul.mubr.bf16.gmra.mrb[0].mxu0 %v1553
        %v1708 = vpop.f32.mrb[0].mxu0
        %v1709 = vadd.f32 0.0, %v1708
        %v1710 = vpop.f32.mrb[0].mxu0
        %v1711 = vpop.f32.mrb[0].mxu0
        %v1712 = vadd.f32 0.0, %v1711
        %v1713 = vpop.f32.mrb[0].mxu0
        %1714 = vmatprep.mubr.bf16.mxu0 0
        %1715 = vmatmul.mubr.bf16.gmra.mrb[0].mxu0 %v1556
        %v1716 = vpop.f32.mrb[0].mxu0
        %v1717 = vadd.f32 0.0, %v1716
        %v1718 = vpop.f32.mrb[0].mxu0
        %v1719 = vpop.f32.mrb[0].mxu0
        %v1720 = vadd.f32 0.0, %v1719
        %v1721 = vpop.f32.mrb[0].mxu0
        %1722 = vmatprep.mubr.bf16.mxu0 0
        %1723 = vmatmul.mubr.bf16.gmra.mrb[0].mxu0 %v1559
        %v1724 = vpop.f32.mrb[0].mxu0
        %v1725 = vadd.f32 0.0, %v1724
        %v1726 = vpop.f32.mrb[0].mxu0
        %v1727 = vpop.f32.mrb[0].mxu0
        %v1728 = vadd.f32 0.0, %v1727
        %v1729 = vpop.f32.mrb[0].mxu0
        %1730 = vmatprep.mubr.bf16.mxu0 0
        %1731 = vmatmul.mubr.bf16.gmra.mrb[0].mxu0 %v1562
        %v1732 = vpop.f32.mrb[0].mxu0
        %v1733 = vadd.f32 0.0, %v1732
        %v1734 = vpop.f32.mrb[0].mxu0
        %v1735 = vpop.f32.mrb[0].mxu0
        %v1736 = vadd.f32 0.0, %v1735
        %v1737 = vpop.f32.mrb[0].mxu0
        %1738 = vmatprep.mubr.bf16.mxu0 0
        %1739 = vmatmul.mubr.bf16.gmra.mrb[0].mxu0 %v1565
        %v1740 = vpop.f32.mrb[0].mxu0
        %v1741 = vadd.f32 0.0, %v1740
        %v1742 = vpop.f32.mrb[0].mxu0
        %v1743 = vpop.f32.mrb[0].mxu0
        %v1744 = vadd.f32 0.0, %v1743
        %v1745 = vpop.f32.mrb[0].mxu0
        %1746 = vmatprep.mubr.bf16.mxu0 0
        %1747 = vmatmul.mubr.bf16.gmra.mrb[0].mxu0 %v1568
        %v1748 = vpop.f32.mrb[0].mxu0
        %v1749 = vadd.f32 0.0, %v1748
        %v1750 = vpop.f32.mrb[0].mxu0
        %v1751 = vpop.f32.mrb[0].mxu0
        %v1752 = vadd.f32 0.0, %v1751
        %v1753 = vpop.f32.mrb[0].mxu0
        %1754 = vmatprep.mubr.bf16.mxu0 0
        %1755 = vmatmul.mubr.bf16.gmra.mrb[0].mxu0 %v1571
        %v1756 = vpop.f32.mrb[0].mxu0
        %v1757 = vadd.f32 0.0, %v1756
        %v1758 = vpop.f32.mrb[0].mxu0
        %v1759 = vpop.f32.mrb[0].mxu0
        %v1760 = vadd.f32 0.0, %v1759
        %v1761 = vpop.f32.mrb[0].mxu0
        %1762 = vmatprep.mubr.bf16.mxu0 0
        %1763 = vmatmul.mubr.bf16.gmra.mrb[0].mxu0 %v1574
        %v1764 = vpop.f32.mrb[0].mxu0
        %v1765 = vadd.f32 0.0, %v1764
        %v1766 = vpop.f32.mrb[0].mxu0
        %v1767 = vpop.f32.mrb[0].mxu0
        %v1768 = vadd.f32 0.0, %v1767
        %v1769 = vpop.f32.mrb[0].mxu0
        %1770 = vmatprep.mubr.bf16.mxu0 0
        %1771 = vmatmul.mubr.bf16.gmra.mrb[0].mxu0 %v1577
        %v1772 = vpop.f32.mrb[0].mxu0
        %v1773 = vadd.f32 0.0, %v1772
        %v1774 = vpop.f32.mrb[0].mxu0
        %v1775 = vpop.f32.mrb[0].mxu0
        %v1776 = vadd.f32 0.0, %v1775
        %v1777 = vpop.f32.mrb[0].mxu0
        %1778 = vmatprep.mubr.bf16.mxu0 0
        %1779 = vmatmul.mubr.bf16.gmra.mrb[0].mxu0 %v1580
        %v1780 = vpop.f32.mrb[0].mxu0
        %v1781 = vadd.f32 0.0, %v1780
        %v1782 = vpop.f32.mrb[0].mxu0
        %v1783 = vpop.f32.mrb[0].mxu0
        %v1784 = vadd.f32 0.0, %v1783
        %v1785 = vpop.f32.mrb[0].mxu0
        %1786 = vmatprep.mubr.bf16.mxu0 0
        %1787 = vmatmul.mubr.bf16.gmra.mrb[0].mxu0 %v1583
        %v1788 = vpop.f32.mrb[0].mxu0
        %v1789 = vadd.f32 0.0, %v1788
        %v1790 = vpop.f32.mrb[0].mxu0
        %v1791 = vpop.f32.mrb[0].mxu0
        %v1792 = vadd.f32 0.0, %v1791
        %v1793 = vpop.f32.mrb[0].mxu0
        %1794 = vmatprep.mubr.bf16.mxu0 0
        %1795 = vmatmul.mubr.bf16.gmra.mrb[0].mxu0 %v1586
        %v1796 = vpop.f32.mrb[0].mxu0
        %v1797 = vadd.f32 0.0, %v1796
        %v1798 = vpop.f32.mrb[0].mxu0
        %v1799 = vpop.f32.mrb[0].mxu0
        %v1800 = vadd.f32 0.0, %v1799
        %v1801 = vpop.f32.mrb[0].mxu0
        %1802 = vmatprep.mubr.bf16.mxu0 0
        %1803 = vmatmul.mubr.bf16.gmra.mrb[0].mxu0 %v1589
        %v1804 = vpop.f32.mrb[0].mxu0
        %v1805 = vadd.f32 0.0, %v1804
        %v1806 = vpop.f32.mrb[0].mxu0
        %v1807 = vpop.f32.mrb[0].mxu0
        %v1808 = vadd.f32 0.0, %v1807
        %v1809 = vpop.f32.mrb[0].mxu0
        %1810 = vmatprep.mubr.bf16.mxu0 0
        %1811 = vmatmul.mubr.bf16.gmra.mrb[0].mxu0 %v1592
        %v1812 = vpop.f32.mrb[0].mxu0
        %v1813 = vadd.f32 0.0, %v1812
        %v1814 = vpop.f32.mrb[0].mxu0
        %v1815 = vpop.f32.mrb[0].mxu0
        %v1816 = vadd.f32 0.0, %v1815
        %v1817 = vpop.f32.mrb[0].mxu0
        %1818 = vdwg.mxu0
        %1827 = vrot.lane.b32.xlu0 %v1629, 96
        %v1828 = vpop.permute.xlu0 %1827
        %1829 = vrot.lane.b32.xlu0 %v1632, 96
        %v1830 = vpop.permute.xlu0 %1829
        %1831 = vrot.lane.b32.xlu0 %v1637, 96
        %v1832 = vpop.permute.xlu0 %1831
        %1833 = vrot.lane.b32.xlu0 %v1640, 96
        %v1834 = vpop.permute.xlu0 %1833
        %1835 = vrot.lane.b32.xlu0 %v1645, 96
        %v1836 = vpop.permute.xlu0 %1835
        %1837 = vrot.lane.b32.xlu0 %v1648, 96
        %v1838 = vpop.permute.xlu0 %1837
        %1839 = vrot.lane.b32.xlu0 %v1653, 96
        %v1840 = vpop.permute.xlu0 %1839
        %1841 = vrot.lane.b32.xlu0 %v1656, 96
        %v1842 = vpop.permute.xlu0 %1841
        %v1851 = vmul.f32 %v1629, %v1828
        %v1852 = vmul.f32 %v1632, %v1830
        %v1853 = vmul.f32 %v1637, %v1832
        %v1854 = vmul.f32 %v1640, %v1834
        %v1855 = vmul.f32 %v1645, %v1836
        %v1856 = vmul.f32 %v1648, %v1838
        %v1857 = vmul.f32 %v1653, %v1840
        %v1858 = vmul.f32 %v1656, %v1842
        %v1859 = vsel %vm746, %v1851, 0.0
        %1860 = vadd.xlane.f32.xlu0 %v1859
        %v1861 = vpop.xlane.xlu0 %1860
        %v1862 = vsel %vm746, %v1852, 0.0
        %1863 = vadd.xlane.f32.xlu0 %v1862
        %v1864 = vpop.xlane.xlu0 %1863
        %v1865 = vsel %vm746, %v1853, 0.0
        %1866 = vadd.xlane.f32.xlu0 %v1865
        %v1867 = vpop.xlane.xlu0 %1866
        %v1868 = vsel %vm746, %v1854, 0.0
        %1869 = vadd.xlane.f32.xlu0 %v1868
        %v1870 = vpop.xlane.xlu0 %1869
        %v1871 = vsel %vm746, %v1855, 0.0
        %1872 = vadd.xlane.f32.xlu0 %v1871
        %v1873 = vpop.xlane.xlu0 %1872
        %v1874 = vsel %vm746, %v1856, 0.0
        %1875 = vadd.xlane.f32.xlu0 %v1874
        %v1876 = vpop.xlane.xlu0 %1875
        %v1877 = vsel %vm746, %v1857, 0.0
        %1878 = vadd.xlane.f32.xlu0 %v1877
        %v1879 = vpop.xlane.xlu0 %1878
        %v1880 = vsel %vm746, %v1858, 0.0
        %1881 = vadd.xlane.f32.xlu0 %v1880
        %v1882 = vpop.xlane.xlu0 %1881
        %1891 = vrot.lane.b32.xlu0 %v1661, 96
        %v1892 = vpop.permute.xlu0 %1891
        %1893 = vrot.lane.b32.xlu0 %v1664, 96
        %v1894 = vpop.permute.xlu0 %1893
        %1895 = vrot.lane.b32.xlu0 %v1669, 96
        %v1896 = vpop.permute.xlu0 %1895
        %1897 = vrot.lane.b32.xlu0 %v1672, 96
        %v1898 = vpop.permute.xlu0 %1897
        %1899 = vrot.lane.b32.xlu0 %v1677, 96
        %v1900 = vpop.permute.xlu0 %1899
        %1901 = vrot.lane.b32.xlu0 %v1680, 96
        %v1902 = vpop.permute.xlu0 %1901
        %1903 = vrot.lane.b32.xlu0 %v1685, 96
        %v1904 = vpop.permute.xlu0 %1903
        %1905 = vrot.lane.b32.xlu0 %v1688, 96
        %v1906 = vpop.permute.xlu0 %1905
        %v1915 = vmul.f32 %v1629, %v1892
        %v1916 = vmul.f32 %v1632, %v1894
        %v1917 = vmul.f32 %v1637, %v1896
        %v1918 = vmul.f32 %v1640, %v1898
        %v1919 = vmul.f32 %v1645, %v1900
        %v1920 = vmul.f32 %v1648, %v1902
        %v1921 = vmul.f32 %v1653, %v1904
        %v1922 = vmul.f32 %v1656, %v1906
        %v1923 = vsel %vm746, %v1915, 0.0
        %1924 = vadd.xlane.f32.xlu0 %v1923
        %v1925 = vpop.xlane.xlu0 %1924
        %v1926 = vsel %vm746, %v1916, 0.0
        %1927 = vadd.xlane.f32.xlu0 %v1926
        %v1928 = vpop.xlane.xlu0 %1927
        %v1929 = vsel %vm746, %v1917, 0.0
        %1930 = vadd.xlane.f32.xlu0 %v1929
        %v1931 = vpop.xlane.xlu0 %1930
        %v1932 = vsel %vm746, %v1918, 0.0
        %1933 = vadd.xlane.f32.xlu0 %v1932
        %v1934 = vpop.xlane.xlu0 %1933
        %v1935 = vsel %vm746, %v1919, 0.0
        %1936 = vadd.xlane.f32.xlu0 %v1935
        %v1937 = vpop.xlane.xlu0 %1936
        %v1938 = vsel %vm746, %v1920, 0.0
        %1939 = vadd.xlane.f32.xlu0 %v1938
        %v1940 = vpop.xlane.xlu0 %1939
        %v1941 = vsel %vm746, %v1921, 0.0
        %1942 = vadd.xlane.f32.xlu0 %v1941
        %v1943 = vpop.xlane.xlu0 %1942
        %v1944 = vsel %vm746, %v1922, 0.0
        %1945 = vadd.xlane.f32.xlu0 %v1944
        %v1946 = vpop.xlane.xlu0 %1945
        %1955 = vrot.lane.b32.xlu0 %v1693, 96
        %v1956 = vpop.permute.xlu0 %1955
        %1957 = vrot.lane.b32.xlu0 %v1696, 96
        %v1958 = vpop.permute.xlu0 %1957
        %1959 = vrot.lane.b32.xlu0 %v1701, 96
        %v1960 = vpop.permute.xlu0 %1959
        %1961 = vrot.lane.b32.xlu0 %v1704, 96
        %v1962 = vpop.permute.xlu0 %1961
        %1963 = vrot.lane.b32.xlu0 %v1709, 96
        %v1964 = vpop.permute.xlu0 %1963
        %1965 = vrot.lane.b32.xlu0 %v1712, 96
        %v1966 = vpop.permute.xlu0 %1965
        %1967 = vrot.lane.b32.xlu0 %v1717, 96
        %v1968 = vpop.permute.xlu0 %1967
        %1969 = vrot.lane.b32.xlu0 %v1720, 96
        %v1970 = vpop.permute.xlu0 %1969
        %v1979 = vmul.f32 %v1629, %v1956
        %v1980 = vmul.f32 %v1632, %v1958
        %v1981 = vmul.f32 %v1637, %v1960
        %v1982 = vmul.f32 %v1640, %v1962
        %v1983 = vmul.f32 %v1645, %v1964
        %v1984 = vmul.f32 %v1648, %v1966
        %v1985 = vmul.f32 %v1653, %v1968
        %v1986 = vmul.f32 %v1656, %v1970
        %v1987 = vsel %vm746, %v1979, 0.0
        %1988 = vadd.xlane.f32.xlu0 %v1987
        %v1989 = vpop.xlane.xlu0 %1988
        %v1990 = vsel %vm746, %v1980, 0.0
        %1991 = vadd.xlane.f32.xlu0 %v1990
        %v1992 = vpop.xlane.xlu0 %1991
        %v1993 = vsel %vm746, %v1981, 0.0
        %1994 = vadd.xlane.f32.xlu0 %v1993
        %v1995 = vpop.xlane.xlu0 %1994
        %v1996 = vsel %vm746, %v1982, 0.0
        %1997 = vadd.xlane.f32.xlu0 %v1996
        %v1998 = vpop.xlane.xlu0 %1997
        %v1999 = vsel %vm746, %v1983, 0.0
        %2000 = vadd.xlane.f32.xlu0 %v1999
        %v2001 = vpop.xlane.xlu0 %2000
        %v2002 = vsel %vm746, %v1984, 0.0
        %2003 = vadd.xlane.f32.xlu0 %v2002
        %v2004 = vpop.xlane.xlu0 %2003
        %v2005 = vsel %vm746, %v1985, 0.0
        %2006 = vadd.xlane.f32.xlu0 %v2005
        %v2007 = vpop.xlane.xlu0 %2006
        %v2008 = vsel %vm746, %v1986, 0.0
        %2009 = vadd.xlane.f32.xlu0 %v2008
        %v2010 = vpop.xlane.xlu0 %2009
        %2019 = vrot.lane.b32.xlu0 %v1725, 96
        %v2020 = vpop.permute.xlu0 %2019
        %2021 = vrot.lane.b32.xlu0 %v1728, 96
        %v2022 = vpop.permute.xlu0 %2021
        %2023 = vrot.lane.b32.xlu0 %v1733, 96
        %v2024 = vpop.permute.xlu0 %2023
        %2025 = vrot.lane.b32.xlu0 %v1736, 96
        %v2026 = vpop.permute.xlu0 %2025
        %2027 = vrot.lane.b32.xlu0 %v1741, 96
        %v2028 = vpop.permute.xlu0 %2027
        %2029 = vrot.lane.b32.xlu0 %v1744, 96
        %v2030 = vpop.permute.xlu0 %2029
        %2031 = vrot.lane.b32.xlu0 %v1749, 96
        %v2032 = vpop.permute.xlu0 %2031
        %2033 = vrot.lane.b32.xlu0 %v1752, 96
        %v2034 = vpop.permute.xlu0 %2033
        %v2043 = vmul.f32 %v1629, %v2020
        %v2044 = vmul.f32 %v1632, %v2022
        %v2045 = vmul.f32 %v1637, %v2024
        %v2046 = vmul.f32 %v1640, %v2026
        %v2047 = vmul.f32 %v1645, %v2028
        %v2048 = vmul.f32 %v1648, %v2030
        %v2049 = vmul.f32 %v1653, %v2032
        %v2050 = vmul.f32 %v1656, %v2034
        %v2051 = vsel %vm746, %v2043, 0.0
        %2052 = vadd.xlane.f32.xlu0 %v2051
        %v2053 = vpop.xlane.xlu0 %2052
        %v2054 = vsel %vm746, %v2044, 0.0
        %2055 = vadd.xlane.f32.xlu0 %v2054
        %v2056 = vpop.xlane.xlu0 %2055
        %v2057 = vsel %vm746, %v2045, 0.0
        %2058 = vadd.xlane.f32.xlu0 %v2057
        %v2059 = vpop.xlane.xlu0 %2058
        %v2060 = vsel %vm746, %v2046, 0.0
        %2061 = vadd.xlane.f32.xlu0 %v2060
        %v2062 = vpop.xlane.xlu0 %2061
        %v2063 = vsel %vm746, %v2047, 0.0
        %2064 = vadd.xlane.f32.xlu0 %v2063
        %v2065 = vpop.xlane.xlu0 %2064
        %v2066 = vsel %vm746, %v2048, 0.0
        %2067 = vadd.xlane.f32.xlu0 %v2066
        %v2068 = vpop.xlane.xlu0 %2067
        %v2069 = vsel %vm746, %v2049, 0.0
        %2070 = vadd.xlane.f32.xlu0 %v2069
        %v2071 = vpop.xlane.xlu0 %2070
        %v2072 = vsel %vm746, %v2050, 0.0
        %2073 = vadd.xlane.f32.xlu0 %v2072
        %v2074 = vpop.xlane.xlu0 %2073
        %2083 = vrot.lane.b32.xlu0 %v1757, 96
        %v2084 = vpop.permute.xlu0 %2083
        %2085 = vrot.lane.b32.xlu0 %v1760, 96
        %v2086 = vpop.permute.xlu0 %2085
        %2087 = vrot.lane.b32.xlu0 %v1765, 96
        %v2088 = vpop.permute.xlu0 %2087
        %2089 = vrot.lane.b32.xlu0 %v1768, 96
        %v2090 = vpop.permute.xlu0 %2089
        %2091 = vrot.lane.b32.xlu0 %v1773, 96
        %v2092 = vpop.permute.xlu0 %2091
        %2093 = vrot.lane.b32.xlu0 %v1776, 96
        %v2094 = vpop.permute.xlu0 %2093
        %2095 = vrot.lane.b32.xlu0 %v1781, 96
        %v2096 = vpop.permute.xlu0 %2095
        %2097 = vrot.lane.b32.xlu0 %v1784, 96
        %v2098 = vpop.permute.xlu0 %2097
        %v2107 = vmul.f32 %v1629, %v2084
        %v2108 = vmul.f32 %v1632, %v2086
        %v2109 = vmul.f32 %v1637, %v2088
        %v2110 = vmul.f32 %v1640, %v2090
        %v2111 = vmul.f32 %v1645, %v2092
        %v2112 = vmul.f32 %v1648, %v2094
        %v2113 = vmul.f32 %v1653, %v2096
        %v2114 = vmul.f32 %v1656, %v2098
        %v2115 = vsel %vm746, %v2107, 0.0
        %2116 = vadd.xlane.f32.xlu0 %v2115
        %v2117 = vpop.xlane.xlu0 %2116
        %v2118 = vsel %vm746, %v2108, 0.0
        %2119 = vadd.xlane.f32.xlu0 %v2118
        %v2120 = vpop.xlane.xlu0 %2119
        %v2121 = vsel %vm746, %v2109, 0.0
        %2122 = vadd.xlane.f32.xlu0 %v2121
        %v2123 = vpop.xlane.xlu0 %2122
        %v2124 = vsel %vm746, %v2110, 0.0
        %2125 = vadd.xlane.f32.xlu0 %v2124
        %v2126 = vpop.xlane.xlu0 %2125
        %v2127 = vsel %vm746, %v2111, 0.0
        %2128 = vadd.xlane.f32.xlu0 %v2127
        %v2129 = vpop.xlane.xlu0 %2128
        %v2130 = vsel %vm746, %v2112, 0.0
        %2131 = vadd.xlane.f32.xlu0 %v2130
        %v2132 = vpop.xlane.xlu0 %2131
        %v2133 = vsel %vm746, %v2113, 0.0
        %2134 = vadd.xlane.f32.xlu0 %v2133
        %v2135 = vpop.xlane.xlu0 %2134
        %v2136 = vsel %vm746, %v2114, 0.0
        %2137 = vadd.xlane.f32.xlu0 %v2136
        %v2138 = vpop.xlane.xlu0 %2137
        %2147 = vrot.lane.b32.xlu0 %v1789, 96
        %v2148 = vpop.permute.xlu0 %2147
        %2149 = vrot.lane.b32.xlu0 %v1792, 96
        %v2150 = vpop.permute.xlu0 %2149
        %2151 = vrot.lane.b32.xlu0 %v1797, 96
        %v2152 = vpop.permute.xlu0 %2151
        %2153 = vrot.lane.b32.xlu0 %v1800, 96
        %v2154 = vpop.permute.xlu0 %2153
        %2155 = vrot.lane.b32.xlu0 %v1805, 96
        %v2156 = vpop.permute.xlu0 %2155
        %2157 = vrot.lane.b32.xlu0 %v1808, 96
        %v2158 = vpop.permute.xlu0 %2157
        %2159 = vrot.lane.b32.xlu0 %v1813, 96
        %v2160 = vpop.permute.xlu0 %2159
        %2161 = vrot.lane.b32.xlu0 %v1816, 96
        %v2162 = vpop.permute.xlu0 %2161
        %v2171 = vmul.f32 %v1629, %v2148
        %v2172 = vmul.f32 %v1632, %v2150
        %v2173 = vmul.f32 %v1637, %v2152
        %v2174 = vmul.f32 %v1640, %v2154
        %v2175 = vmul.f32 %v1645, %v2156
        %v2176 = vmul.f32 %v1648, %v2158
        %v2177 = vmul.f32 %v1653, %v2160
        %v2178 = vmul.f32 %v1656, %v2162
        %v2179 = vsel %vm746, %v2171, 0.0
        %2180 = vadd.xlane.f32.xlu0 %v2179
        %v2181 = vpop.xlane.xlu0 %2180
        %v2182 = vsel %vm746, %v2172, 0.0
        %2183 = vadd.xlane.f32.xlu0 %v2182
        %v2184 = vpop.xlane.xlu0 %2183
        %v2185 = vsel %vm746, %v2173, 0.0
        %2186 = vadd.xlane.f32.xlu0 %v2185
        %v2187 = vpop.xlane.xlu0 %2186
        %v2188 = vsel %vm746, %v2174, 0.0
        %2189 = vadd.xlane.f32.xlu0 %v2188
        %v2190 = vpop.xlane.xlu0 %2189
        %v2191 = vsel %vm746, %v2175, 0.0
        %2192 = vadd.xlane.f32.xlu0 %v2191
        %v2193 = vpop.xlane.xlu0 %2192
        %v2194 = vsel %vm746, %v2176, 0.0
        %2195 = vadd.xlane.f32.xlu0 %v2194
        %v2196 = vpop.xlane.xlu0 %2195
        %v2197 = vsel %vm746, %v2177, 0.0
        %2198 = vadd.xlane.f32.xlu0 %v2197
        %v2199 = vpop.xlane.xlu0 %2198
        %v2200 = vsel %vm746, %v2178, 0.0
        %2201 = vadd.xlane.f32.xlu0 %v2200
        %v2202 = vpop.xlane.xlu0 %2201
        %vm2203 = vcmask 7168
        %v2204 = vsel %vm2203, %v1861, %v1925
        %v2205 = vsel %vm2203, %v1864, %v1928
        %v2206 = vsel %vm2203, %v1867, %v1931
        %v2207 = vsel %vm2203, %v1870, %v1934
        %v2208 = vsel %vm2203, %v1873, %v1937
        %v2209 = vsel %vm2203, %v1876, %v1940
        %v2210 = vsel %vm2203, %v1879, %v1943
        %v2211 = vsel %vm2203, %v1882, %v1946
        %vm2212 = vcmask 15360
        %v2213 = vsel %vm2212, %v2204, %v1989
        %v2214 = vsel %vm2212, %v2205, %v1992
        %v2215 = vsel %vm2212, %v2206, %v1995
        %v2216 = vsel %vm2212, %v2207, %v1998
        %v2217 = vsel %vm2212, %v2208, %v2001
        %v2218 = vsel %vm2212, %v2209, %v2004
        %v2219 = vsel %vm2212, %v2210, %v2007
        %v2220 = vsel %vm2212, %v2211, %v2010
        %vm2221 = vcmask 23552
        %v2222 = vsel %vm2221, %v2213, %v2053
        %v2223 = vsel %vm2221, %v2214, %v2056
        %v2224 = vsel %vm2221, %v2215, %v2059
        %v2225 = vsel %vm2221, %v2216, %v2062
        %v2226 = vsel %vm2221, %v2217, %v2065
        %v2227 = vsel %vm2221, %v2218, %v2068
        %v2228 = vsel %vm2221, %v2219, %v2071
        %v2229 = vsel %vm2221, %v2220, %v2074
        %vm2230 = vcmask 31744
        %v2231 = vsel %vm2230, %v2222, %v2117
        %v2232 = vsel %vm2230, %v2223, %v2120
        %v2233 = vsel %vm2230, %v2224, %v2123
        %v2234 = vsel %vm2230, %v2225, %v2126
        %v2235 = vsel %vm2230, %v2226, %v2129
        %v2236 = vsel %vm2230, %v2227, %v2132
        %v2237 = vsel %vm2230, %v2228, %v2135
        %v2238 = vsel %vm2230, %v2229, %v2138
        %vm2239 = vcmask 39936
        %v2240 = vsel %vm2239, %v2231, %v2181
        %v2241 = vsel %vm2239, %v2232, %v2184
        %v2242 = vsel %vm2239, %v2233, %v2187
        %v2243 = vsel %vm2239, %v2234, %v2190
        %v2244 = vsel %vm2239, %v2235, %v2193
        %v2245 = vsel %vm2239, %v2236, %v2196
        %v2246 = vsel %vm2239, %v2237, %v2199
        %v2247 = vsel %vm2239, %v2238, %v2202
        %vm2248 = vcmask 48128
        %v2249 = vsel %vm2248, %v2240, -inf
        %2250 = vmax.xlane.f32.xlu0 %v2249
        %v2251 = vpop.xlane.xlu0 %2250
        %v2252 = vsel %vm2248, %v2241, -inf
        %2253 = vmax.xlane.f32.xlu0 %v2252
        %v2254 = vpop.xlane.xlu0 %2253
        %v2255 = vsel %vm2248, %v2242, -inf
        %2256 = vmax.xlane.f32.xlu0 %v2255
        %v2257 = vpop.xlane.xlu0 %2256
        %v2258 = vsel %vm2248, %v2243, -inf
        %2259 = vmax.xlane.f32.xlu0 %v2258
        %v2260 = vpop.xlane.xlu0 %2259
        %v2261 = vsel %vm2248, %v2244, -inf
        %2262 = vmax.xlane.f32.xlu0 %v2261
        %v2263 = vpop.xlane.xlu0 %2262
        %v2264 = vsel %vm2248, %v2245, -inf
        %2265 = vmax.xlane.f32.xlu0 %v2264
        %v2266 = vpop.xlane.xlu0 %2265
        %v2267 = vsel %vm2248, %v2246, -inf
        %2268 = vmax.xlane.f32.xlu0 %v2267
        %v2269 = vpop.xlane.xlu0 %2268
        %v2270 = vsel %vm2248, %v2247, -inf
        %2271 = vmax.xlane.f32.xlu0 %v2270
        %v2272 = vpop.xlane.xlu0 %2271
        %v2273 = vsub.f32 %v2240, %v2251
        %v2274 = vsub.f32 %v2241, %v2254
        %v2275 = vsub.f32 %v2242, %v2257
        %v2276 = vsub.f32 %v2243, %v2260
        %v2277 = vsub.f32 %v2244, %v2263
        %v2278 = vsub.f32 %v2245, %v2266
        %v2279 = vsub.f32 %v2246, %v2269
        %v2280 = vsub.f32 %v2247, %v2272
        %v2281 = vmul.f32 %v2273, 1.442695
        %v2282 = vpow.pop %v2281
        %v2283 = vmul.f32 %v2274, 1.442695
        %v2284 = vpow.pop %v2283
        %v2285 = vmul.f32 %v2275, 1.442695
        %v2286 = vpow.pop %v2285
        %v2287 = vmul.f32 %v2276, 1.442695
        %v2288 = vpow.pop %v2287
        %v2289 = vmul.f32 %v2277, 1.442695
        %v2290 = vpow.pop %v2289
        %v2291 = vmul.f32 %v2278, 1.442695
        %v2292 = vpow.pop %v2291
        %v2293 = vmul.f32 %v2279, 1.442695
        %v2294 = vpow.pop %v2293
        %v2295 = vmul.f32 %v2280, 1.442695
        %v2296 = vpow.pop %v2295
        %v2297 = vsel %vm2248, %v2282, 0.0
        %2298 = vadd.xlane.f32.xlu0 %v2297
        %v2299 = vpop.xlane.xlu0 %2298
        %v2300 = vsel %vm2248, %v2284, 0.0
        %2301 = vadd.xlane.f32.xlu0 %v2300
        %v2302 = vpop.xlane.xlu0 %2301
        %v2303 = vsel %vm2248, %v2286, 0.0
        %2304 = vadd.xlane.f32.xlu0 %v2303
        %v2305 = vpop.xlane.xlu0 %2304
        %v2306 = vsel %vm2248, %v2288, 0.0
        %2307 = vadd.xlane.f32.xlu0 %v2306
        %v2308 = vpop.xlane.xlu0 %2307
        %v2309 = vsel %vm2248, %v2290, 0.0
        %2310 = vadd.xlane.f32.xlu0 %v2309
        %v2311 = vpop.xlane.xlu0 %2310
        %v2312 = vsel %vm2248, %v2292, 0.0
        %2313 = vadd.xlane.f32.xlu0 %v2312
        %v2314 = vpop.xlane.xlu0 %2313
        %v2315 = vsel %vm2248, %v2294, 0.0
        %2316 = vadd.xlane.f32.xlu0 %v2315
        %v2317 = vpop.xlane.xlu0 %2316
        %v2318 = vsel %vm2248, %v2296, 0.0
        %2319 = vadd.xlane.f32.xlu0 %v2318
        %v2320 = vpop.xlane.xlu0 %2319
        %v2321 = vrcp.pop %v2299
        %v2322 = vrcp.pop %v2302
        %v2323 = vrcp.pop %v2305
        %v2324 = vrcp.pop %v2308
        %v2325 = vrcp.pop %v2311
        %v2326 = vrcp.pop %v2314
        %v2327 = vrcp.pop %v2317
        %v2328 = vrcp.pop %v2320
        %v2329 = vmul.f32 %v2282, %v2321
        %v2330 = vmul.f32 %v2284, %v2322
        %v2331 = vmul.f32 %v2286, %v2323
        %v2332 = vmul.f32 %v2288, %v2324
        %v2333 = vmul.f32 %v2290, %v2325
        %v2334 = vmul.f32 %v2292, %v2326
        %v2335 = vmul.f32 %v2294, %v2327
        %v2336 = vmul.f32 %v2296, %v2328
        %2338 = vset.pattern.permute.xlu0 0
        %2339 = vperm.xlu0 %2338, %v2329
        %v2340 = vpop.permute.xlu0 %2339
        %2343 = vset.pattern.permute.xlu0 0
        %2344 = vperm.xlu0 %2343, %v2330
        %v2345 = vpop.permute.xlu0 %2344
        %2348 = vset.pattern.permute.xlu0 0
        %2349 = vperm.xlu0 %2348, %v2331
        %v2350 = vpop.permute.xlu0 %2349
        %2353 = vset.pattern.permute.xlu0 0
        %2354 = vperm.xlu0 %2353, %v2332
        %v2355 = vpop.permute.xlu0 %2354
        %2358 = vset.pattern.permute.xlu0 0
        %2359 = vperm.xlu0 %2358, %v2333
        %v2360 = vpop.permute.xlu0 %2359
        %2363 = vset.pattern.permute.xlu0 0
        %2364 = vperm.xlu0 %2363, %v2334
        %v2365 = vpop.permute.xlu0 %2364
        %2368 = vset.pattern.permute.xlu0 0
        %2369 = vperm.xlu0 %2368, %v2335
        %v2370 = vpop.permute.xlu0 %2369
        %2373 = vset.pattern.permute.xlu0 0
        %2374 = vperm.xlu0 %2373, %v2336
        %v2375 = vpop.permute.xlu0 %2374
        %v2377 = vmul.f32 %v2340, %v1629
        %v2378 = vmul.f32 %v2345, %v1632
        %v2379 = vmul.f32 %v2350, %v1637
        %v2380 = vmul.f32 %v2355, %v1640
        %v2381 = vmul.f32 %v2360, %v1645
        %v2382 = vmul.f32 %v2365, %v1648
        %v2383 = vmul.f32 %v2370, %v1653
        %v2384 = vmul.f32 %v2375, %v1656
        %2385 = vset.pattern.permute.xlu0 1
        %2386 = vperm.xlu0 %2385, %v2329
        %v2387 = vpop.permute.xlu0 %2386
        %2389 = vset.pattern.permute.xlu0 1
        %2390 = vperm.xlu0 %2389, %v2330
        %v2391 = vpop.permute.xlu0 %2390
        %2393 = vset.pattern.permute.xlu0 1
        %2394 = vperm.xlu0 %2393, %v2331
        %v2395 = vpop.permute.xlu0 %2394
        %2397 = vset.pattern.permute.xlu0 1
        %2398 = vperm.xlu0 %2397, %v2332
        %v2399 = vpop.permute.xlu0 %2398
        %2401 = vset.pattern.permute.xlu0 1
        %2402 = vperm.xlu0 %2401, %v2333
        %v2403 = vpop.permute.xlu0 %2402
        %2405 = vset.pattern.permute.xlu0 1
        %2406 = vperm.xlu0 %2405, %v2334
        %v2407 = vpop.permute.xlu0 %2406
        %2409 = vset.pattern.permute.xlu0 1
        %2410 = vperm.xlu0 %2409, %v2335
        %v2411 = vpop.permute.xlu0 %2410
        %2413 = vset.pattern.permute.xlu0 1
        %2414 = vperm.xlu0 %2413, %v2336
        %v2415 = vpop.permute.xlu0 %2414
        %v2417 = vmul.f32 %v2387, %v1661
        %v2418 = vmul.f32 %v2391, %v1664
        %v2419 = vmul.f32 %v2395, %v1669
        %v2420 = vmul.f32 %v2399, %v1672
        %v2421 = vmul.f32 %v2403, %v1677
        %v2422 = vmul.f32 %v2407, %v1680
        %v2423 = vmul.f32 %v2411, %v1685
        %v2424 = vmul.f32 %v2415, %v1688
        %v2425 = vadd.f32 %v2377, %v2417
        %v2426 = vadd.f32 %v2378, %v2418
        %v2427 = vadd.f32 %v2379, %v2419
        %v2428 = vadd.f32 %v2380, %v2420
        %v2429 = vadd.f32 %v2381, %v2421
        %v2430 = vadd.f32 %v2382, %v2422
        %v2431 = vadd.f32 %v2383, %v2423
        %v2432 = vadd.f32 %v2384, %v2424
        %2433 = vset.pattern.permute.xlu0 2
        %2434 = vperm.xlu0 %2433, %v2329
        %v2435 = vpop.permute.xlu0 %2434
        %2437 = vset.pattern.permute.xlu0 2
        %2438 = vperm.xlu0 %2437, %v2330
        %v2439 = vpop.permute.xlu0 %2438
        %2441 = vset.pattern.permute.xlu0 2
        %2442 = vperm.xlu0 %2441, %v2331
        %v2443 = vpop.permute.xlu0 %2442
        %2445 = vset.pattern.permute.xlu0 2
        %2446 = vperm.xlu0 %2445, %v2332
        %v2447 = vpop.permute.xlu0 %2446
        %2449 = vset.pattern.permute.xlu0 2
        %2450 = vperm.xlu0 %2449, %v2333
        %v2451 = vpop.permute.xlu0 %2450
        %2453 = vset.pattern.permute.xlu0 2
        %2454 = vperm.xlu0 %2453, %v2334
        %v2455 = vpop.permute.xlu0 %2454
        %2457 = vset.pattern.permute.xlu0 2
        %2458 = vperm.xlu0 %2457, %v2335
        %v2459 = vpop.permute.xlu0 %2458
        %2461 = vset.pattern.permute.xlu0 2
        %2462 = vperm.xlu0 %2461, %v2336
        %v2463 = vpop.permute.xlu0 %2462
        %v2465 = vmul.f32 %v2435, %v1693
        %v2466 = vmul.f32 %v2439, %v1696
        %v2467 = vmul.f32 %v2443, %v1701
        %v2468 = vmul.f32 %v2447, %v1704
        %v2469 = vmul.f32 %v2451, %v1709
        %v2470 = vmul.f32 %v2455, %v1712
        %v2471 = vmul.f32 %v2459, %v1717
        %v2472 = vmul.f32 %v2463, %v1720
        %v2473 = vadd.f32 %v2425, %v2465
        %v2474 = vadd.f32 %v2426, %v2466
        %v2475 = vadd.f32 %v2427, %v2467
        %v2476 = vadd.f32 %v2428, %v2468
        %v2477 = vadd.f32 %v2429, %v2469
        %v2478 = vadd.f32 %v2430, %v2470
        %v2479 = vadd.f32 %v2431, %v2471
        %v2480 = vadd.f32 %v2432, %v2472
        %2481 = vset.pattern.permute.xlu0 3
        %2482 = vperm.xlu0 %2481, %v2329
        %v2483 = vpop.permute.xlu0 %2482
        %2485 = vset.pattern.permute.xlu0 3
        %2486 = vperm.xlu0 %2485, %v2330
        %v2487 = vpop.permute.xlu0 %2486
        %2489 = vset.pattern.permute.xlu0 3
        %2490 = vperm.xlu0 %2489, %v2331
        %v2491 = vpop.permute.xlu0 %2490
        %2493 = vset.pattern.permute.xlu0 3
        %2494 = vperm.xlu0 %2493, %v2332
        %v2495 = vpop.permute.xlu0 %2494
        %2497 = vset.pattern.permute.xlu0 3
        %2498 = vperm.xlu0 %2497, %v2333
        %v2499 = vpop.permute.xlu0 %2498
        %2501 = vset.pattern.permute.xlu0 3
        %2502 = vperm.xlu0 %2501, %v2334
        %v2503 = vpop.permute.xlu0 %2502
        %2505 = vset.pattern.permute.xlu0 3
        %2506 = vperm.xlu0 %2505, %v2335
        %v2507 = vpop.permute.xlu0 %2506
        %2509 = vset.pattern.permute.xlu0 3
        %2510 = vperm.xlu0 %2509, %v2336
        %v2511 = vpop.permute.xlu0 %2510
        %v2513 = vmul.f32 %v2483, %v1725
        %v2514 = vmul.f32 %v2487, %v1728
        %v2515 = vmul.f32 %v2491, %v1733
        %v2516 = vmul.f32 %v2495, %v1736
        %v2517 = vmul.f32 %v2499, %v1741
        %v2518 = vmul.f32 %v2503, %v1744
        %v2519 = vmul.f32 %v2507, %v1749
        %v2520 = vmul.f32 %v2511, %v1752
        %v2521 = vadd.f32 %v2473, %v2513
        %v2522 = vadd.f32 %v2474, %v2514
        %v2523 = vadd.f32 %v2475, %v2515
        %v2524 = vadd.f32 %v2476, %v2516
        %v2525 = vadd.f32 %v2477, %v2517
        %v2526 = vadd.f32 %v2478, %v2518
        %v2527 = vadd.f32 %v2479, %v2519
        %v2528 = vadd.f32 %v2480, %v2520
        %2529 = vset.pattern.permute.xlu0 4
        %2530 = vperm.xlu0 %2529, %v2329
        %v2531 = vpop.permute.xlu0 %2530
        %2533 = vset.pattern.permute.xlu0 4
        %2534 = vperm.xlu0 %2533, %v2330
        %v2535 = vpop.permute.xlu0 %2534
        %2537 = vset.pattern.permute.xlu0 4
        %2538 = vperm.xlu0 %2537, %v2331
        %v2539 = vpop.permute.xlu0 %2538
        %2541 = vset.pattern.permute.xlu0 4
        %2542 = vperm.xlu0 %2541, %v2332
        %v2543 = vpop.permute.xlu0 %2542
        %2545 = vset.pattern.permute.xlu0 4
        %2546 = vperm.xlu0 %2545, %v2333
        %v2547 = vpop.permute.xlu0 %2546
        %2549 = vset.pattern.permute.xlu0 4
        %2550 = vperm.xlu0 %2549, %v2334
        %v2551 = vpop.permute.xlu0 %2550
        %2553 = vset.pattern.permute.xlu0 4
        %2554 = vperm.xlu0 %2553, %v2335
        %v2555 = vpop.permute.xlu0 %2554
        %2557 = vset.pattern.permute.xlu0 4
        %2558 = vperm.xlu0 %2557, %v2336
        %v2559 = vpop.permute.xlu0 %2558
        %v2561 = vmul.f32 %v2531, %v1757
        %v2562 = vmul.f32 %v2535, %v1760
        %v2563 = vmul.f32 %v2539, %v1765
        %v2564 = vmul.f32 %v2543, %v1768
        %v2565 = vmul.f32 %v2547, %v1773
        %v2566 = vmul.f32 %v2551, %v1776
        %v2567 = vmul.f32 %v2555, %v1781
        %v2568 = vmul.f32 %v2559, %v1784
        %v2569 = vadd.f32 %v2521, %v2561
        %v2570 = vadd.f32 %v2522, %v2562
        %v2571 = vadd.f32 %v2523, %v2563
        %v2572 = vadd.f32 %v2524, %v2564
        %v2573 = vadd.f32 %v2525, %v2565
        %v2574 = vadd.f32 %v2526, %v2566
        %v2575 = vadd.f32 %v2527, %v2567
        %v2576 = vadd.f32 %v2528, %v2568
        %2577 = vset.pattern.permute.xlu0 5
        %2578 = vperm.xlu0 %2577, %v2329
        %v2579 = vpop.permute.xlu0 %2578
        %2581 = vset.pattern.permute.xlu0 5
        %2582 = vperm.xlu0 %2581, %v2330
        %v2583 = vpop.permute.xlu0 %2582
        %2585 = vset.pattern.permute.xlu0 5
        %2586 = vperm.xlu0 %2585, %v2331
        %v2587 = vpop.permute.xlu0 %2586
        %2589 = vset.pattern.permute.xlu0 5
        %2590 = vperm.xlu0 %2589, %v2332
        %v2591 = vpop.permute.xlu0 %2590
        %2593 = vset.pattern.permute.xlu0 5
        %2594 = vperm.xlu0 %2593, %v2333
        %v2595 = vpop.permute.xlu0 %2594
        %2597 = vset.pattern.permute.xlu0 5
        %2598 = vperm.xlu0 %2597, %v2334
        %v2599 = vpop.permute.xlu0 %2598
        %2601 = vset.pattern.permute.xlu0 5
        %2602 = vperm.xlu0 %2601, %v2335
        %v2603 = vpop.permute.xlu0 %2602
        %2605 = vset.pattern.permute.xlu0 5
        %2606 = vperm.xlu0 %2605, %v2336
        %v2607 = vpop.permute.xlu0 %2606
        %v2609 = vmul.f32 %v2579, %v1789
        %v2610 = vmul.f32 %v2583, %v1792
        %v2611 = vmul.f32 %v2587, %v1797
        %v2612 = vmul.f32 %v2591, %v1800
        %v2613 = vmul.f32 %v2595, %v1805
        %v2614 = vmul.f32 %v2599, %v1808
        %v2615 = vmul.f32 %v2603, %v1813
        %v2616 = vmul.f32 %v2607, %v1816
        %v2617 = vadd.f32 %v2569, %v2609
        %v2618 = vadd.f32 %v2570, %v2610
        %v2619 = vadd.f32 %v2571, %v2611
        %v2620 = vadd.f32 %v2572, %v2612
        %v2621 = vadd.f32 %v2573, %v2613
        %v2622 = vadd.f32 %v2574, %v2614
        %v2623 = vadd.f32 %v2575, %v2615
        %v2624 = vadd.f32 %v2576, %v2616
        %v2625 = vmul.f32 %v1661, %v1828
        %v2626 = vmul.f32 %v1664, %v1830
        %v2627 = vmul.f32 %v1669, %v1832
        %v2628 = vmul.f32 %v1672, %v1834
        %v2629 = vmul.f32 %v1677, %v1836
        %v2630 = vmul.f32 %v1680, %v1838
        %v2631 = vmul.f32 %v1685, %v1840
        %v2632 = vmul.f32 %v1688, %v1842
        %v2633 = vsel %vm746, %v2625, 0.0
        %2634 = vadd.xlane.f32.xlu0 %v2633
        %v2635 = vpop.xlane.xlu0 %2634
        %v2636 = vsel %vm746, %v2626, 0.0
        %2637 = vadd.xlane.f32.xlu0 %v2636
        %v2638 = vpop.xlane.xlu0 %2637
        %v2639 = vsel %vm746, %v2627, 0.0
        %2640 = vadd.xlane.f32.xlu0 %v2639
        %v2641 = vpop.xlane.xlu0 %2640
        %v2642 = vsel %vm746, %v2628, 0.0
        %2643 = vadd.xlane.f32.xlu0 %v2642
        %v2644 = vpop.xlane.xlu0 %2643
        %v2645 = vsel %vm746, %v2629, 0.0
        %2646 = vadd.xlane.f32.xlu0 %v2645
        %v2647 = vpop.xlane.xlu0 %2646
        %v2648 = vsel %vm746, %v2630, 0.0
        %2649 = vadd.xlane.f32.xlu0 %v2648
        %v2650 = vpop.xlane.xlu0 %2649
        %v2651 = vsel %vm746, %v2631, 0.0
        %2652 = vadd.xlane.f32.xlu0 %v2651
        %v2653 = vpop.xlane.xlu0 %2652
        %v2654 = vsel %vm746, %v2632, 0.0
        %2655 = vadd.xlane.f32.xlu0 %v2654
        %v2656 = vpop.xlane.xlu0 %2655
        %v2657 = vmul.f32 %v1661, %v1892
        %v2658 = vmul.f32 %v1664, %v1894
        %v2659 = vmul.f32 %v1669, %v1896
        %v2660 = vmul.f32 %v1672, %v1898
        %v2661 = vmul.f32 %v1677, %v1900
        %v2662 = vmul.f32 %v1680, %v1902
        %v2663 = vmul.f32 %v1685, %v1904
        %v2664 = vmul.f32 %v1688, %v1906
        %v2665 = vsel %vm746, %v2657, 0.0
        %2666 = vadd.xlane.f32.xlu0 %v2665
        %v2667 = vpop.xlane.xlu0 %2666
        %v2668 = vsel %vm746, %v2658, 0.0
        %2669 = vadd.xlane.f32.xlu0 %v2668
        %v2670 = vpop.xlane.xlu0 %2669
        %v2671 = vsel %vm746, %v2659, 0.0
        %2672 = vadd.xlane.f32.xlu0 %v2671
        %v2673 = vpop.xlane.xlu0 %2672
        %v2674 = vsel %vm746, %v2660, 0.0
        %2675 = vadd.xlane.f32.xlu0 %v2674
        %v2676 = vpop.xlane.xlu0 %2675
        %v2677 = vsel %vm746, %v2661, 0.0
        %2678 = vadd.xlane.f32.xlu0 %v2677
        %v2679 = vpop.xlane.xlu0 %2678
        %v2680 = vsel %vm746, %v2662, 0.0
        %2681 = vadd.xlane.f32.xlu0 %v2680
        %v2682 = vpop.xlane.xlu0 %2681
        %v2683 = vsel %vm746, %v2663, 0.0
        %2684 = vadd.xlane.f32.xlu0 %v2683
        %v2685 = vpop.xlane.xlu0 %2684
        %v2686 = vsel %vm746, %v2664, 0.0
        %2687 = vadd.xlane.f32.xlu0 %v2686
        %v2688 = vpop.xlane.xlu0 %2687
        %v2689 = vmul.f32 %v1661, %v1956
        %v2690 = vmul.f32 %v1664, %v1958
        %v2691 = vmul.f32 %v1669, %v1960
        %v2692 = vmul.f32 %v1672, %v1962
        %v2693 = vmul.f32 %v1677, %v1964
        %v2694 = vmul.f32 %v1680, %v1966
        %v2695 = vmul.f32 %v1685, %v1968
        %v2696 = vmul.f32 %v1688, %v1970
        %v2697 = vsel %vm746, %v2689, 0.0
        %2698 = vadd.xlane.f32.xlu0 %v2697
        %v2699 = vpop.xlane.xlu0 %2698
        %v2700 = vsel %vm746, %v2690, 0.0
        %2701 = vadd.xlane.f32.xlu0 %v2700
        %v2702 = vpop.xlane.xlu0 %2701
        %v2703 = vsel %vm746, %v2691, 0.0
        %2704 = vadd.xlane.f32.xlu0 %v2703
        %v2705 = vpop.xlane.xlu0 %2704
        %v2706 = vsel %vm746, %v2692, 0.0
        %2707 = vadd.xlane.f32.xlu0 %v2706
        %v2708 = vpop.xlane.xlu0 %2707
        %v2709 = vsel %vm746, %v2693, 0.0
        %2710 = vadd.xlane.f32.xlu0 %v2709
        %v2711 = vpop.xlane.xlu0 %2710
        %v2712 = vsel %vm746, %v2694, 0.0
        %2713 = vadd.xlane.f32.xlu0 %v2712
        %v2714 = vpop.xlane.xlu0 %2713
        %v2715 = vsel %vm746, %v2695, 0.0
        %2716 = vadd.xlane.f32.xlu0 %v2715
        %v2717 = vpop.xlane.xlu0 %2716
        %v2718 = vsel %vm746, %v2696, 0.0
        %2719 = vadd.xlane.f32.xlu0 %v2718
        %v2720 = vpop.xlane.xlu0 %2719
        %v2721 = vmul.f32 %v1661, %v2020
        %v2722 = vmul.f32 %v1664, %v2022
        %v2723 = vmul.f32 %v1669, %v2024
        %v2724 = vmul.f32 %v1672, %v2026
        %v2725 = vmul.f32 %v1677, %v2028
        %v2726 = vmul.f32 %v1680, %v2030
        %v2727 = vmul.f32 %v1685, %v2032
        %v2728 = vmul.f32 %v1688, %v2034
        %v2729 = vsel %vm746, %v2721, 0.0
        %2730 = vadd.xlane.f32.xlu0 %v2729
        %v2731 = vpop.xlane.xlu0 %2730
        %v2732 = vsel %vm746, %v2722, 0.0
        %2733 = vadd.xlane.f32.xlu0 %v2732
        %v2734 = vpop.xlane.xlu0 %2733
        %v2735 = vsel %vm746, %v2723, 0.0
        %2736 = vadd.xlane.f32.xlu0 %v2735
        %v2737 = vpop.xlane.xlu0 %2736
        %v2738 = vsel %vm746, %v2724, 0.0
        %2739 = vadd.xlane.f32.xlu0 %v2738
        %v2740 = vpop.xlane.xlu0 %2739
        %v2741 = vsel %vm746, %v2725, 0.0
        %2742 = vadd.xlane.f32.xlu0 %v2741
        %v2743 = vpop.xlane.xlu0 %2742
        %v2744 = vsel %vm746, %v2726, 0.0
        %2745 = vadd.xlane.f32.xlu0 %v2744
        %v2746 = vpop.xlane.xlu0 %2745
        %v2747 = vsel %vm746, %v2727, 0.0
        %2748 = vadd.xlane.f32.xlu0 %v2747
        %v2749 = vpop.xlane.xlu0 %2748
        %v2750 = vsel %vm746, %v2728, 0.0
        %2751 = vadd.xlane.f32.xlu0 %v2750
        %v2752 = vpop.xlane.xlu0 %2751
        %v2753 = vmul.f32 %v1661, %v2084
        %v2754 = vmul.f32 %v1664, %v2086
        %v2755 = vmul.f32 %v1669, %v2088
        %v2756 = vmul.f32 %v1672, %v2090
        %v2757 = vmul.f32 %v1677, %v2092
        %v2758 = vmul.f32 %v1680, %v2094
        %v2759 = vmul.f32 %v1685, %v2096
        %v2760 = vmul.f32 %v1688, %v2098
        %v2761 = vsel %vm746, %v2753, 0.0
        %2762 = vadd.xlane.f32.xlu0 %v2761
        %v2763 = vpop.xlane.xlu0 %2762
        %v2764 = vsel %vm746, %v2754, 0.0
        %2765 = vadd.xlane.f32.xlu0 %v2764
        %v2766 = vpop.xlane.xlu0 %2765
        %v2767 = vsel %vm746, %v2755, 0.0
        %2768 = vadd.xlane.f32.xlu0 %v2767
        %v2769 = vpop.xlane.xlu0 %2768
        %v2770 = vsel %vm746, %v2756, 0.0
        %2771 = vadd.xlane.f32.xlu0 %v2770
        %v2772 = vpop.xlane.xlu0 %2771
        %v2773 = vsel %vm746, %v2757, 0.0
        %2774 = vadd.xlane.f32.xlu0 %v2773
        %v2775 = vpop.xlane.xlu0 %2774
        %v2776 = vsel %vm746, %v2758, 0.0
        %2777 = vadd.xlane.f32.xlu0 %v2776
        %v2778 = vpop.xlane.xlu0 %2777
        %v2779 = vsel %vm746, %v2759, 0.0
        %2780 = vadd.xlane.f32.xlu0 %v2779
        %v2781 = vpop.xlane.xlu0 %2780
        %v2782 = vsel %vm746, %v2760, 0.0
        %2783 = vadd.xlane.f32.xlu0 %v2782
        %v2784 = vpop.xlane.xlu0 %2783
        %v2785 = vmul.f32 %v1661, %v2148
        %v2786 = vmul.f32 %v1664, %v2150
        %v2787 = vmul.f32 %v1669, %v2152
        %v2788 = vmul.f32 %v1672, %v2154
        %v2789 = vmul.f32 %v1677, %v2156
        %v2790 = vmul.f32 %v1680, %v2158
        %v2791 = vmul.f32 %v1685, %v2160
        %v2792 = vmul.f32 %v1688, %v2162
        %v2793 = vsel %vm746, %v2785, 0.0
        %2794 = vadd.xlane.f32.xlu0 %v2793
        %v2795 = vpop.xlane.xlu0 %2794
        %v2796 = vsel %vm746, %v2786, 0.0
        %2797 = vadd.xlane.f32.xlu0 %v2796
        %v2798 = vpop.xlane.xlu0 %2797
        %v2799 = vsel %vm746, %v2787, 0.0
        %2800 = vadd.xlane.f32.xlu0 %v2799
        %v2801 = vpop.xlane.xlu0 %2800
        %v2802 = vsel %vm746, %v2788, 0.0
        %2803 = vadd.xlane.f32.xlu0 %v2802
        %v2804 = vpop.xlane.xlu0 %2803
        %v2805 = vsel %vm746, %v2789, 0.0
        %2806 = vadd.xlane.f32.xlu0 %v2805
        %v2807 = vpop.xlane.xlu0 %2806
        %v2808 = vsel %vm746, %v2790, 0.0
        %2809 = vadd.xlane.f32.xlu0 %v2808
        %v2810 = vpop.xlane.xlu0 %2809
        %v2811 = vsel %vm746, %v2791, 0.0
        %2812 = vadd.xlane.f32.xlu0 %v2811
        %v2813 = vpop.xlane.xlu0 %2812
        %v2814 = vsel %vm746, %v2792, 0.0
        %2815 = vadd.xlane.f32.xlu0 %v2814
        %v2816 = vpop.xlane.xlu0 %2815
        %v2817 = vsel %vm2203, %v2635, %v2667
        %v2818 = vsel %vm2203, %v2638, %v2670
        %v2819 = vsel %vm2203, %v2641, %v2673
        %v2820 = vsel %vm2203, %v2644, %v2676
        %v2821 = vsel %vm2203, %v2647, %v2679
        %v2822 = vsel %vm2203, %v2650, %v2682
        %v2823 = vsel %vm2203, %v2653, %v2685
        %v2824 = vsel %vm2203, %v2656, %v2688
        %v2825 = vsel %vm2212, %v2817, %v2699
        %v2826 = vsel %vm2212, %v2818, %v2702
        %v2827 = vsel %vm2212, %v2819, %v2705
        %v2828 = vsel %vm2212, %v2820, %v2708
        %v2829 = vsel %vm2212, %v2821, %v2711
        %v2830 = vsel %vm2212, %v2822, %v2714
        %v2831 = vsel %vm2212, %v2823, %v2717
        %v2832 = vsel %vm2212, %v2824, %v2720
        %v2833 = vsel %vm2221, %v2825, %v2731
        %v2834 = vsel %vm2221, %v2826, %v2734
        %v2835 = vsel %vm2221, %v2827, %v2737
        %v2836 = vsel %vm2221, %v2828, %v2740
        %v2837 = vsel %vm2221, %v2829, %v2743
        %v2838 = vsel %vm2221, %v2830, %v2746
        %v2839 = vsel %vm2221, %v2831, %v2749
        %v2840 = vsel %vm2221, %v2832, %v2752
        %v2841 = vsel %vm2230, %v2833, %v2763
        %v2842 = vsel %vm2230, %v2834, %v2766
        %v2843 = vsel %vm2230, %v2835, %v2769
        %v2844 = vsel %vm2230, %v2836, %v2772
        %v2845 = vsel %vm2230, %v2837, %v2775
        %v2846 = vsel %vm2230, %v2838, %v2778
        %v2847 = vsel %vm2230, %v2839, %v2781
        %v2848 = vsel %vm2230, %v2840, %v2784
        %v2849 = vsel %vm2239, %v2841, %v2795
        %v2850 = vsel %vm2239, %v2842, %v2798
        %v2851 = vsel %vm2239, %v2843, %v2801
        %v2852 = vsel %vm2239, %v2844, %v2804
        %v2853 = vsel %vm2239, %v2845, %v2807
        %v2854 = vsel %vm2239, %v2846, %v2810
        %v2855 = vsel %vm2239, %v2847, %v2813
        %v2856 = vsel %vm2239, %v2848, %v2816
        %v2857 = vsel %vm2248, %v2849, -inf
        %2858 = vmax.xlane.f32.xlu0 %v2857
        %v2859 = vpop.xlane.xlu0 %2858
        %v2860 = vsel %vm2248, %v2850, -inf
        %2861 = vmax.xlane.f32.xlu0 %v2860
        %v2862 = vpop.xlane.xlu0 %2861
        %v2863 = vsel %vm2248, %v2851, -inf
        %2864 = vmax.xlane.f32.xlu0 %v2863
        %v2865 = vpop.xlane.xlu0 %2864
        %v2866 = vsel %vm2248, %v2852, -inf
        %2867 = vmax.xlane.f32.xlu0 %v2866
        %v2868 = vpop.xlane.xlu0 %2867
        %v2869 = vsel %vm2248, %v2853, -inf
        %2870 = vmax.xlane.f32.xlu0 %v2869
        %v2871 = vpop.xlane.xlu0 %2870
        %v2872 = vsel %vm2248, %v2854, -inf
        %2873 = vmax.xlane.f32.xlu0 %v2872
        %v2874 = vpop.xlane.xlu0 %2873
        %v2875 = vsel %vm2248, %v2855, -inf
        %2876 = vmax.xlane.f32.xlu0 %v2875
        %v2877 = vpop.xlane.xlu0 %2876
        %v2878 = vsel %vm2248, %v2856, -inf
        %2879 = vmax.xlane.f32.xlu0 %v2878
        %v2880 = vpop.xlane.xlu0 %2879
        %v2881 = vsub.f32 %v2849, %v2859
        %v2882 = vsub.f32 %v2850, %v2862
        %v2883 = vsub.f32 %v2851, %v2865
        %v2884 = vsub.f32 %v2852, %v2868
        %v2885 = vsub.f32 %v2853, %v2871
        %v2886 = vsub.f32 %v2854, %v2874
        %v2887 = vsub.f32 %v2855, %v2877
        %v2888 = vsub.f32 %v2856, %v2880
        %v2889 = vmul.f32 %v2881, 1.442695
        %v2890 = vpow.pop %v2889
        %v2891 = vmul.f32 %v2882, 1.442695
        %v2892 = vpow.pop %v2891
        %v2893 = vmul.f32 %v2883, 1.442695
        %v2894 = vpow.pop %v2893
        %v2895 = vmul.f32 %v2884, 1.442695
        %v2896 = vpow.pop %v2895
        %v2897 = vmul.f32 %v2885, 1.442695
        %v2898 = vpow.pop %v2897
        %v2899 = vmul.f32 %v2886, 1.442695
        %v2900 = vpow.pop %v2899
        %v2901 = vmul.f32 %v2887, 1.442695
        %v2902 = vpow.pop %v2901
        %v2903 = vmul.f32 %v2888, 1.442695
        %v2904 = vpow.pop %v2903
        %v2905 = vsel %vm2248, %v2890, 0.0
        %2906 = vadd.xlane.f32.xlu0 %v2905
        %v2907 = vpop.xlane.xlu0 %2906
        %v2908 = vsel %vm2248, %v2892, 0.0
        %2909 = vadd.xlane.f32.xlu0 %v2908
        %v2910 = vpop.xlane.xlu0 %2909
        %v2911 = vsel %vm2248, %v2894, 0.0
        %2912 = vadd.xlane.f32.xlu0 %v2911
        %v2913 = vpop.xlane.xlu0 %2912
        %v2914 = vsel %vm2248, %v2896, 0.0
        %2915 = vadd.xlane.f32.xlu0 %v2914
        %v2916 = vpop.xlane.xlu0 %2915
        %v2917 = vsel %vm2248, %v2898, 0.0
        %2918 = vadd.xlane.f32.xlu0 %v2917
        %v2919 = vpop.xlane.xlu0 %2918
        %v2920 = vsel %vm2248, %v2900, 0.0
        %2921 = vadd.xlane.f32.xlu0 %v2920
        %v2922 = vpop.xlane.xlu0 %2921
        %v2923 = vsel %vm2248, %v2902, 0.0
        %2924 = vadd.xlane.f32.xlu0 %v2923
        %v2925 = vpop.xlane.xlu0 %2924
        %v2926 = vsel %vm2248, %v2904, 0.0
        %2927 = vadd.xlane.f32.xlu0 %v2926
        %v2928 = vpop.xlane.xlu0 %2927
        %v2929 = vrcp.pop %v2907
        %v2930 = vrcp.pop %v2910
        %v2931 = vrcp.pop %v2913
        %v2932 = vrcp.pop %v2916
        %v2933 = vrcp.pop %v2919
        %v2934 = vrcp.pop %v2922
        %v2935 = vrcp.pop %v2925
        %v2936 = vrcp.pop %v2928
        %v2937 = vmul.f32 %v2890, %v2929
        %v2938 = vmul.f32 %v2892, %v2930
        %v2939 = vmul.f32 %v2894, %v2931
        %v2940 = vmul.f32 %v2896, %v2932
        %v2941 = vmul.f32 %v2898, %v2933
        %v2942 = vmul.f32 %v2900, %v2934
        %v2943 = vmul.f32 %v2902, %v2935
        %v2944 = vmul.f32 %v2904, %v2936
        %2946 = vset.pattern.permute.xlu0 0
        %2947 = vperm.xlu0 %2946, %v2937
        %v2948 = vpop.permute.xlu0 %2947
        %2951 = vset.pattern.permute.xlu0 0
        %2952 = vperm.xlu0 %2951, %v2938
        %v2953 = vpop.permute.xlu0 %2952
        %2956 = vset.pattern.permute.xlu0 0
        %2957 = vperm.xlu0 %2956, %v2939
        %v2958 = vpop.permute.xlu0 %2957
        %2961 = vset.pattern.permute.xlu0 0
        %2962 = vperm.xlu0 %2961, %v2940
        %v2963 = vpop.permute.xlu0 %2962
        %2966 = vset.pattern.permute.xlu0 0
        %2967 = vperm.xlu0 %2966, %v2941
        %v2968 = vpop.permute.xlu0 %2967
        %2971 = vset.pattern.permute.xlu0 0
        %2972 = vperm.xlu0 %2971, %v2942
        %v2973 = vpop.permute.xlu0 %2972
        %2976 = vset.pattern.permute.xlu0 0
        %2977 = vperm.xlu0 %2976, %v2943
        %v2978 = vpop.permute.xlu0 %2977
        %2981 = vset.pattern.permute.xlu0 0
        %2982 = vperm.xlu0 %2981, %v2944
        %v2983 = vpop.permute.xlu0 %2982
        %v2985 = vmul.f32 %v2948, %v1629
        %v2986 = vmul.f32 %v2953, %v1632
        %v2987 = vmul.f32 %v2958, %v1637
        %v2988 = vmul.f32 %v2963, %v1640
        %v2989 = vmul.f32 %v2968, %v1645
        %v2990 = vmul.f32 %v2973, %v1648
        %v2991 = vmul.f32 %v2978, %v1653
        %v2992 = vmul.f32 %v2983, %v1656
        %2993 = vset.pattern.permute.xlu0 1
        %2994 = vperm.xlu0 %2993, %v2937
        %v2995 = vpop.permute.xlu0 %2994
        %2997 = vset.pattern.permute.xlu0 1
        %2998 = vperm.xlu0 %2997, %v2938
        %v2999 = vpop.permute.xlu0 %2998
        %3001 = vset.pattern.permute.xlu0 1
        %3002 = vperm.xlu0 %3001, %v2939
        %v3003 = vpop.permute.xlu0 %3002
        %3005 = vset.pattern.permute.xlu0 1
        %3006 = vperm.xlu0 %3005, %v2940
        %v3007 = vpop.permute.xlu0 %3006
        %3009 = vset.pattern.permute.xlu0 1
        %3010 = vperm.xlu0 %3009, %v2941
        %v3011 = vpop.permute.xlu0 %3010
        %3013 = vset.pattern.permute.xlu0 1
        %3014 = vperm.xlu0 %3013, %v2942
        %v3015 = vpop.permute.xlu0 %3014
        %3017 = vset.pattern.permute.xlu0 1
        %3018 = vperm.xlu0 %3017, %v2943
        %v3019 = vpop.permute.xlu0 %3018
        %3021 = vset.pattern.permute.xlu0 1
        %3022 = vperm.xlu0 %3021, %v2944
        %v3023 = vpop.permute.xlu0 %3022
        %v3025 = vmul.f32 %v2995, %v1661
        %v3026 = vmul.f32 %v2999, %v1664
        %v3027 = vmul.f32 %v3003, %v1669
        %v3028 = vmul.f32 %v3007, %v1672
        %v3029 = vmul.f32 %v3011, %v1677
        %v3030 = vmul.f32 %v3015, %v1680
        %v3031 = vmul.f32 %v3019, %v1685
        %v3032 = vmul.f32 %v3023, %v1688
        %v3033 = vadd.f32 %v2985, %v3025
        %v3034 = vadd.f32 %v2986, %v3026
        %v3035 = vadd.f32 %v2987, %v3027
        %v3036 = vadd.f32 %v2988, %v3028
        %v3037 = vadd.f32 %v2989, %v3029
        %v3038 = vadd.f32 %v2990, %v3030
        %v3039 = vadd.f32 %v2991, %v3031
        %v3040 = vadd.f32 %v2992, %v3032
        %3041 = vset.pattern.permute.xlu0 2
        %3042 = vperm.xlu0 %3041, %v2937
        %v3043 = vpop.permute.xlu0 %3042
        %3045 = vset.pattern.permute.xlu0 2
        %3046 = vperm.xlu0 %3045, %v2938
        %v3047 = vpop.permute.xlu0 %3046
        %3049 = vset.pattern.permute.xlu0 2
        %3050 = vperm.xlu0 %3049, %v2939
        %v3051 = vpop.permute.xlu0 %3050
        %3053 = vset.pattern.permute.xlu0 2
        %3054 = vperm.xlu0 %3053, %v2940
        %v3055 = vpop.permute.xlu0 %3054
        %3057 = vset.pattern.permute.xlu0 2
        %3058 = vperm.xlu0 %3057, %v2941
        %v3059 = vpop.permute.xlu0 %3058
        %3061 = vset.pattern.permute.xlu0 2
        %3062 = vperm.xlu0 %3061, %v2942
        %v3063 = vpop.permute.xlu0 %3062
        %3065 = vset.pattern.permute.xlu0 2
        %3066 = vperm.xlu0 %3065, %v2943
        %v3067 = vpop.permute.xlu0 %3066
        %3069 = vset.pattern.permute.xlu0 2
        %3070 = vperm.xlu0 %3069, %v2944
        %v3071 = vpop.permute.xlu0 %3070
        %v3073 = vmul.f32 %v3043, %v1693
        %v3074 = vmul.f32 %v3047, %v1696
        %v3075 = vmul.f32 %v3051, %v1701
        %v3076 = vmul.f32 %v3055, %v1704
        %v3077 = vmul.f32 %v3059, %v1709
        %v3078 = vmul.f32 %v3063, %v1712
        %v3079 = vmul.f32 %v3067, %v1717
        %v3080 = vmul.f32 %v3071, %v1720
        %v3081 = vadd.f32 %v3033, %v3073
        %v3082 = vadd.f32 %v3034, %v3074
        %v3083 = vadd.f32 %v3035, %v3075
        %v3084 = vadd.f32 %v3036, %v3076
        %v3085 = vadd.f32 %v3037, %v3077
        %v3086 = vadd.f32 %v3038, %v3078
        %v3087 = vadd.f32 %v3039, %v3079
        %v3088 = vadd.f32 %v3040, %v3080
        %3089 = vset.pattern.permute.xlu0 3
        %3090 = vperm.xlu0 %3089, %v2937
        %v3091 = vpop.permute.xlu0 %3090
        %3093 = vset.pattern.permute.xlu0 3
        %3094 = vperm.xlu0 %3093, %v2938
        %v3095 = vpop.permute.xlu0 %3094
        %3097 = vset.pattern.permute.xlu0 3
        %3098 = vperm.xlu0 %3097, %v2939
        %v3099 = vpop.permute.xlu0 %3098
        %3101 = vset.pattern.permute.xlu0 3
        %3102 = vperm.xlu0 %3101, %v2940
        %v3103 = vpop.permute.xlu0 %3102
        %3105 = vset.pattern.permute.xlu0 3
        %3106 = vperm.xlu0 %3105, %v2941
        %v3107 = vpop.permute.xlu0 %3106
        %3109 = vset.pattern.permute.xlu0 3
        %3110 = vperm.xlu0 %3109, %v2942
        %v3111 = vpop.permute.xlu0 %3110
        %3113 = vset.pattern.permute.xlu0 3
        %3114 = vperm.xlu0 %3113, %v2943
        %v3115 = vpop.permute.xlu0 %3114
        %3117 = vset.pattern.permute.xlu0 3
        %3118 = vperm.xlu0 %3117, %v2944
        %v3119 = vpop.permute.xlu0 %3118
        %v3121 = vmul.f32 %v3091, %v1725
        %v3122 = vmul.f32 %v3095, %v1728
        %v3123 = vmul.f32 %v3099, %v1733
        %v3124 = vmul.f32 %v3103, %v1736
        %v3125 = vmul.f32 %v3107, %v1741
        %v3126 = vmul.f32 %v3111, %v1744
        %v3127 = vmul.f32 %v3115, %v1749
        %v3128 = vmul.f32 %v3119, %v1752
        %v3129 = vadd.f32 %v3081, %v3121
        %v3130 = vadd.f32 %v3082, %v3122
        %v3131 = vadd.f32 %v3083, %v3123
        %v3132 = vadd.f32 %v3084, %v3124
        %v3133 = vadd.f32 %v3085, %v3125
        %v3134 = vadd.f32 %v3086, %v3126
        %v3135 = vadd.f32 %v3087, %v3127
        %v3136 = vadd.f32 %v3088, %v3128
        %3137 = vset.pattern.permute.xlu0 4
        %3138 = vperm.xlu0 %3137, %v2937
        %v3139 = vpop.permute.xlu0 %3138
        %3141 = vset.pattern.permute.xlu0 4
        %3142 = vperm.xlu0 %3141, %v2938
        %v3143 = vpop.permute.xlu0 %3142
        %3145 = vset.pattern.permute.xlu0 4
        %3146 = vperm.xlu0 %3145, %v2939
        %v3147 = vpop.permute.xlu0 %3146
        %3149 = vset.pattern.permute.xlu0 4
        %3150 = vperm.xlu0 %3149, %v2940
        %v3151 = vpop.permute.xlu0 %3150
        %3153 = vset.pattern.permute.xlu0 4
        %3154 = vperm.xlu0 %3153, %v2941
        %v3155 = vpop.permute.xlu0 %3154
        %3157 = vset.pattern.permute.xlu0 4
        %3158 = vperm.xlu0 %3157, %v2942
        %v3159 = vpop.permute.xlu0 %3158
        %3161 = vset.pattern.permute.xlu0 4
        %3162 = vperm.xlu0 %3161, %v2943
        %v3163 = vpop.permute.xlu0 %3162
        %3165 = vset.pattern.permute.xlu0 4
        %3166 = vperm.xlu0 %3165, %v2944
        %v3167 = vpop.permute.xlu0 %3166
        %v3169 = vmul.f32 %v3139, %v1757
        %v3170 = vmul.f32 %v3143, %v1760
        %v3171 = vmul.f32 %v3147, %v1765
        %v3172 = vmul.f32 %v3151, %v1768
        %v3173 = vmul.f32 %v3155, %v1773
        %v3174 = vmul.f32 %v3159, %v1776
        %v3175 = vmul.f32 %v3163, %v1781
        %v3176 = vmul.f32 %v3167, %v1784
        %v3177 = vadd.f32 %v3129, %v3169
        %v3178 = vadd.f32 %v3130, %v3170
        %v3179 = vadd.f32 %v3131, %v3171
        %v3180 = vadd.f32 %v3132, %v3172
        %v3181 = vadd.f32 %v3133, %v3173
        %v3182 = vadd.f32 %v3134, %v3174
        %v3183 = vadd.f32 %v3135, %v3175
        %v3184 = vadd.f32 %v3136, %v3176
        %3185 = vset.pattern.permute.xlu0 5
        %3186 = vperm.xlu0 %3185, %v2937
        %v3187 = vpop.permute.xlu0 %3186
        %3189 = vset.pattern.permute.xlu0 5
        %3190 = vperm.xlu0 %3189, %v2938
        %v3191 = vpop.permute.xlu0 %3190
        %3193 = vset.pattern.permute.xlu0 5
        %3194 = vperm.xlu0 %3193, %v2939
        %v3195 = vpop.permute.xlu0 %3194
        %3197 = vset.pattern.permute.xlu0 5
        %3198 = vperm.xlu0 %3197, %v2940
        %v3199 = vpop.permute.xlu0 %3198
        %3201 = vset.pattern.permute.xlu0 5
        %3202 = vperm.xlu0 %3201, %v2941
        %v3203 = vpop.permute.xlu0 %3202
        %3205 = vset.pattern.permute.xlu0 5
        %3206 = vperm.xlu0 %3205, %v2942
        %v3207 = vpop.permute.xlu0 %3206
        %3209 = vset.pattern.permute.xlu0 5
        %3210 = vperm.xlu0 %3209, %v2943
        %v3211 = vpop.permute.xlu0 %3210
        %3213 = vset.pattern.permute.xlu0 5
        %3214 = vperm.xlu0 %3213, %v2944
        %v3215 = vpop.permute.xlu0 %3214
        %v3217 = vmul.f32 %v3187, %v1789
        %v3218 = vmul.f32 %v3191, %v1792
        %v3219 = vmul.f32 %v3195, %v1797
        %v3220 = vmul.f32 %v3199, %v1800
        %v3221 = vmul.f32 %v3203, %v1805
        %v3222 = vmul.f32 %v3207, %v1808
        %v3223 = vmul.f32 %v3211, %v1813
        %v3224 = vmul.f32 %v3215, %v1816
        %v3225 = vadd.f32 %v3177, %v3217
        %v3226 = vadd.f32 %v3178, %v3218
        %v3227 = vadd.f32 %v3179, %v3219
        %v3228 = vadd.f32 %v3180, %v3220
        %v3229 = vadd.f32 %v3181, %v3221
        %v3230 = vadd.f32 %v3182, %v3222
        %v3231 = vadd.f32 %v3183, %v3223
        %v3232 = vadd.f32 %v3184, %v3224
        %v3233 = vmul.f32 %v1693, %v1828
        %v3234 = vmul.f32 %v1696, %v1830
        %v3235 = vmul.f32 %v1701, %v1832
        %v3236 = vmul.f32 %v1704, %v1834
        %v3237 = vmul.f32 %v1709, %v1836
        %v3238 = vmul.f32 %v1712, %v1838
        %v3239 = vmul.f32 %v1717, %v1840
        %v3240 = vmul.f32 %v1720, %v1842
        %v3241 = vsel %vm746, %v3233, 0.0
        %3242 = vadd.xlane.f32.xlu0 %v3241
        %v3243 = vpop.xlane.xlu0 %3242
        %v3244 = vsel %vm746, %v3234, 0.0
        %3245 = vadd.xlane.f32.xlu0 %v3244
        %v3246 = vpop.xlane.xlu0 %3245
        %v3247 = vsel %vm746, %v3235, 0.0
        %3248 = vadd.xlane.f32.xlu0 %v3247
        %v3249 = vpop.xlane.xlu0 %3248
        %v3250 = vsel %vm746, %v3236, 0.0
        %3251 = vadd.xlane.f32.xlu0 %v3250
        %v3252 = vpop.xlane.xlu0 %3251
        %v3253 = vsel %vm746, %v3237, 0.0
        %3254 = vadd.xlane.f32.xlu0 %v3253
        %v3255 = vpop.xlane.xlu0 %3254
        %v3256 = vsel %vm746, %v3238, 0.0
        %3257 = vadd.xlane.f32.xlu0 %v3256
        %v3258 = vpop.xlane.xlu0 %3257
        %v3259 = vsel %vm746, %v3239, 0.0
        %3260 = vadd.xlane.f32.xlu0 %v3259
        %v3261 = vpop.xlane.xlu0 %3260
        %v3262 = vsel %vm746, %v3240, 0.0
        %3263 = vadd.xlane.f32.xlu0 %v3262
        %v3264 = vpop.xlane.xlu0 %3263
        %v3265 = vmul.f32 %v1693, %v1892
        %v3266 = vmul.f32 %v1696, %v1894
        %v3267 = vmul.f32 %v1701, %v1896
        %v3268 = vmul.f32 %v1704, %v1898
        %v3269 = vmul.f32 %v1709, %v1900
        %v3270 = vmul.f32 %v1712, %v1902
        %v3271 = vmul.f32 %v1717, %v1904
        %v3272 = vmul.f32 %v1720, %v1906
        %v3273 = vsel %vm746, %v3265, 0.0
        %3274 = vadd.xlane.f32.xlu0 %v3273
        %v3275 = vpop.xlane.xlu0 %3274
        %v3276 = vsel %vm746, %v3266, 0.0
        %3277 = vadd.xlane.f32.xlu0 %v3276
        %v3278 = vpop.xlane.xlu0 %3277
        %v3279 = vsel %vm746, %v3267, 0.0
        %3280 = vadd.xlane.f32.xlu0 %v3279
        %v3281 = vpop.xlane.xlu0 %3280
        %v3282 = vsel %vm746, %v3268, 0.0
        %3283 = vadd.xlane.f32.xlu0 %v3282
        %v3284 = vpop.xlane.xlu0 %3283
        %v3285 = vsel %vm746, %v3269, 0.0
        %3286 = vadd.xlane.f32.xlu0 %v3285
        %v3287 = vpop.xlane.xlu0 %3286
        %v3288 = vsel %vm746, %v3270, 0.0
        %3289 = vadd.xlane.f32.xlu0 %v3288
        %v3290 = vpop.xlane.xlu0 %3289
        %v3291 = vsel %vm746, %v3271, 0.0
        %3292 = vadd.xlane.f32.xlu0 %v3291
        %v3293 = vpop.xlane.xlu0 %3292
        %v3294 = vsel %vm746, %v3272, 0.0
        %3295 = vadd.xlane.f32.xlu0 %v3294
        %v3296 = vpop.xlane.xlu0 %3295
        %v3297 = vmul.f32 %v1693, %v1956
        %v3298 = vmul.f32 %v1696, %v1958
        %v3299 = vmul.f32 %v1701, %v1960
        %v3300 = vmul.f32 %v1704, %v1962
        %v3301 = vmul.f32 %v1709, %v1964
        %v3302 = vmul.f32 %v1712, %v1966
        %v3303 = vmul.f32 %v1717, %v1968
        %v3304 = vmul.f32 %v1720, %v1970
        %v3305 = vsel %vm746, %v3297, 0.0
        %3306 = vadd.xlane.f32.xlu0 %v3305
        %v3307 = vpop.xlane.xlu0 %3306
        %v3308 = vsel %vm746, %v3298, 0.0
        %3309 = vadd.xlane.f32.xlu0 %v3308
        %v3310 = vpop.xlane.xlu0 %3309
        %v3311 = vsel %vm746, %v3299, 0.0
        %3312 = vadd.xlane.f32.xlu0 %v3311
        %v3313 = vpop.xlane.xlu0 %3312
        %v3314 = vsel %vm746, %v3300, 0.0
        %3315 = vadd.xlane.f32.xlu0 %v3314
        %v3316 = vpop.xlane.xlu0 %3315
        %v3317 = vsel %vm746, %v3301, 0.0
        %3318 = vadd.xlane.f32.xlu0 %v3317
        %v3319 = vpop.xlane.xlu0 %3318
        %v3320 = vsel %vm746, %v3302, 0.0
        %3321 = vadd.xlane.f32.xlu0 %v3320
        %v3322 = vpop.xlane.xlu0 %3321
        %v3323 = vsel %vm746, %v3303, 0.0
        %3324 = vadd.xlane.f32.xlu0 %v3323
        %v3325 = vpop.xlane.xlu0 %3324
        %v3326 = vsel %vm746, %v3304, 0.0
        %3327 = vadd.xlane.f32.xlu0 %v3326
        %v3328 = vpop.xlane.xlu0 %3327
        %v3329 = vmul.f32 %v1693, %v2020
        %v3330 = vmul.f32 %v1696, %v2022
        %v3331 = vmul.f32 %v1701, %v2024
        %v3332 = vmul.f32 %v1704, %v2026
        %v3333 = vmul.f32 %v1709, %v2028
        %v3334 = vmul.f32 %v1712, %v2030
        %v3335 = vmul.f32 %v1717, %v2032
        %v3336 = vmul.f32 %v1720, %v2034
        %v3337 = vsel %vm746, %v3329, 0.0
        %3338 = vadd.xlane.f32.xlu0 %v3337
        %v3339 = vpop.xlane.xlu0 %3338
        %v3340 = vsel %vm746, %v3330, 0.0
        %3341 = vadd.xlane.f32.xlu0 %v3340
        %v3342 = vpop.xlane.xlu0 %3341
        %v3343 = vsel %vm746, %v3331, 0.0
        %3344 = vadd.xlane.f32.xlu0 %v3343
        %v3345 = vpop.xlane.xlu0 %3344
        %v3346 = vsel %vm746, %v3332, 0.0
        %3347 = vadd.xlane.f32.xlu0 %v3346
        %v3348 = vpop.xlane.xlu0 %3347
        %v3349 = vsel %vm746, %v3333, 0.0
        %3350 = vadd.xlane.f32.xlu0 %v3349
        %v3351 = vpop.xlane.xlu0 %3350
        %v3352 = vsel %vm746, %v3334, 0.0
        %3353 = vadd.xlane.f32.xlu0 %v3352
        %v3354 = vpop.xlane.xlu0 %3353
        %v3355 = vsel %vm746, %v3335, 0.0
        %3356 = vadd.xlane.f32.xlu0 %v3355
        %v3357 = vpop.xlane.xlu0 %3356
        %v3358 = vsel %vm746, %v3336, 0.0
        %3359 = vadd.xlane.f32.xlu0 %v3358
        %v3360 = vpop.xlane.xlu0 %3359
        %v3361 = vmul.f32 %v1693, %v2084
        %v3362 = vmul.f32 %v1696, %v2086
        %v3363 = vmul.f32 %v1701, %v2088
        %v3364 = vmul.f32 %v1704, %v2090
        %v3365 = vmul.f32 %v1709, %v2092
        %v3366 = vmul.f32 %v1712, %v2094
        %v3367 = vmul.f32 %v1717, %v2096
        %v3368 = vmul.f32 %v1720, %v2098
        %v3369 = vsel %vm746, %v3361, 0.0
        %3370 = vadd.xlane.f32.xlu0 %v3369
        %v3371 = vpop.xlane.xlu0 %3370
        %v3372 = vsel %vm746, %v3362, 0.0
        %3373 = vadd.xlane.f32.xlu0 %v3372
        %v3374 = vpop.xlane.xlu0 %3373
        %v3375 = vsel %vm746, %v3363, 0.0
        %3376 = vadd.xlane.f32.xlu0 %v3375
        %v3377 = vpop.xlane.xlu0 %3376
        %v3378 = vsel %vm746, %v3364, 0.0
        %3379 = vadd.xlane.f32.xlu0 %v3378
        %v3380 = vpop.xlane.xlu0 %3379
        %v3381 = vsel %vm746, %v3365, 0.0
        %3382 = vadd.xlane.f32.xlu0 %v3381
        %v3383 = vpop.xlane.xlu0 %3382
        %v3384 = vsel %vm746, %v3366, 0.0
        %3385 = vadd.xlane.f32.xlu0 %v3384
        %v3386 = vpop.xlane.xlu0 %3385
        %v3387 = vsel %vm746, %v3367, 0.0
        %3388 = vadd.xlane.f32.xlu0 %v3387
        %v3389 = vpop.xlane.xlu0 %3388
        %v3390 = vsel %vm746, %v3368, 0.0
        %3391 = vadd.xlane.f32.xlu0 %v3390
        %v3392 = vpop.xlane.xlu0 %3391
        %v3393 = vmul.f32 %v1693, %v2148
        %v3394 = vmul.f32 %v1696, %v2150
        %v3395 = vmul.f32 %v1701, %v2152
        %v3396 = vmul.f32 %v1704, %v2154
        %v3397 = vmul.f32 %v1709, %v2156
        %v3398 = vmul.f32 %v1712, %v2158
        %v3399 = vmul.f32 %v1717, %v2160
        %v3400 = vmul.f32 %v1720, %v2162
        %v3401 = vsel %vm746, %v3393, 0.0
        %3402 = vadd.xlane.f32.xlu0 %v3401
        %v3403 = vpop.xlane.xlu0 %3402
        %v3404 = vsel %vm746, %v3394, 0.0
        %3405 = vadd.xlane.f32.xlu0 %v3404
        %v3406 = vpop.xlane.xlu0 %3405
        %v3407 = vsel %vm746, %v3395, 0.0
        %3408 = vadd.xlane.f32.xlu0 %v3407
        %v3409 = vpop.xlane.xlu0 %3408
        %v3410 = vsel %vm746, %v3396, 0.0
        %3411 = vadd.xlane.f32.xlu0 %v3410
        %v3412 = vpop.xlane.xlu0 %3411
        %v3413 = vsel %vm746, %v3397, 0.0
        %3414 = vadd.xlane.f32.xlu0 %v3413
        %v3415 = vpop.xlane.xlu0 %3414
        %v3416 = vsel %vm746, %v3398, 0.0
        %3417 = vadd.xlane.f32.xlu0 %v3416
        %v3418 = vpop.xlane.xlu0 %3417
        %v3419 = vsel %vm746, %v3399, 0.0
        %3420 = vadd.xlane.f32.xlu0 %v3419
        %v3421 = vpop.xlane.xlu0 %3420
        %v3422 = vsel %vm746, %v3400, 0.0
        %3423 = vadd.xlane.f32.xlu0 %v3422
        %v3424 = vpop.xlane.xlu0 %3423
        %v3425 = vsel %vm2203, %v3243, %v3275
        %v3426 = vsel %vm2203, %v3246, %v3278
        %v3427 = vsel %vm2203, %v3249, %v3281
        %v3428 = vsel %vm2203, %v3252, %v3284
        %v3429 = vsel %vm2203, %v3255, %v3287
        %v3430 = vsel %vm2203, %v3258, %v3290
        %v3431 = vsel %vm2203, %v3261, %v3293
        %v3432 = vsel %vm2203, %v3264, %v3296
        %v3433 = vsel %vm2212, %v3425, %v3307
        %v3434 = vsel %vm2212, %v3426, %v3310
        %v3435 = vsel %vm2212, %v3427, %v3313
        %v3436 = vsel %vm2212, %v3428, %v3316
        %v3437 = vsel %vm2212, %v3429, %v3319
        %v3438 = vsel %vm2212, %v3430, %v3322
        %v3439 = vsel %vm2212, %v3431, %v3325
        %v3440 = vsel %vm2212, %v3432, %v3328
        %v3441 = vsel %vm2221, %v3433, %v3339
        %v3442 = vsel %vm2221, %v3434, %v3342
        %v3443 = vsel %vm2221, %v3435, %v3345
        %v3444 = vsel %vm2221, %v3436, %v3348
        %v3445 = vsel %vm2221, %v3437, %v3351
        %v3446 = vsel %vm2221, %v3438, %v3354
        %v3447 = vsel %vm2221, %v3439, %v3357
        %v3448 = vsel %vm2221, %v3440, %v3360
        %v3449 = vsel %vm2230, %v3441, %v3371
        %v3450 = vsel %vm2230, %v3442, %v3374
        %v3451 = vsel %vm2230, %v3443, %v3377
        %v3452 = vsel %vm2230, %v3444, %v3380
        %v3453 = vsel %vm2230, %v3445, %v3383
        %v3454 = vsel %vm2230, %v3446, %v3386
        %v3455 = vsel %vm2230, %v3447, %v3389
        %v3456 = vsel %vm2230, %v3448, %v3392
        %v3457 = vsel %vm2239, %v3449, %v3403
        %v3458 = vsel %vm2239, %v3450, %v3406
        %v3459 = vsel %vm2239, %v3451, %v3409
        %v3460 = vsel %vm2239, %v3452, %v3412
        %v3461 = vsel %vm2239, %v3453, %v3415
        %v3462 = vsel %vm2239, %v3454, %v3418
        %v3463 = vsel %vm2239, %v3455, %v3421
        %v3464 = vsel %vm2239, %v3456, %v3424
        %v3465 = vsel %vm2248, %v3457, -inf
        %3466 = vmax.xlane.f32.xlu0 %v3465
        %v3467 = vpop.xlane.xlu0 %3466
        %v3468 = vsel %vm2248, %v3458, -inf
        %3469 = vmax.xlane.f32.xlu0 %v3468
        %v3470 = vpop.xlane.xlu0 %3469
        %v3471 = vsel %vm2248, %v3459, -inf
        %3472 = vmax.xlane.f32.xlu0 %v3471
        %v3473 = vpop.xlane.xlu0 %3472
        %v3474 = vsel %vm2248, %v3460, -inf
        %3475 = vmax.xlane.f32.xlu0 %v3474
        %v3476 = vpop.xlane.xlu0 %3475
        %v3477 = vsel %vm2248, %v3461, -inf
        %3478 = vmax.xlane.f32.xlu0 %v3477
        %v3479 = vpop.xlane.xlu0 %3478
        %v3480 = vsel %vm2248, %v3462, -inf
        %3481 = vmax.xlane.f32.xlu0 %v3480
        %v3482 = vpop.xlane.xlu0 %3481
        %v3483 = vsel %vm2248, %v3463, -inf
        %3484 = vmax.xlane.f32.xlu0 %v3483
        %v3485 = vpop.xlane.xlu0 %3484
        %v3486 = vsel %vm2248, %v3464, -inf
        %3487 = vmax.xlane.f32.xlu0 %v3486
        %v3488 = vpop.xlane.xlu0 %3487
        %v3489 = vsub.f32 %v3457, %v3467
        %v3490 = vsub.f32 %v3458, %v3470
        %v3491 = vsub.f32 %v3459, %v3473
        %v3492 = vsub.f32 %v3460, %v3476
        %v3493 = vsub.f32 %v3461, %v3479
        %v3494 = vsub.f32 %v3462, %v3482
        %v3495 = vsub.f32 %v3463, %v3485
        %v3496 = vsub.f32 %v3464, %v3488
        %v3497 = vmul.f32 %v3489, 1.442695
        %v3498 = vpow.pop %v3497
        %v3499 = vmul.f32 %v3490, 1.442695
        %v3500 = vpow.pop %v3499
        %v3501 = vmul.f32 %v3491, 1.442695
        %v3502 = vpow.pop %v3501
        %v3503 = vmul.f32 %v3492, 1.442695
        %v3504 = vpow.pop %v3503
        %v3505 = vmul.f32 %v3493, 1.442695
        %v3506 = vpow.pop %v3505
        %v3507 = vmul.f32 %v3494, 1.442695
        %v3508 = vpow.pop %v3507
        %v3509 = vmul.f32 %v3495, 1.442695
        %v3510 = vpow.pop %v3509
        %v3511 = vmul.f32 %v3496, 1.442695
        %v3512 = vpow.pop %v3511
        %v3513 = vsel %vm2248, %v3498, 0.0
        %3514 = vadd.xlane.f32.xlu0 %v3513
        %v3515 = vpop.xlane.xlu0 %3514
        %v3516 = vsel %vm2248, %v3500, 0.0
        %3517 = vadd.xlane.f32.xlu0 %v3516
        %v3518 = vpop.xlane.xlu0 %3517
        %v3519 = vsel %vm2248, %v3502, 0.0
        %3520 = vadd.xlane.f32.xlu0 %v3519
        %v3521 = vpop.xlane.xlu0 %3520
        %v3522 = vsel %vm2248, %v3504, 0.0
        %3523 = vadd.xlane.f32.xlu0 %v3522
        %v3524 = vpop.xlane.xlu0 %3523
        %v3525 = vsel %vm2248, %v3506, 0.0
        %3526 = vadd.xlane.f32.xlu0 %v3525
        %v3527 = vpop.xlane.xlu0 %3526
        %v3528 = vsel %vm2248, %v3508, 0.0
        %3529 = vadd.xlane.f32.xlu0 %v3528
        %v3530 = vpop.xlane.xlu0 %3529
        %v3531 = vsel %vm2248, %v3510, 0.0
        %3532 = vadd.xlane.f32.xlu0 %v3531
        %v3533 = vpop.xlane.xlu0 %3532
        %v3534 = vsel %vm2248, %v3512, 0.0
        %3535 = vadd.xlane.f32.xlu0 %v3534
        %v3536 = vpop.xlane.xlu0 %3535
        %v3537 = vrcp.pop %v3515
        %v3538 = vrcp.pop %v3518
        %v3539 = vrcp.pop %v3521
        %v3540 = vrcp.pop %v3524
        %v3541 = vrcp.pop %v3527
        %v3542 = vrcp.pop %v3530
        %v3543 = vrcp.pop %v3533
        %v3544 = vrcp.pop %v3536
        %v3545 = vmul.f32 %v3498, %v3537
        %v3546 = vmul.f32 %v3500, %v3538
        %v3547 = vmul.f32 %v3502, %v3539
        %v3548 = vmul.f32 %v3504, %v3540
        %v3549 = vmul.f32 %v3506, %v3541
        %v3550 = vmul.f32 %v3508, %v3542
        %v3551 = vmul.f32 %v3510, %v3543
        %v3552 = vmul.f32 %v3512, %v3544
        %3554 = vset.pattern.permute.xlu0 0
        %3555 = vperm.xlu0 %3554, %v3545
        %v3556 = vpop.permute.xlu0 %3555
        %3559 = vset.pattern.permute.xlu0 0
        %3560 = vperm.xlu0 %3559, %v3546
        %v3561 = vpop.permute.xlu0 %3560
        %3564 = vset.pattern.permute.xlu0 0
        %3565 = vperm.xlu0 %3564, %v3547
        %v3566 = vpop.permute.xlu0 %3565
        %3569 = vset.pattern.permute.xlu0 0
        %3570 = vperm.xlu0 %3569, %v3548
        %v3571 = vpop.permute.xlu0 %3570
        %3574 = vset.pattern.permute.xlu0 0
        %3575 = vperm.xlu0 %3574, %v3549
        %v3576 = vpop.permute.xlu0 %3575
        %3579 = vset.pattern.permute.xlu0 0
        %3580 = vperm.xlu0 %3579, %v3550
        %v3581 = vpop.permute.xlu0 %3580
        %3584 = vset.pattern.permute.xlu0 0
        %3585 = vperm.xlu0 %3584, %v3551
        %v3586 = vpop.permute.xlu0 %3585
        %3589 = vset.pattern.permute.xlu0 0
        %3590 = vperm.xlu0 %3589, %v3552
        %v3591 = vpop.permute.xlu0 %3590
        %v3593 = vmul.f32 %v3556, %v1629
        %v3594 = vmul.f32 %v3561, %v1632
        %v3595 = vmul.f32 %v3566, %v1637
        %v3596 = vmul.f32 %v3571, %v1640
        %v3597 = vmul.f32 %v3576, %v1645
        %v3598 = vmul.f32 %v3581, %v1648
        %v3599 = vmul.f32 %v3586, %v1653
        %v3600 = vmul.f32 %v3591, %v1656
        %3601 = vset.pattern.permute.xlu0 1
        %3602 = vperm.xlu0 %3601, %v3545
        %v3603 = vpop.permute.xlu0 %3602
        %3605 = vset.pattern.permute.xlu0 1
        %3606 = vperm.xlu0 %3605, %v3546
        %v3607 = vpop.permute.xlu0 %3606
        %3609 = vset.pattern.permute.xlu0 1
        %3610 = vperm.xlu0 %3609, %v3547
        %v3611 = vpop.permute.xlu0 %3610
        %3613 = vset.pattern.permute.xlu0 1
        %3614 = vperm.xlu0 %3613, %v3548
        %v3615 = vpop.permute.xlu0 %3614
        %3617 = vset.pattern.permute.xlu0 1
        %3618 = vperm.xlu0 %3617, %v3549
        %v3619 = vpop.permute.xlu0 %3618
        %3621 = vset.pattern.permute.xlu0 1
        %3622 = vperm.xlu0 %3621, %v3550
        %v3623 = vpop.permute.xlu0 %3622
        %3625 = vset.pattern.permute.xlu0 1
        %3626 = vperm.xlu0 %3625, %v3551
        %v3627 = vpop.permute.xlu0 %3626
        %3629 = vset.pattern.permute.xlu0 1
        %3630 = vperm.xlu0 %3629, %v3552
        %v3631 = vpop.permute.xlu0 %3630
        %v3633 = vmul.f32 %v3603, %v1661
        %v3634 = vmul.f32 %v3607, %v1664
        %v3635 = vmul.f32 %v3611, %v1669
        %v3636 = vmul.f32 %v3615, %v1672
        %v3637 = vmul.f32 %v3619, %v1677
        %v3638 = vmul.f32 %v3623, %v1680
        %v3639 = vmul.f32 %v3627, %v1685
        %v3640 = vmul.f32 %v3631, %v1688
        %v3641 = vadd.f32 %v3593, %v3633
        %v3642 = vadd.f32 %v3594, %v3634
        %v3643 = vadd.f32 %v3595, %v3635
        %v3644 = vadd.f32 %v3596, %v3636
        %v3645 = vadd.f32 %v3597, %v3637
        %v3646 = vadd.f32 %v3598, %v3638
        %v3647 = vadd.f32 %v3599, %v3639
        %v3648 = vadd.f32 %v3600, %v3640
        %3649 = vset.pattern.permute.xlu0 2
        %3650 = vperm.xlu0 %3649, %v3545
        %v3651 = vpop.permute.xlu0 %3650
        %3653 = vset.pattern.permute.xlu0 2
        %3654 = vperm.xlu0 %3653, %v3546
        %v3655 = vpop.permute.xlu0 %3654
        %3657 = vset.pattern.permute.xlu0 2
        %3658 = vperm.xlu0 %3657, %v3547
        %v3659 = vpop.permute.xlu0 %3658
        %3661 = vset.pattern.permute.xlu0 2
        %3662 = vperm.xlu0 %3661, %v3548
        %v3663 = vpop.permute.xlu0 %3662
        %3665 = vset.pattern.permute.xlu0 2
        %3666 = vperm.xlu0 %3665, %v3549
        %v3667 = vpop.permute.xlu0 %3666
        %3669 = vset.pattern.permute.xlu0 2
        %3670 = vperm.xlu0 %3669, %v3550
        %v3671 = vpop.permute.xlu0 %3670
        %3673 = vset.pattern.permute.xlu0 2
        %3674 = vperm.xlu0 %3673, %v3551
        %v3675 = vpop.permute.xlu0 %3674
        %3677 = vset.pattern.permute.xlu0 2
        %3678 = vperm.xlu0 %3677, %v3552
        %v3679 = vpop.permute.xlu0 %3678
        %v3681 = vmul.f32 %v3651, %v1693
        %v3682 = vmul.f32 %v3655, %v1696
        %v3683 = vmul.f32 %v3659, %v1701
        %v3684 = vmul.f32 %v3663, %v1704
        %v3685 = vmul.f32 %v3667, %v1709
        %v3686 = vmul.f32 %v3671, %v1712
        %v3687 = vmul.f32 %v3675, %v1717
        %v3688 = vmul.f32 %v3679, %v1720
        %v3689 = vadd.f32 %v3641, %v3681
        %v3690 = vadd.f32 %v3642, %v3682
        %v3691 = vadd.f32 %v3643, %v3683
        %v3692 = vadd.f32 %v3644, %v3684
        %v3693 = vadd.f32 %v3645, %v3685
        %v3694 = vadd.f32 %v3646, %v3686
        %v3695 = vadd.f32 %v3647, %v3687
        %v3696 = vadd.f32 %v3648, %v3688
        %3697 = vset.pattern.permute.xlu0 3
        %3698 = vperm.xlu0 %3697, %v3545
        %v3699 = vpop.permute.xlu0 %3698
        %3701 = vset.pattern.permute.xlu0 3
        %3702 = vperm.xlu0 %3701, %v3546
        %v3703 = vpop.permute.xlu0 %3702
        %3705 = vset.pattern.permute.xlu0 3
        %3706 = vperm.xlu0 %3705, %v3547
        %v3707 = vpop.permute.xlu0 %3706
        %3709 = vset.pattern.permute.xlu0 3
        %3710 = vperm.xlu0 %3709, %v3548
        %v3711 = vpop.permute.xlu0 %3710
        %3713 = vset.pattern.permute.xlu0 3
        %3714 = vperm.xlu0 %3713, %v3549
        %v3715 = vpop.permute.xlu0 %3714
        %3717 = vset.pattern.permute.xlu0 3
        %3718 = vperm.xlu0 %3717, %v3550
        %v3719 = vpop.permute.xlu0 %3718
        %3721 = vset.pattern.permute.xlu0 3
        %3722 = vperm.xlu0 %3721, %v3551
        %v3723 = vpop.permute.xlu0 %3722
        %3725 = vset.pattern.permute.xlu0 3
        %3726 = vperm.xlu0 %3725, %v3552
        %v3727 = vpop.permute.xlu0 %3726
        %v3729 = vmul.f32 %v3699, %v1725
        %v3730 = vmul.f32 %v3703, %v1728
        %v3731 = vmul.f32 %v3707, %v1733
        %v3732 = vmul.f32 %v3711, %v1736
        %v3733 = vmul.f32 %v3715, %v1741
        %v3734 = vmul.f32 %v3719, %v1744
        %v3735 = vmul.f32 %v3723, %v1749
        %v3736 = vmul.f32 %v3727, %v1752
        %v3737 = vadd.f32 %v3689, %v3729
        %v3738 = vadd.f32 %v3690, %v3730
        %v3739 = vadd.f32 %v3691, %v3731
        %v3740 = vadd.f32 %v3692, %v3732
        %v3741 = vadd.f32 %v3693, %v3733
        %v3742 = vadd.f32 %v3694, %v3734
        %v3743 = vadd.f32 %v3695, %v3735
        %v3744 = vadd.f32 %v3696, %v3736
        %3745 = vset.pattern.permute.xlu0 4
        %3746 = vperm.xlu0 %3745, %v3545
        %v3747 = vpop.permute.xlu0 %3746
        %3749 = vset.pattern.permute.xlu0 4
        %3750 = vperm.xlu0 %3749, %v3546
        %v3751 = vpop.permute.xlu0 %3750
        %3753 = vset.pattern.permute.xlu0 4
        %3754 = vperm.xlu0 %3753, %v3547
        %v3755 = vpop.permute.xlu0 %3754
        %3757 = vset.pattern.permute.xlu0 4
        %3758 = vperm.xlu0 %3757, %v3548
        %v3759 = vpop.permute.xlu0 %3758
        %3761 = vset.pattern.permute.xlu0 4
        %3762 = vperm.xlu0 %3761, %v3549
        %v3763 = vpop.permute.xlu0 %3762
        %3765 = vset.pattern.permute.xlu0 4
        %3766 = vperm.xlu0 %3765, %v3550
        %v3767 = vpop.permute.xlu0 %3766
        %3769 = vset.pattern.permute.xlu0 4
        %3770 = vperm.xlu0 %3769, %v3551
        %v3771 = vpop.permute.xlu0 %3770
        %3773 = vset.pattern.permute.xlu0 4
        %3774 = vperm.xlu0 %3773, %v3552
        %v3775 = vpop.permute.xlu0 %3774
        %v3777 = vmul.f32 %v3747, %v1757
        %v3778 = vmul.f32 %v3751, %v1760
        %v3779 = vmul.f32 %v3755, %v1765
        %v3780 = vmul.f32 %v3759, %v1768
        %v3781 = vmul.f32 %v3763, %v1773
        %v3782 = vmul.f32 %v3767, %v1776
        %v3783 = vmul.f32 %v3771, %v1781
        %v3784 = vmul.f32 %v3775, %v1784
        %v3785 = vadd.f32 %v3737, %v3777
        %v3786 = vadd.f32 %v3738, %v3778
        %v3787 = vadd.f32 %v3739, %v3779
        %v3788 = vadd.f32 %v3740, %v3780
        %v3789 = vadd.f32 %v3741, %v3781
        %v3790 = vadd.f32 %v3742, %v3782
        %v3791 = vadd.f32 %v3743, %v3783
        %v3792 = vadd.f32 %v3744, %v3784
        %3793 = vset.pattern.permute.xlu0 5
        %3794 = vperm.xlu0 %3793, %v3545
        %v3795 = vpop.permute.xlu0 %3794
        %3797 = vset.pattern.permute.xlu0 5
        %3798 = vperm.xlu0 %3797, %v3546
        %v3799 = vpop.permute.xlu0 %3798
        %3801 = vset.pattern.permute.xlu0 5
        %3802 = vperm.xlu0 %3801, %v3547
        %v3803 = vpop.permute.xlu0 %3802
        %3805 = vset.pattern.permute.xlu0 5
        %3806 = vperm.xlu0 %3805, %v3548
        %v3807 = vpop.permute.xlu0 %3806
        %3809 = vset.pattern.permute.xlu0 5
        %3810 = vperm.xlu0 %3809, %v3549
        %v3811 = vpop.permute.xlu0 %3810
        %3813 = vset.pattern.permute.xlu0 5
        %3814 = vperm.xlu0 %3813, %v3550
        %v3815 = vpop.permute.xlu0 %3814
        %3817 = vset.pattern.permute.xlu0 5
        %3818 = vperm.xlu0 %3817, %v3551
        %v3819 = vpop.permute.xlu0 %3818
        %3821 = vset.pattern.permute.xlu0 5
        %3822 = vperm.xlu0 %3821, %v3552
        %v3823 = vpop.permute.xlu0 %3822
        %v3825 = vmul.f32 %v3795, %v1789
        %v3826 = vmul.f32 %v3799, %v1792
        %v3827 = vmul.f32 %v3803, %v1797
        %v3828 = vmul.f32 %v3807, %v1800
        %v3829 = vmul.f32 %v3811, %v1805
        %v3830 = vmul.f32 %v3815, %v1808
        %v3831 = vmul.f32 %v3819, %v1813
        %v3832 = vmul.f32 %v3823, %v1816
        %v3833 = vadd.f32 %v3785, %v3825
        %v3834 = vadd.f32 %v3786, %v3826
        %v3835 = vadd.f32 %v3787, %v3827
        %v3836 = vadd.f32 %v3788, %v3828
        %v3837 = vadd.f32 %v3789, %v3829
        %v3838 = vadd.f32 %v3790, %v3830
        %v3839 = vadd.f32 %v3791, %v3831
        %v3840 = vadd.f32 %v3792, %v3832
        %v3841 = vmul.f32 %v1725, %v1828
        %v3842 = vmul.f32 %v1728, %v1830
        %v3843 = vmul.f32 %v1733, %v1832
        %v3844 = vmul.f32 %v1736, %v1834
        %v3845 = vmul.f32 %v1741, %v1836
        %v3846 = vmul.f32 %v1744, %v1838
        %v3847 = vmul.f32 %v1749, %v1840
        %v3848 = vmul.f32 %v1752, %v1842
        %v3849 = vsel %vm746, %v3841, 0.0
        %3850 = vadd.xlane.f32.xlu0 %v3849
        %v3851 = vpop.xlane.xlu0 %3850
        %v3852 = vsel %vm746, %v3842, 0.0
        %3853 = vadd.xlane.f32.xlu0 %v3852
        %v3854 = vpop.xlane.xlu0 %3853
        %v3855 = vsel %vm746, %v3843, 0.0
        %3856 = vadd.xlane.f32.xlu0 %v3855
        %v3857 = vpop.xlane.xlu0 %3856
        %v3858 = vsel %vm746, %v3844, 0.0
        %3859 = vadd.xlane.f32.xlu0 %v3858
        %v3860 = vpop.xlane.xlu0 %3859
        %v3861 = vsel %vm746, %v3845, 0.0
        %3862 = vadd.xlane.f32.xlu0 %v3861
        %v3863 = vpop.xlane.xlu0 %3862
        %v3864 = vsel %vm746, %v3846, 0.0
        %3865 = vadd.xlane.f32.xlu0 %v3864
        %v3866 = vpop.xlane.xlu0 %3865
        %v3867 = vsel %vm746, %v3847, 0.0
        %3868 = vadd.xlane.f32.xlu0 %v3867
        %v3869 = vpop.xlane.xlu0 %3868
        %v3870 = vsel %vm746, %v3848, 0.0
        %3871 = vadd.xlane.f32.xlu0 %v3870
        %v3872 = vpop.xlane.xlu0 %3871
        %v3873 = vmul.f32 %v1725, %v1892
        %v3874 = vmul.f32 %v1728, %v1894
        %v3875 = vmul.f32 %v1733, %v1896
        %v3876 = vmul.f32 %v1736, %v1898
        %v3877 = vmul.f32 %v1741, %v1900
        %v3878 = vmul.f32 %v1744, %v1902
        %v3879 = vmul.f32 %v1749, %v1904
        %v3880 = vmul.f32 %v1752, %v1906
        %v3881 = vsel %vm746, %v3873, 0.0
        %3882 = vadd.xlane.f32.xlu0 %v3881
        %v3883 = vpop.xlane.xlu0 %3882
        %v3884 = vsel %vm746, %v3874, 0.0
        %3885 = vadd.xlane.f32.xlu0 %v3884
        %v3886 = vpop.xlane.xlu0 %3885
        %v3887 = vsel %vm746, %v3875, 0.0
        %3888 = vadd.xlane.f32.xlu0 %v3887
        %v3889 = vpop.xlane.xlu0 %3888
        %v3890 = vsel %vm746, %v3876, 0.0
        %3891 = vadd.xlane.f32.xlu0 %v3890
        %v3892 = vpop.xlane.xlu0 %3891
        %v3893 = vsel %vm746, %v3877, 0.0
        %3894 = vadd.xlane.f32.xlu0 %v3893
        %v3895 = vpop.xlane.xlu0 %3894
        %v3896 = vsel %vm746, %v3878, 0.0
        %3897 = vadd.xlane.f32.xlu0 %v3896
        %v3898 = vpop.xlane.xlu0 %3897
        %v3899 = vsel %vm746, %v3879, 0.0
        %3900 = vadd.xlane.f32.xlu0 %v3899
        %v3901 = vpop.xlane.xlu0 %3900
        %v3902 = vsel %vm746, %v3880, 0.0
        %3903 = vadd.xlane.f32.xlu0 %v3902
        %v3904 = vpop.xlane.xlu0 %3903
        %v3905 = vmul.f32 %v1725, %v1956
        %v3906 = vmul.f32 %v1728, %v1958
        %v3907 = vmul.f32 %v1733, %v1960
        %v3908 = vmul.f32 %v1736, %v1962
        %v3909 = vmul.f32 %v1741, %v1964
        %v3910 = vmul.f32 %v1744, %v1966
        %v3911 = vmul.f32 %v1749, %v1968
        %v3912 = vmul.f32 %v1752, %v1970
        %v3913 = vsel %vm746, %v3905, 0.0
        %3914 = vadd.xlane.f32.xlu0 %v3913
        %v3915 = vpop.xlane.xlu0 %3914
        %v3916 = vsel %vm746, %v3906, 0.0
        %3917 = vadd.xlane.f32.xlu0 %v3916
        %v3918 = vpop.xlane.xlu0 %3917
        %v3919 = vsel %vm746, %v3907, 0.0
        %3920 = vadd.xlane.f32.xlu0 %v3919
        %v3921 = vpop.xlane.xlu0 %3920
        %v3922 = vsel %vm746, %v3908, 0.0
        %3923 = vadd.xlane.f32.xlu0 %v3922
        %v3924 = vpop.xlane.xlu0 %3923
        %v3925 = vsel %vm746, %v3909, 0.0
        %3926 = vadd.xlane.f32.xlu0 %v3925
        %v3927 = vpop.xlane.xlu0 %3926
        %v3928 = vsel %vm746, %v3910, 0.0
        %3929 = vadd.xlane.f32.xlu0 %v3928
        %v3930 = vpop.xlane.xlu0 %3929
        %v3931 = vsel %vm746, %v3911, 0.0
        %3932 = vadd.xlane.f32.xlu0 %v3931
        %v3933 = vpop.xlane.xlu0 %3932
        %v3934 = vsel %vm746, %v3912, 0.0
        %3935 = vadd.xlane.f32.xlu0 %v3934
        %v3936 = vpop.xlane.xlu0 %3935
        %v3937 = vmul.f32 %v1725, %v2020
        %v3938 = vmul.f32 %v1728, %v2022
        %v3939 = vmul.f32 %v1733, %v2024
        %v3940 = vmul.f32 %v1736, %v2026
        %v3941 = vmul.f32 %v1741, %v2028
        %v3942 = vmul.f32 %v1744, %v2030
        %v3943 = vmul.f32 %v1749, %v2032
        %v3944 = vmul.f32 %v1752, %v2034
        %v3945 = vsel %vm746, %v3937, 0.0
        %3946 = vadd.xlane.f32.xlu0 %v3945
        %v3947 = vpop.xlane.xlu0 %3946
        %v3948 = vsel %vm746, %v3938, 0.0
        %3949 = vadd.xlane.f32.xlu0 %v3948
        %v3950 = vpop.xlane.xlu0 %3949
        %v3951 = vsel %vm746, %v3939, 0.0
        %3952 = vadd.xlane.f32.xlu0 %v3951
        %v3953 = vpop.xlane.xlu0 %3952
        %v3954 = vsel %vm746, %v3940, 0.0
        %3955 = vadd.xlane.f32.xlu0 %v3954
        %v3956 = vpop.xlane.xlu0 %3955
        %v3957 = vsel %vm746, %v3941, 0.0
        %3958 = vadd.xlane.f32.xlu0 %v3957
        %v3959 = vpop.xlane.xlu0 %3958
        %v3960 = vsel %vm746, %v3942, 0.0
        %3961 = vadd.xlane.f32.xlu0 %v3960
        %v3962 = vpop.xlane.xlu0 %3961
        %v3963 = vsel %vm746, %v3943, 0.0
        %3964 = vadd.xlane.f32.xlu0 %v3963
        %v3965 = vpop.xlane.xlu0 %3964
        %v3966 = vsel %vm746, %v3944, 0.0
        %3967 = vadd.xlane.f32.xlu0 %v3966
        %v3968 = vpop.xlane.xlu0 %3967
        %v3969 = vmul.f32 %v1725, %v2084
        %v3970 = vmul.f32 %v1728, %v2086
        %v3971 = vmul.f32 %v1733, %v2088
        %v3972 = vmul.f32 %v1736, %v2090
        %v3973 = vmul.f32 %v1741, %v2092
        %v3974 = vmul.f32 %v1744, %v2094
        %v3975 = vmul.f32 %v1749, %v2096
        %v3976 = vmul.f32 %v1752, %v2098
        %v3977 = vsel %vm746, %v3969, 0.0
        %3978 = vadd.xlane.f32.xlu0 %v3977
        %v3979 = vpop.xlane.xlu0 %3978
        %v3980 = vsel %vm746, %v3970, 0.0
        %3981 = vadd.xlane.f32.xlu0 %v3980
        %v3982 = vpop.xlane.xlu0 %3981
        %v3983 = vsel %vm746, %v3971, 0.0
        %3984 = vadd.xlane.f32.xlu0 %v3983
        %v3985 = vpop.xlane.xlu0 %3984
        %v3986 = vsel %vm746, %v3972, 0.0
        %3987 = vadd.xlane.f32.xlu0 %v3986
        %v3988 = vpop.xlane.xlu0 %3987
        %v3989 = vsel %vm746, %v3973, 0.0
        %3990 = vadd.xlane.f32.xlu0 %v3989
        %v3991 = vpop.xlane.xlu0 %3990
        %v3992 = vsel %vm746, %v3974, 0.0
        %3993 = vadd.xlane.f32.xlu0 %v3992
        %v3994 = vpop.xlane.xlu0 %3993
        %v3995 = vsel %vm746, %v3975, 0.0
        %3996 = vadd.xlane.f32.xlu0 %v3995
        %v3997 = vpop.xlane.xlu0 %3996
        %v3998 = vsel %vm746, %v3976, 0.0
        %3999 = vadd.xlane.f32.xlu0 %v3998
        %v4000 = vpop.xlane.xlu0 %3999
        %v4001 = vmul.f32 %v1725, %v2148
        %v4002 = vmul.f32 %v1728, %v2150
        %v4003 = vmul.f32 %v1733, %v2152
        %v4004 = vmul.f32 %v1736, %v2154
        %v4005 = vmul.f32 %v1741, %v2156
        %v4006 = vmul.f32 %v1744, %v2158
        %v4007 = vmul.f32 %v1749, %v2160
        %v4008 = vmul.f32 %v1752, %v2162
        %v4009 = vsel %vm746, %v4001, 0.0
        %4010 = vadd.xlane.f32.xlu0 %v4009
        %v4011 = vpop.xlane.xlu0 %4010
        %v4012 = vsel %vm746, %v4002, 0.0
        %4013 = vadd.xlane.f32.xlu0 %v4012
        %v4014 = vpop.xlane.xlu0 %4013
        %v4015 = vsel %vm746, %v4003, 0.0
        %4016 = vadd.xlane.f32.xlu0 %v4015
        %v4017 = vpop.xlane.xlu0 %4016
        %v4018 = vsel %vm746, %v4004, 0.0
        %4019 = vadd.xlane.f32.xlu0 %v4018
        %v4020 = vpop.xlane.xlu0 %4019
        %v4021 = vsel %vm746, %v4005, 0.0
        %4022 = vadd.xlane.f32.xlu0 %v4021
        %v4023 = vpop.xlane.xlu0 %4022
        %v4024 = vsel %vm746, %v4006, 0.0
        %4025 = vadd.xlane.f32.xlu0 %v4024
        %v4026 = vpop.xlane.xlu0 %4025
        %v4027 = vsel %vm746, %v4007, 0.0
        %4028 = vadd.xlane.f32.xlu0 %v4027
        %v4029 = vpop.xlane.xlu0 %4028
        %v4030 = vsel %vm746, %v4008, 0.0
        %4031 = vadd.xlane.f32.xlu0 %v4030
        %v4032 = vpop.xlane.xlu0 %4031
        %v4033 = vsel %vm2203, %v3851, %v3883
        %v4034 = vsel %vm2203, %v3854, %v3886
        %v4035 = vsel %vm2203, %v3857, %v3889
        %v4036 = vsel %vm2203, %v3860, %v3892
        %v4037 = vsel %vm2203, %v3863, %v3895
        %v4038 = vsel %vm2203, %v3866, %v3898
        %v4039 = vsel %vm2203, %v3869, %v3901
        %v4040 = vsel %vm2203, %v3872, %v3904
        %v4041 = vsel %vm2212, %v4033, %v3915
        %v4042 = vsel %vm2212, %v4034, %v3918
        %v4043 = vsel %vm2212, %v4035, %v3921
        %v4044 = vsel %vm2212, %v4036, %v3924
        %v4045 = vsel %vm2212, %v4037, %v3927
        %v4046 = vsel %vm2212, %v4038, %v3930
        %v4047 = vsel %vm2212, %v4039, %v3933
        %v4048 = vsel %vm2212, %v4040, %v3936
        %v4049 = vsel %vm2221, %v4041, %v3947
        %v4050 = vsel %vm2221, %v4042, %v3950
        %v4051 = vsel %vm2221, %v4043, %v3953
        %v4052 = vsel %vm2221, %v4044, %v3956
        %v4053 = vsel %vm2221, %v4045, %v3959
        %v4054 = vsel %vm2221, %v4046, %v3962
        %v4055 = vsel %vm2221, %v4047, %v3965
        %v4056 = vsel %vm2221, %v4048, %v3968
        %v4057 = vsel %vm2230, %v4049, %v3979
        %v4058 = vsel %vm2230, %v4050, %v3982
        %v4059 = vsel %vm2230, %v4051, %v3985
        %v4060 = vsel %vm2230, %v4052, %v3988
        %v4061 = vsel %vm2230, %v4053, %v3991
        %v4062 = vsel %vm2230, %v4054, %v3994
        %v4063 = vsel %vm2230, %v4055, %v3997
        %v4064 = vsel %vm2230, %v4056, %v4000
        %v4065 = vsel %vm2239, %v4057, %v4011
        %v4066 = vsel %vm2239, %v4058, %v4014
        %v4067 = vsel %vm2239, %v4059, %v4017
        %v4068 = vsel %vm2239, %v4060, %v4020
        %v4069 = vsel %vm2239, %v4061, %v4023
        %v4070 = vsel %vm2239, %v4062, %v4026
        %v4071 = vsel %vm2239, %v4063, %v4029
        %v4072 = vsel %vm2239, %v4064, %v4032
        %v4073 = vsel %vm2248, %v4065, -inf
        %4074 = vmax.xlane.f32.xlu0 %v4073
        %v4075 = vpop.xlane.xlu0 %4074
        %v4076 = vsel %vm2248, %v4066, -inf
        %4077 = vmax.xlane.f32.xlu0 %v4076
        %v4078 = vpop.xlane.xlu0 %4077
        %v4079 = vsel %vm2248, %v4067, -inf
        %4080 = vmax.xlane.f32.xlu0 %v4079
        %v4081 = vpop.xlane.xlu0 %4080
        %v4082 = vsel %vm2248, %v4068, -inf
        %4083 = vmax.xlane.f32.xlu0 %v4082
        %v4084 = vpop.xlane.xlu0 %4083
        %v4085 = vsel %vm2248, %v4069, -inf
        %4086 = vmax.xlane.f32.xlu0 %v4085
        %v4087 = vpop.xlane.xlu0 %4086
        %v4088 = vsel %vm2248, %v4070, -inf
        %4089 = vmax.xlane.f32.xlu0 %v4088
        %v4090 = vpop.xlane.xlu0 %4089
        %v4091 = vsel %vm2248, %v4071, -inf
        %4092 = vmax.xlane.f32.xlu0 %v4091
        %v4093 = vpop.xlane.xlu0 %4092
        %v4094 = vsel %vm2248, %v4072, -inf
        %4095 = vmax.xlane.f32.xlu0 %v4094
        %v4096 = vpop.xlane.xlu0 %4095
        %v4097 = vsub.f32 %v4065, %v4075
        %v4098 = vsub.f32 %v4066, %v4078
        %v4099 = vsub.f32 %v4067, %v4081
        %v4100 = vsub.f32 %v4068, %v4084
        %v4101 = vsub.f32 %v4069, %v4087
        %v4102 = vsub.f32 %v4070, %v4090
        %v4103 = vsub.f32 %v4071, %v4093
        %v4104 = vsub.f32 %v4072, %v4096
        %v4105 = vmul.f32 %v4097, 1.442695
        %v4106 = vpow.pop %v4105
        %v4107 = vmul.f32 %v4098, 1.442695
        %v4108 = vpow.pop %v4107
        %v4109 = vmul.f32 %v4099, 1.442695
        %v4110 = vpow.pop %v4109
        %v4111 = vmul.f32 %v4100, 1.442695
        %v4112 = vpow.pop %v4111
        %v4113 = vmul.f32 %v4101, 1.442695
        %v4114 = vpow.pop %v4113
        %v4115 = vmul.f32 %v4102, 1.442695
        %v4116 = vpow.pop %v4115
        %v4117 = vmul.f32 %v4103, 1.442695
        %v4118 = vpow.pop %v4117
        %v4119 = vmul.f32 %v4104, 1.442695
        %v4120 = vpow.pop %v4119
        %v4121 = vsel %vm2248, %v4106, 0.0
        %4122 = vadd.xlane.f32.xlu0 %v4121
        %v4123 = vpop.xlane.xlu0 %4122
        %v4124 = vsel %vm2248, %v4108, 0.0
        %4125 = vadd.xlane.f32.xlu0 %v4124
        %v4126 = vpop.xlane.xlu0 %4125
        %v4127 = vsel %vm2248, %v4110, 0.0
        %4128 = vadd.xlane.f32.xlu0 %v4127
        %v4129 = vpop.xlane.xlu0 %4128
        %v4130 = vsel %vm2248, %v4112, 0.0
        %4131 = vadd.xlane.f32.xlu0 %v4130
        %v4132 = vpop.xlane.xlu0 %4131
        %v4133 = vsel %vm2248, %v4114, 0.0
        %4134 = vadd.xlane.f32.xlu0 %v4133
        %v4135 = vpop.xlane.xlu0 %4134
        %v4136 = vsel %vm2248, %v4116, 0.0
        %4137 = vadd.xlane.f32.xlu0 %v4136
        %v4138 = vpop.xlane.xlu0 %4137
        %v4139 = vsel %vm2248, %v4118, 0.0
        %4140 = vadd.xlane.f32.xlu0 %v4139
        %v4141 = vpop.xlane.xlu0 %4140
        %v4142 = vsel %vm2248, %v4120, 0.0
        %4143 = vadd.xlane.f32.xlu0 %v4142
        %v4144 = vpop.xlane.xlu0 %4143
        %v4145 = vrcp.pop %v4123
        %v4146 = vrcp.pop %v4126
        %v4147 = vrcp.pop %v4129
        %v4148 = vrcp.pop %v4132
        %v4149 = vrcp.pop %v4135
        %v4150 = vrcp.pop %v4138
        %v4151 = vrcp.pop %v4141
        %v4152 = vrcp.pop %v4144
        %v4153 = vmul.f32 %v4106, %v4145
        %v4154 = vmul.f32 %v4108, %v4146
        %v4155 = vmul.f32 %v4110, %v4147
        %v4156 = vmul.f32 %v4112, %v4148
        %v4157 = vmul.f32 %v4114, %v4149
        %v4158 = vmul.f32 %v4116, %v4150
        %v4159 = vmul.f32 %v4118, %v4151
        %v4160 = vmul.f32 %v4120, %v4152
        %4162 = vset.pattern.permute.xlu0 0
        %4163 = vperm.xlu0 %4162, %v4153
        %v4164 = vpop.permute.xlu0 %4163
        %4167 = vset.pattern.permute.xlu0 0
        %4168 = vperm.xlu0 %4167, %v4154
        %v4169 = vpop.permute.xlu0 %4168
        %4172 = vset.pattern.permute.xlu0 0
        %4173 = vperm.xlu0 %4172, %v4155
        %v4174 = vpop.permute.xlu0 %4173
        %4177 = vset.pattern.permute.xlu0 0
        %4178 = vperm.xlu0 %4177, %v4156
        %v4179 = vpop.permute.xlu0 %4178
        %4182 = vset.pattern.permute.xlu0 0
        %4183 = vperm.xlu0 %4182, %v4157
        %v4184 = vpop.permute.xlu0 %4183
        %4187 = vset.pattern.permute.xlu0 0
        %4188 = vperm.xlu0 %4187, %v4158
        %v4189 = vpop.permute.xlu0 %4188
        %4192 = vset.pattern.permute.xlu0 0
        %4193 = vperm.xlu0 %4192, %v4159
        %v4194 = vpop.permute.xlu0 %4193
        %4197 = vset.pattern.permute.xlu0 0
        %4198 = vperm.xlu0 %4197, %v4160
        %v4199 = vpop.permute.xlu0 %4198
        %v4201 = vmul.f32 %v4164, %v1629
        %v4202 = vmul.f32 %v4169, %v1632
        %v4203 = vmul.f32 %v4174, %v1637
        %v4204 = vmul.f32 %v4179, %v1640
        %v4205 = vmul.f32 %v4184, %v1645
        %v4206 = vmul.f32 %v4189, %v1648
        %v4207 = vmul.f32 %v4194, %v1653
        %v4208 = vmul.f32 %v4199, %v1656
        %4209 = vset.pattern.permute.xlu0 1
        %4210 = vperm.xlu0 %4209, %v4153
        %v4211 = vpop.permute.xlu0 %4210
        %4213 = vset.pattern.permute.xlu0 1
        %4214 = vperm.xlu0 %4213, %v4154
        %v4215 = vpop.permute.xlu0 %4214
        %4217 = vset.pattern.permute.xlu0 1
        %4218 = vperm.xlu0 %4217, %v4155
        %v4219 = vpop.permute.xlu0 %4218
        %4221 = vset.pattern.permute.xlu0 1
        %4222 = vperm.xlu0 %4221, %v4156
        %v4223 = vpop.permute.xlu0 %4222
        %4225 = vset.pattern.permute.xlu0 1
        %4226 = vperm.xlu0 %4225, %v4157
        %v4227 = vpop.permute.xlu0 %4226
        %4229 = vset.pattern.permute.xlu0 1
        %4230 = vperm.xlu0 %4229, %v4158
        %v4231 = vpop.permute.xlu0 %4230
        %4233 = vset.pattern.permute.xlu0 1
        %4234 = vperm.xlu0 %4233, %v4159
        %v4235 = vpop.permute.xlu0 %4234
        %4237 = vset.pattern.permute.xlu0 1
        %4238 = vperm.xlu0 %4237, %v4160
        %v4239 = vpop.permute.xlu0 %4238
        %v4241 = vmul.f32 %v4211, %v1661
        %v4242 = vmul.f32 %v4215, %v1664
        %v4243 = vmul.f32 %v4219, %v1669
        %v4244 = vmul.f32 %v4223, %v1672
        %v4245 = vmul.f32 %v4227, %v1677
        %v4246 = vmul.f32 %v4231, %v1680
        %v4247 = vmul.f32 %v4235, %v1685
        %v4248 = vmul.f32 %v4239, %v1688
        %v4249 = vadd.f32 %v4201, %v4241
        %v4250 = vadd.f32 %v4202, %v4242
        %v4251 = vadd.f32 %v4203, %v4243
        %v4252 = vadd.f32 %v4204, %v4244
        %v4253 = vadd.f32 %v4205, %v4245
        %v4254 = vadd.f32 %v4206, %v4246
        %v4255 = vadd.f32 %v4207, %v4247
        %v4256 = vadd.f32 %v4208, %v4248
        %4257 = vset.pattern.permute.xlu0 2
        %4258 = vperm.xlu0 %4257, %v4153
        %v4259 = vpop.permute.xlu0 %4258
        %4261 = vset.pattern.permute.xlu0 2
        %4262 = vperm.xlu0 %4261, %v4154
        %v4263 = vpop.permute.xlu0 %4262
        %4265 = vset.pattern.permute.xlu0 2
        %4266 = vperm.xlu0 %4265, %v4155
        %v4267 = vpop.permute.xlu0 %4266
        %4269 = vset.pattern.permute.xlu0 2
        %4270 = vperm.xlu0 %4269, %v4156
        %v4271 = vpop.permute.xlu0 %4270
        %4273 = vset.pattern.permute.xlu0 2
        %4274 = vperm.xlu0 %4273, %v4157
        %v4275 = vpop.permute.xlu0 %4274
        %4277 = vset.pattern.permute.xlu0 2
        %4278 = vperm.xlu0 %4277, %v4158
        %v4279 = vpop.permute.xlu0 %4278
        %4281 = vset.pattern.permute.xlu0 2
        %4282 = vperm.xlu0 %4281, %v4159
        %v4283 = vpop.permute.xlu0 %4282
        %4285 = vset.pattern.permute.xlu0 2
        %4286 = vperm.xlu0 %4285, %v4160
        %v4287 = vpop.permute.xlu0 %4286
        %v4289 = vmul.f32 %v4259, %v1693
        %v4290 = vmul.f32 %v4263, %v1696
        %v4291 = vmul.f32 %v4267, %v1701
        %v4292 = vmul.f32 %v4271, %v1704
        %v4293 = vmul.f32 %v4275, %v1709
        %v4294 = vmul.f32 %v4279, %v1712
        %v4295 = vmul.f32 %v4283, %v1717
        %v4296 = vmul.f32 %v4287, %v1720
        %v4297 = vadd.f32 %v4249, %v4289
        %v4298 = vadd.f32 %v4250, %v4290
        %v4299 = vadd.f32 %v4251, %v4291
        %v4300 = vadd.f32 %v4252, %v4292
        %v4301 = vadd.f32 %v4253, %v4293
        %v4302 = vadd.f32 %v4254, %v4294
        %v4303 = vadd.f32 %v4255, %v4295
        %v4304 = vadd.f32 %v4256, %v4296
        %4305 = vset.pattern.permute.xlu0 3
        %4306 = vperm.xlu0 %4305, %v4153
        %v4307 = vpop.permute.xlu0 %4306
        %4309 = vset.pattern.permute.xlu0 3
        %4310 = vperm.xlu0 %4309, %v4154
        %v4311 = vpop.permute.xlu0 %4310
        %4313 = vset.pattern.permute.xlu0 3
        %4314 = vperm.xlu0 %4313, %v4155
        %v4315 = vpop.permute.xlu0 %4314
        %4317 = vset.pattern.permute.xlu0 3
        %4318 = vperm.xlu0 %4317, %v4156
        %v4319 = vpop.permute.xlu0 %4318
        %4321 = vset.pattern.permute.xlu0 3
        %4322 = vperm.xlu0 %4321, %v4157
        %v4323 = vpop.permute.xlu0 %4322
        %4325 = vset.pattern.permute.xlu0 3
        %4326 = vperm.xlu0 %4325, %v4158
        %v4327 = vpop.permute.xlu0 %4326
        %4329 = vset.pattern.permute.xlu0 3
        %4330 = vperm.xlu0 %4329, %v4159
        %v4331 = vpop.permute.xlu0 %4330
        %4333 = vset.pattern.permute.xlu0 3
        %4334 = vperm.xlu0 %4333, %v4160
        %v4335 = vpop.permute.xlu0 %4334
        %v4337 = vmul.f32 %v4307, %v1725
        %v4338 = vmul.f32 %v4311, %v1728
        %v4339 = vmul.f32 %v4315, %v1733
        %v4340 = vmul.f32 %v4319, %v1736
        %v4341 = vmul.f32 %v4323, %v1741
        %v4342 = vmul.f32 %v4327, %v1744
        %v4343 = vmul.f32 %v4331, %v1749
        %v4344 = vmul.f32 %v4335, %v1752
        %v4345 = vadd.f32 %v4297, %v4337
        %v4346 = vadd.f32 %v4298, %v4338
        %v4347 = vadd.f32 %v4299, %v4339
        %v4348 = vadd.f32 %v4300, %v4340
        %v4349 = vadd.f32 %v4301, %v4341
        %v4350 = vadd.f32 %v4302, %v4342
        %v4351 = vadd.f32 %v4303, %v4343
        %v4352 = vadd.f32 %v4304, %v4344
        %4353 = vset.pattern.permute.xlu0 4
        %4354 = vperm.xlu0 %4353, %v4153
        %v4355 = vpop.permute.xlu0 %4354
        %4357 = vset.pattern.permute.xlu0 4
        %4358 = vperm.xlu0 %4357, %v4154
        %v4359 = vpop.permute.xlu0 %4358
        %4361 = vset.pattern.permute.xlu0 4
        %4362 = vperm.xlu0 %4361, %v4155
        %v4363 = vpop.permute.xlu0 %4362
        %4365 = vset.pattern.permute.xlu0 4
        %4366 = vperm.xlu0 %4365, %v4156
        %v4367 = vpop.permute.xlu0 %4366
        %4369 = vset.pattern.permute.xlu0 4
        %4370 = vperm.xlu0 %4369, %v4157
        %v4371 = vpop.permute.xlu0 %4370
        %4373 = vset.pattern.permute.xlu0 4
        %4374 = vperm.xlu0 %4373, %v4158
        %v4375 = vpop.permute.xlu0 %4374
        %4377 = vset.pattern.permute.xlu0 4
        %4378 = vperm.xlu0 %4377, %v4159
        %v4379 = vpop.permute.xlu0 %4378
        %4381 = vset.pattern.permute.xlu0 4
        %4382 = vperm.xlu0 %4381, %v4160
        %v4383 = vpop.permute.xlu0 %4382
        %v4385 = vmul.f32 %v4355, %v1757
        %v4386 = vmul.f32 %v4359, %v1760
        %v4387 = vmul.f32 %v4363, %v1765
        %v4388 = vmul.f32 %v4367, %v1768
        %v4389 = vmul.f32 %v4371, %v1773
        %v4390 = vmul.f32 %v4375, %v1776
        %v4391 = vmul.f32 %v4379, %v1781
        %v4392 = vmul.f32 %v4383, %v1784
        %v4393 = vadd.f32 %v4345, %v4385
        %v4394 = vadd.f32 %v4346, %v4386
        %v4395 = vadd.f32 %v4347, %v4387
        %v4396 = vadd.f32 %v4348, %v4388
        %v4397 = vadd.f32 %v4349, %v4389
        %v4398 = vadd.f32 %v4350, %v4390
        %v4399 = vadd.f32 %v4351, %v4391
        %v4400 = vadd.f32 %v4352, %v4392
        %4401 = vset.pattern.permute.xlu0 5
        %4402 = vperm.xlu0 %4401, %v4153
        %v4403 = vpop.permute.xlu0 %4402
        %4405 = vset.pattern.permute.xlu0 5
        %4406 = vperm.xlu0 %4405, %v4154
        %v4407 = vpop.permute.xlu0 %4406
        %4409 = vset.pattern.permute.xlu0 5
        %4410 = vperm.xlu0 %4409, %v4155
        %v4411 = vpop.permute.xlu0 %4410
        %4413 = vset.pattern.permute.xlu0 5
        %4414 = vperm.xlu0 %4413, %v4156
        %v4415 = vpop.permute.xlu0 %4414
        %4417 = vset.pattern.permute.xlu0 5
        %4418 = vperm.xlu0 %4417, %v4157
        %v4419 = vpop.permute.xlu0 %4418
        %4421 = vset.pattern.permute.xlu0 5
        %4422 = vperm.xlu0 %4421, %v4158
        %v4423 = vpop.permute.xlu0 %4422
        %4425 = vset.pattern.permute.xlu0 5
        %4426 = vperm.xlu0 %4425, %v4159
        %v4427 = vpop.permute.xlu0 %4426
        %4429 = vset.pattern.permute.xlu0 5
        %4430 = vperm.xlu0 %4429, %v4160
        %v4431 = vpop.permute.xlu0 %4430
        %v4433 = vmul.f32 %v4403, %v1789
        %v4434 = vmul.f32 %v4407, %v1792
        %v4435 = vmul.f32 %v4411, %v1797
        %v4436 = vmul.f32 %v4415, %v1800
        %v4437 = vmul.f32 %v4419, %v1805
        %v4438 = vmul.f32 %v4423, %v1808
        %v4439 = vmul.f32 %v4427, %v1813
        %v4440 = vmul.f32 %v4431, %v1816
        %v4441 = vadd.f32 %v4393, %v4433
        %v4442 = vadd.f32 %v4394, %v4434
        %v4443 = vadd.f32 %v4395, %v4435
        %v4444 = vadd.f32 %v4396, %v4436
        %v4445 = vadd.f32 %v4397, %v4437
        %v4446 = vadd.f32 %v4398, %v4438
        %v4447 = vadd.f32 %v4399, %v4439
        %v4448 = vadd.f32 %v4400, %v4440
        %v4449 = vmul.f32 %v1757, %v1828
        %v4450 = vmul.f32 %v1760, %v1830
        %v4451 = vmul.f32 %v1765, %v1832
        %v4452 = vmul.f32 %v1768, %v1834
        %v4453 = vmul.f32 %v1773, %v1836
        %v4454 = vmul.f32 %v1776, %v1838
        %v4455 = vmul.f32 %v1781, %v1840
        %v4456 = vmul.f32 %v1784, %v1842
        %v4457 = vsel %vm746, %v4449, 0.0
        %4458 = vadd.xlane.f32.xlu0 %v4457
        %v4459 = vpop.xlane.xlu0 %4458
        %v4460 = vsel %vm746, %v4450, 0.0
        %4461 = vadd.xlane.f32.xlu0 %v4460
        %v4462 = vpop.xlane.xlu0 %4461
        %v4463 = vsel %vm746, %v4451, 0.0
        %4464 = vadd.xlane.f32.xlu0 %v4463
        %v4465 = vpop.xlane.xlu0 %4464
        %v4466 = vsel %vm746, %v4452, 0.0
        %4467 = vadd.xlane.f32.xlu0 %v4466
        %v4468 = vpop.xlane.xlu0 %4467
        %v4469 = vsel %vm746, %v4453, 0.0
        %4470 = vadd.xlane.f32.xlu0 %v4469
        %v4471 = vpop.xlane.xlu0 %4470
        %v4472 = vsel %vm746, %v4454, 0.0
        %4473 = vadd.xlane.f32.xlu0 %v4472
        %v4474 = vpop.xlane.xlu0 %4473
        %v4475 = vsel %vm746, %v4455, 0.0
        %4476 = vadd.xlane.f32.xlu0 %v4475
        %v4477 = vpop.xlane.xlu0 %4476
        %v4478 = vsel %vm746, %v4456, 0.0
        %4479 = vadd.xlane.f32.xlu0 %v4478
        %v4480 = vpop.xlane.xlu0 %4479
        %v4481 = vmul.f32 %v1757, %v1892
        %v4482 = vmul.f32 %v1760, %v1894
        %v4483 = vmul.f32 %v1765, %v1896
        %v4484 = vmul.f32 %v1768, %v1898
        %v4485 = vmul.f32 %v1773, %v1900
        %v4486 = vmul.f32 %v1776, %v1902
        %v4487 = vmul.f32 %v1781, %v1904
        %v4488 = vmul.f32 %v1784, %v1906
        %v4489 = vsel %vm746, %v4481, 0.0
        %4490 = vadd.xlane.f32.xlu0 %v4489
        %v4491 = vpop.xlane.xlu0 %4490
        %v4492 = vsel %vm746, %v4482, 0.0
        %4493 = vadd.xlane.f32.xlu0 %v4492
        %v4494 = vpop.xlane.xlu0 %4493
        %v4495 = vsel %vm746, %v4483, 0.0
        %4496 = vadd.xlane.f32.xlu0 %v4495
        %v4497 = vpop.xlane.xlu0 %4496
        %v4498 = vsel %vm746, %v4484, 0.0
        %4499 = vadd.xlane.f32.xlu0 %v4498
        %v4500 = vpop.xlane.xlu0 %4499
        %v4501 = vsel %vm746, %v4485, 0.0
        %4502 = vadd.xlane.f32.xlu0 %v4501
        %v4503 = vpop.xlane.xlu0 %4502
        %v4504 = vsel %vm746, %v4486, 0.0
        %4505 = vadd.xlane.f32.xlu0 %v4504
        %v4506 = vpop.xlane.xlu0 %4505
        %v4507 = vsel %vm746, %v4487, 0.0
        %4508 = vadd.xlane.f32.xlu0 %v4507
        %v4509 = vpop.xlane.xlu0 %4508
        %v4510 = vsel %vm746, %v4488, 0.0
        %4511 = vadd.xlane.f32.xlu0 %v4510
        %v4512 = vpop.xlane.xlu0 %4511
        %v4513 = vmul.f32 %v1757, %v1956
        %v4514 = vmul.f32 %v1760, %v1958
        %v4515 = vmul.f32 %v1765, %v1960
        %v4516 = vmul.f32 %v1768, %v1962
        %v4517 = vmul.f32 %v1773, %v1964
        %v4518 = vmul.f32 %v1776, %v1966
        %v4519 = vmul.f32 %v1781, %v1968
        %v4520 = vmul.f32 %v1784, %v1970
        %v4521 = vsel %vm746, %v4513, 0.0
        %4522 = vadd.xlane.f32.xlu0 %v4521
        %v4523 = vpop.xlane.xlu0 %4522
        %v4524 = vsel %vm746, %v4514, 0.0
        %4525 = vadd.xlane.f32.xlu0 %v4524
        %v4526 = vpop.xlane.xlu0 %4525
        %v4527 = vsel %vm746, %v4515, 0.0
        %4528 = vadd.xlane.f32.xlu0 %v4527
        %v4529 = vpop.xlane.xlu0 %4528
        %v4530 = vsel %vm746, %v4516, 0.0
        %4531 = vadd.xlane.f32.xlu0 %v4530
        %v4532 = vpop.xlane.xlu0 %4531
        %v4533 = vsel %vm746, %v4517, 0.0
        %4534 = vadd.xlane.f32.xlu0 %v4533
        %v4535 = vpop.xlane.xlu0 %4534
        %v4536 = vsel %vm746, %v4518, 0.0
        %4537 = vadd.xlane.f32.xlu0 %v4536
        %v4538 = vpop.xlane.xlu0 %4537
        %v4539 = vsel %vm746, %v4519, 0.0
        %4540 = vadd.xlane.f32.xlu0 %v4539
        %v4541 = vpop.xlane.xlu0 %4540
        %v4542 = vsel %vm746, %v4520, 0.0
        %4543 = vadd.xlane.f32.xlu0 %v4542
        %v4544 = vpop.xlane.xlu0 %4543
        %v4545 = vmul.f32 %v1757, %v2020
        %v4546 = vmul.f32 %v1760, %v2022
        %v4547 = vmul.f32 %v1765, %v2024
        %v4548 = vmul.f32 %v1768, %v2026
        %v4549 = vmul.f32 %v1773, %v2028
        %v4550 = vmul.f32 %v1776, %v2030
        %v4551 = vmul.f32 %v1781, %v2032
        %v4552 = vmul.f32 %v1784, %v2034
        %v4553 = vsel %vm746, %v4545, 0.0
        %4554 = vadd.xlane.f32.xlu0 %v4553
        %v4555 = vpop.xlane.xlu0 %4554
        %v4556 = vsel %vm746, %v4546, 0.0
        %4557 = vadd.xlane.f32.xlu0 %v4556
        %v4558 = vpop.xlane.xlu0 %4557
        %v4559 = vsel %vm746, %v4547, 0.0
        %4560 = vadd.xlane.f32.xlu0 %v4559
        %v4561 = vpop.xlane.xlu0 %4560
        %v4562 = vsel %vm746, %v4548, 0.0
        %4563 = vadd.xlane.f32.xlu0 %v4562
        %v4564 = vpop.xlane.xlu0 %4563
        %v4565 = vsel %vm746, %v4549, 0.0
        %4566 = vadd.xlane.f32.xlu0 %v4565
        %v4567 = vpop.xlane.xlu0 %4566
        %v4568 = vsel %vm746, %v4550, 0.0
        %4569 = vadd.xlane.f32.xlu0 %v4568
        %v4570 = vpop.xlane.xlu0 %4569
        %v4571 = vsel %vm746, %v4551, 0.0
        %4572 = vadd.xlane.f32.xlu0 %v4571
        %v4573 = vpop.xlane.xlu0 %4572
        %v4574 = vsel %vm746, %v4552, 0.0
        %4575 = vadd.xlane.f32.xlu0 %v4574
        %v4576 = vpop.xlane.xlu0 %4575
        %v4577 = vmul.f32 %v1757, %v2084
        %v4578 = vmul.f32 %v1760, %v2086
        %v4579 = vmul.f32 %v1765, %v2088
        %v4580 = vmul.f32 %v1768, %v2090
        %v4581 = vmul.f32 %v1773, %v2092
        %v4582 = vmul.f32 %v1776, %v2094
        %v4583 = vmul.f32 %v1781, %v2096
        %v4584 = vmul.f32 %v1784, %v2098
        %v4585 = vsel %vm746, %v4577, 0.0
        %4586 = vadd.xlane.f32.xlu0 %v4585
        %v4587 = vpop.xlane.xlu0 %4586
        %v4588 = vsel %vm746, %v4578, 0.0
        %4589 = vadd.xlane.f32.xlu0 %v4588
        %v4590 = vpop.xlane.xlu0 %4589
        %v4591 = vsel %vm746, %v4579, 0.0
        %4592 = vadd.xlane.f32.xlu0 %v4591
        %v4593 = vpop.xlane.xlu0 %4592
        %v4594 = vsel %vm746, %v4580, 0.0
        %4595 = vadd.xlane.f32.xlu0 %v4594
        %v4596 = vpop.xlane.xlu0 %4595
        %v4597 = vsel %vm746, %v4581, 0.0
        %4598 = vadd.xlane.f32.xlu0 %v4597
        %v4599 = vpop.xlane.xlu0 %4598
        %v4600 = vsel %vm746, %v4582, 0.0
        %4601 = vadd.xlane.f32.xlu0 %v4600
        %v4602 = vpop.xlane.xlu0 %4601
        %v4603 = vsel %vm746, %v4583, 0.0
        %4604 = vadd.xlane.f32.xlu0 %v4603
        %v4605 = vpop.xlane.xlu0 %4604
        %v4606 = vsel %vm746, %v4584, 0.0
        %4607 = vadd.xlane.f32.xlu0 %v4606
        %v4608 = vpop.xlane.xlu0 %4607
        %v4609 = vmul.f32 %v1757, %v2148
        %v4610 = vmul.f32 %v1760, %v2150
        %v4611 = vmul.f32 %v1765, %v2152
        %v4612 = vmul.f32 %v1768, %v2154
        %v4613 = vmul.f32 %v1773, %v2156
        %v4614 = vmul.f32 %v1776, %v2158
        %v4615 = vmul.f32 %v1781, %v2160
        %v4616 = vmul.f32 %v1784, %v2162
        %v4617 = vsel %vm746, %v4609, 0.0
        %4618 = vadd.xlane.f32.xlu0 %v4617
        %v4619 = vpop.xlane.xlu0 %4618
        %v4620 = vsel %vm746, %v4610, 0.0
        %4621 = vadd.xlane.f32.xlu0 %v4620
        %v4622 = vpop.xlane.xlu0 %4621
        %v4623 = vsel %vm746, %v4611, 0.0
        %4624 = vadd.xlane.f32.xlu0 %v4623
        %v4625 = vpop.xlane.xlu0 %4624
        %v4626 = vsel %vm746, %v4612, 0.0
        %4627 = vadd.xlane.f32.xlu0 %v4626
        %v4628 = vpop.xlane.xlu0 %4627
        %v4629 = vsel %vm746, %v4613, 0.0
        %4630 = vadd.xlane.f32.xlu0 %v4629
        %v4631 = vpop.xlane.xlu0 %4630
        %v4632 = vsel %vm746, %v4614, 0.0
        %4633 = vadd.xlane.f32.xlu0 %v4632
        %v4634 = vpop.xlane.xlu0 %4633
        %v4635 = vsel %vm746, %v4615, 0.0
        %4636 = vadd.xlane.f32.xlu0 %v4635
        %v4637 = vpop.xlane.xlu0 %4636
        %v4638 = vsel %vm746, %v4616, 0.0
        %4639 = vadd.xlane.f32.xlu0 %v4638
        %v4640 = vpop.xlane.xlu0 %4639
        %v4641 = vsel %vm2203, %v4459, %v4491
        %v4642 = vsel %vm2203, %v4462, %v4494
        %v4643 = vsel %vm2203, %v4465, %v4497
        %v4644 = vsel %vm2203, %v4468, %v4500
        %v4645 = vsel %vm2203, %v4471, %v4503
        %v4646 = vsel %vm2203, %v4474, %v4506
        %v4647 = vsel %vm2203, %v4477, %v4509
        %v4648 = vsel %vm2203, %v4480, %v4512
        %v4649 = vsel %vm2212, %v4641, %v4523
        %v4650 = vsel %vm2212, %v4642, %v4526
        %v4651 = vsel %vm2212, %v4643, %v4529
        %v4652 = vsel %vm2212, %v4644, %v4532
        %v4653 = vsel %vm2212, %v4645, %v4535
        %v4654 = vsel %vm2212, %v4646, %v4538
        %v4655 = vsel %vm2212, %v4647, %v4541
        %v4656 = vsel %vm2212, %v4648, %v4544
        %v4657 = vsel %vm2221, %v4649, %v4555
        %v4658 = vsel %vm2221, %v4650, %v4558
        %v4659 = vsel %vm2221, %v4651, %v4561
        %v4660 = vsel %vm2221, %v4652, %v4564
        %v4661 = vsel %vm2221, %v4653, %v4567
        %v4662 = vsel %vm2221, %v4654, %v4570
        %v4663 = vsel %vm2221, %v4655, %v4573
        %v4664 = vsel %vm2221, %v4656, %v4576
        %v4665 = vsel %vm2230, %v4657, %v4587
        %v4666 = vsel %vm2230, %v4658, %v4590
        %v4667 = vsel %vm2230, %v4659, %v4593
        %v4668 = vsel %vm2230, %v4660, %v4596
        %v4669 = vsel %vm2230, %v4661, %v4599
        %v4670 = vsel %vm2230, %v4662, %v4602
        %v4671 = vsel %vm2230, %v4663, %v4605
        %v4672 = vsel %vm2230, %v4664, %v4608
        %v4673 = vsel %vm2239, %v4665, %v4619
        %v4674 = vsel %vm2239, %v4666, %v4622
        %v4675 = vsel %vm2239, %v4667, %v4625
        %v4676 = vsel %vm2239, %v4668, %v4628
        %v4677 = vsel %vm2239, %v4669, %v4631
        %v4678 = vsel %vm2239, %v4670, %v4634
        %v4679 = vsel %vm2239, %v4671, %v4637
        %v4680 = vsel %vm2239, %v4672, %v4640
        %v4681 = vsel %vm2248, %v4673, -inf
        %4682 = vmax.xlane.f32.xlu0 %v4681
        %v4683 = vpop.xlane.xlu0 %4682
        %v4684 = vsel %vm2248, %v4674, -inf
        %4685 = vmax.xlane.f32.xlu0 %v4684
        %v4686 = vpop.xlane.xlu0 %4685
        %v4687 = vsel %vm2248, %v4675, -inf
        %4688 = vmax.xlane.f32.xlu0 %v4687
        %v4689 = vpop.xlane.xlu0 %4688
        %v4690 = vsel %vm2248, %v4676, -inf
        %4691 = vmax.xlane.f32.xlu0 %v4690
        %v4692 = vpop.xlane.xlu0 %4691
        %v4693 = vsel %vm2248, %v4677, -inf
        %4694 = vmax.xlane.f32.xlu0 %v4693
        %v4695 = vpop.xlane.xlu0 %4694
        %v4696 = vsel %vm2248, %v4678, -inf
        %4697 = vmax.xlane.f32.xlu0 %v4696
        %v4698 = vpop.xlane.xlu0 %4697
        %v4699 = vsel %vm2248, %v4679, -inf
        %4700 = vmax.xlane.f32.xlu0 %v4699
        %v4701 = vpop.xlane.xlu0 %4700
        %v4702 = vsel %vm2248, %v4680, -inf
        %4703 = vmax.xlane.f32.xlu0 %v4702
        %v4704 = vpop.xlane.xlu0 %4703
        %v4705 = vsub.f32 %v4673, %v4683
        %v4706 = vsub.f32 %v4674, %v4686
        %v4707 = vsub.f32 %v4675, %v4689
        %v4708 = vsub.f32 %v4676, %v4692
        %v4709 = vsub.f32 %v4677, %v4695
        %v4710 = vsub.f32 %v4678, %v4698
        %v4711 = vsub.f32 %v4679, %v4701
        %v4712 = vsub.f32 %v4680, %v4704
        %v4713 = vmul.f32 %v4705, 1.442695
        %v4714 = vpow.pop %v4713
        %v4715 = vmul.f32 %v4706, 1.442695
        %v4716 = vpow.pop %v4715
        %v4717 = vmul.f32 %v4707, 1.442695
        %v4718 = vpow.pop %v4717
        %v4719 = vmul.f32 %v4708, 1.442695
        %v4720 = vpow.pop %v4719
        %v4721 = vmul.f32 %v4709, 1.442695
        %v4722 = vpow.pop %v4721
        %v4723 = vmul.f32 %v4710, 1.442695
        %v4724 = vpow.pop %v4723
        %v4725 = vmul.f32 %v4711, 1.442695
        %v4726 = vpow.pop %v4725
        %v4727 = vmul.f32 %v4712, 1.442695
        %v4728 = vpow.pop %v4727
        %v4729 = vsel %vm2248, %v4714, 0.0
        %4730 = vadd.xlane.f32.xlu0 %v4729
        %v4731 = vpop.xlane.xlu0 %4730
        %v4732 = vsel %vm2248, %v4716, 0.0
        %4733 = vadd.xlane.f32.xlu0 %v4732
        %v4734 = vpop.xlane.xlu0 %4733
        %v4735 = vsel %vm2248, %v4718, 0.0
        %4736 = vadd.xlane.f32.xlu0 %v4735
        %v4737 = vpop.xlane.xlu0 %4736
        %v4738 = vsel %vm2248, %v4720, 0.0
        %4739 = vadd.xlane.f32.xlu0 %v4738
        %v4740 = vpop.xlane.xlu0 %4739
        %v4741 = vsel %vm2248, %v4722, 0.0
        %4742 = vadd.xlane.f32.xlu0 %v4741
        %v4743 = vpop.xlane.xlu0 %4742
        %v4744 = vsel %vm2248, %v4724, 0.0
        %4745 = vadd.xlane.f32.xlu0 %v4744
        %v4746 = vpop.xlane.xlu0 %4745
        %v4747 = vsel %vm2248, %v4726, 0.0
        %4748 = vadd.xlane.f32.xlu0 %v4747
        %v4749 = vpop.xlane.xlu0 %4748
        %v4750 = vsel %vm2248, %v4728, 0.0
        %4751 = vadd.xlane.f32.xlu0 %v4750
        %v4752 = vpop.xlane.xlu0 %4751
        %v4753 = vrcp.pop %v4731
        %v4754 = vrcp.pop %v4734
        %v4755 = vrcp.pop %v4737
        %v4756 = vrcp.pop %v4740
        %v4757 = vrcp.pop %v4743
        %v4758 = vrcp.pop %v4746
        %v4759 = vrcp.pop %v4749
        %v4760 = vrcp.pop %v4752
        %v4761 = vmul.f32 %v4714, %v4753
        %v4762 = vmul.f32 %v4716, %v4754
        %v4763 = vmul.f32 %v4718, %v4755
        %v4764 = vmul.f32 %v4720, %v4756
        %v4765 = vmul.f32 %v4722, %v4757
        %v4766 = vmul.f32 %v4724, %v4758
        %v4767 = vmul.f32 %v4726, %v4759
        %v4768 = vmul.f32 %v4728, %v4760
        %4770 = vset.pattern.permute.xlu0 0
        %4771 = vperm.xlu0 %4770, %v4761
        %v4772 = vpop.permute.xlu0 %4771
        %4775 = vset.pattern.permute.xlu0 0
        %4776 = vperm.xlu0 %4775, %v4762
        %v4777 = vpop.permute.xlu0 %4776
        %4780 = vset.pattern.permute.xlu0 0
        %4781 = vperm.xlu0 %4780, %v4763
        %v4782 = vpop.permute.xlu0 %4781
        %4785 = vset.pattern.permute.xlu0 0
        %4786 = vperm.xlu0 %4785, %v4764
        %v4787 = vpop.permute.xlu0 %4786
        %4790 = vset.pattern.permute.xlu0 0
        %4791 = vperm.xlu0 %4790, %v4765
        %v4792 = vpop.permute.xlu0 %4791
        %4795 = vset.pattern.permute.xlu0 0
        %4796 = vperm.xlu0 %4795, %v4766
        %v4797 = vpop.permute.xlu0 %4796
        %4800 = vset.pattern.permute.xlu0 0
        %4801 = vperm.xlu0 %4800, %v4767
        %v4802 = vpop.permute.xlu0 %4801
        %4805 = vset.pattern.permute.xlu0 0
        %4806 = vperm.xlu0 %4805, %v4768
        %v4807 = vpop.permute.xlu0 %4806
        %v4809 = vmul.f32 %v4772, %v1629
        %v4810 = vmul.f32 %v4777, %v1632
        %v4811 = vmul.f32 %v4782, %v1637
        %v4812 = vmul.f32 %v4787, %v1640
        %v4813 = vmul.f32 %v4792, %v1645
        %v4814 = vmul.f32 %v4797, %v1648
        %v4815 = vmul.f32 %v4802, %v1653
        %v4816 = vmul.f32 %v4807, %v1656
        %4817 = vset.pattern.permute.xlu0 1
        %4818 = vperm.xlu0 %4817, %v4761
        %v4819 = vpop.permute.xlu0 %4818
        %4821 = vset.pattern.permute.xlu0 1
        %4822 = vperm.xlu0 %4821, %v4762
        %v4823 = vpop.permute.xlu0 %4822
        %4825 = vset.pattern.permute.xlu0 1
        %4826 = vperm.xlu0 %4825, %v4763
        %v4827 = vpop.permute.xlu0 %4826
        %4829 = vset.pattern.permute.xlu0 1
        %4830 = vperm.xlu0 %4829, %v4764
        %v4831 = vpop.permute.xlu0 %4830
        %4833 = vset.pattern.permute.xlu0 1
        %4834 = vperm.xlu0 %4833, %v4765
        %v4835 = vpop.permute.xlu0 %4834
        %4837 = vset.pattern.permute.xlu0 1
        %4838 = vperm.xlu0 %4837, %v4766
        %v4839 = vpop.permute.xlu0 %4838
        %4841 = vset.pattern.permute.xlu0 1
        %4842 = vperm.xlu0 %4841, %v4767
        %v4843 = vpop.permute.xlu0 %4842
        %4845 = vset.pattern.permute.xlu0 1
        %4846 = vperm.xlu0 %4845, %v4768
        %v4847 = vpop.permute.xlu0 %4846
        %v4849 = vmul.f32 %v4819, %v1661
        %v4850 = vmul.f32 %v4823, %v1664
        %v4851 = vmul.f32 %v4827, %v1669
        %v4852 = vmul.f32 %v4831, %v1672
        %v4853 = vmul.f32 %v4835, %v1677
        %v4854 = vmul.f32 %v4839, %v1680
        %v4855 = vmul.f32 %v4843, %v1685
        %v4856 = vmul.f32 %v4847, %v1688
        %v4857 = vadd.f32 %v4809, %v4849
        %v4858 = vadd.f32 %v4810, %v4850
        %v4859 = vadd.f32 %v4811, %v4851
        %v4860 = vadd.f32 %v4812, %v4852
        %v4861 = vadd.f32 %v4813, %v4853
        %v4862 = vadd.f32 %v4814, %v4854
        %v4863 = vadd.f32 %v4815, %v4855
        %v4864 = vadd.f32 %v4816, %v4856
        %4865 = vset.pattern.permute.xlu0 2
        %4866 = vperm.xlu0 %4865, %v4761
        %v4867 = vpop.permute.xlu0 %4866
        %4869 = vset.pattern.permute.xlu0 2
        %4870 = vperm.xlu0 %4869, %v4762
        %v4871 = vpop.permute.xlu0 %4870
        %4873 = vset.pattern.permute.xlu0 2
        %4874 = vperm.xlu0 %4873, %v4763
        %v4875 = vpop.permute.xlu0 %4874
        %4877 = vset.pattern.permute.xlu0 2
        %4878 = vperm.xlu0 %4877, %v4764
        %v4879 = vpop.permute.xlu0 %4878
        %4881 = vset.pattern.permute.xlu0 2
        %4882 = vperm.xlu0 %4881, %v4765
        %v4883 = vpop.permute.xlu0 %4882
        %4885 = vset.pattern.permute.xlu0 2
        %4886 = vperm.xlu0 %4885, %v4766
        %v4887 = vpop.permute.xlu0 %4886
        %4889 = vset.pattern.permute.xlu0 2
        %4890 = vperm.xlu0 %4889, %v4767
        %v4891 = vpop.permute.xlu0 %4890
        %4893 = vset.pattern.permute.xlu0 2
        %4894 = vperm.xlu0 %4893, %v4768
        %v4895 = vpop.permute.xlu0 %4894
        %v4897 = vmul.f32 %v4867, %v1693
        %v4898 = vmul.f32 %v4871, %v1696
        %v4899 = vmul.f32 %v4875, %v1701
        %v4900 = vmul.f32 %v4879, %v1704
        %v4901 = vmul.f32 %v4883, %v1709
        %v4902 = vmul.f32 %v4887, %v1712
        %v4903 = vmul.f32 %v4891, %v1717
        %v4904 = vmul.f32 %v4895, %v1720
        %v4905 = vadd.f32 %v4857, %v4897
        %v4906 = vadd.f32 %v4858, %v4898
        %v4907 = vadd.f32 %v4859, %v4899
        %v4908 = vadd.f32 %v4860, %v4900
        %v4909 = vadd.f32 %v4861, %v4901
        %v4910 = vadd.f32 %v4862, %v4902
        %v4911 = vadd.f32 %v4863, %v4903
        %v4912 = vadd.f32 %v4864, %v4904
        %4913 = vset.pattern.permute.xlu0 3
        %4914 = vperm.xlu0 %4913, %v4761
        %v4915 = vpop.permute.xlu0 %4914
        %4917 = vset.pattern.permute.xlu0 3
        %4918 = vperm.xlu0 %4917, %v4762
        %v4919 = vpop.permute.xlu0 %4918
        %4921 = vset.pattern.permute.xlu0 3
        %4922 = vperm.xlu0 %4921, %v4763
        %v4923 = vpop.permute.xlu0 %4922
        %4925 = vset.pattern.permute.xlu0 3
        %4926 = vperm.xlu0 %4925, %v4764
        %v4927 = vpop.permute.xlu0 %4926
        %4929 = vset.pattern.permute.xlu0 3
        %4930 = vperm.xlu0 %4929, %v4765
        %v4931 = vpop.permute.xlu0 %4930
        %4933 = vset.pattern.permute.xlu0 3
        %4934 = vperm.xlu0 %4933, %v4766
        %v4935 = vpop.permute.xlu0 %4934
        %4937 = vset.pattern.permute.xlu0 3
        %4938 = vperm.xlu0 %4937, %v4767
        %v4939 = vpop.permute.xlu0 %4938
        %4941 = vset.pattern.permute.xlu0 3
        %4942 = vperm.xlu0 %4941, %v4768
        %v4943 = vpop.permute.xlu0 %4942
        %v4945 = vmul.f32 %v4915, %v1725
        %v4946 = vmul.f32 %v4919, %v1728
        %v4947 = vmul.f32 %v4923, %v1733
        %v4948 = vmul.f32 %v4927, %v1736
        %v4949 = vmul.f32 %v4931, %v1741
        %v4950 = vmul.f32 %v4935, %v1744
        %v4951 = vmul.f32 %v4939, %v1749
        %v4952 = vmul.f32 %v4943, %v1752
        %v4953 = vadd.f32 %v4905, %v4945
        %v4954 = vadd.f32 %v4906, %v4946
        %v4955 = vadd.f32 %v4907, %v4947
        %v4956 = vadd.f32 %v4908, %v4948
        %v4957 = vadd.f32 %v4909, %v4949
        %v4958 = vadd.f32 %v4910, %v4950
        %v4959 = vadd.f32 %v4911, %v4951
        %v4960 = vadd.f32 %v4912, %v4952
        %4961 = vset.pattern.permute.xlu0 4
        %4962 = vperm.xlu0 %4961, %v4761
        %v4963 = vpop.permute.xlu0 %4962
        %4965 = vset.pattern.permute.xlu0 4
        %4966 = vperm.xlu0 %4965, %v4762
        %v4967 = vpop.permute.xlu0 %4966
        %4969 = vset.pattern.permute.xlu0 4
        %4970 = vperm.xlu0 %4969, %v4763
        %v4971 = vpop.permute.xlu0 %4970
        %4973 = vset.pattern.permute.xlu0 4
        %4974 = vperm.xlu0 %4973, %v4764
        %v4975 = vpop.permute.xlu0 %4974
        %4977 = vset.pattern.permute.xlu0 4
        %4978 = vperm.xlu0 %4977, %v4765
        %v4979 = vpop.permute.xlu0 %4978
        %4981 = vset.pattern.permute.xlu0 4
        %4982 = vperm.xlu0 %4981, %v4766
        %v4983 = vpop.permute.xlu0 %4982
        %4985 = vset.pattern.permute.xlu0 4
        %4986 = vperm.xlu0 %4985, %v4767
        %v4987 = vpop.permute.xlu0 %4986
        %4989 = vset.pattern.permute.xlu0 4
        %4990 = vperm.xlu0 %4989, %v4768
        %v4991 = vpop.permute.xlu0 %4990
        %v4993 = vmul.f32 %v4963, %v1757
        %v4994 = vmul.f32 %v4967, %v1760
        %v4995 = vmul.f32 %v4971, %v1765
        %v4996 = vmul.f32 %v4975, %v1768
        %v4997 = vmul.f32 %v4979, %v1773
        %v4998 = vmul.f32 %v4983, %v1776
        %v4999 = vmul.f32 %v4987, %v1781
        %v5000 = vmul.f32 %v4991, %v1784
        %v5001 = vadd.f32 %v4953, %v4993
        %v5002 = vadd.f32 %v4954, %v4994
        %v5003 = vadd.f32 %v4955, %v4995
        %v5004 = vadd.f32 %v4956, %v4996
        %v5005 = vadd.f32 %v4957, %v4997
        %v5006 = vadd.f32 %v4958, %v4998
        %v5007 = vadd.f32 %v4959, %v4999
        %v5008 = vadd.f32 %v4960, %v5000
        %5009 = vset.pattern.permute.xlu0 5
        %5010 = vperm.xlu0 %5009, %v4761
        %v5011 = vpop.permute.xlu0 %5010
        %5013 = vset.pattern.permute.xlu0 5
        %5014 = vperm.xlu0 %5013, %v4762
        %v5015 = vpop.permute.xlu0 %5014
        %5017 = vset.pattern.permute.xlu0 5
        %5018 = vperm.xlu0 %5017, %v4763
        %v5019 = vpop.permute.xlu0 %5018
        %5021 = vset.pattern.permute.xlu0 5
        %5022 = vperm.xlu0 %5021, %v4764
        %v5023 = vpop.permute.xlu0 %5022
        %5025 = vset.pattern.permute.xlu0 5
        %5026 = vperm.xlu0 %5025, %v4765
        %v5027 = vpop.permute.xlu0 %5026
        %5029 = vset.pattern.permute.xlu0 5
        %5030 = vperm.xlu0 %5029, %v4766
        %v5031 = vpop.permute.xlu0 %5030
        %5033 = vset.pattern.permute.xlu0 5
        %5034 = vperm.xlu0 %5033, %v4767
        %v5035 = vpop.permute.xlu0 %5034
        %5037 = vset.pattern.permute.xlu0 5
        %5038 = vperm.xlu0 %5037, %v4768
        %v5039 = vpop.permute.xlu0 %5038
        %v5041 = vmul.f32 %v5011, %v1789
        %v5042 = vmul.f32 %v5015, %v1792
        %v5043 = vmul.f32 %v5019, %v1797
        %v5044 = vmul.f32 %v5023, %v1800
        %v5045 = vmul.f32 %v5027, %v1805
        %v5046 = vmul.f32 %v5031, %v1808
        %v5047 = vmul.f32 %v5035, %v1813
        %v5048 = vmul.f32 %v5039, %v1816
        %v5049 = vadd.f32 %v5001, %v5041
        %v5050 = vadd.f32 %v5002, %v5042
        %v5051 = vadd.f32 %v5003, %v5043
        %v5052 = vadd.f32 %v5004, %v5044
        %v5053 = vadd.f32 %v5005, %v5045
        %v5054 = vadd.f32 %v5006, %v5046
        %v5055 = vadd.f32 %v5007, %v5047
        %v5056 = vadd.f32 %v5008, %v5048
        %v5057 = vmul.f32 %v1789, %v1828
        %v5058 = vmul.f32 %v1792, %v1830
        %v5059 = vmul.f32 %v1797, %v1832
        %v5060 = vmul.f32 %v1800, %v1834
        %v5061 = vmul.f32 %v1805, %v1836
        %v5062 = vmul.f32 %v1808, %v1838
        %v5063 = vmul.f32 %v1813, %v1840
        %v5064 = vmul.f32 %v1816, %v1842
        %v5065 = vsel %vm746, %v5057, 0.0
        %5066 = vadd.xlane.f32.xlu0 %v5065
        %v5067 = vpop.xlane.xlu0 %5066
        %v5068 = vsel %vm746, %v5058, 0.0
        %5069 = vadd.xlane.f32.xlu0 %v5068
        %v5070 = vpop.xlane.xlu0 %5069
        %v5071 = vsel %vm746, %v5059, 0.0
        %5072 = vadd.xlane.f32.xlu0 %v5071
        %v5073 = vpop.xlane.xlu0 %5072
        %v5074 = vsel %vm746, %v5060, 0.0
        %5075 = vadd.xlane.f32.xlu0 %v5074
        %v5076 = vpop.xlane.xlu0 %5075
        %v5077 = vsel %vm746, %v5061, 0.0
        %5078 = vadd.xlane.f32.xlu0 %v5077
        %v5079 = vpop.xlane.xlu0 %5078
        %v5080 = vsel %vm746, %v5062, 0.0
        %5081 = vadd.xlane.f32.xlu0 %v5080
        %v5082 = vpop.xlane.xlu0 %5081
        %v5083 = vsel %vm746, %v5063, 0.0
        %5084 = vadd.xlane.f32.xlu0 %v5083
        %v5085 = vpop.xlane.xlu0 %5084
        %v5086 = vsel %vm746, %v5064, 0.0
        %5087 = vadd.xlane.f32.xlu0 %v5086
        %v5088 = vpop.xlane.xlu0 %5087
        %v5089 = vmul.f32 %v1789, %v1892
        %v5090 = vmul.f32 %v1792, %v1894
        %v5091 = vmul.f32 %v1797, %v1896
        %v5092 = vmul.f32 %v1800, %v1898
        %v5093 = vmul.f32 %v1805, %v1900
        %v5094 = vmul.f32 %v1808, %v1902
        %v5095 = vmul.f32 %v1813, %v1904
        %v5096 = vmul.f32 %v1816, %v1906
        %v5097 = vsel %vm746, %v5089, 0.0
        %5098 = vadd.xlane.f32.xlu0 %v5097
        %v5099 = vpop.xlane.xlu0 %5098
        %v5100 = vsel %vm746, %v5090, 0.0
        %5101 = vadd.xlane.f32.xlu0 %v5100
        %v5102 = vpop.xlane.xlu0 %5101
        %v5103 = vsel %vm746, %v5091, 0.0
        %5104 = vadd.xlane.f32.xlu0 %v5103
        %v5105 = vpop.xlane.xlu0 %5104
        %v5106 = vsel %vm746, %v5092, 0.0
        %5107 = vadd.xlane.f32.xlu0 %v5106
        %v5108 = vpop.xlane.xlu0 %5107
        %v5109 = vsel %vm746, %v5093, 0.0
        %5110 = vadd.xlane.f32.xlu0 %v5109
        %v5111 = vpop.xlane.xlu0 %5110
        %v5112 = vsel %vm746, %v5094, 0.0
        %5113 = vadd.xlane.f32.xlu0 %v5112
        %v5114 = vpop.xlane.xlu0 %5113
        %v5115 = vsel %vm746, %v5095, 0.0
        %5116 = vadd.xlane.f32.xlu0 %v5115
        %v5117 = vpop.xlane.xlu0 %5116
        %v5118 = vsel %vm746, %v5096, 0.0
        %5119 = vadd.xlane.f32.xlu0 %v5118
        %v5120 = vpop.xlane.xlu0 %5119
        %v5121 = vmul.f32 %v1789, %v1956
        %v5122 = vmul.f32 %v1792, %v1958
        %v5123 = vmul.f32 %v1797, %v1960
        %v5124 = vmul.f32 %v1800, %v1962
        %v5125 = vmul.f32 %v1805, %v1964
        %v5126 = vmul.f32 %v1808, %v1966
        %v5127 = vmul.f32 %v1813, %v1968
        %v5128 = vmul.f32 %v1816, %v1970
        %v5129 = vsel %vm746, %v5121, 0.0
        %5130 = vadd.xlane.f32.xlu0 %v5129
        %v5131 = vpop.xlane.xlu0 %5130
        %v5132 = vsel %vm746, %v5122, 0.0
        %5133 = vadd.xlane.f32.xlu0 %v5132
        %v5134 = vpop.xlane.xlu0 %5133
        %v5135 = vsel %vm746, %v5123, 0.0
        %5136 = vadd.xlane.f32.xlu0 %v5135
        %v5137 = vpop.xlane.xlu0 %5136
        %v5138 = vsel %vm746, %v5124, 0.0
        %5139 = vadd.xlane.f32.xlu0 %v5138
        %v5140 = vpop.xlane.xlu0 %5139
        %v5141 = vsel %vm746, %v5125, 0.0
        %5142 = vadd.xlane.f32.xlu0 %v5141
        %v5143 = vpop.xlane.xlu0 %5142
        %v5144 = vsel %vm746, %v5126, 0.0
        %5145 = vadd.xlane.f32.xlu0 %v5144
        %v5146 = vpop.xlane.xlu0 %5145
        %v5147 = vsel %vm746, %v5127, 0.0
        %5148 = vadd.xlane.f32.xlu0 %v5147
        %v5149 = vpop.xlane.xlu0 %5148
        %v5150 = vsel %vm746, %v5128, 0.0
        %5151 = vadd.xlane.f32.xlu0 %v5150
        %v5152 = vpop.xlane.xlu0 %5151
        %v5153 = vmul.f32 %v1789, %v2020
        %v5154 = vmul.f32 %v1792, %v2022
        %v5155 = vmul.f32 %v1797, %v2024
        %v5156 = vmul.f32 %v1800, %v2026
        %v5157 = vmul.f32 %v1805, %v2028
        %v5158 = vmul.f32 %v1808, %v2030
        %v5159 = vmul.f32 %v1813, %v2032
        %v5160 = vmul.f32 %v1816, %v2034
        %v5161 = vsel %vm746, %v5153, 0.0
        %5162 = vadd.xlane.f32.xlu0 %v5161
        %v5163 = vpop.xlane.xlu0 %5162
        %v5164 = vsel %vm746, %v5154, 0.0
        %5165 = vadd.xlane.f32.xlu0 %v5164
        %v5166 = vpop.xlane.xlu0 %5165
        %v5167 = vsel %vm746, %v5155, 0.0
        %5168 = vadd.xlane.f32.xlu0 %v5167
        %v5169 = vpop.xlane.xlu0 %5168
        %v5170 = vsel %vm746, %v5156, 0.0
        %5171 = vadd.xlane.f32.xlu0 %v5170
        %v5172 = vpop.xlane.xlu0 %5171
        %v5173 = vsel %vm746, %v5157, 0.0
        %5174 = vadd.xlane.f32.xlu0 %v5173
        %v5175 = vpop.xlane.xlu0 %5174
        %v5176 = vsel %vm746, %v5158, 0.0
        %5177 = vadd.xlane.f32.xlu0 %v5176
        %v5178 = vpop.xlane.xlu0 %5177
        %v5179 = vsel %vm746, %v5159, 0.0
        %5180 = vadd.xlane.f32.xlu0 %v5179
        %v5181 = vpop.xlane.xlu0 %5180
        %v5182 = vsel %vm746, %v5160, 0.0
        %5183 = vadd.xlane.f32.xlu0 %v5182
        %v5184 = vpop.xlane.xlu0 %5183
        %v5185 = vmul.f32 %v1789, %v2084
        %v5186 = vmul.f32 %v1792, %v2086
        %v5187 = vmul.f32 %v1797, %v2088
        %v5188 = vmul.f32 %v1800, %v2090
        %v5189 = vmul.f32 %v1805, %v2092
        %v5190 = vmul.f32 %v1808, %v2094
        %v5191 = vmul.f32 %v1813, %v2096
        %v5192 = vmul.f32 %v1816, %v2098
        %v5193 = vsel %vm746, %v5185, 0.0
        %5194 = vadd.xlane.f32.xlu0 %v5193
        %v5195 = vpop.xlane.xlu0 %5194
        %v5196 = vsel %vm746, %v5186, 0.0
        %5197 = vadd.xlane.f32.xlu0 %v5196
        %v5198 = vpop.xlane.xlu0 %5197
        %v5199 = vsel %vm746, %v5187, 0.0
        %5200 = vadd.xlane.f32.xlu0 %v5199
        %v5201 = vpop.xlane.xlu0 %5200
        %v5202 = vsel %vm746, %v5188, 0.0
        %5203 = vadd.xlane.f32.xlu0 %v5202
        %v5204 = vpop.xlane.xlu0 %5203
        %v5205 = vsel %vm746, %v5189, 0.0
        %5206 = vadd.xlane.f32.xlu0 %v5205
        %v5207 = vpop.xlane.xlu0 %5206
        %v5208 = vsel %vm746, %v5190, 0.0
        %5209 = vadd.xlane.f32.xlu0 %v5208
        %v5210 = vpop.xlane.xlu0 %5209
        %v5211 = vsel %vm746, %v5191, 0.0
        %5212 = vadd.xlane.f32.xlu0 %v5211
        %v5213 = vpop.xlane.xlu0 %5212
        %v5214 = vsel %vm746, %v5192, 0.0
        %5215 = vadd.xlane.f32.xlu0 %v5214
        %v5216 = vpop.xlane.xlu0 %5215
        %v5217 = vmul.f32 %v1789, %v2148
        %v5218 = vmul.f32 %v1792, %v2150
        %v5219 = vmul.f32 %v1797, %v2152
        %v5220 = vmul.f32 %v1800, %v2154
        %v5221 = vmul.f32 %v1805, %v2156
        %v5222 = vmul.f32 %v1808, %v2158
        %v5223 = vmul.f32 %v1813, %v2160
        %v5224 = vmul.f32 %v1816, %v2162
        %v5225 = vsel %vm746, %v5217, 0.0
        %5226 = vadd.xlane.f32.xlu0 %v5225
        %v5227 = vpop.xlane.xlu0 %5226
        %v5228 = vsel %vm746, %v5218, 0.0
        %5229 = vadd.xlane.f32.xlu0 %v5228
        %v5230 = vpop.xlane.xlu0 %5229
        %v5231 = vsel %vm746, %v5219, 0.0
        %5232 = vadd.xlane.f32.xlu0 %v5231
        %v5233 = vpop.xlane.xlu0 %5232
        %v5234 = vsel %vm746, %v5220, 0.0
        %5235 = vadd.xlane.f32.xlu0 %v5234
        %v5236 = vpop.xlane.xlu0 %5235
        %v5237 = vsel %vm746, %v5221, 0.0
        %5238 = vadd.xlane.f32.xlu0 %v5237
        %v5239 = vpop.xlane.xlu0 %5238
        %v5240 = vsel %vm746, %v5222, 0.0
        %5241 = vadd.xlane.f32.xlu0 %v5240
        %v5242 = vpop.xlane.xlu0 %5241
        %v5243 = vsel %vm746, %v5223, 0.0
        %5244 = vadd.xlane.f32.xlu0 %v5243
        %v5245 = vpop.xlane.xlu0 %5244
        %v5246 = vsel %vm746, %v5224, 0.0
        %5247 = vadd.xlane.f32.xlu0 %v5246
        %v5248 = vpop.xlane.xlu0 %5247
        %v5249 = vsel %vm2203, %v5067, %v5099
        %v5250 = vsel %vm2203, %v5070, %v5102
        %v5251 = vsel %vm2203, %v5073, %v5105
        %v5252 = vsel %vm2203, %v5076, %v5108
        %v5253 = vsel %vm2203, %v5079, %v5111
        %v5254 = vsel %vm2203, %v5082, %v5114
        %v5255 = vsel %vm2203, %v5085, %v5117
        %v5256 = vsel %vm2203, %v5088, %v5120
        %v5257 = vsel %vm2212, %v5249, %v5131
        %v5258 = vsel %vm2212, %v5250, %v5134
        %v5259 = vsel %vm2212, %v5251, %v5137
        %v5260 = vsel %vm2212, %v5252, %v5140
        %v5261 = vsel %vm2212, %v5253, %v5143
        %v5262 = vsel %vm2212, %v5254, %v5146
        %v5263 = vsel %vm2212, %v5255, %v5149
        %v5264 = vsel %vm2212, %v5256, %v5152
        %v5265 = vsel %vm2221, %v5257, %v5163
        %v5266 = vsel %vm2221, %v5258, %v5166
        %v5267 = vsel %vm2221, %v5259, %v5169
        %v5268 = vsel %vm2221, %v5260, %v5172
        %v5269 = vsel %vm2221, %v5261, %v5175
        %v5270 = vsel %vm2221, %v5262, %v5178
        %v5271 = vsel %vm2221, %v5263, %v5181
        %v5272 = vsel %vm2221, %v5264, %v5184
        %v5273 = vsel %vm2230, %v5265, %v5195
        %v5274 = vsel %vm2230, %v5266, %v5198
        %v5275 = vsel %vm2230, %v5267, %v5201
        %v5276 = vsel %vm2230, %v5268, %v5204
        %v5277 = vsel %vm2230, %v5269, %v5207
        %v5278 = vsel %vm2230, %v5270, %v5210
        %v5279 = vsel %vm2230, %v5271, %v5213
        %v5280 = vsel %vm2230, %v5272, %v5216
        %v5281 = vsel %vm2239, %v5273, %v5227
        %v5282 = vsel %vm2239, %v5274, %v5230
        %v5283 = vsel %vm2239, %v5275, %v5233
        %v5284 = vsel %vm2239, %v5276, %v5236
        %v5285 = vsel %vm2239, %v5277, %v5239
        %v5286 = vsel %vm2239, %v5278, %v5242
        %v5287 = vsel %vm2239, %v5279, %v5245
        %v5288 = vsel %vm2239, %v5280, %v5248
        %v5289 = vsel %vm2248, %v5281, -inf
        %5290 = vmax.xlane.f32.xlu0 %v5289
        %v5291 = vpop.xlane.xlu0 %5290
        %v5292 = vsel %vm2248, %v5282, -inf
        %5293 = vmax.xlane.f32.xlu0 %v5292
        %v5294 = vpop.xlane.xlu0 %5293
        %v5295 = vsel %vm2248, %v5283, -inf
        %5296 = vmax.xlane.f32.xlu0 %v5295
        %v5297 = vpop.xlane.xlu0 %5296
        %v5298 = vsel %vm2248, %v5284, -inf
        %5299 = vmax.xlane.f32.xlu0 %v5298
        %v5300 = vpop.xlane.xlu0 %5299
        %v5301 = vsel %vm2248, %v5285, -inf
        %5302 = vmax.xlane.f32.xlu0 %v5301
        %v5303 = vpop.xlane.xlu0 %5302
        %v5304 = vsel %vm2248, %v5286, -inf
        %5305 = vmax.xlane.f32.xlu0 %v5304
        %v5306 = vpop.xlane.xlu0 %5305
        %v5307 = vsel %vm2248, %v5287, -inf
        %5308 = vmax.xlane.f32.xlu0 %v5307
        %v5309 = vpop.xlane.xlu0 %5308
        %v5310 = vsel %vm2248, %v5288, -inf
        %5311 = vmax.xlane.f32.xlu0 %v5310
        %v5312 = vpop.xlane.xlu0 %5311
        %v5313 = vsub.f32 %v5281, %v5291
        %v5314 = vsub.f32 %v5282, %v5294
        %v5315 = vsub.f32 %v5283, %v5297
        %v5316 = vsub.f32 %v5284, %v5300
        %v5317 = vsub.f32 %v5285, %v5303
        %v5318 = vsub.f32 %v5286, %v5306
        %v5319 = vsub.f32 %v5287, %v5309
        %v5320 = vsub.f32 %v5288, %v5312
        %v5321 = vmul.f32 %v5313, 1.442695
        %v5322 = vpow.pop %v5321
        %v5323 = vmul.f32 %v5314, 1.442695
        %v5324 = vpow.pop %v5323
        %v5325 = vmul.f32 %v5315, 1.442695
        %v5326 = vpow.pop %v5325
        %v5327 = vmul.f32 %v5316, 1.442695
        %v5328 = vpow.pop %v5327
        %v5329 = vmul.f32 %v5317, 1.442695
        %v5330 = vpow.pop %v5329
        %v5331 = vmul.f32 %v5318, 1.442695
        %v5332 = vpow.pop %v5331
        %v5333 = vmul.f32 %v5319, 1.442695
        %v5334 = vpow.pop %v5333
        %v5335 = vmul.f32 %v5320, 1.442695
        %v5336 = vpow.pop %v5335
        %v5337 = vsel %vm2248, %v5322, 0.0
        %5338 = vadd.xlane.f32.xlu0 %v5337
        %v5339 = vpop.xlane.xlu0 %5338
        %v5340 = vsel %vm2248, %v5324, 0.0
        %5341 = vadd.xlane.f32.xlu0 %v5340
        %v5342 = vpop.xlane.xlu0 %5341
        %v5343 = vsel %vm2248, %v5326, 0.0
        %5344 = vadd.xlane.f32.xlu0 %v5343
        %v5345 = vpop.xlane.xlu0 %5344
        %v5346 = vsel %vm2248, %v5328, 0.0
        %5347 = vadd.xlane.f32.xlu0 %v5346
        %v5348 = vpop.xlane.xlu0 %5347
        %v5349 = vsel %vm2248, %v5330, 0.0
        %5350 = vadd.xlane.f32.xlu0 %v5349
        %v5351 = vpop.xlane.xlu0 %5350
        %v5352 = vsel %vm2248, %v5332, 0.0
        %5353 = vadd.xlane.f32.xlu0 %v5352
        %v5354 = vpop.xlane.xlu0 %5353
        %v5355 = vsel %vm2248, %v5334, 0.0
        %5356 = vadd.xlane.f32.xlu0 %v5355
        %v5357 = vpop.xlane.xlu0 %5356
        %v5358 = vsel %vm2248, %v5336, 0.0
        %5359 = vadd.xlane.f32.xlu0 %v5358
        %v5360 = vpop.xlane.xlu0 %5359
        %v5361 = vrcp.pop %v5339
        %v5362 = vrcp.pop %v5342
        %v5363 = vrcp.pop %v5345
        %v5364 = vrcp.pop %v5348
        %v5365 = vrcp.pop %v5351
        %v5366 = vrcp.pop %v5354
        %v5367 = vrcp.pop %v5357
        %v5368 = vrcp.pop %v5360
        %v5369 = vmul.f32 %v5322, %v5361
        %v5370 = vmul.f32 %v5324, %v5362
        %v5371 = vmul.f32 %v5326, %v5363
        %v5372 = vmul.f32 %v5328, %v5364
        %v5373 = vmul.f32 %v5330, %v5365
        %v5374 = vmul.f32 %v5332, %v5366
        %v5375 = vmul.f32 %v5334, %v5367
        %v5376 = vmul.f32 %v5336, %v5368
        %5378 = vset.pattern.permute.xlu0 0
        %5379 = vperm.xlu0 %5378, %v5369
        %v5380 = vpop.permute.xlu0 %5379
        %5383 = vset.pattern.permute.xlu0 0
        %5384 = vperm.xlu0 %5383, %v5370
        %v5385 = vpop.permute.xlu0 %5384
        %5388 = vset.pattern.permute.xlu0 0
        %5389 = vperm.xlu0 %5388, %v5371
        %v5390 = vpop.permute.xlu0 %5389
        %5393 = vset.pattern.permute.xlu0 0
        %5394 = vperm.xlu0 %5393, %v5372
        %v5395 = vpop.permute.xlu0 %5394
        %5398 = vset.pattern.permute.xlu0 0
        %5399 = vperm.xlu0 %5398, %v5373
        %v5400 = vpop.permute.xlu0 %5399
        %5403 = vset.pattern.permute.xlu0 0
        %5404 = vperm.xlu0 %5403, %v5374
        %v5405 = vpop.permute.xlu0 %5404
        %5408 = vset.pattern.permute.xlu0 0
        %5409 = vperm.xlu0 %5408, %v5375
        %v5410 = vpop.permute.xlu0 %5409
        %5413 = vset.pattern.permute.xlu0 0
        %5414 = vperm.xlu0 %5413, %v5376
        %v5415 = vpop.permute.xlu0 %5414
        %v5417 = vmul.f32 %v5380, %v1629
        %v5418 = vmul.f32 %v5385, %v1632
        %v5419 = vmul.f32 %v5390, %v1637
        %v5420 = vmul.f32 %v5395, %v1640
        %v5421 = vmul.f32 %v5400, %v1645
        %v5422 = vmul.f32 %v5405, %v1648
        %v5423 = vmul.f32 %v5410, %v1653
        %v5424 = vmul.f32 %v5415, %v1656
        %5425 = vset.pattern.permute.xlu0 1
        %5426 = vperm.xlu0 %5425, %v5369
        %v5427 = vpop.permute.xlu0 %5426
        %5429 = vset.pattern.permute.xlu0 1
        %5430 = vperm.xlu0 %5429, %v5370
        %v5431 = vpop.permute.xlu0 %5430
        %5433 = vset.pattern.permute.xlu0 1
        %5434 = vperm.xlu0 %5433, %v5371
        %v5435 = vpop.permute.xlu0 %5434
        %5437 = vset.pattern.permute.xlu0 1
        %5438 = vperm.xlu0 %5437, %v5372
        %v5439 = vpop.permute.xlu0 %5438
        %5441 = vset.pattern.permute.xlu0 1
        %5442 = vperm.xlu0 %5441, %v5373
        %v5443 = vpop.permute.xlu0 %5442
        %5445 = vset.pattern.permute.xlu0 1
        %5446 = vperm.xlu0 %5445, %v5374
        %v5447 = vpop.permute.xlu0 %5446
        %5449 = vset.pattern.permute.xlu0 1
        %5450 = vperm.xlu0 %5449, %v5375
        %v5451 = vpop.permute.xlu0 %5450
        %5453 = vset.pattern.permute.xlu0 1
        %5454 = vperm.xlu0 %5453, %v5376
        %v5455 = vpop.permute.xlu0 %5454
        %v5457 = vmul.f32 %v5427, %v1661
        %v5458 = vmul.f32 %v5431, %v1664
        %v5459 = vmul.f32 %v5435, %v1669
        %v5460 = vmul.f32 %v5439, %v1672
        %v5461 = vmul.f32 %v5443, %v1677
        %v5462 = vmul.f32 %v5447, %v1680
        %v5463 = vmul.f32 %v5451, %v1685
        %v5464 = vmul.f32 %v5455, %v1688
        %v5465 = vadd.f32 %v5417, %v5457
        %v5466 = vadd.f32 %v5418, %v5458
        %v5467 = vadd.f32 %v5419, %v5459
        %v5468 = vadd.f32 %v5420, %v5460
        %v5469 = vadd.f32 %v5421, %v5461
        %v5470 = vadd.f32 %v5422, %v5462
        %v5471 = vadd.f32 %v5423, %v5463
        %v5472 = vadd.f32 %v5424, %v5464
        %5473 = vset.pattern.permute.xlu0 2
        %5474 = vperm.xlu0 %5473, %v5369
        %v5475 = vpop.permute.xlu0 %5474
        %5477 = vset.pattern.permute.xlu0 2
        %5478 = vperm.xlu0 %5477, %v5370
        %v5479 = vpop.permute.xlu0 %5478
        %5481 = vset.pattern.permute.xlu0 2
        %5482 = vperm.xlu0 %5481, %v5371
        %v5483 = vpop.permute.xlu0 %5482
        %5485 = vset.pattern.permute.xlu0 2
        %5486 = vperm.xlu0 %5485, %v5372
        %v5487 = vpop.permute.xlu0 %5486
        %5489 = vset.pattern.permute.xlu0 2
        %5490 = vperm.xlu0 %5489, %v5373
        %v5491 = vpop.permute.xlu0 %5490
        %5493 = vset.pattern.permute.xlu0 2
        %5494 = vperm.xlu0 %5493, %v5374
        %v5495 = vpop.permute.xlu0 %5494
        %5497 = vset.pattern.permute.xlu0 2
        %5498 = vperm.xlu0 %5497, %v5375
        %v5499 = vpop.permute.xlu0 %5498
        %5501 = vset.pattern.permute.xlu0 2
        %5502 = vperm.xlu0 %5501, %v5376
        %v5503 = vpop.permute.xlu0 %5502
        %v5505 = vmul.f32 %v5475, %v1693
        %v5506 = vmul.f32 %v5479, %v1696
        %v5507 = vmul.f32 %v5483, %v1701
        %v5508 = vmul.f32 %v5487, %v1704
        %v5509 = vmul.f32 %v5491, %v1709
        %v5510 = vmul.f32 %v5495, %v1712
        %v5511 = vmul.f32 %v5499, %v1717
        %v5512 = vmul.f32 %v5503, %v1720
        %v5513 = vadd.f32 %v5465, %v5505
        %v5514 = vadd.f32 %v5466, %v5506
        %v5515 = vadd.f32 %v5467, %v5507
        %v5516 = vadd.f32 %v5468, %v5508
        %v5517 = vadd.f32 %v5469, %v5509
        %v5518 = vadd.f32 %v5470, %v5510
        %v5519 = vadd.f32 %v5471, %v5511
        %v5520 = vadd.f32 %v5472, %v5512
        %5521 = vset.pattern.permute.xlu0 3
        %5522 = vperm.xlu0 %5521, %v5369
        %v5523 = vpop.permute.xlu0 %5522
        %5525 = vset.pattern.permute.xlu0 3
        %5526 = vperm.xlu0 %5525, %v5370
        %v5527 = vpop.permute.xlu0 %5526
        %5529 = vset.pattern.permute.xlu0 3
        %5530 = vperm.xlu0 %5529, %v5371
        %v5531 = vpop.permute.xlu0 %5530
        %5533 = vset.pattern.permute.xlu0 3
        %5534 = vperm.xlu0 %5533, %v5372
        %v5535 = vpop.permute.xlu0 %5534
        %5537 = vset.pattern.permute.xlu0 3
        %5538 = vperm.xlu0 %5537, %v5373
        %v5539 = vpop.permute.xlu0 %5538
        %5541 = vset.pattern.permute.xlu0 3
        %5542 = vperm.xlu0 %5541, %v5374
        %v5543 = vpop.permute.xlu0 %5542
        %5545 = vset.pattern.permute.xlu0 3
        %5546 = vperm.xlu0 %5545, %v5375
        %v5547 = vpop.permute.xlu0 %5546
        %5549 = vset.pattern.permute.xlu0 3
        %5550 = vperm.xlu0 %5549, %v5376
        %v5551 = vpop.permute.xlu0 %5550
        %v5553 = vmul.f32 %v5523, %v1725
        %v5554 = vmul.f32 %v5527, %v1728
        %v5555 = vmul.f32 %v5531, %v1733
        %v5556 = vmul.f32 %v5535, %v1736
        %v5557 = vmul.f32 %v5539, %v1741
        %v5558 = vmul.f32 %v5543, %v1744
        %v5559 = vmul.f32 %v5547, %v1749
        %v5560 = vmul.f32 %v5551, %v1752
        %v5561 = vadd.f32 %v5513, %v5553
        %v5562 = vadd.f32 %v5514, %v5554
        %v5563 = vadd.f32 %v5515, %v5555
        %v5564 = vadd.f32 %v5516, %v5556
        %v5565 = vadd.f32 %v5517, %v5557
        %v5566 = vadd.f32 %v5518, %v5558
        %v5567 = vadd.f32 %v5519, %v5559
        %v5568 = vadd.f32 %v5520, %v5560
        %5569 = vset.pattern.permute.xlu0 4
        %5570 = vperm.xlu0 %5569, %v5369
        %v5571 = vpop.permute.xlu0 %5570
        %5573 = vset.pattern.permute.xlu0 4
        %5574 = vperm.xlu0 %5573, %v5370
        %v5575 = vpop.permute.xlu0 %5574
        %5577 = vset.pattern.permute.xlu0 4
        %5578 = vperm.xlu0 %5577, %v5371
        %v5579 = vpop.permute.xlu0 %5578
        %5581 = vset.pattern.permute.xlu0 4
        %5582 = vperm.xlu0 %5581, %v5372
        %v5583 = vpop.permute.xlu0 %5582
        %5585 = vset.pattern.permute.xlu0 4
        %5586 = vperm.xlu0 %5585, %v5373
        %v5587 = vpop.permute.xlu0 %5586
        %5589 = vset.pattern.permute.xlu0 4
        %5590 = vperm.xlu0 %5589, %v5374
        %v5591 = vpop.permute.xlu0 %5590
        %5593 = vset.pattern.permute.xlu0 4
        %5594 = vperm.xlu0 %5593, %v5375
        %v5595 = vpop.permute.xlu0 %5594
        %5597 = vset.pattern.permute.xlu0 4
        %5598 = vperm.xlu0 %5597, %v5376
        %v5599 = vpop.permute.xlu0 %5598
        %v5601 = vmul.f32 %v5571, %v1757
        %v5602 = vmul.f32 %v5575, %v1760
        %v5603 = vmul.f32 %v5579, %v1765
        %v5604 = vmul.f32 %v5583, %v1768
        %v5605 = vmul.f32 %v5587, %v1773
        %v5606 = vmul.f32 %v5591, %v1776
        %v5607 = vmul.f32 %v5595, %v1781
        %v5608 = vmul.f32 %v5599, %v1784
        %v5609 = vadd.f32 %v5561, %v5601
        %v5610 = vadd.f32 %v5562, %v5602
        %v5611 = vadd.f32 %v5563, %v5603
        %v5612 = vadd.f32 %v5564, %v5604
        %v5613 = vadd.f32 %v5565, %v5605
        %v5614 = vadd.f32 %v5566, %v5606
        %v5615 = vadd.f32 %v5567, %v5607
        %v5616 = vadd.f32 %v5568, %v5608
        %5617 = vset.pattern.permute.xlu0 5
        %5618 = vperm.xlu0 %5617, %v5369
        %v5619 = vpop.permute.xlu0 %5618
        %5621 = vset.pattern.permute.xlu0 5
        %5622 = vperm.xlu0 %5621, %v5370
        %v5623 = vpop.permute.xlu0 %5622
        %5625 = vset.pattern.permute.xlu0 5
        %5626 = vperm.xlu0 %5625, %v5371
        %v5627 = vpop.permute.xlu0 %5626
        %5629 = vset.pattern.permute.xlu0 5
        %5630 = vperm.xlu0 %5629, %v5372
        %v5631 = vpop.permute.xlu0 %5630
        %5633 = vset.pattern.permute.xlu0 5
        %5634 = vperm.xlu0 %5633, %v5373
        %v5635 = vpop.permute.xlu0 %5634
        %5637 = vset.pattern.permute.xlu0 5
        %5638 = vperm.xlu0 %5637, %v5374
        %v5639 = vpop.permute.xlu0 %5638
        %5641 = vset.pattern.permute.xlu0 5
        %5642 = vperm.xlu0 %5641, %v5375
        %v5643 = vpop.permute.xlu0 %5642
        %5645 = vset.pattern.permute.xlu0 5
        %5646 = vperm.xlu0 %5645, %v5376
        %v5647 = vpop.permute.xlu0 %5646
        %v5649 = vmul.f32 %v5619, %v1789
        %v5650 = vmul.f32 %v5623, %v1792
        %v5651 = vmul.f32 %v5627, %v1797
        %v5652 = vmul.f32 %v5631, %v1800
        %v5653 = vmul.f32 %v5635, %v1805
        %v5654 = vmul.f32 %v5639, %v1808
        %v5655 = vmul.f32 %v5643, %v1813
        %v5656 = vmul.f32 %v5647, %v1816
        %v5657 = vadd.f32 %v5609, %v5649
        %v5658 = vadd.f32 %v5610, %v5650
        %v5659 = vadd.f32 %v5611, %v5651
        %v5660 = vadd.f32 %v5612, %v5652
        %v5661 = vadd.f32 %v5613, %v5653
        %v5662 = vadd.f32 %v5614, %v5654
        %v5663 = vadd.f32 %v5615, %v5655
        %v5664 = vadd.f32 %v5616, %v5656
        %v5665 = vpack.c.bf16 %v2618, %v2617
        %v5666 = vpack.c.bf16 %v2620, %v2619
        %v5667 = vpack.c.bf16 %v2622, %v2621
        %v5668 = vpack.c.bf16 %v2624, %v2623
        %v5669 = vpack.c.bf16 %v3226, %v3225
        %v5670 = vpack.c.bf16 %v3228, %v3227
        %v5671 = vpack.c.bf16 %v3230, %v3229
        %v5672 = vpack.c.bf16 %v3232, %v3231
        %v5673 = vpack.c.bf16 %v3834, %v3833
        %v5674 = vpack.c.bf16 %v3836, %v3835
        %v5675 = vpack.c.bf16 %v3838, %v3837
        %v5676 = vpack.c.bf16 %v3840, %v3839
        %v5677 = vpack.c.bf16 %v4442, %v4441
        %v5678 = vpack.c.bf16 %v4444, %v4443
        %v5679 = vpack.c.bf16 %v4446, %v4445
        %v5680 = vpack.c.bf16 %v4448, %v4447
        %v5681 = vpack.c.bf16 %v5050, %v5049
        %v5682 = vpack.c.bf16 %v5052, %v5051
        %v5683 = vpack.c.bf16 %v5054, %v5053
        %v5684 = vpack.c.bf16 %v5056, %v5055
        %v5685 = vpack.c.bf16 %v5658, %v5657
        %v5686 = vpack.c.bf16 %v5660, %v5659
        %v5687 = vpack.c.bf16 %v5662, %v5661
        %v5688 = vpack.c.bf16 %v5664, %v5663
        %v5689 = vld [vmem:[%s7] sm:$0xf]
        %v5690 = vld [vmem:[%s7 + $0x4] sm:$0xf]
        %v5691 = vld [vmem:[%s7 + $0x8] sm:$0xf]
        %v5692 = vld [vmem:[%s7 + $0xc] sm:$0xf]
        %v5693 = vld [vmem:[%s8] sm:$0x1]
        %v5695 = vlaneseq
        %v5696 = vshrl.u32 %v5695, 7
        %v5697 = vsub.s32 0, %v5696
        %v5698 = vrot.slane %v5693, %v5697
        %5724 = vrot.lane.b32.xlu0 %v5665, 64
        %v5725 = vpop.permute.xlu0 %5724
        %5726 = vrot.lane.b32.xlu0 %v5666, 64
        %v5727 = vpop.permute.xlu0 %5726
        %5728 = vrot.lane.b32.xlu0 %v5667, 64
        %v5729 = vpop.permute.xlu0 %5728
        %5730 = vrot.lane.b32.xlu0 %v5668, 64
        %v5731 = vpop.permute.xlu0 %5730
        %5732 = vrot.lane.b32.xlu0 %v5669, 64
        %v5733 = vpop.permute.xlu0 %5732
        %5734 = vrot.lane.b32.xlu0 %v5670, 64
        %v5735 = vpop.permute.xlu0 %5734
        %5736 = vrot.lane.b32.xlu0 %v5671, 64
        %v5737 = vpop.permute.xlu0 %5736
        %5738 = vrot.lane.b32.xlu0 %v5672, 64
        %v5739 = vpop.permute.xlu0 %5738
        %5740 = vrot.lane.b32.xlu0 %v5673, 64
        %v5741 = vpop.permute.xlu0 %5740
        %5742 = vrot.lane.b32.xlu0 %v5674, 64
        %v5743 = vpop.permute.xlu0 %5742
        %5744 = vrot.lane.b32.xlu0 %v5675, 64
        %v5745 = vpop.permute.xlu0 %5744
        %5746 = vrot.lane.b32.xlu0 %v5676, 64
        %v5747 = vpop.permute.xlu0 %5746
        %5748 = vrot.lane.b32.xlu0 %v5677, 64
        %v5749 = vpop.permute.xlu0 %5748
        %5750 = vrot.lane.b32.xlu0 %v5678, 64
        %v5751 = vpop.permute.xlu0 %5750
        %5752 = vrot.lane.b32.xlu0 %v5679, 64
        %v5753 = vpop.permute.xlu0 %5752
        %5754 = vrot.lane.b32.xlu0 %v5680, 64
        %v5755 = vpop.permute.xlu0 %5754
        %5756 = vrot.lane.b32.xlu0 %v5681, 64
        %v5757 = vpop.permute.xlu0 %5756
        %5758 = vrot.lane.b32.xlu0 %v5682, 64
        %v5759 = vpop.permute.xlu0 %5758
        %5760 = vrot.lane.b32.xlu0 %v5683, 64
        %v5761 = vpop.permute.xlu0 %5760
        %5762 = vrot.lane.b32.xlu0 %v5684, 64
        %v5763 = vpop.permute.xlu0 %5762
        %5764 = vrot.lane.b32.xlu0 %v5685, 64
        %v5765 = vpop.permute.xlu0 %5764
        %5766 = vrot.lane.b32.xlu0 %v5686, 64
        %v5767 = vpop.permute.xlu0 %5766
        %5768 = vrot.lane.b32.xlu0 %v5687, 64
        %v5769 = vpop.permute.xlu0 %5768
        %5770 = vrot.lane.b32.xlu0 %v5688, 64
        %v5771 = vpop.permute.xlu0 %5770
        %v5776 = vunpack.c.l.b16 %v5689
        %v5777 = vunpack.c.l.b16 %v5690
        %v5778 = vunpack.c.l.b16 %v5691
        %v5779 = vunpack.c.l.b16 %v5692
        %v5780 = vpack.c.b16 %v5777, %v5776
        %v5781 = vpack.c.b16 %v5779, %v5778
        %v5785 = vsel %vm746, %v5725, 0
        %v5788 = vsel %vm746, %v5727, 0
        %v5791 = vsel %vm746, %v5729, 0
        %v5794 = vsel %vm746, %v5731, 0
        %v5797 = vsel %vm746, %v5733, 0
        %v5800 = vsel %vm746, %v5735, 0
        %v5803 = vsel %vm746, %v5737, 0
        %v5806 = vsel %vm746, %v5739, 0
        %v5809 = vsel %vm746, %v5741, 0
        %v5812 = vsel %vm746, %v5743, 0
        %v5815 = vsel %vm746, %v5745, 0
        %v5818 = vsel %vm746, %v5747, 0
        %v5821 = vsel %vm746, %v5749, 0
        %v5824 = vsel %vm746, %v5751, 0
        %v5827 = vsel %vm746, %v5753, 0
        %v5830 = vsel %vm746, %v5755, 0
        %v5833 = vsel %vm746, %v5757, 0
        %v5836 = vsel %vm746, %v5759, 0
        %v5839 = vsel %vm746, %v5761, 0
        %v5842 = vsel %vm746, %v5763, 0
        %v5845 = vsel %vm746, %v5765, 0
        %v5848 = vsel %vm746, %v5767, 0
        %v5851 = vsel %vm746, %v5769, 0
        %v5854 = vsel %vm746, %v5771, 0
        %5856 = vmatprep.subr.bf16.mxu0 0
        %5857 = vmatpush1.bf16.msra.mxu0 %v5780
        %5858 = vmatprep.subr.bf16.mxu0 0
        %5859 = vmatpush1.bf16.msra.mxu0 %v5781
        %5860 = vmatprep.subr.bf16.mxu0 0
        %5861 = vmatpush1.bf16.msra.mxu0 0
        %5862 = vmatprep.subr.bf16.mxu0 0
        %5863 = vmatpush1.bf16.msra.mxu0 0
        %5864 = vmatprep.subr.bf16.mxu0 0
        %5865 = vmatpush1.bf16.msra.mxu0 0
        %5866 = vmatprep.subr.bf16.mxu0 0
        %5867 = vmatpush1.bf16.msra.mxu0 0
        %5868 = vmatprep.subr.bf16.mxu0 0
        %5869 = vmatpush1.bf16.msra.mxu0 0
        %5870 = vmatprep.subr.bf16.mxu0 0
        %5871 = vmatpush1.bf16.msra.mxu0 0
        %5872 = vmatprep.subr.bf16.mxu0 0
        %5873 = vmatpush1.bf16.msra.mxu0 0
        %5874 = vmatprep.subr.bf16.mxu0 0
        %5875 = vmatpush1.bf16.msra.mxu0 0
        %5876 = vmatprep.subr.bf16.mxu0 0
        %5877 = vmatpush1.bf16.msra.mxu0 0
        %5878 = vmatprep.subr.bf16.mxu0 0
        %5879 = vmatpush1.bf16.msra.mxu0 0
        %5880 = vmatprep.subr.bf16.mxu0 0
        %5881 = vmatpush1.bf16.msra.mxu0 0
        %5882 = vmatprep.subr.bf16.mxu0 0
        %5883 = vmatpush1.bf16.msra.mxu0 0
        %5884 = vmatprep.subr.bf16.mxu0 0
        %5885 = vmatpush1.bf16.msra.mxu0 0
        %5886 = vmatprep.subr.bf16.mxu0 0
        %5887 = vmatpush1.bf16.msra.mxu0 0
        %5888 = vmatprep.mubr.bf16.mxu0 0
        %5889 = vmatmul.mubr.bf16.gmra.mrb[0].mxu0 %v5785
        %v5890 = vpop.f32.mrb[0].mxu0
        %v5891 = vadd.f32 %v5698, %v5890
        %v5892 = vpop.f32.mrb[0].mxu0
        %v5893 = vpop.f32.mrb[0].mxu0
        %v5894 = vadd.f32 %v5698, %v5893
        %v5895 = vpop.f32.mrb[0].mxu0
        %5896 = vmatprep.mubr.bf16.mxu0 0
        %5897 = vmatmul.mubr.bf16.gmra.mrb[0].mxu0 %v5788
        %v5898 = vpop.f32.mrb[0].mxu0
        %v5899 = vadd.f32 %v5698, %v5898
        %v5900 = vpop.f32.mrb[0].mxu0
        %v5901 = vpop.f32.mrb[0].mxu0
        %v5902 = vadd.f32 %v5698, %v5901
        %v5903 = vpop.f32.mrb[0].mxu0
        %5904 = vmatprep.mubr.bf16.mxu0 0
        %5905 = vmatmul.mubr.bf16.gmra.mrb[0].mxu0 %v5791
        %v5906 = vpop.f32.mrb[0].mxu0
        %v5907 = vadd.f32 %v5698, %v5906
        %v5908 = vpop.f32.mrb[0].mxu0
        %v5909 = vpop.f32.mrb[0].mxu0
        %v5910 = vadd.f32 %v5698, %v5909
        %v5911 = vpop.f32.mrb[0].mxu0
        %5912 = vmatprep.mubr.bf16.mxu0 0
        %5913 = vmatmul.mubr.bf16.gmra.mrb[0].mxu0 %v5794
        %v5914 = vpop.f32.mrb[0].mxu0
        %v5915 = vadd.f32 %v5698, %v5914
        %v5916 = vpop.f32.mrb[0].mxu0
        %v5917 = vpop.f32.mrb[0].mxu0
        %v5918 = vadd.f32 %v5698, %v5917
        %v5919 = vpop.f32.mrb[0].mxu0
        %5920 = vmatprep.mubr.bf16.mxu0 0
        %5921 = vmatmul.mubr.bf16.gmra.mrb[0].mxu0 %v5797
        %v5922 = vpop.f32.mrb[0].mxu0
        %v5923 = vadd.f32 %v5698, %v5922
        %v5924 = vpop.f32.mrb[0].mxu0
        %v5925 = vpop.f32.mrb[0].mxu0
        %v5926 = vadd.f32 %v5698, %v5925
        %v5927 = vpop.f32.mrb[0].mxu0
        %5928 = vmatprep.mubr.bf16.mxu0 0
        %5929 = vmatmul.mubr.bf16.gmra.mrb[0].mxu0 %v5800
        %v5930 = vpop.f32.mrb[0].mxu0
        %v5931 = vadd.f32 %v5698, %v5930
        %v5932 = vpop.f32.mrb[0].mxu0
        %v5933 = vpop.f32.mrb[0].mxu0
        %v5934 = vadd.f32 %v5698, %v5933
        %v5935 = vpop.f32.mrb[0].mxu0
        %5936 = vmatprep.mubr.bf16.mxu0 0
        %5937 = vmatmul.mubr.bf16.gmra.mrb[0].mxu0 %v5803
        %v5938 = vpop.f32.mrb[0].mxu0
        %v5939 = vadd.f32 %v5698, %v5938
        %v5940 = vpop.f32.mrb[0].mxu0
        %v5941 = vpop.f32.mrb[0].mxu0
        %v5942 = vadd.f32 %v5698, %v5941
        %v5943 = vpop.f32.mrb[0].mxu0
        %5944 = vmatprep.mubr.bf16.mxu0 0
        %5945 = vmatmul.mubr.bf16.gmra.mrb[0].mxu0 %v5806
        %v5946 = vpop.f32.mrb[0].mxu0
        %v5947 = vadd.f32 %v5698, %v5946
        %v5948 = vpop.f32.mrb[0].mxu0
        %v5949 = vpop.f32.mrb[0].mxu0
        %v5950 = vadd.f32 %v5698, %v5949
        %v5951 = vpop.f32.mrb[0].mxu0
        %5952 = vmatprep.mubr.bf16.mxu0 0
        %5953 = vmatmul.mubr.bf16.gmra.mrb[0].mxu0 %v5809
        %v5954 = vpop.f32.mrb[0].mxu0
        %v5955 = vadd.f32 %v5698, %v5954
        %v5956 = vpop.f32.mrb[0].mxu0
        %v5957 = vpop.f32.mrb[0].mxu0
        %v5958 = vadd.f32 %v5698, %v5957
        %v5959 = vpop.f32.mrb[0].mxu0
        %5960 = vmatprep.mubr.bf16.mxu0 0
        %5961 = vmatmul.mubr.bf16.gmra.mrb[0].mxu0 %v5812
        %v5962 = vpop.f32.mrb[0].mxu0
        %v5963 = vadd.f32 %v5698, %v5962
        %v5964 = vpop.f32.mrb[0].mxu0
        %v5965 = vpop.f32.mrb[0].mxu0
        %v5966 = vadd.f32 %v5698, %v5965
        %v5967 = vpop.f32.mrb[0].mxu0
        %5968 = vmatprep.mubr.bf16.mxu0 0
        %5969 = vmatmul.mubr.bf16.gmra.mrb[0].mxu0 %v5815
        %v5970 = vpop.f32.mrb[0].mxu0
        %v5971 = vadd.f32 %v5698, %v5970
        %v5972 = vpop.f32.mrb[0].mxu0
        %v5973 = vpop.f32.mrb[0].mxu0
        %v5974 = vadd.f32 %v5698, %v5973
        %v5975 = vpop.f32.mrb[0].mxu0
        %5976 = vmatprep.mubr.bf16.mxu0 0
        %5977 = vmatmul.mubr.bf16.gmra.mrb[0].mxu0 %v5818
        %v5978 = vpop.f32.mrb[0].mxu0
        %v5979 = vadd.f32 %v5698, %v5978
        %v5980 = vpop.f32.mrb[0].mxu0
        %v5981 = vpop.f32.mrb[0].mxu0
        %v5982 = vadd.f32 %v5698, %v5981
        %v5983 = vpop.f32.mrb[0].mxu0
        %5984 = vmatprep.mubr.bf16.mxu0 0
        %5985 = vmatmul.mubr.bf16.gmra.mrb[0].mxu0 %v5821
        %v5986 = vpop.f32.mrb[0].mxu0
        %v5987 = vadd.f32 %v5698, %v5986
        %v5988 = vpop.f32.mrb[0].mxu0
        %v5989 = vpop.f32.mrb[0].mxu0
        %v5990 = vadd.f32 %v5698, %v5989
        %v5991 = vpop.f32.mrb[0].mxu0
        %5992 = vmatprep.mubr.bf16.mxu0 0
        %5993 = vmatmul.mubr.bf16.gmra.mrb[0].mxu0 %v5824
        %v5994 = vpop.f32.mrb[0].mxu0
        %v5995 = vadd.f32 %v5698, %v5994
        %v5996 = vpop.f32.mrb[0].mxu0
        %v5997 = vpop.f32.mrb[0].mxu0
        %v5998 = vadd.f32 %v5698, %v5997
        %v5999 = vpop.f32.mrb[0].mxu0
        %6000 = vmatprep.mubr.bf16.mxu0 0
        %6001 = vmatmul.mubr.bf16.gmra.mrb[0].mxu0 %v5827
        %v6002 = vpop.f32.mrb[0].mxu0
        %v6003 = vadd.f32 %v5698, %v6002
        %v6004 = vpop.f32.mrb[0].mxu0
        %v6005 = vpop.f32.mrb[0].mxu0
        %v6006 = vadd.f32 %v5698, %v6005
        %v6007 = vpop.f32.mrb[0].mxu0
        %6008 = vmatprep.mubr.bf16.mxu0 0
        %6009 = vmatmul.mubr.bf16.gmra.mrb[0].mxu0 %v5830
        %v6010 = vpop.f32.mrb[0].mxu0
        %v6011 = vadd.f32 %v5698, %v6010
        %v6012 = vpop.f32.mrb[0].mxu0
        %v6013 = vpop.f32.mrb[0].mxu0
        %v6014 = vadd.f32 %v5698, %v6013
        %v6015 = vpop.f32.mrb[0].mxu0
        %6016 = vmatprep.mubr.bf16.mxu0 0
        %6017 = vmatmul.mubr.bf16.gmra.mrb[0].mxu0 %v5833
        %v6018 = vpop.f32.mrb[0].mxu0
        %v6019 = vadd.f32 %v5698, %v6018
        %v6020 = vpop.f32.mrb[0].mxu0
        %v6021 = vpop.f32.mrb[0].mxu0
        %v6022 = vadd.f32 %v5698, %v6021
        %v6023 = vpop.f32.mrb[0].mxu0
        %6024 = vmatprep.mubr.bf16.mxu0 0
        %6025 = vmatmul.mubr.bf16.gmra.mrb[0].mxu0 %v5836
        %v6026 = vpop.f32.mrb[0].mxu0
        %v6027 = vadd.f32 %v5698, %v6026
        %v6028 = vpop.f32.mrb[0].mxu0
        %v6029 = vpop.f32.mrb[0].mxu0
        %v6030 = vadd.f32 %v5698, %v6029
        %v6031 = vpop.f32.mrb[0].mxu0
        %6032 = vmatprep.mubr.bf16.mxu0 0
        %6033 = vmatmul.mubr.bf16.gmra.mrb[0].mxu0 %v5839
        %v6034 = vpop.f32.mrb[0].mxu0
        %v6035 = vadd.f32 %v5698, %v6034
        %v6036 = vpop.f32.mrb[0].mxu0
        %v6037 = vpop.f32.mrb[0].mxu0
        %v6038 = vadd.f32 %v5698, %v6037
        %v6039 = vpop.f32.mrb[0].mxu0
        %6040 = vmatprep.mubr.bf16.mxu0 0
        %6041 = vmatmul.mubr.bf16.gmra.mrb[0].mxu0 %v5842
        %v6042 = vpop.f32.mrb[0].mxu0
        %v6043 = vadd.f32 %v5698, %v6042
        %v6044 = vpop.f32.mrb[0].mxu0
        %v6045 = vpop.f32.mrb[0].mxu0
        %v6046 = vadd.f32 %v5698, %v6045
        %v6047 = vpop.f32.mrb[0].mxu0
        %6048 = vmatprep.mubr.bf16.mxu0 0
        %6049 = vmatmul.mubr.bf16.gmra.mrb[0].mxu0 %v5845
        %v6050 = vpop.f32.mrb[0].mxu0
        %v6051 = vadd.f32 %v5698, %v6050
        %v6052 = vpop.f32.mrb[0].mxu0
        %v6053 = vpop.f32.mrb[0].mxu0
        %v6054 = vadd.f32 %v5698, %v6053
        %v6055 = vpop.f32.mrb[0].mxu0
        %6056 = vmatprep.mubr.bf16.mxu0 0
        %6057 = vmatmul.mubr.bf16.gmra.mrb[0].mxu0 %v5848
        %v6058 = vpop.f32.mrb[0].mxu0
        %v6059 = vadd.f32 %v5698, %v6058
        %v6060 = vpop.f32.mrb[0].mxu0
        %v6061 = vpop.f32.mrb[0].mxu0
        %v6062 = vadd.f32 %v5698, %v6061
        %v6063 = vpop.f32.mrb[0].mxu0
        %6064 = vmatprep.mubr.bf16.mxu0 0
        %6065 = vmatmul.mubr.bf16.gmra.mrb[0].mxu0 %v5851
        %v6066 = vpop.f32.mrb[0].mxu0
        %v6067 = vadd.f32 %v5698, %v6066
        %v6068 = vpop.f32.mrb[0].mxu0
        %v6069 = vpop.f32.mrb[0].mxu0
        %v6070 = vadd.f32 %v5698, %v6069
        %v6071 = vpop.f32.mrb[0].mxu0
        %6072 = vmatprep.mubr.bf16.mxu0 0
        %6073 = vmatmul.mubr.bf16.gmra.mrb[0].mxu0 %v5854
        %v6074 = vpop.f32.mrb[0].mxu0
        %v6075 = vadd.f32 %v5698, %v6074
        %v6076 = vpop.f32.mrb[0].mxu0
        %v6077 = vpop.f32.mrb[0].mxu0
        %v6078 = vadd.f32 %v5698, %v6077
        %v6079 = vpop.f32.mrb[0].mxu0
        %6080 = vdwg.mxu0
        %v6081 = vpack.c.bf16 %v5894, %v5891
        %v6082 = vpack.c.bf16 %v5902, %v5899
        %v6083 = vpack.c.bf16 %v5910, %v5907
        %v6084 = vpack.c.bf16 %v5918, %v5915
        %v6085 = vpack.c.bf16 %v5926, %v5923
        %v6086 = vpack.c.bf16 %v5934, %v5931
        %v6087 = vpack.c.bf16 %v5942, %v5939
        %v6088 = vpack.c.bf16 %v5950, %v5947
        %v6089 = vpack.c.bf16 %v5958, %v5955
        %v6090 = vpack.c.bf16 %v5966, %v5963
        %v6091 = vpack.c.bf16 %v5974, %v5971
        %v6092 = vpack.c.bf16 %v5982, %v5979
        %v6093 = vpack.c.bf16 %v5990, %v5987
        %v6094 = vpack.c.bf16 %v5998, %v5995
        %v6095 = vpack.c.bf16 %v6006, %v6003
        %v6096 = vpack.c.bf16 %v6014, %v6011
        %v6097 = vpack.c.bf16 %v6022, %v6019
        %v6098 = vpack.c.bf16 %v6030, %v6027
        %v6099 = vpack.c.bf16 %v6038, %v6035
        %v6100 = vpack.c.bf16 %v6046, %v6043
        %v6101 = vpack.c.bf16 %v6054, %v6051
        %v6102 = vpack.c.bf16 %v6062, %v6059
        %v6103 = vpack.c.bf16 %v6070, %v6067
        %v6104 = vpack.c.bf16 %v6078, %v6075
        %v6105 = vld [vmem:[%s9] sm:$0xf]
        %v6106 = vld [vmem:[%s9 + $0x4] sm:$0xf]
        %v6107 = vld [vmem:[%s9 + $0x8] sm:$0xf]
        %v6108 = vld [vmem:[%s9 + $0xc] sm:$0xf]
        %v6109 = vld [vmem:[%s10] sm:$0x1]
        %v6111 = vlaneseq
        %v6112 = vshrl.u32 %v6111, 7
        %v6113 = vsub.s32 0, %v6112
        %v6114 = vrot.slane %v6109, %v6113
        %v6120 = vunpack.c.l.b16 %v6105
        %v6121 = vunpack.c.l.b16 %v6106
        %v6122 = vunpack.c.l.b16 %v6107
        %v6123 = vunpack.c.l.b16 %v6108
        %v6124 = vpack.c.b16 %v6121, %v6120
        %v6125 = vpack.c.b16 %v6123, %v6122
        %v6129 = vsel %vm746, %v6081, 0
        %v6132 = vsel %vm746, %v6082, 0
        %v6135 = vsel %vm746, %v6083, 0
        %v6138 = vsel %vm746, %v6084, 0
        %v6141 = vsel %vm746, %v6085, 0
        %v6144 = vsel %vm746, %v6086, 0
        %v6147 = vsel %vm746, %v6087, 0
        %v6150 = vsel %vm746, %v6088, 0
        %v6153 = vsel %vm746, %v6089, 0
        %v6156 = vsel %vm746, %v6090, 0
        %v6159 = vsel %vm746, %v6091, 0
        %v6162 = vsel %vm746, %v6092, 0
        %v6165 = vsel %vm746, %v6093, 0
        %v6168 = vsel %vm746, %v6094, 0
        %v6171 = vsel %vm746, %v6095, 0
        %v6174 = vsel %vm746, %v6096, 0
        %v6177 = vsel %vm746, %v6097, 0
        %v6180 = vsel %vm746, %v6098, 0
        %v6183 = vsel %vm746, %v6099, 0
        %v6186 = vsel %vm746, %v6100, 0
        %v6189 = vsel %vm746, %v6101, 0
        %v6192 = vsel %vm746, %v6102, 0
        %v6195 = vsel %vm746, %v6103, 0
        %v6198 = vsel %vm746, %v6104, 0
        %6200 = vmatprep.subr.bf16.mxu0 0
        %6201 = vmatpush1.bf16.msra.mxu0 %v6124
        %6202 = vmatprep.subr.bf16.mxu0 0
        %6203 = vmatpush1.bf16.msra.mxu0 %v6125
        %6204 = vmatprep.subr.bf16.mxu0 0
        %6205 = vmatpush1.bf16.msra.mxu0 0
        %6206 = vmatprep.subr.bf16.mxu0 0
        %6207 = vmatpush1.bf16.msra.mxu0 0
        %6208 = vmatprep.subr.bf16.mxu0 0
        %6209 = vmatpush1.bf16.msra.mxu0 0
        %6210 = vmatprep.subr.bf16.mxu0 0
        %6211 = vmatpush1.bf16.msra.mxu0 0
        %6212 = vmatprep.subr.bf16.mxu0 0
        %6213 = vmatpush1.bf16.msra.mxu0 0
        %6214 = vmatprep.subr.bf16.mxu0 0
        %6215 = vmatpush1.bf16.msra.mxu0 0
        %6216 = vmatprep.subr.bf16.mxu0 0
        %6217 = vmatpush1.bf16.msra.mxu0 0
        %6218 = vmatprep.subr.bf16.mxu0 0
        %6219 = vmatpush1.bf16.msra.mxu0 0
        %6220 = vmatprep.subr.bf16.mxu0 0
        %6221 = vmatpush1.bf16.msra.mxu0 0
        %6222 = vmatprep.subr.bf16.mxu0 0
        %6223 = vmatpush1.bf16.msra.mxu0 0
        %6224 = vmatprep.subr.bf16.mxu0 0
        %6225 = vmatpush1.bf16.msra.mxu0 0
        %6226 = vmatprep.subr.bf16.mxu0 0
        %6227 = vmatpush1.bf16.msra.mxu0 0
        %6228 = vmatprep.subr.bf16.mxu0 0
        %6229 = vmatpush1.bf16.msra.mxu0 0
        %6230 = vmatprep.subr.bf16.mxu0 0
        %6231 = vmatpush1.bf16.msra.mxu0 0
        %6232 = vmatprep.mubr.bf16.mxu0 0
        %6233 = vmatmul.mubr.bf16.gmra.mrb[0].mxu0 %v6129
        %v6234 = vpop.f32.mrb[0].mxu0
        %v6235 = vadd.f32 %v6114, %v6234
        %v6236 = vpop.f32.mrb[0].mxu0
        %v6237 = vpop.f32.mrb[0].mxu0
        %v6238 = vadd.f32 %v6114, %v6237
        %v6239 = vpop.f32.mrb[0].mxu0
        %6240 = vmatprep.mubr.bf16.mxu0 0
        %6241 = vmatmul.mubr.bf16.gmra.mrb[0].mxu0 %v6132
        %v6242 = vpop.f32.mrb[0].mxu0
        %v6243 = vadd.f32 %v6114, %v6242
        %v6244 = vpop.f32.mrb[0].mxu0
        %v6245 = vpop.f32.mrb[0].mxu0
        %v6246 = vadd.f32 %v6114, %v6245
        %v6247 = vpop.f32.mrb[0].mxu0
        %6248 = vmatprep.mubr.bf16.mxu0 0
        %6249 = vmatmul.mubr.bf16.gmra.mrb[0].mxu0 %v6135
        %v6250 = vpop.f32.mrb[0].mxu0
        %v6251 = vadd.f32 %v6114, %v6250
        %v6252 = vpop.f32.mrb[0].mxu0
        %v6253 = vpop.f32.mrb[0].mxu0
        %v6254 = vadd.f32 %v6114, %v6253
        %v6255 = vpop.f32.mrb[0].mxu0
        %6256 = vmatprep.mubr.bf16.mxu0 0
        %6257 = vmatmul.mubr.bf16.gmra.mrb[0].mxu0 %v6138
        %v6258 = vpop.f32.mrb[0].mxu0
        %v6259 = vadd.f32 %v6114, %v6258
        %v6260 = vpop.f32.mrb[0].mxu0
        %v6261 = vpop.f32.mrb[0].mxu0
        %v6262 = vadd.f32 %v6114, %v6261
        %v6263 = vpop.f32.mrb[0].mxu0
        %6264 = vmatprep.mubr.bf16.mxu0 0
        %6265 = vmatmul.mubr.bf16.gmra.mrb[0].mxu0 %v6141
        %v6266 = vpop.f32.mrb[0].mxu0
        %v6267 = vadd.f32 %v6114, %v6266
        %v6268 = vpop.f32.mrb[0].mxu0
        %v6269 = vpop.f32.mrb[0].mxu0
        %v6270 = vadd.f32 %v6114, %v6269
        %v6271 = vpop.f32.mrb[0].mxu0
        %6272 = vmatprep.mubr.bf16.mxu0 0
        %6273 = vmatmul.mubr.bf16.gmra.mrb[0].mxu0 %v6144
        %v6274 = vpop.f32.mrb[0].mxu0
        %v6275 = vadd.f32 %v6114, %v6274
        %v6276 = vpop.f32.mrb[0].mxu0
        %v6277 = vpop.f32.mrb[0].mxu0
        %v6278 = vadd.f32 %v6114, %v6277
        %v6279 = vpop.f32.mrb[0].mxu0
        %6280 = vmatprep.mubr.bf16.mxu0 0
        %6281 = vmatmul.mubr.bf16.gmra.mrb[0].mxu0 %v6147
        %v6282 = vpop.f32.mrb[0].mxu0
        %v6283 = vadd.f32 %v6114, %v6282
        %v6284 = vpop.f32.mrb[0].mxu0
        %v6285 = vpop.f32.mrb[0].mxu0
        %v6286 = vadd.f32 %v6114, %v6285
        %v6287 = vpop.f32.mrb[0].mxu0
        %6288 = vmatprep.mubr.bf16.mxu0 0
        %6289 = vmatmul.mubr.bf16.gmra.mrb[0].mxu0 %v6150
        %v6290 = vpop.f32.mrb[0].mxu0
        %v6291 = vadd.f32 %v6114, %v6290
        %v6292 = vpop.f32.mrb[0].mxu0
        %v6293 = vpop.f32.mrb[0].mxu0
        %v6294 = vadd.f32 %v6114, %v6293
        %v6295 = vpop.f32.mrb[0].mxu0
        %6296 = vmatprep.mubr.bf16.mxu0 0
        %6297 = vmatmul.mubr.bf16.gmra.mrb[0].mxu0 %v6153
        %v6298 = vpop.f32.mrb[0].mxu0
        %v6299 = vadd.f32 %v6114, %v6298
        %v6300 = vpop.f32.mrb[0].mxu0
        %v6301 = vpop.f32.mrb[0].mxu0
        %v6302 = vadd.f32 %v6114, %v6301
        %v6303 = vpop.f32.mrb[0].mxu0
        %6304 = vmatprep.mubr.bf16.mxu0 0
        %6305 = vmatmul.mubr.bf16.gmra.mrb[0].mxu0 %v6156
        %v6306 = vpop.f32.mrb[0].mxu0
        %v6307 = vadd.f32 %v6114, %v6306
        %v6308 = vpop.f32.mrb[0].mxu0
        %v6309 = vpop.f32.mrb[0].mxu0
        %v6310 = vadd.f32 %v6114, %v6309
        %v6311 = vpop.f32.mrb[0].mxu0
        %6312 = vmatprep.mubr.bf16.mxu0 0
        %6313 = vmatmul.mubr.bf16.gmra.mrb[0].mxu0 %v6159
        %v6314 = vpop.f32.mrb[0].mxu0
        %v6315 = vadd.f32 %v6114, %v6314
        %v6316 = vpop.f32.mrb[0].mxu0
        %v6317 = vpop.f32.mrb[0].mxu0
        %v6318 = vadd.f32 %v6114, %v6317
        %v6319 = vpop.f32.mrb[0].mxu0
        %6320 = vmatprep.mubr.bf16.mxu0 0
        %6321 = vmatmul.mubr.bf16.gmra.mrb[0].mxu0 %v6162
        %v6322 = vpop.f32.mrb[0].mxu0
        %v6323 = vadd.f32 %v6114, %v6322
        %v6324 = vpop.f32.mrb[0].mxu0
        %v6325 = vpop.f32.mrb[0].mxu0
        %v6326 = vadd.f32 %v6114, %v6325
        %v6327 = vpop.f32.mrb[0].mxu0
        %6328 = vmatprep.mubr.bf16.mxu0 0
        %6329 = vmatmul.mubr.bf16.gmra.mrb[0].mxu0 %v6165
        %v6330 = vpop.f32.mrb[0].mxu0
        %v6331 = vadd.f32 %v6114, %v6330
        %v6332 = vpop.f32.mrb[0].mxu0
        %v6333 = vpop.f32.mrb[0].mxu0
        %v6334 = vadd.f32 %v6114, %v6333
        %v6335 = vpop.f32.mrb[0].mxu0
        %6336 = vmatprep.mubr.bf16.mxu0 0
        %6337 = vmatmul.mubr.bf16.gmra.mrb[0].mxu0 %v6168
        %v6338 = vpop.f32.mrb[0].mxu0
        %v6339 = vadd.f32 %v6114, %v6338
        %v6340 = vpop.f32.mrb[0].mxu0
        %v6341 = vpop.f32.mrb[0].mxu0
        %v6342 = vadd.f32 %v6114, %v6341
        %v6343 = vpop.f32.mrb[0].mxu0
        %6344 = vmatprep.mubr.bf16.mxu0 0
        %6345 = vmatmul.mubr.bf16.gmra.mrb[0].mxu0 %v6171
        %v6346 = vpop.f32.mrb[0].mxu0
        %v6347 = vadd.f32 %v6114, %v6346
        %v6348 = vpop.f32.mrb[0].mxu0
        %v6349 = vpop.f32.mrb[0].mxu0
        %v6350 = vadd.f32 %v6114, %v6349
        %v6351 = vpop.f32.mrb[0].mxu0
        %6352 = vmatprep.mubr.bf16.mxu0 0
        %6353 = vmatmul.mubr.bf16.gmra.mrb[0].mxu0 %v6174
        %v6354 = vpop.f32.mrb[0].mxu0
        %v6355 = vadd.f32 %v6114, %v6354
        %v6356 = vpop.f32.mrb[0].mxu0
        %v6357 = vpop.f32.mrb[0].mxu0
        %v6358 = vadd.f32 %v6114, %v6357
        %v6359 = vpop.f32.mrb[0].mxu0
        %6360 = vmatprep.mubr.bf16.mxu0 0
        %6361 = vmatmul.mubr.bf16.gmra.mrb[0].mxu0 %v6177
        %v6362 = vpop.f32.mrb[0].mxu0
        %v6363 = vadd.f32 %v6114, %v6362
        %v6364 = vpop.f32.mrb[0].mxu0
        %v6365 = vpop.f32.mrb[0].mxu0
        %v6366 = vadd.f32 %v6114, %v6365
        %v6367 = vpop.f32.mrb[0].mxu0
        %6368 = vmatprep.mubr.bf16.mxu0 0
        %6369 = vmatmul.mubr.bf16.gmra.mrb[0].mxu0 %v6180
        %v6370 = vpop.f32.mrb[0].mxu0
        %v6371 = vadd.f32 %v6114, %v6370
        %v6372 = vpop.f32.mrb[0].mxu0
        %v6373 = vpop.f32.mrb[0].mxu0
        %v6374 = vadd.f32 %v6114, %v6373
        %v6375 = vpop.f32.mrb[0].mxu0
        %6376 = vmatprep.mubr.bf16.mxu0 0
        %6377 = vmatmul.mubr.bf16.gmra.mrb[0].mxu0 %v6183
        %v6378 = vpop.f32.mrb[0].mxu0
        %v6379 = vadd.f32 %v6114, %v6378
        %v6380 = vpop.f32.mrb[0].mxu0
        %v6381 = vpop.f32.mrb[0].mxu0
        %v6382 = vadd.f32 %v6114, %v6381
        %v6383 = vpop.f32.mrb[0].mxu0
        %6384 = vmatprep.mubr.bf16.mxu0 0
        %6385 = vmatmul.mubr.bf16.gmra.mrb[0].mxu0 %v6186
        %v6386 = vpop.f32.mrb[0].mxu0
        %v6387 = vadd.f32 %v6114, %v6386
        %v6388 = vpop.f32.mrb[0].mxu0
        %v6389 = vpop.f32.mrb[0].mxu0
        %v6390 = vadd.f32 %v6114, %v6389
        %v6391 = vpop.f32.mrb[0].mxu0
        %6392 = vmatprep.mubr.bf16.mxu0 0
        %6393 = vmatmul.mubr.bf16.gmra.mrb[0].mxu0 %v6189
        %v6394 = vpop.f32.mrb[0].mxu0
        %v6395 = vadd.f32 %v6114, %v6394
        %v6396 = vpop.f32.mrb[0].mxu0
        %v6397 = vpop.f32.mrb[0].mxu0
        %v6398 = vadd.f32 %v6114, %v6397
        %v6399 = vpop.f32.mrb[0].mxu0
        %6400 = vmatprep.mubr.bf16.mxu0 0
        %6401 = vmatmul.mubr.bf16.gmra.mrb[0].mxu0 %v6192
        %v6402 = vpop.f32.mrb[0].mxu0
        %v6403 = vadd.f32 %v6114, %v6402
        %v6404 = vpop.f32.mrb[0].mxu0
        %v6405 = vpop.f32.mrb[0].mxu0
        %v6406 = vadd.f32 %v6114, %v6405
        %v6407 = vpop.f32.mrb[0].mxu0
        %6408 = vmatprep.mubr.bf16.mxu0 0
        %6409 = vmatmul.mubr.bf16.gmra.mrb[0].mxu0 %v6195
        %v6410 = vpop.f32.mrb[0].mxu0
        %v6411 = vadd.f32 %v6114, %v6410
        %v6412 = vpop.f32.mrb[0].mxu0
        %v6413 = vpop.f32.mrb[0].mxu0
        %v6414 = vadd.f32 %v6114, %v6413
        %v6415 = vpop.f32.mrb[0].mxu0
        %6416 = vmatprep.mubr.bf16.mxu0 0
        %6417 = vmatmul.mubr.bf16.gmra.mrb[0].mxu0 %v6198
        %v6418 = vpop.f32.mrb[0].mxu0
        %v6419 = vadd.f32 %v6114, %v6418
        %v6420 = vpop.f32.mrb[0].mxu0
        %v6421 = vpop.f32.mrb[0].mxu0
        %v6422 = vadd.f32 %v6114, %v6421
        %v6423 = vpop.f32.mrb[0].mxu0
        %6424 = vdwg.mxu0
        %v6425 = vmul.f32 %v6235, 0.5
        %v6426 = vmul.f32 %v6238, 0.5
        %v6427 = vmul.f32 %v6243, 0.5
        %v6428 = vmul.f32 %v6246, 0.5
        %v6429 = vmul.f32 %v6251, 0.5
        %v6430 = vmul.f32 %v6254, 0.5
        %v6431 = vmul.f32 %v6259, 0.5
        %v6432 = vmul.f32 %v6262, 0.5
        %v6433 = vmul.f32 %v6267, 0.5
        %v6434 = vmul.f32 %v6270, 0.5
        %v6435 = vmul.f32 %v6275, 0.5
        %v6436 = vmul.f32 %v6278, 0.5
        %v6437 = vmul.f32 %v6283, 0.5
        %v6438 = vmul.f32 %v6286, 0.5
        %v6439 = vmul.f32 %v6291, 0.5
        %v6440 = vmul.f32 %v6294, 0.5
        %v6441 = vmul.f32 %v6299, 0.5
        %v6442 = vmul.f32 %v6302, 0.5
        %v6443 = vmul.f32 %v6307, 0.5
        %v6444 = vmul.f32 %v6310, 0.5
        %v6445 = vmul.f32 %v6315, 0.5
        %v6446 = vmul.f32 %v6318, 0.5
        %v6447 = vmul.f32 %v6323, 0.5
        %v6448 = vmul.f32 %v6326, 0.5
        %v6449 = vmul.f32 %v6331, 0.5
        %v6450 = vmul.f32 %v6334, 0.5
        %v6451 = vmul.f32 %v6339, 0.5
        %v6452 = vmul.f32 %v6342, 0.5
        %v6453 = vmul.f32 %v6347, 0.5
        %v6454 = vmul.f32 %v6350, 0.5
        %v6455 = vmul.f32 %v6355, 0.5
        %v6456 = vmul.f32 %v6358, 0.5
        %v6457 = vmul.f32 %v6363, 0.5
        %v6458 = vmul.f32 %v6366, 0.5
        %v6459 = vmul.f32 %v6371, 0.5
        %v6460 = vmul.f32 %v6374, 0.5
        %v6461 = vmul.f32 %v6379, 0.5
        %v6462 = vmul.f32 %v6382, 0.5
        %v6463 = vmul.f32 %v6387, 0.5
        %v6464 = vmul.f32 %v6390, 0.5
        %v6465 = vmul.f32 %v6395, 0.5
        %v6466 = vmul.f32 %v6398, 0.5
        %v6467 = vmul.f32 %v6403, 0.5
        %v6468 = vmul.f32 %v6406, 0.5
        %v6469 = vmul.f32 %v6411, 0.5
        %v6470 = vmul.f32 %v6414, 0.5
        %v6471 = vmul.f32 %v6419, 0.5
        %v6472 = vmul.f32 %v6422, 0.5
        %v6473 = vmul.f32 %v6235, 0.044715
        %v6474 = vmul.f32 %v6238, 0.044715
        %v6475 = vmul.f32 %v6243, 0.044715
        %v6476 = vmul.f32 %v6246, 0.044715
        %v6477 = vmul.f32 %v6251, 0.044715
        %v6478 = vmul.f32 %v6254, 0.044715
        %v6479 = vmul.f32 %v6259, 0.044715
        %v6480 = vmul.f32 %v6262, 0.044715
        %v6481 = vmul.f32 %v6267, 0.044715
        %v6482 = vmul.f32 %v6270, 0.044715
        %v6483 = vmul.f32 %v6275, 0.044715
        %v6484 = vmul.f32 %v6278, 0.044715
        %v6485 = vmul.f32 %v6283, 0.044715
        %v6486 = vmul.f32 %v6286, 0.044715
        %v6487 = vmul.f32 %v6291, 0.044715
        %v6488 = vmul.f32 %v6294, 0.044715
        %v6489 = vmul.f32 %v6299, 0.044715
        %v6490 = vmul.f32 %v6302, 0.044715
        %v6491 = vmul.f32 %v6307, 0.044715
        %v6492 = vmul.f32 %v6310, 0.044715
        %v6493 = vmul.f32 %v6315, 0.044715
        %v6494 = vmul.f32 %v6318, 0.044715
        %v6495 = vmul.f32 %v6323, 0.044715
        %v6496 = vmul.f32 %v6326, 0.044715
        %v6497 = vmul.f32 %v6331, 0.044715
        %v6498 = vmul.f32 %v6334, 0.044715
        %v6499 = vmul.f32 %v6339, 0.044715
        %v6500 = vmul.f32 %v6342, 0.044715
        %v6501 = vmul.f32 %v6347, 0.044715
        %v6502 = vmul.f32 %v6350, 0.044715
        %v6503 = vmul.f32 %v6355, 0.044715
        %v6504 = vmul.f32 %v6358, 0.044715
        %v6505 = vmul.f32 %v6363, 0.044715
        %v6506 = vmul.f32 %v6366, 0.044715
        %v6507 = vmul.f32 %v6371, 0.044715
        %v6508 = vmul.f32 %v6374, 0.044715
        %v6509 = vmul.f32 %v6379, 0.044715
        %v6510 = vmul.f32 %v6382, 0.044715
        %v6511 = vmul.f32 %v6387, 0.044715
        %v6512 = vmul.f32 %v6390, 0.044715
        %v6513 = vmul.f32 %v6395, 0.044715
        %v6514 = vmul.f32 %v6398, 0.044715
        %v6515 = vmul.f32 %v6403, 0.044715
        %v6516 = vmul.f32 %v6406, 0.044715
        %v6517 = vmul.f32 %v6411, 0.044715
        %v6518 = vmul.f32 %v6414, 0.044715
        %v6519 = vmul.f32 %v6419, 0.044715
        %v6520 = vmul.f32 %v6422, 0.044715
        %v6521 = vmul.f32 %v6473, %v6235
        %v6522 = vmul.f32 %v6474, %v6238
        %v6523 = vmul.f32 %v6475, %v6243
        %v6524 = vmul.f32 %v6476, %v6246
        %v6525 = vmul.f32 %v6477, %v6251
        %v6526 = vmul.f32 %v6478, %v6254
        %v6527 = vmul.f32 %v6479, %v6259
        %v6528 = vmul.f32 %v6480, %v6262
        %v6529 = vmul.f32 %v6481, %v6267
        %v6530 = vmul.f32 %v6482, %v6270
        %v6531 = vmul.f32 %v6483, %v6275
        %v6532 = vmul.f32 %v6484, %v6278
        %v6533 = vmul.f32 %v6485, %v6283
        %v6534 = vmul.f32 %v6486, %v6286
        %v6535 = vmul.f32 %v6487, %v6291
        %v6536 = vmul.f32 %v6488, %v6294
        %v6537 = vmul.f32 %v6489, %v6299
        %v6538 = vmul.f32 %v6490, %v6302
        %v6539 = vmul.f32 %v6491, %v6307
        %v6540 = vmul.f32 %v6492, %v6310
        %v6541 = vmul.f32 %v6493, %v6315
        %v6542 = vmul.f32 %v6494, %v6318
        %v6543 = vmul.f32 %v6495, %v6323
        %v6544 = vmul.f32 %v6496, %v6326
        %v6545 = vmul.f32 %v6497, %v6331
        %v6546 = vmul.f32 %v6498, %v6334
        %v6547 = vmul.f32 %v6499, %v6339
        %v6548 = vmul.f32 %v6500, %v6342
        %v6549 = vmul.f32 %v6501, %v6347
        %v6550 = vmul.f32 %v6502, %v6350
        %v6551 = vmul.f32 %v6503, %v6355
        %v6552 = vmul.f32 %v6504, %v6358
        %v6553 = vmul.f32 %v6505, %v6363
        %v6554 = vmul.f32 %v6506, %v6366
        %v6555 = vmul.f32 %v6507, %v6371
        %v6556 = vmul.f32 %v6508, %v6374
        %v6557 = vmul.f32 %v6509, %v6379
        %v6558 = vmul.f32 %v6510, %v6382
        %v6559 = vmul.f32 %v6511, %v6387
        %v6560 = vmul.f32 %v6512, %v6390
        %v6561 = vmul.f32 %v6513, %v6395
        %v6562 = vmul.f32 %v6514, %v6398
        %v6563 = vmul.f32 %v6515, %v6403
        %v6564 = vmul.f32 %v6516, %v6406
        %v6565 = vmul.f32 %v6517, %v6411
        %v6566 = vmul.f32 %v6518, %v6414
        %v6567 = vmul.f32 %v6519, %v6419
        %v6568 = vmul.f32 %v6520, %v6422
        %v6569 = vmul.f32 %v6521, %v6235
        %v6570 = vmul.f32 %v6522, %v6238
        %v6571 = vmul.f32 %v6523, %v6243
        %v6572 = vmul.f32 %v6524, %v6246
        %v6573 = vmul.f32 %v6525, %v6251
        %v6574 = vmul.f32 %v6526, %v6254
        %v6575 = vmul.f32 %v6527, %v6259
        %v6576 = vmul.f32 %v6528, %v6262
        %v6577 = vmul.f32 %v6529, %v6267
        %v6578 = vmul.f32 %v6530, %v6270
        %v6579 = vmul.f32 %v6531, %v6275
        %v6580 = vmul.f32 %v6532, %v6278
        %v6581 = vmul.f32 %v6533, %v6283
        %v6582 = vmul.f32 %v6534, %v6286
        %v6583 = vmul.f32 %v6535, %v6291
        %v6584 = vmul.f32 %v6536, %v6294
        %v6585 = vmul.f32 %v6537, %v6299
        %v6586 = vmul.f32 %v6538, %v6302
        %v6587 = vmul.f32 %v6539, %v6307
        %v6588 = vmul.f32 %v6540, %v6310
        %v6589 = vmul.f32 %v6541, %v6315
        %v6590 = vmul.f32 %v6542, %v6318
        %v6591 = vmul.f32 %v6543, %v6323
        %v6592 = vmul.f32 %v6544, %v6326
        %v6593 = vmul.f32 %v6545, %v6331
        %v6594 = vmul.f32 %v6546, %v6334
        %v6595 = vmul.f32 %v6547, %v6339
        %v6596 = vmul.f32 %v6548, %v6342
        %v6597 = vmul.f32 %v6549, %v6347
        %v6598 = vmul.f32 %v6550, %v6350
        %v6599 = vmul.f32 %v6551, %v6355
        %v6600 = vmul.f32 %v6552, %v6358
        %v6601 = vmul.f32 %v6553, %v6363
        %v6602 = vmul.f32 %v6554, %v6366
        %v6603 = vmul.f32 %v6555, %v6371
        %v6604 = vmul.f32 %v6556, %v6374
        %v6605 = vmul.f32 %v6557, %v6379
        %v6606 = vmul.f32 %v6558, %v6382
        %v6607 = vmul.f32 %v6559, %v6387
        %v6608 = vmul.f32 %v6560, %v6390
        %v6609 = vmul.f32 %v6561, %v6395
        %v6610 = vmul.f32 %v6562, %v6398
        %v6611 = vmul.f32 %v6563, %v6403
        %v6612 = vmul.f32 %v6564, %v6406
        %v6613 = vmul.f32 %v6565, %v6411
        %v6614 = vmul.f32 %v6566, %v6414
        %v6615 = vmul.f32 %v6567, %v6419
        %v6616 = vmul.f32 %v6568, %v6422
        %v6617 = vadd.f32 %v6235, %v6569
        %v6618 = vadd.f32 %v6238, %v6570
        %v6619 = vadd.f32 %v6243, %v6571
        %v6620 = vadd.f32 %v6246, %v6572
        %v6621 = vadd.f32 %v6251, %v6573
        %v6622 = vadd.f32 %v6254, %v6574
        %v6623 = vadd.f32 %v6259, %v6575
        %v6624 = vadd.f32 %v6262, %v6576
        %v6625 = vadd.f32 %v6267, %v6577
        %v6626 = vadd.f32 %v6270, %v6578
        %v6627 = vadd.f32 %v6275, %v6579
        %v6628 = vadd.f32 %v6278, %v6580
        %v6629 = vadd.f32 %v6283, %v6581
        %v6630 = vadd.f32 %v6286, %v6582
        %v6631 = vadd.f32 %v6291, %v6583
        %v6632 = vadd.f32 %v6294, %v6584
        %v6633 = vadd.f32 %v6299, %v6585
        %v6634 = vadd.f32 %v6302, %v6586
        %v6635 = vadd.f32 %v6307, %v6587
        %v6636 = vadd.f32 %v6310, %v6588
        %v6637 = vadd.f32 %v6315, %v6589
        %v6638 = vadd.f32 %v6318, %v6590
        %v6639 = vadd.f32 %v6323, %v6591
        %v6640 = vadd.f32 %v6326, %v6592
        %v6641 = vadd.f32 %v6331, %v6593
        %v6642 = vadd.f32 %v6334, %v6594
        %v6643 = vadd.f32 %v6339, %v6595
        %v6644 = vadd.f32 %v6342, %v6596
        %v6645 = vadd.f32 %v6347, %v6597
        %v6646 = vadd.f32 %v6350, %v6598
        %v6647 = vadd.f32 %v6355, %v6599
        %v6648 = vadd.f32 %v6358, %v6600
        %v6649 = vadd.f32 %v6363, %v6601
        %v6650 = vadd.f32 %v6366, %v6602
        %v6651 = vadd.f32 %v6371, %v6603
        %v6652 = vadd.f32 %v6374, %v6604
        %v6653 = vadd.f32 %v6379, %v6605
        %v6654 = vadd.f32 %v6382, %v6606
        %v6655 = vadd.f32 %v6387, %v6607
        %v6656 = vadd.f32 %v6390, %v6608
        %v6657 = vadd.f32 %v6395, %v6609
        %v6658 = vadd.f32 %v6398, %v6610
        %v6659 = vadd.f32 %v6403, %v6611
        %v6660 = vadd.f32 %v6406, %v6612
        %v6661 = vadd.f32 %v6411, %v6613
        %v6662 = vadd.f32 %v6414, %v6614
        %v6663 = vadd.f32 %v6419, %v6615
        %v6664 = vadd.f32 %v6422, %v6616
        %v6665 = vmul.f32 %v6617, 0.7978846
        %v6666 = vmul.f32 %v6618, 0.7978846
        %v6667 = vmul.f32 %v6619, 0.7978846
        %v6668 = vmul.f32 %v6620, 0.7978846
        %v6669 = vmul.f32 %v6621, 0.7978846
        %v6670 = vmul.f32 %v6622, 0.7978846
        %v6671 = vmul.f32 %v6623, 0.7978846
        %v6672 = vmul.f32 %v6624, 0.7978846
        %v6673 = vmul.f32 %v6625, 0.7978846
        %v6674 = vmul.f32 %v6626, 0.7978846
        %v6675 = vmul.f32 %v6627, 0.7978846
        %v6676 = vmul.f32 %v6628, 0.7978846
        %v6677 = vmul.f32 %v6629, 0.7978846
        %v6678 = vmul.f32 %v6630, 0.7978846
        %v6679 = vmul.f32 %v6631, 0.7978846
        %v6680 = vmul.f32 %v6632, 0.7978846
        %v6681 = vmul.f32 %v6633, 0.7978846
        %v6682 = vmul.f32 %v6634, 0.7978846
        %v6683 = vmul.f32 %v6635, 0.7978846
        %v6684 = vmul.f32 %v6636, 0.7978846
        %v6685 = vmul.f32 %v6637, 0.7978846
        %v6686 = vmul.f32 %v6638, 0.7978846
        %v6687 = vmul.f32 %v6639, 0.7978846
        %v6688 = vmul.f32 %v6640, 0.7978846
        %v6689 = vmul.f32 %v6641, 0.7978846
        %v6690 = vmul.f32 %v6642, 0.7978846
        %v6691 = vmul.f32 %v6643, 0.7978846
        %v6692 = vmul.f32 %v6644, 0.7978846
        %v6693 = vmul.f32 %v6645, 0.7978846
        %v6694 = vmul.f32 %v6646, 0.7978846
        %v6695 = vmul.f32 %v6647, 0.7978846
        %v6696 = vmul.f32 %v6648, 0.7978846
        %v6697 = vmul.f32 %v6649, 0.7978846
        %v6698 = vmul.f32 %v6650, 0.7978846
        %v6699 = vmul.f32 %v6651, 0.7978846
        %v6700 = vmul.f32 %v6652, 0.7978846
        %v6701 = vmul.f32 %v6653, 0.7978846
        %v6702 = vmul.f32 %v6654, 0.7978846
        %v6703 = vmul.f32 %v6655, 0.7978846
        %v6704 = vmul.f32 %v6656, 0.7978846
        %v6705 = vmul.f32 %v6657, 0.7978846
        %v6706 = vmul.f32 %v6658, 0.7978846
        %v6707 = vmul.f32 %v6659, 0.7978846
        %v6708 = vmul.f32 %v6660, 0.7978846
        %v6709 = vmul.f32 %v6661, 0.7978846
        %v6710 = vmul.f32 %v6662, 0.7978846
        %v6711 = vmul.f32 %v6663, 0.7978846
        %v6712 = vmul.f32 %v6664, 0.7978846
        %v6713 = vtanh.pop %v6665
        %v6714 = vtanh.pop %v6666
        %v6715 = vtanh.pop %v6667
        %v6716 = vtanh.pop %v6668
        %v6717 = vtanh.pop %v6669
        %v6718 = vtanh.pop %v6670
        %v6719 = vtanh.pop %v6671
        %v6720 = vtanh.pop %v6672
        %v6721 = vtanh.pop %v6673
        %v6722 = vtanh.pop %v6674
        %v6723 = vtanh.pop %v6675
        %v6724 = vtanh.pop %v6676
        %v6725 = vtanh.pop %v6677
        %v6726 = vtanh.pop %v6678
        %v6727 = vtanh.pop %v6679
        %v6728 = vtanh.pop %v6680
        %v6729 = vtanh.pop %v6681
        %v6730 = vtanh.pop %v6682
        %v6731 = vtanh.pop %v6683
        %v6732 = vtanh.pop %v6684
        %v6733 = vtanh.pop %v6685
        %v6734 = vtanh.pop %v6686
        %v6735 = vtanh.pop %v6687
        %v6736 = vtanh.pop %v6688
        %v6737 = vtanh.pop %v6689
        %v6738 = vtanh.pop %v6690
        %v6739 = vtanh.pop %v6691
        %v6740 = vtanh.pop %v6692
        %v6741 = vtanh.pop %v6693
        %v6742 = vtanh.pop %v6694
        %v6743 = vtanh.pop %v6695
        %v6744 = vtanh.pop %v6696
        %v6745 = vtanh.pop %v6697
        %v6746 = vtanh.pop %v6698
        %v6747 = vtanh.pop %v6699
        %v6748 = vtanh.pop %v6700
        %v6749 = vtanh.pop %v6701
        %v6750 = vtanh.pop %v6702
        %v6751 = vtanh.pop %v6703
        %v6752 = vtanh.pop %v6704
        %v6753 = vtanh.pop %v6705
        %v6754 = vtanh.pop %v6706
        %v6755 = vtanh.pop %v6707
        %v6756 = vtanh.pop %v6708
        %v6757 = vtanh.pop %v6709
        %v6758 = vtanh.pop %v6710
        %v6759 = vtanh.pop %v6711
        %v6760 = vtanh.pop %v6712
        %v6761 = vadd.f32 %v6713, 1.0
        %v6762 = vadd.f32 %v6714, 1.0
        %v6763 = vadd.f32 %v6715, 1.0
        %v6764 = vadd.f32 %v6716, 1.0
        %v6765 = vadd.f32 %v6717, 1.0
        %v6766 = vadd.f32 %v6718, 1.0
        %v6767 = vadd.f32 %v6719, 1.0
        %v6768 = vadd.f32 %v6720, 1.0
        %v6769 = vadd.f32 %v6721, 1.0
        %v6770 = vadd.f32 %v6722, 1.0
        %v6771 = vadd.f32 %v6723, 1.0
        %v6772 = vadd.f32 %v6724, 1.0
        %v6773 = vadd.f32 %v6725, 1.0
        %v6774 = vadd.f32 %v6726, 1.0
        %v6775 = vadd.f32 %v6727, 1.0
        %v6776 = vadd.f32 %v6728, 1.0
        %v6777 = vadd.f32 %v6729, 1.0
        %v6778 = vadd.f32 %v6730, 1.0
        %v6779 = vadd.f32 %v6731, 1.0
        %v6780 = vadd.f32 %v6732, 1.0
        %v6781 = vadd.f32 %v6733, 1.0
        %v6782 = vadd.f32 %v6734, 1.0
        %v6783 = vadd.f32 %v6735, 1.0
        %v6784 = vadd.f32 %v6736, 1.0
        %v6785 = vadd.f32 %v6737, 1.0
        %v6786 = vadd.f32 %v6738, 1.0
        %v6787 = vadd.f32 %v6739, 1.0
        %v6788 = vadd.f32 %v6740, 1.0
        %v6789 = vadd.f32 %v6741, 1.0
        %v6790 = vadd.f32 %v6742, 1.0
        %v6791 = vadd.f32 %v6743, 1.0
        %v6792 = vadd.f32 %v6744, 1.0
        %v6793 = vadd.f32 %v6745, 1.0
        %v6794 = vadd.f32 %v6746, 1.0
        %v6795 = vadd.f32 %v6747, 1.0
        %v6796 = vadd.f32 %v6748, 1.0
        %v6797 = vadd.f32 %v6749, 1.0
        %v6798 = vadd.f32 %v6750, 1.0
        %v6799 = vadd.f32 %v6751, 1.0
        %v6800 = vadd.f32 %v6752, 1.0
        %v6801 = vadd.f32 %v6753, 1.0
        %v6802 = vadd.f32 %v6754, 1.0
        %v6803 = vadd.f32 %v6755, 1.0
        %v6804 = vadd.f32 %v6756, 1.0
        %v6805 = vadd.f32 %v6757, 1.0
        %v6806 = vadd.f32 %v6758, 1.0
        %v6807 = vadd.f32 %v6759, 1.0
        %v6808 = vadd.f32 %v6760, 1.0
        %v6809 = vmul.f32 %v6425, %v6761
        %v6810 = vmul.f32 %v6426, %v6762
        %v6811 = vmul.f32 %v6427, %v6763
        %v6812 = vmul.f32 %v6428, %v6764
        %v6813 = vmul.f32 %v6429, %v6765
        %v6814 = vmul.f32 %v6430, %v6766
        %v6815 = vmul.f32 %v6431, %v6767
        %v6816 = vmul.f32 %v6432, %v6768
        %v6817 = vmul.f32 %v6433, %v6769
        %v6818 = vmul.f32 %v6434, %v6770
        %v6819 = vmul.f32 %v6435, %v6771
        %v6820 = vmul.f32 %v6436, %v6772
        %v6821 = vmul.f32 %v6437, %v6773
        %v6822 = vmul.f32 %v6438, %v6774
        %v6823 = vmul.f32 %v6439, %v6775
        %v6824 = vmul.f32 %v6440, %v6776
        %v6825 = vmul.f32 %v6441, %v6777
        %v6826 = vmul.f32 %v6442, %v6778
        %v6827 = vmul.f32 %v6443, %v6779
        %v6828 = vmul.f32 %v6444, %v6780
        %v6829 = vmul.f32 %v6445, %v6781
        %v6830 = vmul.f32 %v6446, %v6782
        %v6831 = vmul.f32 %v6447, %v6783
        %v6832 = vmul.f32 %v6448, %v6784
        %v6833 = vmul.f32 %v6449, %v6785
        %v6834 = vmul.f32 %v6450, %v6786
        %v6835 = vmul.f32 %v6451, %v6787
        %v6836 = vmul.f32 %v6452, %v6788
        %v6837 = vmul.f32 %v6453, %v6789
        %v6838 = vmul.f32 %v6454, %v6790
        %v6839 = vmul.f32 %v6455, %v6791
        %v6840 = vmul.f32 %v6456, %v6792
        %v6841 = vmul.f32 %v6457, %v6793
        %v6842 = vmul.f32 %v6458, %v6794
        %v6843 = vmul.f32 %v6459, %v6795
        %v6844 = vmul.f32 %v6460, %v6796
        %v6845 = vmul.f32 %v6461, %v6797
        %v6846 = vmul.f32 %v6462, %v6798
        %v6847 = vmul.f32 %v6463, %v6799
        %v6848 = vmul.f32 %v6464, %v6800
        %v6849 = vmul.f32 %v6465, %v6801
        %v6850 = vmul.f32 %v6466, %v6802
        %v6851 = vmul.f32 %v6467, %v6803
        %v6852 = vmul.f32 %v6468, %v6804
        %v6853 = vmul.f32 %v6469, %v6805
        %v6854 = vmul.f32 %v6470, %v6806
        %v6855 = vmul.f32 %v6471, %v6807
        %v6856 = vmul.f32 %v6472, %v6808
        %6905 = vrot.lane.b32.xlu0 %v6809, 64
        %v6906 = vpop.permute.xlu0 %6905
        %6907 = vrot.lane.b32.xlu0 %v6810, 64
        %v6908 = vpop.permute.xlu0 %6907
        %6909 = vrot.lane.b32.xlu0 %v6811, 64
        %v6910 = vpop.permute.xlu0 %6909
        %6911 = vrot.lane.b32.xlu0 %v6812, 64
        %v6912 = vpop.permute.xlu0 %6911
        %6913 = vrot.lane.b32.xlu0 %v6813, 64
        %v6914 = vpop.permute.xlu0 %6913
        %6915 = vrot.lane.b32.xlu0 %v6814, 64
        %v6916 = vpop.permute.xlu0 %6915
        %6917 = vrot.lane.b32.xlu0 %v6815, 64
        %v6918 = vpop.permute.xlu0 %6917
        %6919 = vrot.lane.b32.xlu0 %v6816, 64
        %v6920 = vpop.permute.xlu0 %6919
        %6921 = vrot.lane.b32.xlu0 %v6817, 64
        %v6922 = vpop.permute.xlu0 %6921
        %6923 = vrot.lane.b32.xlu0 %v6818, 64
        %v6924 = vpop.permute.xlu0 %6923
        %6925 = vrot.lane.b32.xlu0 %v6819, 64
        %v6926 = vpop.permute.xlu0 %6925
        %6927 = vrot.lane.b32.xlu0 %v6820, 64
        %v6928 = vpop.permute.xlu0 %6927
        %6929 = vrot.lane.b32.xlu0 %v6821, 64
        %v6930 = vpop.permute.xlu0 %6929
        %6931 = vrot.lane.b32.xlu0 %v6822, 64
        %v6932 = vpop.permute.xlu0 %6931
        %6933 = vrot.lane.b32.xlu0 %v6823, 64
        %v6934 = vpop.permute.xlu0 %6933
        %6935 = vrot.lane.b32.xlu0 %v6824, 64
        %v6936 = vpop.permute.xlu0 %6935
        %6937 = vrot.lane.b32.xlu0 %v6825, 64
        %v6938 = vpop.permute.xlu0 %6937
        %6939 = vrot.lane.b32.xlu0 %v6826, 64
        %v6940 = vpop.permute.xlu0 %6939
        %6941 = vrot.lane.b32.xlu0 %v6827, 64
        %v6942 = vpop.permute.xlu0 %6941
        %6943 = vrot.lane.b32.xlu0 %v6828, 64
        %v6944 = vpop.permute.xlu0 %6943
        %6945 = vrot.lane.b32.xlu0 %v6829, 64
        %v6946 = vpop.permute.xlu0 %6945
        %6947 = vrot.lane.b32.xlu0 %v6830, 64
        %v6948 = vpop.permute.xlu0 %6947
        %6949 = vrot.lane.b32.xlu0 %v6831, 64
        %v6950 = vpop.permute.xlu0 %6949
        %6951 = vrot.lane.b32.xlu0 %v6832, 64
        %v6952 = vpop.permute.xlu0 %6951
        %6953 = vrot.lane.b32.xlu0 %v6833, 64
        %v6954 = vpop.permute.xlu0 %6953
        %6955 = vrot.lane.b32.xlu0 %v6834, 64
        %v6956 = vpop.permute.xlu0 %6955
        %6957 = vrot.lane.b32.xlu0 %v6835, 64
        %v6958 = vpop.permute.xlu0 %6957
        %6959 = vrot.lane.b32.xlu0 %v6836, 64
        %v6960 = vpop.permute.xlu0 %6959
        %6961 = vrot.lane.b32.xlu0 %v6837, 64
        %v6962 = vpop.permute.xlu0 %6961
        %6963 = vrot.lane.b32.xlu0 %v6838, 64
        %v6964 = vpop.permute.xlu0 %6963
        %6965 = vrot.lane.b32.xlu0 %v6839, 64
        %v6966 = vpop.permute.xlu0 %6965
        %6967 = vrot.lane.b32.xlu0 %v6840, 64
        %v6968 = vpop.permute.xlu0 %6967
        %6969 = vrot.lane.b32.xlu0 %v6841, 64
        %v6970 = vpop.permute.xlu0 %6969
        %6971 = vrot.lane.b32.xlu0 %v6842, 64
        %v6972 = vpop.permute.xlu0 %6971
        %6973 = vrot.lane.b32.xlu0 %v6843, 64
        %v6974 = vpop.permute.xlu0 %6973
        %6975 = vrot.lane.b32.xlu0 %v6844, 64
        %v6976 = vpop.permute.xlu0 %6975
        %6977 = vrot.lane.b32.xlu0 %v6845, 64
        %v6978 = vpop.permute.xlu0 %6977
        %6979 = vrot.lane.b32.xlu0 %v6846, 64
        %v6980 = vpop.permute.xlu0 %6979
        %6981 = vrot.lane.b32.xlu0 %v6847, 64
        %v6982 = vpop.permute.xlu0 %6981
        %6983 = vrot.lane.b32.xlu0 %v6848, 64
        %v6984 = vpop.permute.xlu0 %6983
        %6985 = vrot.lane.b32.xlu0 %v6849, 64
        %v6986 = vpop.permute.xlu0 %6985
        %6987 = vrot.lane.b32.xlu0 %v6850, 64
        %v6988 = vpop.permute.xlu0 %6987
        %6989 = vrot.lane.b32.xlu0 %v6851, 64
        %v6990 = vpop.permute.xlu0 %6989
        %6991 = vrot.lane.b32.xlu0 %v6852, 64
        %v6992 = vpop.permute.xlu0 %6991
        %6993 = vrot.lane.b32.xlu0 %v6853, 64
        %v6994 = vpop.permute.xlu0 %6993
        %6995 = vrot.lane.b32.xlu0 %v6854, 64
        %v6996 = vpop.permute.xlu0 %6995
        %6997 = vrot.lane.b32.xlu0 %v6855, 64
        %v6998 = vpop.permute.xlu0 %6997
        %6999 = vrot.lane.b32.xlu0 %v6856, 64
        %v7000 = vpop.permute.xlu0 %6999
        %v7049 = vmul.f32 %v6235, %v6906
        %v7050 = vmul.f32 %v6238, %v6908
        %v7051 = vmul.f32 %v6243, %v6910
        %v7052 = vmul.f32 %v6246, %v6912
        %v7053 = vmul.f32 %v6251, %v6914
        %v7054 = vmul.f32 %v6254, %v6916
        %v7055 = vmul.f32 %v6259, %v6918
        %v7056 = vmul.f32 %v6262, %v6920
        %v7057 = vmul.f32 %v6267, %v6922
        %v7058 = vmul.f32 %v6270, %v6924
        %v7059 = vmul.f32 %v6275, %v6926
        %v7060 = vmul.f32 %v6278, %v6928
        %v7061 = vmul.f32 %v6283, %v6930
        %v7062 = vmul.f32 %v6286, %v6932
        %v7063 = vmul.f32 %v6291, %v6934
        %v7064 = vmul.f32 %v6294, %v6936
        %v7065 = vmul.f32 %v6299, %v6938
        %v7066 = vmul.f32 %v6302, %v6940
        %v7067 = vmul.f32 %v6307, %v6942
        %v7068 = vmul.f32 %v6310, %v6944
        %v7069 = vmul.f32 %v6315, %v6946
        %v7070 = vmul.f32 %v6318, %v6948
        %v7071 = vmul.f32 %v6323, %v6950
        %v7072 = vmul.f32 %v6326, %v6952
        %v7073 = vmul.f32 %v6331, %v6954
        %v7074 = vmul.f32 %v6334, %v6956
        %v7075 = vmul.f32 %v6339, %v6958
        %v7076 = vmul.f32 %v6342, %v6960
        %v7077 = vmul.f32 %v6347, %v6962
        %v7078 = vmul.f32 %v6350, %v6964
        %v7079 = vmul.f32 %v6355, %v6966
        %v7080 = vmul.f32 %v6358, %v6968
        %v7081 = vmul.f32 %v6363, %v6970
        %v7082 = vmul.f32 %v6366, %v6972
        %v7083 = vmul.f32 %v6371, %v6974
        %v7084 = vmul.f32 %v6374, %v6976
        %v7085 = vmul.f32 %v6379, %v6978
        %v7086 = vmul.f32 %v6382, %v6980
        %v7087 = vmul.f32 %v6387, %v6982
        %v7088 = vmul.f32 %v6390, %v6984
        %v7089 = vmul.f32 %v6395, %v6986
        %v7090 = vmul.f32 %v6398, %v6988
        %v7091 = vmul.f32 %v6403, %v6990
        %v7092 = vmul.f32 %v6406, %v6992
        %v7093 = vmul.f32 %v6411, %v6994
        %v7094 = vmul.f32 %v6414, %v6996
        %v7095 = vmul.f32 %v6419, %v6998
        %v7096 = vmul.f32 %v6422, %v7000
        %v7097 = vpack.c.bf16 %v7050, %v7049
        %v7098 = vpack.c.bf16 %v7052, %v7051
        %v7099 = vpack.c.bf16 %v7054, %v7053
        %v7100 = vpack.c.bf16 %v7056, %v7055
        %v7101 = vpack.c.bf16 %v7058, %v7057
        %v7102 = vpack.c.bf16 %v7060, %v7059
        %v7103 = vpack.c.bf16 %v7062, %v7061
        %v7104 = vpack.c.bf16 %v7064, %v7063
        %v7105 = vpack.c.bf16 %v7066, %v7065
        %v7106 = vpack.c.bf16 %v7068, %v7067
        %v7107 = vpack.c.bf16 %v7070, %v7069
        %v7108 = vpack.c.bf16 %v7072, %v7071
        %v7109 = vpack.c.bf16 %v7074, %v7073
        %v7110 = vpack.c.bf16 %v7076, %v7075
        %v7111 = vpack.c.bf16 %v7078, %v7077
        %v7112 = vpack.c.bf16 %v7080, %v7079
        %v7113 = vpack.c.bf16 %v7082, %v7081
        %v7114 = vpack.c.bf16 %v7084, %v7083
        %v7115 = vpack.c.bf16 %v7086, %v7085
        %v7116 = vpack.c.bf16 %v7088, %v7087
        %v7117 = vpack.c.bf16 %v7090, %v7089
        %v7118 = vpack.c.bf16 %v7092, %v7091
        %v7119 = vpack.c.bf16 %v7094, %v7093
        %v7120 = vpack.c.bf16 %v7096, %v7095
        %v7121 = vld [vmem:[%s11] sm:$0xf]
        %v7122 = vld [vmem:[%s11 + $0x4] sm:$0xf]
        %v7123 = vld [vmem:[%s11 + $0x8] sm:$0xf]
        %v7124 = vld [vmem:[%s11 + $0xc] sm:$0xf]
        %v7125 = vld [vmem:[%s11 + $0x10] sm:$0xf]
        %v7126 = vld [vmem:[%s11 + $0x14] sm:$0xf]
        %v7127 = vld [vmem:[%s11 + $0x18] sm:$0xf]
        %v7128 = vld [vmem:[%s11 + $0x1c] sm:$0xf]
        %v7129 = vld [vmem:[%s12] sm:$0x1]
        %v7131 = vlaneseq
        %v7132 = vshrl.u32 %v7131, 7
        %v7133 = vsub.s32 0, %v7132
        %v7134 = vrot.slane %v7129, %v7133
        %v7144 = vunpack.c.l.b16 %v7121
        %v7145 = vunpack.c.l.b16 %v7122
        %v7146 = vunpack.c.l.b16 %v7123
        %v7147 = vunpack.c.l.b16 %v7124
        %v7148 = vunpack.c.l.b16 %v7125
        %v7149 = vunpack.c.l.b16 %v7126
        %v7150 = vunpack.c.l.b16 %v7127
        %v7151 = vunpack.c.l.b16 %v7128
        %v7152 = vpack.c.b16 %v7145, %v7144
        %v7153 = vpack.c.b16 %v7147, %v7146
        %v7154 = vpack.c.b16 %v7149, %v7148
        %v7155 = vpack.c.b16 %v7151, %v7150
        %vm7160 = vcmask 523264
        %v7162 = vsel %vm7160, %v7097, 0
        %v7165 = vsel %vm7160, %v7098, 0
        %v7168 = vsel %vm7160, %v7099, 0
        %v7171 = vsel %vm7160, %v7100, 0
        %v7174 = vsel %vm7160, %v7101, 0
        %v7177 = vsel %vm7160, %v7102, 0
        %v7180 = vsel %vm7160, %v7103, 0
        %v7183 = vsel %vm7160, %v7104, 0
        %v7186 = vsel %vm7160, %v7105, 0
        %v7189 = vsel %vm7160, %v7106, 0
        %v7192 = vsel %vm7160, %v7107, 0
        %v7195 = vsel %vm7160, %v7108, 0
        %v7198 = vsel %vm7160, %v7109, 0
        %v7201 = vsel %vm7160, %v7110, 0
        %v7204 = vsel %vm7160, %v7111, 0
        %v7207 = vsel %vm7160, %v7112, 0
        %v7210 = vsel %vm7160, %v7113, 0
        %v7213 = vsel %vm7160, %v7114, 0
        %v7216 = vsel %vm7160, %v7115, 0
        %v7219 = vsel %vm7160, %v7116, 0
        %v7222 = vsel %vm7160, %v7117, 0
        %v7225 = vsel %vm7160, %v7118, 0
        %v7228 = vsel %vm7160, %v7119, 0
        %v7231 = vsel %vm7160, %v7120, 0
        %7233 = vmatprep.subr.bf16.mxu0 0
        %7234 = vmatpush1.bf16.msra.mxu0 %v7152
        %7235 = vmatprep.subr.bf16.mxu0 0
        %7236 = vmatpush1.bf16.msra.mxu0 %v7153
        %7237 = vmatprep.subr.bf16.mxu0 0
        %7238 = vmatpush1.bf16.msra.mxu0 %v7154
        %7239 = vmatprep.subr.bf16.mxu0 0
        %7240 = vmatpush1.bf16.msra.mxu0 %v7155
        %7241 = vmatprep.subr.bf16.mxu0 0
        %7242 = vmatpush1.bf16.msra.mxu0 0
        %7243 = vmatprep.subr.bf16.mxu0 0
        %7244 = vmatpush1.bf16.msra.mxu0 0
        %7245 = vmatprep.subr.bf16.mxu0 0
        %7246 = vmatpush1.bf16.msra.mxu0 0
        %7247 = vmatprep.subr.bf16.mxu0 0
        %7248 = vmatpush1.bf16.msra.mxu0 0
        %7249 = vmatprep.subr.bf16.mxu0 0
        %7250 = vmatpush1.bf16.msra.mxu0 0
        %7251 = vmatprep.subr.bf16.mxu0 0
        %7252 = vmatpush1.bf16.msra.mxu0 0
        %7253 = vmatprep.subr.bf16.mxu0 0
        %7254 = vmatpush1.bf16.msra.mxu0 0
        %7255 = vmatprep.subr.bf16.mxu0 0
        %7256 = vmatpush1.bf16.msra.mxu0 0
        %7257 = vmatprep.subr.bf16.mxu0 0
        %7258 = vmatpush1.bf16.msra.mxu0 0
        %7259 = vmatprep.subr.bf16.mxu0 0
        %7260 = vmatpush1.bf16.msra.mxu0 0
        %7261 = vmatprep.subr.bf16.mxu0 0
        %7262 = vmatpush1.bf16.msra.mxu0 0
        %7263 = vmatprep.subr.bf16.mxu0 0
        %7264 = vmatpush1.bf16.msra.mxu0 0
        %7265 = vmatprep.mubr.bf16.mxu0 0
        %7266 = vmatmul.mubr.bf16.gmra.mrb[0].mxu0 %v7162
        %v7267 = vpop.f32.mrb[0].mxu0
        %v7268 = vpop.f32.mrb[0].mxu0
        %v7269 = vpop.f32.mrb[0].mxu0
        %v7270 = vpop.f32.mrb[0].mxu0
        %7271 = vmatprep.mubr.bf16.mxu0 0
        %7272 = vmatmul.mubr.bf16.gmra.mrb[0].mxu0 %v7165
        %v7273 = vpop.f32.mrb[0].mxu0
        %v7274 = vpop.f32.mrb[0].mxu0
        %v7275 = vpop.f32.mrb[0].mxu0
        %v7276 = vpop.f32.mrb[0].mxu0
        %7277 = vmatprep.mubr.bf16.mxu0 0
        %7278 = vmatmul.mubr.bf16.gmra.mrb[0].mxu0 %v7168
        %v7279 = vpop.f32.mrb[0].mxu0
        %v7280 = vpop.f32.mrb[0].mxu0
        %v7281 = vpop.f32.mrb[0].mxu0
        %v7282 = vpop.f32.mrb[0].mxu0
        %7283 = vmatprep.mubr.bf16.mxu0 0
        %7284 = vmatmul.mubr.bf16.gmra.mrb[0].mxu0 %v7171
        %v7285 = vpop.f32.mrb[0].mxu0
        %v7286 = vpop.f32.mrb[0].mxu0
        %v7287 = vpop.f32.mrb[0].mxu0
        %v7288 = vpop.f32.mrb[0].mxu0
        %7289 = vmatprep.mubr.bf16.mxu0 0
        %7290 = vmatmul.mubr.bf16.gmra.mrb[0].mxu0 %v7174
        %v7291 = vpop.f32.mrb[0].mxu0
        %v7292 = vadd.f32 %v7134, %v7291
        %v7293 = vpop.f32.mrb[0].mxu0
        %v7294 = vpop.f32.mrb[0].mxu0
        %v7295 = vadd.f32 %v7134, %v7294
        %v7296 = vpop.f32.mrb[0].mxu0
        %7297 = vmatprep.mubr.bf16.mxu0 0
        %7298 = vmatmul.mubr.bf16.gmra.mrb[0].mxu0 %v7177
        %v7299 = vpop.f32.mrb[0].mxu0
        %v7300 = vadd.f32 %v7134, %v7299
        %v7301 = vpop.f32.mrb[0].mxu0
        %v7302 = vpop.f32.mrb[0].mxu0
        %v7303 = vadd.f32 %v7134, %v7302
        %v7304 = vpop.f32.mrb[0].mxu0
        %7305 = vmatprep.mubr.bf16.mxu0 0
        %7306 = vmatmul.mubr.bf16.gmra.mrb[0].mxu0 %v7180
        %v7307 = vpop.f32.mrb[0].mxu0
        %v7308 = vadd.f32 %v7134, %v7307
        %v7309 = vpop.f32.mrb[0].mxu0
        %v7310 = vpop.f32.mrb[0].mxu0
        %v7311 = vadd.f32 %v7134, %v7310
        %v7312 = vpop.f32.mrb[0].mxu0
        %7313 = vmatprep.mubr.bf16.mxu0 0
        %7314 = vmatmul.mubr.bf16.gmra.mrb[0].mxu0 %v7183
        %v7315 = vpop.f32.mrb[0].mxu0
        %v7316 = vadd.f32 %v7134, %v7315
        %v7317 = vpop.f32.mrb[0].mxu0
        %v7318 = vpop.f32.mrb[0].mxu0
        %v7319 = vadd.f32 %v7134, %v7318
        %v7320 = vpop.f32.mrb[0].mxu0
        %7321 = vmatprep.mubr.bf16.mxu0 0
        %7322 = vmatmul.mubr.bf16.gmra.mrb[0].mxu0 %v7186
        %v7323 = vpop.f32.mrb[0].mxu0
        %v7324 = vadd.f32 %v7134, %v7323
        %v7325 = vpop.f32.mrb[0].mxu0
        %v7326 = vpop.f32.mrb[0].mxu0
        %v7327 = vadd.f32 %v7134, %v7326
        %v7328 = vpop.f32.mrb[0].mxu0
        %7329 = vmatprep.mubr.bf16.mxu0 0
        %7330 = vmatmul.mubr.bf16.gmra.mrb[0].mxu0 %v7189
        %v7331 = vpop.f32.mrb[0].mxu0
        %v7332 = vadd.f32 %v7134, %v7331
        %v7333 = vpop.f32.mrb[0].mxu0
        %v7334 = vpop.f32.mrb[0].mxu0
        %v7335 = vadd.f32 %v7134, %v7334
        %v7336 = vpop.f32.mrb[0].mxu0
        %7337 = vmatprep.mubr.bf16.mxu0 0
        %7338 = vmatmul.mubr.bf16.gmra.mrb[0].mxu0 %v7192
        %v7339 = vpop.f32.mrb[0].mxu0
        %v7340 = vadd.f32 %v7134, %v7339
        %v7341 = vpop.f32.mrb[0].mxu0
        %v7342 = vpop.f32.mrb[0].mxu0
        %v7343 = vadd.f32 %v7134, %v7342
        %v7344 = vpop.f32.mrb[0].mxu0
        %7345 = vmatprep.mubr.bf16.mxu0 0
        %7346 = vmatmul.mubr.bf16.gmra.mrb[0].mxu0 %v7195
        %v7347 = vpop.f32.mrb[0].mxu0
        %v7348 = vadd.f32 %v7134, %v7347
        %v7349 = vpop.f32.mrb[0].mxu0
        %v7350 = vpop.f32.mrb[0].mxu0
        %v7351 = vadd.f32 %v7134, %v7350
        %v7352 = vpop.f32.mrb[0].mxu0
        %7353 = vmatprep.mubr.bf16.mxu0 0
        %7354 = vmatmul.mubr.bf16.gmra.mrb[0].mxu0 %v7198
        %v7355 = vpop.f32.mrb[0].mxu0
        %v7356 = vadd.f32 %v7134, %v7355
        %v7357 = vpop.f32.mrb[0].mxu0
        %v7358 = vpop.f32.mrb[0].mxu0
        %v7359 = vadd.f32 %v7134, %v7358
        %v7360 = vpop.f32.mrb[0].mxu0
        %7361 = vmatprep.mubr.bf16.mxu0 0
        %7362 = vmatmul.mubr.bf16.gmra.mrb[0].mxu0 %v7201
        %v7363 = vpop.f32.mrb[0].mxu0
        %v7364 = vadd.f32 %v7134, %v7363
        %v7365 = vpop.f32.mrb[0].mxu0
        %v7366 = vpop.f32.mrb[0].mxu0
        %v7367 = vadd.f32 %v7134, %v7366
        %v7368 = vpop.f32.mrb[0].mxu0
        %7369 = vmatprep.mubr.bf16.mxu0 0
        %7370 = vmatmul.mubr.bf16.gmra.mrb[0].mxu0 %v7204
        %v7371 = vpop.f32.mrb[0].mxu0
        %v7372 = vadd.f32 %v7134, %v7371
        %v7373 = vpop.f32.mrb[0].mxu0
        %v7374 = vpop.f32.mrb[0].mxu0
        %v7375 = vadd.f32 %v7134, %v7374
        %v7376 = vpop.f32.mrb[0].mxu0
        %7377 = vmatprep.mubr.bf16.mxu0 0
        %7378 = vmatmul.mubr.bf16.gmra.mrb[0].mxu0 %v7207
        %v7379 = vpop.f32.mrb[0].mxu0
        %v7380 = vadd.f32 %v7134, %v7379
        %v7381 = vpop.f32.mrb[0].mxu0
        %v7382 = vpop.f32.mrb[0].mxu0
        %v7383 = vadd.f32 %v7134, %v7382
        %v7384 = vpop.f32.mrb[0].mxu0
        %7385 = vmatprep.mubr.bf16.mxu0 0
        %7386 = vmatmul.mubr.bf16.gmra.mrb[0].mxu0 %v7210
        %v7387 = vpop.f32.mrb[0].mxu0
        %v7388 = vadd.f32 %v7134, %v7387
        %v7389 = vpop.f32.mrb[0].mxu0
        %v7390 = vpop.f32.mrb[0].mxu0
        %v7391 = vadd.f32 %v7134, %v7390
        %v7392 = vpop.f32.mrb[0].mxu0
        %7393 = vmatprep.mubr.bf16.mxu0 0
        %7394 = vmatmul.mubr.bf16.gmra.mrb[0].mxu0 %v7213
        %v7395 = vpop.f32.mrb[0].mxu0
        %v7396 = vadd.f32 %v7134, %v7395
        %v7397 = vpop.f32.mrb[0].mxu0
        %v7398 = vpop.f32.mrb[0].mxu0
        %v7399 = vadd.f32 %v7134, %v7398
        %v7400 = vpop.f32.mrb[0].mxu0
        %7401 = vmatprep.mubr.bf16.mxu0 0
        %7402 = vmatmul.mubr.bf16.gmra.mrb[0].mxu0 %v7216
        %v7403 = vpop.f32.mrb[0].mxu0
        %v7404 = vadd.f32 %v7134, %v7403
        %v7405 = vpop.f32.mrb[0].mxu0
        %v7406 = vpop.f32.mrb[0].mxu0
        %v7407 = vadd.f32 %v7134, %v7406
        %v7408 = vpop.f32.mrb[0].mxu0
        %7409 = vmatprep.mubr.bf16.mxu0 0
        %7410 = vmatmul.mubr.bf16.gmra.mrb[0].mxu0 %v7219
        %v7411 = vpop.f32.mrb[0].mxu0
        %v7412 = vadd.f32 %v7134, %v7411
        %v7413 = vpop.f32.mrb[0].mxu0
        %v7414 = vpop.f32.mrb[0].mxu0
        %v7415 = vadd.f32 %v7134, %v7414
        %v7416 = vpop.f32.mrb[0].mxu0
        %7417 = vmatprep.mubr.bf16.mxu0 0
        %7418 = vmatmul.mubr.bf16.gmra.mrb[0].mxu0 %v7222
        %v7419 = vpop.f32.mrb[0].mxu0
        %v7420 = vpop.f32.mrb[0].mxu0
        %v7421 = vpop.f32.mrb[0].mxu0
        %v7422 = vpop.f32.mrb[0].mxu0
        %7423 = vmatprep.mubr.bf16.mxu0 0
        %7424 = vmatmul.mubr.bf16.gmra.mrb[0].mxu0 %v7225
        %v7425 = vpop.f32.mrb[0].mxu0
        %v7426 = vpop.f32.mrb[0].mxu0
        %v7427 = vpop.f32.mrb[0].mxu0
        %v7428 = vpop.f32.mrb[0].mxu0
        %7429 = vmatprep.mubr.bf16.mxu0 0
        %7430 = vmatmul.mubr.bf16.gmra.mrb[0].mxu0 %v7228
        %v7431 = vpop.f32.mrb[0].mxu0
        %v7432 = vpop.f32.mrb[0].mxu0
        %v7433 = vpop.f32.mrb[0].mxu0
        %v7434 = vpop.f32.mrb[0].mxu0
        %7435 = vmatprep.mubr.bf16.mxu0 0
        %7436 = vmatmul.mubr.bf16.gmra.mrb[0].mxu0 %v7231
        %v7437 = vpop.f32.mrb[0].mxu0
        %v7438 = vpop.f32.mrb[0].mxu0
        %v7439 = vpop.f32.mrb[0].mxu0
        %v7440 = vpop.f32.mrb[0].mxu0
        %7441 = vdwg.mxu0
        %v7442 = vpack.c.bf16 %v7295, %v7292
        %v7443 = vpack.c.bf16 %v7303, %v7300
        %v7444 = vpack.c.bf16 %v7311, %v7308
        %v7445 = vpack.c.bf16 %v7319, %v7316
        %v7450 = vunpack.c.l.b16 %v7442
        %v7451 = vunpack.c.h.b16 %v7442
        %v7452 = vunpack.c.l.b16 %v7443
        %v7453 = vunpack.c.h.b16 %v7443
        %v7454 = vunpack.c.l.b16 %v7444
        %v7455 = vunpack.c.h.b16 %v7444
        %v7456 = vunpack.c.l.b16 %v7445
        %v7457 = vunpack.c.h.b16 %v7445
        %v7458 = vpack.c.b16 %v7450, %v7450
        %v7459 = vpack.c.b16 %v7451, %v7451
        %v7460 = vpack.c.b16 %v7452, %v7452
        %v7461 = vpack.c.b16 %v7453, %v7453
        %v7462 = vpack.c.b16 %v7454, %v7454
        %v7463 = vpack.c.b16 %v7455, %v7455
        %v7464 = vpack.c.b16 %v7456, %v7456
        %v7465 = vpack.c.b16 %v7457, %v7457
        %vm7474 = vcmask 257024
        %7475 = vst.msk [vmem:[%s546] sm:$0xf] %vm7474, %v7458
        %7476 = vst.msk [vmem:[%s546 + $0x4] sm:$0xf] %vm7474, %v7459
        %7477 = vst.msk [vmem:[%s546 + $0x8] sm:$0xf] %vm7474, %v7460
        %7478 = vst.msk [vmem:[%s546 + $0xc] sm:$0xf] %vm7474, %v7461
        %7479 = vst.msk [vmem:[%s546 + $0x10] sm:$0xf] %vm7474, %v7462
        %7480 = vst.msk [vmem:[%s546 + $0x14] sm:$0xf] %vm7474, %v7463
        %7481 = vst.msk [vmem:[%s546 + $0x18] sm:$0xf] %vm7474, %v7464
        %7482 = vst.msk [vmem:[%s546 + $0x1c] sm:$0xf] %vm7474, %v7465
        %v7483 = vpack.c.bf16 %v7327, %v7324
        %v7484 = vpack.c.bf16 %v7335, %v7332
        %v7485 = vpack.c.bf16 %v7343, %v7340
        %v7486 = vpack.c.bf16 %v7351, %v7348
        %v7491 = vunpack.c.l.b16 %v7483
        %v7492 = vunpack.c.h.b16 %v7483
        %v7493 = vunpack.c.l.b16 %v7484
        %v7494 = vunpack.c.h.b16 %v7484
        %v7495 = vunpack.c.l.b16 %v7485
        %v7496 = vunpack.c.h.b16 %v7485
        %v7497 = vunpack.c.l.b16 %v7486
        %v7498 = vunpack.c.h.b16 %v7486
        %v7499 = vpack.c.b16 %v7491, %v7491
        %v7500 = vpack.c.b16 %v7492, %v7492
        %v7501 = vpack.c.b16 %v7493, %v7493
        %v7502 = vpack.c.b16 %v7494, %v7494
        %v7503 = vpack.c.b16 %v7495, %v7495
        %v7504 = vpack.c.b16 %v7496, %v7496
        %v7505 = vpack.c.b16 %v7497, %v7497
        %v7506 = vpack.c.b16 %v7498, %v7498
        %s7515 = scalar_lea.vmem %s546, 32
        %7516 = vst.msk [vmem:[%s7515] sm:$0xf] %vm7474, %v7499
        %7517 = vst.msk [vmem:[%s7515 + $0x4] sm:$0xf] %vm7474, %v7500
        %7518 = vst.msk [vmem:[%s7515 + $0x8] sm:$0xf] %vm7474, %v7501
        %7519 = vst.msk [vmem:[%s7515 + $0xc] sm:$0xf] %vm7474, %v7502
        %7520 = vst.msk [vmem:[%s7515 + $0x10] sm:$0xf] %vm7474, %v7503
        %7521 = vst.msk [vmem:[%s7515 + $0x14] sm:$0xf] %vm7474, %v7504
        %7522 = vst.msk [vmem:[%s7515 + $0x18] sm:$0xf] %vm7474, %v7505
        %7523 = vst.msk [vmem:[%s7515 + $0x1c] sm:$0xf] %vm7474, %v7506
        %v7524 = vpack.c.bf16 %v7359, %v7356
        %v7525 = vpack.c.bf16 %v7367, %v7364
        %v7526 = vpack.c.bf16 %v7375, %v7372
        %v7527 = vpack.c.bf16 %v7383, %v7380
        %v7532 = vunpack.c.l.b16 %v7524
        %v7533 = vunpack.c.h.b16 %v7524
        %v7534 = vunpack.c.l.b16 %v7525
        %v7535 = vunpack.c.h.b16 %v7525
        %v7536 = vunpack.c.l.b16 %v7526
        %v7537 = vunpack.c.h.b16 %v7526
        %v7538 = vunpack.c.l.b16 %v7527
        %v7539 = vunpack.c.h.b16 %v7527
        %v7540 = vpack.c.b16 %v7532, %v7532
        %v7541 = vpack.c.b16 %v7533, %v7533
        %v7542 = vpack.c.b16 %v7534, %v7534
        %v7543 = vpack.c.b16 %v7535, %v7535
        %v7544 = vpack.c.b16 %v7536, %v7536
        %v7545 = vpack.c.b16 %v7537, %v7537
        %v7546 = vpack.c.b16 %v7538, %v7538
        %v7547 = vpack.c.b16 %v7539, %v7539
        %s7556 = scalar_lea.vmem %s546, 64
        %7557 = vst.msk [vmem:[%s7556] sm:$0xf] %vm7474, %v7540
        %7558 = vst.msk [vmem:[%s7556 + $0x4] sm:$0xf] %vm7474, %v7541
        %7559 = vst.msk [vmem:[%s7556 + $0x8] sm:$0xf] %vm7474, %v7542
        %7560 = vst.msk [vmem:[%s7556 + $0xc] sm:$0xf] %vm7474, %v7543
        %7561 = vst.msk [vmem:[%s7556 + $0x10] sm:$0xf] %vm7474, %v7544
        %7562 = vst.msk [vmem:[%s7556 + $0x14] sm:$0xf] %vm7474, %v7545
        %7563 = vst.msk [vmem:[%s7556 + $0x18] sm:$0xf] %vm7474, %v7546
        %7564 = vst.msk [vmem:[%s7556 + $0x1c] sm:$0xf] %vm7474, %v7547
        %v7565 = vpack.c.bf16 %v7391, %v7388
        %v7566 = vpack.c.bf16 %v7399, %v7396
        %v7567 = vpack.c.bf16 %v7407, %v7404
        %v7568 = vpack.c.bf16 %v7415, %v7412
        %v7573 = vunpack.c.l.b16 %v7565
        %v7574 = vunpack.c.h.b16 %v7565
        %v7575 = vunpack.c.l.b16 %v7566
        %v7576 = vunpack.c.h.b16 %v7566
        %v7577 = vunpack.c.l.b16 %v7567
        %v7578 = vunpack.c.h.b16 %v7567
        %v7579 = vunpack.c.l.b16 %v7568
        %v7580 = vunpack.c.h.b16 %v7568
        %v7581 = vpack.c.b16 %v7573, %v7573
        %v7582 = vpack.c.b16 %v7574, %v7574
        %v7583 = vpack.c.b16 %v7575, %v7575
        %v7584 = vpack.c.b16 %v7576, %v7576
        %v7585 = vpack.c.b16 %v7577, %v7577
        %v7586 = vpack.c.b16 %v7578, %v7578
        %v7587 = vpack.c.b16 %v7579, %v7579
        %v7588 = vpack.c.b16 %v7580, %v7580
        %s7597 = scalar_lea.vmem %s546, 96
        %7598 = vst.msk [vmem:[%s7597] sm:$0xf] %vm7474, %v7581
        %7599 = vst.msk [vmem:[%s7597 + $0x4] sm:$0xf] %vm7474, %v7582
        %7600 = vst.msk [vmem:[%s7597 + $0x8] sm:$0xf] %vm7474, %v7583
        %7601 = vst.msk [vmem:[%s7597 + $0xc] sm:$0xf] %vm7474, %v7584
        %7602 = vst.msk [vmem:[%s7597 + $0x10] sm:$0xf] %vm7474, %v7585
        %7603 = vst.msk [vmem:[%s7597 + $0x14] sm:$0xf] %vm7474, %v7586
        %7604 = vst.msk [vmem:[%s7597 + $0x18] sm:$0xf] %vm7474, %v7587
        %7605 = vst.msk [vmem:[%s7597 + $0x1c] sm:$0xf] %vm7474, %v7588
        %s7606 = smul.u32 8, %s35
        %p7607 = scmp.lt.s32.totalorder %s34, 1
        %s7608 = scalar_select %p7607, %s34, 1
        %p7609 = scmp.lt.s32.totalorder %s7606, 7
        %s7610 = scalar_select %p7609, %s7606, 7
        %s7611 = smul.addr %s7608, 32
        %s7612 = sadd.s32 %s7610, %s7611
        %s7613 = smul.addr %s7612, 4
        %s7614 = scalar_lea.vmem %s13, %s7613
        // Predicated region
        $region81: #{sk_motion_module_forward.2} parent=71 // pred_check
          %p7615 = pneg %p354
        $region82: #{sk_motion_module_forward.2} parent=71 // pred_check_branch
          %7617 = sbr.rel (%p7615) target = $region84
        $region83: #{sk_motion_module_forward.2} parent=71 // pred_region
          %s7618 = smul.u32 8, %s35
        $region84: #{sk_motion_module_forward.2} parent=71 // pred_fallthru
          _
      $region72: #{sk_motion_module_forward.2} parent=5 // pred_fallthru
        _
      %p7619 = scmp.le.s32.totalorder 2, %s25
      // Predicated region
      $region85: #{sk_motion_module_forward.2} parent=5 // pred_check
        %p7620 = pneg %p7619
      $region86: #{sk_motion_module_forward.2} parent=5 // pred_check_branch
        %7622 = sbr.rel (%p7620) target = $region88
      $region87: #{sk_motion_module_forward.2} parent=5 // pred_region
        %s7623 = ssub.s32 %s25, 2
        // Predicated region
        $region89: #{sk_motion_module_forward.2} parent=87 // pred_check
          %p7624 = pneg %p360
        $region90: #{sk_motion_module_forward.2} parent=87 // pred_check_branch
          %7626 = sbr.rel (%p7624) target = $region92
        $region91: #{sk_motion_module_forward.2} parent=87 // pred_region
          %s7627 = smul.u32 8, %s37
          %p7628 = scmp.lt.s32.totalorder %s36, 1
          %s7629 = scalar_select %p7628, %s36, 1
          %p7630 = scmp.lt.s32.totalorder %s7627, 7
          %s7631 = scalar_select %p7630, %s7627, 7
          %s7632 = smul.addr %s7629, 32
          %s7633 = sadd.s32 %s7631, %s7632
          %s7634 = smul.addr %s7633, 4
          %s7635 = scalar_lea.vmem %s13, %s7634
        $region92: #{sk_motion_module_forward.2} parent=87 // pred_fallthru
          _
      $region88: #{sk_motion_module_forward.2} parent=5 // pred_fallthru
        _
    $region6: #{sk_motion_module_forward.2} parent=1 // loop_footer
      %s29 = sadd.s32 1, %s25
    $region7: #{sk_motion_module_forward.2} parent=1 // loop_footer_branch
      %24 = sbr.rel target = $region3
    $region8: #{sk_motion_module_forward.2} parent=1 // loop_exit
      _
    %7636 = vsyncpa [#allocation3], 1
    %s7637 = scalar_lea.sflag [#allocation3], 1
    %7638 = vsyncpa %s7637, 1
    %7639 = vsyncpa [#allocation5], 1
    %s7640 = scalar_lea.sflag [#allocation5], 1
    %7641 = vsyncpa %s7640, 1

</llo_original>
